<compile_context>
chip_gen: v5e
topology: v5e:2x2
jax: 0.10.0
libtpu: 0.0.40
codegen_flags: <defaults>
</compile_context>

<pallas_src>
import functools

import jax
import jax.numpy as jnp
from jax.experimental import pallas as pl
from jax.experimental.pallas import tpu as pltpu


# ---------------------------------------------------------------------------
# Pallas kernel
# ---------------------------------------------------------------------------
def _feat_kernel(inv_n,
                 xe_ref,
                 w1_ref, b1_ref,
                 w2_ref, b2_ref,
                 w5a_ref, w5b_ref, b5_ref,
                 w6_ref, b6_ref,
                 out_ref):
    n = pl.program_id(2)

    @pl.when(n == 0)
    def _():
        out_ref[...] = jnp.zeros_like(out_ref)

    f32 = jnp.float32
    bf16 = jnp.bfloat16

    xe = xe_ref[...]                                   # (TN, 40) bf16 = [xyz|pad5|emb32]

    # Stage 1: blockdiag(W1, We1): [x|e] -> [x1|e1]    (TN, 128)
    h1 = jnp.maximum(
        jnp.dot(xe, w1_ref[...], preferred_element_type=f32) + b1_ref[...], 0.0)
    h1b = h1.astype(bf16)

    # Stage 2: blockdiag(W2, We2): [x1|e1] -> [x2|e2]  (TN, 256)
    h2 = jnp.maximum(
        jnp.dot(h1b, w2_ref[...], preferred_element_type=f32) + b2_ref[...], 0.0)
    h2b = h2.astype(bf16)

    # conv5 on pointfeat_3 = [x1|e1|x2|e2] == [h1|h2]: W5 split along Cin,
    # so the concat is never materialized (identical math).
    h5 = jnp.maximum(
        jnp.dot(h1b, w5a_ref[...], preferred_element_type=f32)
        + jnp.dot(h2b, w5b_ref[...], preferred_element_type=f32)
        + b5_ref[...], 0.0)                            # (TN, 512)
    h5b = h5.astype(bf16)

    # conv6
    h6 = jnp.maximum(
        jnp.dot(h5b, w6_ref[...], preferred_element_type=f32) + b6_ref[...], 0.0)

    # avg-pool over points: accumulate the per-tile sum directly in the
    # resident (1, 1024) output block (lane-dense).
    out_ref[...] += jnp.sum(h6, axis=0, keepdims=True)

    @pl.when(n == pl.num_programs(2) - 1)
    def _():
        out_ref[...] *= inv_n


# ---------------------------------------------------------------------------
# Wrapper
# ---------------------------------------------------------------------------
def pose_refine_net_feat(x, emb, params):
    """x: (B, 3, N), emb: (B, 32, N), params: torch-layout (Cout, Cin) weights.

    Returns the (B, 1024) global feature (equivalent to the PyTorch forward).
    """
    B, _, N = x.shape
    f32, bf16 = jnp.float32, jnp.bfloat16

    # Split the point axis in two "parallel" partials when the batch axis
    # gives no cross-TensorCore parallelism (v7x has 2 TCs).
    n_par = 2 if (B == 1 and N % 16 == 0) else 1
    n_part = N // n_par

    # One point tile per part for typical DenseFusion sizes (also handles
    # N = 500 / 1000 since a full-extent block needs no (8,128) divisibility).
    if n_part <= 1024:
        tile_n = n_part
    else:
        tile_n = next((t for t in (1024, 512, 256, 128, 64, 32, 16, 8)
                       if n_part % t == 0), None)
        assert tile_n is not None, "tiled point count must be a multiple of 8"
    tiles_per_part = n_part // tile_n

    # Points -> sublanes, channels -> lanes; single bf16 (B, N, 40) slab.
    xt = jnp.transpose(x, (0, 2, 1)).astype(f32)               # (B, N, 3)
    xt = jnp.pad(xt, ((0, 0), (0, 0), (0, 5)))                 # (B, N, 8)
    et = jnp.transpose(emb, (0, 2, 1)).astype(f32)             # (B, N, 32)
    xe = jnp.concatenate([xt, et], axis=-1).astype(bf16)       # (B, N, 40)

    def wt(name):
        w, b = params[name]
        return jnp.asarray(w, f32).T, jnp.asarray(b, f32)      # (Cin, Cout), (Cout,)

    w1, b1 = wt('conv1')        # (3, 64)
    we1, be1 = wt('e_conv1')    # (32, 64)
    w2, b2 = wt('conv2')        # (64, 128)
    we2, be2 = wt('e_conv2')    # (64, 128)
    w5, b5 = wt('conv5')        # (384, 512)
    w6, b6 = wt('conv6')        # (512, 1024)

    # Block-diagonal fusion of the two branches (concat falls out for free).
    w1_blk = jnp.zeros((40, 128), f32)
    w1_blk = w1_blk.at[0:3, 0:64].set(w1).at[8:40, 64:128].set(we1)
    b1_blk = jnp.concatenate([b1, be1]).reshape(1, 128)

    w2_blk = jnp.zeros((128, 256), f32)
    w2_blk = w2_blk.at[0:64, 0:128].set(w2).at[64:128, 128:256].set(we2)
    b2_blk = jnp.concatenate([b2, be2]).reshape(1, 256)

    w5a = w5[0:128, :]          # acts on [x1|e1]
    w5b = w5[128:384, :]        # acts on [x2|e2]

    w1_blk, w2_blk, w5a, w5b, w6 = (a.astype(bf16)
                                    for a in (w1_blk, w2_blk, w5a, w5b, w6))
    b5r = b5.reshape(1, 512)
    b6r = b6.reshape(1, 1024)

    const = lambda b, p, n: (0, 0)
    kernel = functools.partial(_feat_kernel, 1.0 / float(N))

    out = pl.pallas_call(
        kernel,
        out_shape=jax.ShapeDtypeStruct((B, n_par, 1024), f32),
        grid_spec=pltpu.PrefetchScalarGridSpec(
            num_scalar_prefetch=0,
            grid=(B, n_par, tiles_per_part),
            in_specs=[
                pl.BlockSpec((None, tile_n, 40),
                             lambda b, p, n: (b, p * tiles_per_part + n, 0)),
                pl.BlockSpec((40, 128),   const),
                pl.BlockSpec((1, 128),    const),
                pl.BlockSpec((128, 256),  const),
                pl.BlockSpec((1, 256),    const),
                pl.BlockSpec((128, 512),  const),
                pl.BlockSpec((256, 512),  const),
                pl.BlockSpec((1, 512),    const),
                pl.BlockSpec((512, 1024), const),
                pl.BlockSpec((1, 1024),   const),
            ],
            out_specs=pl.BlockSpec((None, 1, 1024), lambda b, p, n: (b, p, 0)),
        ),
        compiler_params=pltpu.CompilerParams(
            dimension_semantics=("parallel", "parallel", "arbitrary"),
            vmem_limit_bytes=48 * 1024 * 1024),
    )(xe, w1_blk, b1_blk, w2_blk, b2_blk, w5a, w5b, b5r, w6, b6r)

    # Each partial sum was already scaled by 1/N, so partials combine by add.
    return jnp.sum(out, axis=1)                                # (B, 1024)


# ---------------------------------------------------------------------------
# Pure-JAX reference (mirrors the PyTorch forward exactly, f32)
# ---------------------------------------------------------------------------
def _ref_forward(x, emb, p):
    def conv_relu(h, name):                    # 1x1 Conv1d + ReLU
        w, b = p[name]                         # w: (Cout, Cin), b: (Cout,)
        return jax.nn.relu(jnp.einsum('oc,bcn->bon', w, h) + b[None, :, None])

    x1 = conv_relu(x, 'conv1')
    e1 = conv_relu(emb, 'e_conv1')
    pf1 = jnp.concatenate([x1, e1], axis=1)
    x2 = conv_relu(x1, 'conv2')
    e2 = conv_relu(e1, 'e_conv2')
    pf2 = jnp.concatenate([x2, e2], axis=1)
    pf3 = jnp.concatenate([pf1, pf2], axis=1)
    h5 = conv_relu(pf3, 'conv5')
    h6 = conv_relu(h5, 'conv6')
    return jnp.mean(h6, axis=2)                # AvgPool1d(num_points) + view


def _init_params(key):
    dims = {'conv1': (64, 3), 'e_conv1': (64, 32),
            'conv2': (128, 64), 'e_conv2': (128, 64),
            'conv5': (512, 384), 'conv6': (1024, 512)}
    params = {}
    for i, (name, (co, ci)) in enumerate(dims.items()):
        kw, kb = jax.random.split(jax.random.fold_in(key, i))
        params[name] = (jax.random.normal(kw, (co, ci), jnp.float32) / jnp.sqrt(ci),
                        0.1 * jax.random.normal(kb, (co,), jnp.float32))
    return params


if __name__ == "__main__":
    key = jax.random.PRNGKey(0)
    B, N = 2, 256                              # num_points = 256
    kx, ke, kp = jax.random.split(key, 3)

    x = jax.random.uniform(kx, (B, 3, N), jnp.float32, -1.0, 1.0)
    emb = jax.random.normal(ke, (B, 32, N), jnp.float32)
    params = _init_params(kp)

    out = jax.block_until_ready(pose_refine_net_feat(x, emb, params))
    ref = _ref_forward(x, emb, params)

    assert out.shape == (B, 1024) and out.dtype == jnp.float32
    assert bool(jnp.allclose(out, ref, rtol=2e-2, atol=2e-2)), \
        float(jnp.max(jnp.abs(out - ref)))
    print("KERNEL_OK")
</pallas_src>

<mosaic_0001>
module attributes {stable_mosaic.version = 11 : i64} {
  func.func @_feat_kernel(%arg0: i32, %arg1: i32, %arg2: i32, %arg3: memref<1x256x40xbf16, #tpu.memory_space<vmem>>, %arg4: memref<40x128xbf16, #tpu.memory_space<vmem>>, %arg5: memref<1x128xf32, #tpu.memory_space<vmem>>, %arg6: memref<128x256xbf16, #tpu.memory_space<vmem>>, %arg7: memref<1x256xf32, #tpu.memory_space<vmem>>, %arg8: memref<128x512xbf16, #tpu.memory_space<vmem>>, %arg9: memref<256x512xbf16, #tpu.memory_space<vmem>>, %arg10: memref<1x512xf32, #tpu.memory_space<vmem>>, %arg11: memref<512x1024xbf16, #tpu.memory_space<vmem>>, %arg12: memref<1x1024xf32, #tpu.memory_space<vmem>>, %arg13: memref<1x1x1024xf32, #tpu.memory_space<vmem>>) attributes {dimension_semantics = [#tpu.dimension_semantics<parallel>, #tpu.dimension_semantics<parallel>, #tpu.dimension_semantics<arbitrary>], iteration_bounds = array<i64: 2, 1, 1>, scalar_prefetch = 0 : i64, scratch_operands = 0 : i64, tpu.core_type = #tpu.core_type<tc>, window_params = [{transform_indices = @transform_0, window_bounds = array<i64: 1, 256, 40>}, {pipeline_mode = #tpu.pipeline_mode<synchronous>, transform_indices = @transform_1, window_bounds = array<i64: 40, 128>}, {pipeline_mode = #tpu.pipeline_mode<synchronous>, transform_indices = @transform_2, window_bounds = array<i64: 1, 128>}, {pipeline_mode = #tpu.pipeline_mode<synchronous>, transform_indices = @transform_3, window_bounds = array<i64: 128, 256>}, {pipeline_mode = #tpu.pipeline_mode<synchronous>, transform_indices = @transform_4, window_bounds = array<i64: 1, 256>}, {pipeline_mode = #tpu.pipeline_mode<synchronous>, transform_indices = @transform_5, window_bounds = array<i64: 128, 512>}, {pipeline_mode = #tpu.pipeline_mode<synchronous>, transform_indices = @transform_6, window_bounds = array<i64: 256, 512>}, {pipeline_mode = #tpu.pipeline_mode<synchronous>, transform_indices = @transform_7, window_bounds = array<i64: 1, 512>}, {pipeline_mode = #tpu.pipeline_mode<synchronous>, transform_indices = @transform_8, window_bounds = array<i64: 512, 1024>}, {pipeline_mode = #tpu.pipeline_mode<synchronous>, transform_indices = @transform_9, window_bounds = array<i64: 1, 1024>}, {transform_indices = @transform_10, window_bounds = array<i64: 1, 1, 1024>}]} {
    %c0_i32 = arith.constant 0 : i32
    %0 = arith.cmpi eq, %arg2, %c0_i32 : i32
    %1 = arith.extui %0 : i1 to i32
    %c0_i32_0 = arith.constant 0 : i32
    %2 = arith.cmpi ne, %1, %c0_i32_0 : i32
    scf.if %2 {
      %cst_38 = arith.constant 0.000000e+00 : f32
      %50 = vector.broadcast %cst_38 : f32 to vector<1x1024xf32>
      %c0_39 = arith.constant 0 : index
      %c0_40 = arith.constant 0 : index
      %c0_41 = arith.constant 0 : index
      %51 = vector.load %arg13[%c0_39, %c0_40, %c0_41] : memref<1x1x1024xf32, #tpu.memory_space<vmem>>, vector<1x1x1024xf32>
      %52 = vector.shape_cast %51 : vector<1x1x1024xf32> to vector<1x1024xf32>
      %53 = vector.shape_cast %50 : vector<1x1024xf32> to vector<1x1x1024xf32>
      tpu.vector_store %arg13[%c0_39, %c0_40, %c0_41], %53 {strides = array<i32>} : memref<1x1x1024xf32, #tpu.memory_space<vmem>>, vector<1x1x1024xf32>,
    } else {
    }
    %c0 = arith.constant 0 : index
    %c0_1 = arith.constant 0 : index
    %c0_2 = arith.constant 0 : index
    %3 = vector.load %arg3[%c0, %c0_1, %c0_2] : memref<1x256x40xbf16, #tpu.memory_space<vmem>>, vector<1x256x40xbf16>
    %4 = vector.shape_cast %3 : vector<1x256x40xbf16> to vector<256x40xbf16>
    %c0_3 = arith.constant 0 : index
    %c0_4 = arith.constant 0 : index
    %5 = vector.load %arg4[%c0_3, %c0_4] : memref<40x128xbf16, #tpu.memory_space<vmem>>, vector<40x128xbf16>
    %cst = arith.constant dense<0.000000e+00> : vector<256x128xf32>
    %6 = tpu.matmul %4, %5, %cst {dimension_numbers = #tpu.dot_dimension_numbers<[1], [0], [0], [1], [0, 0, 1, 1], [], []>} : vector<256x40xbf16>, vector<40x128xbf16>, vector<256x128xf32> -> vector<256x128xf32>
    %c0_5 = arith.constant 0 : index
    %c0_6 = arith.constant 0 : index
    %7 = vector.load %arg5[%c0_5, %c0_6] : memref<1x128xf32, #tpu.memory_space<vmem>>, vector<1x128xf32>
    %8 = vector.broadcast %7 : vector<1x128xf32> to vector<256x128xf32>
    %9 = arith.addf %6, %8 : vector<256x128xf32>
    %cst_7 = arith.constant 0.000000e+00 : f32
    %10 = vector.broadcast %cst_7 : f32 to vector<256x128xf32>
    %11 = arith.maximumf %9, %10 : vector<256x128xf32>
    %12 = arith.truncf %11 : vector<256x128xf32> to vector<256x128xbf16>
    %c0_8 = arith.constant 0 : index
    %c0_9 = arith.constant 0 : index
    %13 = vector.load %arg6[%c0_8, %c0_9] : memref<128x256xbf16, #tpu.memory_space<vmem>>, vector<128x256xbf16>
    %cst_10 = arith.constant dense<0.000000e+00> : vector<256x256xf32>
    %14 = tpu.matmul %12, %13, %cst_10 {dimension_numbers = #tpu.dot_dimension_numbers<[1], [0], [0], [1], [0, 0, 1, 1], [], []>} : vector<256x128xbf16>, vector<128x256xbf16>, vector<256x256xf32> -> vector<256x256xf32>
    %c0_11 = arith.constant 0 : index
    %c0_12 = arith.constant 0 : index
    %15 = vector.load %arg7[%c0_11, %c0_12] : memref<1x256xf32, #tpu.memory_space<vmem>>, vector<1x256xf32>
    %16 = vector.broadcast %15 : vector<1x256xf32> to vector<256x256xf32>
    %17 = arith.addf %14, %16 : vector<256x256xf32>
    %cst_13 = arith.constant 0.000000e+00 : f32
    %18 = vector.broadcast %cst_13 : f32 to vector<256x256xf32>
    %19 = arith.maximumf %17, %18 : vector<256x256xf32>
    %20 = arith.truncf %19 : vector<256x256xf32> to vector<256x256xbf16>
    %c0_14 = arith.constant 0 : index
    %c0_15 = arith.constant 0 : index
    %21 = vector.load %arg8[%c0_14, %c0_15] : memref<128x512xbf16, #tpu.memory_space<vmem>>, vector<128x512xbf16>
    %cst_16 = arith.constant dense<0.000000e+00> : vector<256x512xf32>
    %22 = tpu.matmul %12, %21, %cst_16 {dimension_numbers = #tpu.dot_dimension_numbers<[1], [0], [0], [1], [0, 0, 1, 1], [], []>} : vector<256x128xbf16>, vector<128x512xbf16>, vector<256x512xf32> -> vector<256x512xf32>
    %c0_17 = arith.constant 0 : index
    %c0_18 = arith.constant 0 : index
    %23 = vector.load %arg9[%c0_17, %c0_18] : memref<256x512xbf16, #tpu.memory_space<vmem>>, vector<256x512xbf16>
    %cst_19 = arith.constant dense<0.000000e+00> : vector<256x512xf32>
    %24 = tpu.matmul %20, %23, %cst_19 {dimension_numbers = #tpu.dot_dimension_numbers<[1], [0], [0], [1], [0, 0, 1, 1], [], []>} : vector<256x256xbf16>, vector<256x512xbf16>, vector<256x512xf32> -> vector<256x512xf32>
    %25 = arith.addf %22, %24 : vector<256x512xf32>
    %c0_20 = arith.constant 0 : index
    %c0_21 = arith.constant 0 : index
    %26 = vector.load %arg10[%c0_20, %c0_21] : memref<1x512xf32, #tpu.memory_space<vmem>>, vector<1x512xf32>
    %27 = vector.broadcast %26 : vector<1x512xf32> to vector<256x512xf32>
    %28 = arith.addf %25, %27 : vector<256x512xf32>
    %cst_22 = arith.constant 0.000000e+00 : f32
    %29 = vector.broadcast %cst_22 : f32 to vector<256x512xf32>
    %30 = arith.maximumf %28, %29 : vector<256x512xf32>
    %31 = arith.truncf %30 : vector<256x512xf32> to vector<256x512xbf16>
    %c0_23 = arith.constant 0 : index
    %c0_24 = arith.constant 0 : index
    %32 = vector.load %arg11[%c0_23, %c0_24] : memref<512x1024xbf16, #tpu.memory_space<vmem>>, vector<512x1024xbf16>
    %cst_25 = arith.constant dense<0.000000e+00> : vector<256x1024xf32>
    %33 = tpu.matmul %31, %32, %cst_25 {dimension_numbers = #tpu.dot_dimension_numbers<[1], [0], [0], [1], [0, 0, 1, 1], [], []>} : vector<256x512xbf16>, vector<512x1024xbf16>, vector<256x1024xf32> -> vector<256x1024xf32>
    %c0_26 = arith.constant 0 : index
    %c0_27 = arith.constant 0 : index
    %34 = vector.load %arg12[%c0_26, %c0_27] : memref<1x1024xf32, #tpu.memory_space<vmem>>, vector<1x1024xf32>
    %35 = vector.broadcast %34 : vector<1x1024xf32> to vector<256x1024xf32>
    %36 = arith.addf %33, %35 : vector<256x1024xf32>
    %cst_28 = arith.constant 0.000000e+00 : f32
    %37 = vector.broadcast %cst_28 : f32 to vector<256x1024xf32>
    %38 = arith.maximumf %36, %37 : vector<256x1024xf32>
    %c0_29 = arith.constant 0 : index
    %c0_30 = arith.constant 0 : index
    %c0_31 = arith.constant 0 : index
    %39 = vector.load %arg13[%c0_29, %c0_30, %c0_31] : memref<1x1x1024xf32, #tpu.memory_space<vmem>>, vector<1x1x1024xf32>
    %40 = vector.shape_cast %39 : vector<1x1x1024xf32> to vector<1x1024xf32>
    %cst_32 = arith.constant dense<0.000000e+00> : vector<1024xf32>
    %41 = vector.multi_reduction <add>, %38, %cst_32 [0] : vector<256x1024xf32> to vector<1024xf32>
    %42 = vector.shape_cast %41 : vector<1024xf32> to vector<1x1024xf32>
    %43 = arith.addf %40, %42 : vector<1x1024xf32>
    %c0_33 = arith.constant 0 : index
    %c0_34 = arith.constant 0 : index
    %c0_35 = arith.constant 0 : index
    %44 = vector.load %arg13[%c0_33, %c0_34, %c0_35] : memref<1x1x1024xf32, #tpu.memory_space<vmem>>, vector<1x1x1024xf32>
    %45 = vector.shape_cast %44 : vector<1x1x1024xf32> to vector<1x1024xf32>
    %46 = vector.shape_cast %43 : vector<1x1024xf32> to vector<1x1x1024xf32>
    tpu.vector_store %arg13[%c0_33, %c0_34, %c0_35], %46 {strides = array<i32>} : memref<1x1x1024xf32, #tpu.memory_space<vmem>>, vector<1x1x1024xf32>,
    %c0_i32_36 = arith.constant 0 : i32
    %47 = arith.cmpi eq, %arg2, %c0_i32_36 : i32
    %48 = arith.extui %47 : i1 to i32
    %c0_i32_37 = arith.constant 0 : i32
    %49 = arith.cmpi ne, %48, %c0_i32_37 : i32
    scf.if %49 {
      %c0_38 = arith.constant 0 : index
      %c0_39 = arith.constant 0 : index
      %c0_40 = arith.constant 0 : index
      %50 = vector.load %arg13[%c0_38, %c0_39, %c0_40] : memref<1x1x1024xf32, #tpu.memory_space<vmem>>, vector<1x1x1024xf32>
      %51 = vector.shape_cast %50 : vector<1x1x1024xf32> to vector<1x1024xf32>
      %cst_41 = arith.constant 3.906250e-03 : f32
      %52 = vector.broadcast %cst_41 : f32 to vector<1x1024xf32>
      %53 = arith.mulf %51, %52 : vector<1x1024xf32>
      %c0_42 = arith.constant 0 : index
      %c0_43 = arith.constant 0 : index
      %c0_44 = arith.constant 0 : index
      %54 = vector.load %arg13[%c0_42, %c0_43, %c0_44] : memref<1x1x1024xf32, #tpu.memory_space<vmem>>, vector<1x1x1024xf32>
      %55 = vector.shape_cast %54 : vector<1x1x1024xf32> to vector<1x1024xf32>
      %56 = vector.shape_cast %53 : vector<1x1024xf32> to vector<1x1x1024xf32>
      tpu.vector_store %arg13[%c0_42, %c0_43, %c0_44], %56 {strides = array<i32>} : memref<1x1x1024xf32, #tpu.memory_space<vmem>>, vector<1x1x1024xf32>,
    } else {
    }
    return
  }
  func.func @transform_0(%arg0: i32, %arg1: i32, %arg2: i32) -> (i32, i32, i32) {
    %c1_i32 = arith.constant 1 : i32
    %0 = arith.muli %arg1, %c1_i32 : i32
    %1 = arith.addi %0, %arg2 : i32
    %c0_i32 = arith.constant 0 : i32
    %c0_i32_0 = arith.constant 0 : i32
    return %arg0, %1, %c0_i32 : i32, i32, i32
  }
  func.func @transform_1(%arg0: i32, %arg1: i32, %arg2: i32) -> (i32, i32) {
    %c0_i32 = arith.constant 0 : i32
    %c0_i32_0 = arith.constant 0 : i32
    %c0_i32_1 = arith.constant 0 : i32
    return %c0_i32, %c0_i32_0 : i32, i32
  }
  func.func @transform_2(%arg0: i32, %arg1: i32, %arg2: i32) -> (i32, i32) {
    %c0_i32 = arith.constant 0 : i32
    %c0_i32_0 = arith.constant 0 : i32
    %c0_i32_1 = arith.constant 0 : i32
    return %c0_i32, %c0_i32_0 : i32, i32
  }
  func.func @transform_3(%arg0: i32, %arg1: i32, %arg2: i32) -> (i32, i32) {
    %c0_i32 = arith.constant 0 : i32
    %c0_i32_0 = arith.constant 0 : i32
    %c0_i32_1 = arith.constant 0 : i32
    return %c0_i32, %c0_i32_0 : i32, i32
  }
  func.func @transform_4(%arg0: i32, %arg1: i32, %arg2: i32) -> (i32, i32) {
    %c0_i32 = arith.constant 0 : i32
    %c0_i32_0 = arith.constant 0 : i32
    %c0_i32_1 = arith.constant 0 : i32
    return %c0_i32, %c0_i32_0 : i32, i32
  }
  func.func @transform_5(%arg0: i32, %arg1: i32, %arg2: i32) -> (i32, i32) {
    %c0_i32 = arith.constant 0 : i32
    %c0_i32_0 = arith.constant 0 : i32
    %c0_i32_1 = arith.constant 0 : i32
    return %c0_i32, %c0_i32_0 : i32, i32
  }
  func.func @transform_6(%arg0: i32, %arg1: i32, %arg2: i32) -> (i32, i32) {
    %c0_i32 = arith.constant 0 : i32
    %c0_i32_0 = arith.constant 0 : i32
    %c0_i32_1 = arith.constant 0 : i32
    return %c0_i32, %c0_i32_0 : i32, i32
  }
  func.func @transform_7(%arg0: i32, %arg1: i32, %arg2: i32) -> (i32, i32) {
    %c0_i32 = arith.constant 0 : i32
    %c0_i32_0 = arith.constant 0 : i32
    %c0_i32_1 = arith.constant 0 : i32
    return %c0_i32, %c0_i32_0 : i32, i32
  }
  func.func @transform_8(%arg0: i32, %arg1: i32, %arg2: i32) -> (i32, i32) {
    %c0_i32 = arith.constant 0 : i32
    %c0_i32_0 = arith.constant 0 : i32
    %c0_i32_1 = arith.constant 0 : i32
    return %c0_i32, %c0_i32_0 : i32, i32
  }
  func.func @transform_9(%arg0: i32, %arg1: i32, %arg2: i32) -> (i32, i32) {
    %c0_i32 = arith.constant 0 : i32
    %c0_i32_0 = arith.constant 0 : i32
    %c0_i32_1 = arith.constant 0 : i32
    return %c0_i32, %c0_i32_0 : i32, i32
  }
  func.func @transform_10(%arg0: i32, %arg1: i32, %arg2: i32) -> (i32, i32, i32) {
    %c0_i32 = arith.constant 0 : i32
    %c0_i32_0 = arith.constant 0 : i32
    return %arg0, %arg1, %c0_i32 : i32, i32, i32
  }
}

</mosaic_0001>

<llo_original>
// kernel: tpu_custom_call.1
$region0: #{tpu_custom_call.1}
  #allocation0 [shape = 'u32[]', space=smem, size = 0x4, offset = 0x4, fixed_abs, tag = 'smem constant byte address 0x4 - core index']
  #allocation1 [shape = 'u32[72,128]{1,0:T(1,128)}', space=vmem, size = 0x9000, scoped, tag = 'internal scratch']
  %s0 = inlined_call_operand.vmem [shape: bf16[2,256,40], index: 0, kind: input, shape index: {}]
  %s1 = inlined_call_operand.vmem [shape: bf16[40,128], index: 1, kind: input, shape index: {}]
  %s2 = inlined_call_operand.vmem [shape: f32[1,128], index: 2, kind: input, shape index: {}]
  %s3 = inlined_call_operand.hbm [shape: bf16[128,256], index: 3, kind: input, shape index: {}]
  %s4 = inlined_call_operand.vmem [shape: f32[1,256], index: 4, kind: input, shape index: {}]
  %s5 = inlined_call_operand.vmem [shape: bf16[128,512], index: 5, kind: input, shape index: {}]
  %s6 = inlined_call_operand.hbm [shape: bf16[256,512], index: 6, kind: input, shape index: {}]
  %s7 = inlined_call_operand.vmem [shape: f32[1,512], index: 7, kind: input, shape index: {}]
  %s8 = inlined_call_operand.hbm [shape: bf16[512,1024], index: 8, kind: input, shape index: {}]
  %s9 = inlined_call_operand.vmem [shape: f32[1,1024], index: 9, kind: input, shape index: {}]
  %s10 = inlined_call_operand.hbm [shape: f32[2,1,1024], index: 10, kind: output, shape index: {}]
  %s11 = sld [smem:[#allocation0]]
  $region93: #{tpu_custom_call.1} parent=0
    _
  %s13 = ssub.s32 1, %s11
  %s14 = scalar_select 0, %s13, %s11
  $region1: #{tpu_custom_call.1} parent=0
    #allocation2 [shape = 'u8[65536]{0}', space=vmem, size = 0x10000, scoped, tag = 'input window, operand 3, single buffered']
    #allocation3 [shape = 's32[2]{0}', space=sflag, size = 0x8, scoped, tag = 'scoped memory for tpu_custom_call.1']
    #allocation4 [shape = 's32[2]{0}', space=sflag, size = 0x8, scoped, tag = 'scoped memory for tpu_custom_call.1']
    #allocation5 [shape = 'u8[262144]{0}', space=vmem, size = 0x40000, scoped, tag = 'input window, operand 6, single buffered']
    #allocation6 [shape = 's32[1]{0}', space=sflag, size = 0x4, scoped, tag = 'scoped memory for tpu_custom_call.1']
    #allocation7 [shape = 'u8[1048576]{0}', space=vmem, size = 0x100000, scoped, tag = 'input window, operand 8, single buffered']
    #allocation8 [shape = 'u8[8192]{0}', space=vmem, size = 0x2000, scoped, tag = 'output window, operand 0']
    %15 = vsyncpa [#allocation3], 0
    %16 = vsyncpa [#allocation6], 0
    %17 = vsyncpa [#allocation4], 0
    %s18 = scalar_lea.sflag [#allocation4], 1
    %19 = vsyncpa %s18, 0
    loop: start=0, step=1, limit=4
    $region2: #{tpu_custom_call.1} parent=1 // loop_pre_header
      _
    $region3: #{tpu_custom_call.1} parent=1 // loop_header
      %s21 = sphi 0, %s25
      %p22 = scmp.ge.s32.totalorder %s21, 4
      %s28 = sphi 0, %s47
      %s29 = sphi 0, %s43
      %s30 = sphi 0, %s39
      %s31 = sphi 0, %s28
      %s32 = sphi 0, %s29
      %s33 = sphi 0, %s30
      %s34 = sphi 0, %s31
      %s35 = sphi 0, %s32
      %s36 = sphi 0, %s33
      %s54 = sphi 0, %s56
      %s57 = sphi 0, %s54
      %s58 = sphi 0, %s57
      %s74 = sphi 0, %s58
      %s78 = sphi 0, %s78
      %s80 = sphi 0, %s78
      %s81 = sphi 0, %s80
      %s95 = sphi 0, %s81
      %s99 = sphi 0, %s99
      %s101 = sphi 0, %s99
      %s102 = sphi 0, %s101
      %s116 = sphi 0, %s102
      %s120 = sphi 0, %s120
      %s122 = sphi 0, %s120
      %s123 = sphi 0, %s122
      %s137 = sphi 0, %s123
      %s141 = sphi 0, %s141
      %s143 = sphi 0, %s141
      %s144 = sphi 0, %s143
      %s158 = sphi 0, %s144
      %s162 = sphi 0, %s162
      %s164 = sphi 0, %s162
      %s165 = sphi 0, %s164
      %s179 = sphi 0, %s165
      %s183 = sphi 0, %s183
      %s185 = sphi 0, %s183
      %s186 = sphi 0, %s185
      %s200 = sphi 0, %s186
      %s204 = sphi 0, %s204
      %s206 = sphi 0, %s204
      %s207 = sphi 0, %s206
      %s221 = sphi 0, %s207
      %s225 = sphi 0, %s225
      %s227 = sphi 0, %s225
      %s228 = sphi 0, %s227
      %s242 = sphi 0, %s228
      %s246 = sphi 0, %s246
      %s248 = sphi 0, %s246
      %s249 = sphi 0, %s248
      %s263 = sphi 0, %s249
      %s271 = sphi 0, %s273
      %s274 = sphi 0, %s271
      %s275 = sphi 0, %s274
      %s291 = sphi 0, %s275
    $region4: #{tpu_custom_call.1} parent=1 // loop_header_branch
      %24 = sbr.rel (%p22) target = $region8
    $region5: #{tpu_custom_call.1} parent=1 // loop_body
      %s26 = ssub.s32 %s21, 1
      %s27 = ssub.s32 %s21, 2
      %s37 = sadd.s32 1, %s30
      %p38 = scmp.ge.s32.totalorder %s37, 1
      %s39 = scalar_select %p38, 0, %s37
      %s40 = sadd.s32 1, %s29
      %s41 = scalar_select %p38, %s40, %s29
      %p42 = scmp.ge.s32.totalorder %s41, 1
      %s43 = scalar_select %p42, 0, %s41
      %s44 = sadd.s32 1, %s28
      %s45 = scalar_select %p42, %s44, %s28
      %p46 = scmp.ge.s32.totalorder %s45, 2
      %s47 = scalar_select %p46, 0, %s45
      %s48 = sadd.s32 %s29, %s30
      %s49 = sadd.s32 %s43, %s39
      %s50 = ssub.s32 %s28, %s47
      %s51 = ssub.s32 %s48, %s49
      %s52 = sor.u32 %s50, %s51
      %p53 = scmp.eq.s32.totalorder %s52, 0
      %s55 = sadd.s32 %s54, 1
      %s56 = scalar_select %p53, %s54, %s55
      %p59 = pneg %p53
      %p60 = scmp.eq.s32.totalorder %s21, 1
      %p61 = por %p59, %p60
      %p62 = scmp.ne.s32.totalorder %s54, %s57
      %p63 = scmp.eq.s32.totalorder %s21, 0
      %p64 = por %p62, %p63
      %p65 = scmp.ne.s32.totalorder %s54, %s57
      %p66 = scmp.eq.s32.totalorder %s26, 1
      %p67 = por %p65, %p66
      %p68 = scmp.ne.s32.totalorder %s57, %s58
      %p69 = scmp.eq.s32.totalorder %s26, 0
      %p70 = por %p68, %p69
      %p71 = scmp.ne.s32.totalorder %s57, %s58
      %p72 = scmp.eq.s32.totalorder %s27, 1
      %p73 = por %p71, %p72
      %p75 = scmp.ne.s32.totalorder %s58, %s74
      %p76 = scmp.eq.s32.totalorder %s27, 0
      %p77 = por %p75, %p76
      %s79 = sadd.s32 %s78, 1
      %p82 = scmp.eq.s32.totalorder %s21, 1
      %p83 = scmp.ne.s32.totalorder %s78, %s80
      %p84 = scmp.eq.s32.totalorder %s21, 0
      %p85 = por %p83, %p84
      %p86 = scmp.ne.s32.totalorder %s78, %s80
      %p87 = scmp.eq.s32.totalorder %s26, 1
      %p88 = por %p86, %p87
      %p89 = scmp.ne.s32.totalorder %s80, %s81
      %p90 = scmp.eq.s32.totalorder %s26, 0
      %p91 = por %p89, %p90
      %p92 = scmp.ne.s32.totalorder %s80, %s81
      %p93 = scmp.eq.s32.totalorder %s27, 1
      %p94 = por %p92, %p93
      %p96 = scmp.ne.s32.totalorder %s81, %s95
      %p97 = scmp.eq.s32.totalorder %s27, 0
      %p98 = por %p96, %p97
      %s100 = sadd.s32 %s99, 1
      %p103 = scmp.eq.s32.totalorder %s21, 1
      %p104 = scmp.ne.s32.totalorder %s99, %s101
      %p105 = scmp.eq.s32.totalorder %s21, 0
      %p106 = por %p104, %p105
      %p107 = scmp.ne.s32.totalorder %s99, %s101
      %p108 = scmp.eq.s32.totalorder %s26, 1
      %p109 = por %p107, %p108
      %p110 = scmp.ne.s32.totalorder %s101, %s102
      %p111 = scmp.eq.s32.totalorder %s26, 0
      %p112 = por %p110, %p111
      %p113 = scmp.ne.s32.totalorder %s101, %s102
      %p114 = scmp.eq.s32.totalorder %s27, 1
      %p115 = por %p113, %p114
      %p117 = scmp.ne.s32.totalorder %s102, %s116
      %p118 = scmp.eq.s32.totalorder %s27, 0
      %p119 = por %p117, %p118
      %s121 = sadd.s32 %s120, 1
      %p124 = scmp.eq.s32.totalorder %s21, 1
      %p125 = scmp.ne.s32.totalorder %s120, %s122
      %p126 = scmp.eq.s32.totalorder %s21, 0
      %p127 = por %p125, %p126
      %p128 = scmp.ne.s32.totalorder %s120, %s122
      %p129 = scmp.eq.s32.totalorder %s26, 1
      %p130 = por %p128, %p129
      %p131 = scmp.ne.s32.totalorder %s122, %s123
      %p132 = scmp.eq.s32.totalorder %s26, 0
      %p133 = por %p131, %p132
      %p134 = scmp.ne.s32.totalorder %s122, %s123
      %p135 = scmp.eq.s32.totalorder %s27, 1
      %p136 = por %p134, %p135
      %p138 = scmp.ne.s32.totalorder %s123, %s137
      %p139 = scmp.eq.s32.totalorder %s27, 0
      %p140 = por %p138, %p139
      %s142 = sadd.s32 %s141, 1
      %p145 = scmp.eq.s32.totalorder %s21, 1
      %p146 = scmp.ne.s32.totalorder %s141, %s143
      %p147 = scmp.eq.s32.totalorder %s21, 0
      %p148 = por %p146, %p147
      %p149 = scmp.ne.s32.totalorder %s141, %s143
      %p150 = scmp.eq.s32.totalorder %s26, 1
      %p151 = por %p149, %p150
      %p152 = scmp.ne.s32.totalorder %s143, %s144
      %p153 = scmp.eq.s32.totalorder %s26, 0
      %p154 = por %p152, %p153
      %p155 = scmp.ne.s32.totalorder %s143, %s144
      %p156 = scmp.eq.s32.totalorder %s27, 1
      %p157 = por %p155, %p156
      %p159 = scmp.ne.s32.totalorder %s144, %s158
      %p160 = scmp.eq.s32.totalorder %s27, 0
      %p161 = por %p159, %p160
      %s163 = sadd.s32 %s162, 1
      %p166 = scmp.eq.s32.totalorder %s21, 1
      %p167 = scmp.ne.s32.totalorder %s162, %s164
      %p168 = scmp.eq.s32.totalorder %s21, 0
      %p169 = por %p167, %p168
      %p170 = scmp.ne.s32.totalorder %s162, %s164
      %p171 = scmp.eq.s32.totalorder %s26, 1
      %p172 = por %p170, %p171
      %p173 = scmp.ne.s32.totalorder %s164, %s165
      %p174 = scmp.eq.s32.totalorder %s26, 0
      %p175 = por %p173, %p174
      %p176 = scmp.ne.s32.totalorder %s164, %s165
      %p177 = scmp.eq.s32.totalorder %s27, 1
      %p178 = por %p176, %p177
      %p180 = scmp.ne.s32.totalorder %s165, %s179
      %p181 = scmp.eq.s32.totalorder %s27, 0
      %p182 = por %p180, %p181
      %s184 = sadd.s32 %s183, 1
      %p187 = scmp.eq.s32.totalorder %s21, 1
      %p188 = scmp.ne.s32.totalorder %s183, %s185
      %p189 = scmp.eq.s32.totalorder %s21, 0
      %p190 = por %p188, %p189
      %p191 = scmp.ne.s32.totalorder %s183, %s185
      %p192 = scmp.eq.s32.totalorder %s26, 1
      %p193 = por %p191, %p192
      %p194 = scmp.ne.s32.totalorder %s185, %s186
      %p195 = scmp.eq.s32.totalorder %s26, 0
      %p196 = por %p194, %p195
      %p197 = scmp.ne.s32.totalorder %s185, %s186
      %p198 = scmp.eq.s32.totalorder %s27, 1
      %p199 = por %p197, %p198
      %p201 = scmp.ne.s32.totalorder %s186, %s200
      %p202 = scmp.eq.s32.totalorder %s27, 0
      %p203 = por %p201, %p202
      %s205 = sadd.s32 %s204, 1
      %p208 = scmp.eq.s32.totalorder %s21, 1
      %p209 = scmp.ne.s32.totalorder %s204, %s206
      %p210 = scmp.eq.s32.totalorder %s21, 0
      %p211 = por %p209, %p210
      %p212 = scmp.ne.s32.totalorder %s204, %s206
      %p213 = scmp.eq.s32.totalorder %s26, 1
      %p214 = por %p212, %p213
      %p215 = scmp.ne.s32.totalorder %s206, %s207
      %p216 = scmp.eq.s32.totalorder %s26, 0
      %p217 = por %p215, %p216
      %p218 = scmp.ne.s32.totalorder %s206, %s207
      %p219 = scmp.eq.s32.totalorder %s27, 1
      %p220 = por %p218, %p219
      %p222 = scmp.ne.s32.totalorder %s207, %s221
      %p223 = scmp.eq.s32.totalorder %s27, 0
      %p224 = por %p222, %p223
      %s226 = sadd.s32 %s225, 1
      %p229 = scmp.eq.s32.totalorder %s21, 1
      %p230 = scmp.ne.s32.totalorder %s225, %s227
      %p231 = scmp.eq.s32.totalorder %s21, 0
      %p232 = por %p230, %p231
      %p233 = scmp.ne.s32.totalorder %s225, %s227
      %p234 = scmp.eq.s32.totalorder %s26, 1
      %p235 = por %p233, %p234
      %p236 = scmp.ne.s32.totalorder %s227, %s228
      %p237 = scmp.eq.s32.totalorder %s26, 0
      %p238 = por %p236, %p237
      %p239 = scmp.ne.s32.totalorder %s227, %s228
      %p240 = scmp.eq.s32.totalorder %s27, 1
      %p241 = por %p239, %p240
      %p243 = scmp.ne.s32.totalorder %s228, %s242
      %p244 = scmp.eq.s32.totalorder %s27, 0
      %p245 = por %p243, %p244
      %s247 = sadd.s32 %s246, 1
      %p250 = scmp.eq.s32.totalorder %s21, 1
      %p251 = scmp.ne.s32.totalorder %s246, %s248
      %p252 = scmp.eq.s32.totalorder %s21, 0
      %p253 = por %p251, %p252
      %p254 = scmp.ne.s32.totalorder %s246, %s248
      %p255 = scmp.eq.s32.totalorder %s26, 1
      %p256 = por %p254, %p255
      %p257 = scmp.ne.s32.totalorder %s248, %s249
      %p258 = scmp.eq.s32.totalorder %s26, 0
      %p259 = por %p257, %p258
      %p260 = scmp.ne.s32.totalorder %s248, %s249
      %p261 = scmp.eq.s32.totalorder %s27, 1
      %p262 = por %p260, %p261
      %p264 = scmp.ne.s32.totalorder %s249, %s263
      %p265 = scmp.eq.s32.totalorder %s27, 0
      %p266 = por %p264, %p265
      %s267 = ssub.s32 %s28, %s47
      %s268 = ssub.s32 %s29, %s43
      %s269 = sor.u32 %s267, %s268
      %p270 = scmp.eq.s32.totalorder %s269, 0
      %s272 = sadd.s32 %s271, 1
      %s273 = scalar_select %p270, %s271, %s272
      %p276 = pneg %p270
      %p277 = scmp.eq.s32.totalorder %s21, 1
      %p278 = por %p276, %p277
      %p279 = scmp.ne.s32.totalorder %s271, %s274
      %p280 = scmp.eq.s32.totalorder %s21, 0
      %p281 = por %p279, %p280
      %p282 = scmp.ne.s32.totalorder %s271, %s274
      %p283 = scmp.eq.s32.totalorder %s26, 1
      %p284 = por %p282, %p283
      %p285 = scmp.ne.s32.totalorder %s274, %s275
      %p286 = scmp.eq.s32.totalorder %s26, 0
      %p287 = por %p285, %p286
      %p288 = scmp.ne.s32.totalorder %s274, %s275
      %p289 = scmp.eq.s32.totalorder %s27, 1
      %p290 = por %p288, %p289
      %p292 = scmp.ne.s32.totalorder %s275, %s291
      %p293 = scmp.eq.s32.totalorder %s27, 0
      %p294 = por %p292, %p293
      %p295 = scmp.le.s32.totalorder 1, %s21
      %p296 = scmp.lt.s32.totalorder %s21, 3
      %p297 = pnand %p295, %p296
      %p298 = pneg %p297
      // Predicated region
      $region9: #{tpu_custom_call.1} parent=5 // pred_check
        _
      $region10: #{tpu_custom_call.1} parent=5 // pred_check_branch
        %300 = sbr.rel (%p297) target = $region12
      $region11: #{tpu_custom_call.1} parent=5 // pred_region
        %s301 = ssub.s32 %s21, 1
        // Predicated region
        $region13: #{tpu_custom_call.1} parent=11 // pred_check
          %p302 = pneg %p91
        $region14: #{tpu_custom_call.1} parent=11 // pred_check_branch
          %304 = sbr.rel (%p302) target = $region16
        $region15: #{tpu_custom_call.1} parent=11 // pred_region
          _
        $region16: #{tpu_custom_call.1} parent=11 // pred_fallthru
          _
        // Predicated region
        $region17: #{tpu_custom_call.1} parent=11 // pred_check
          %p305 = pneg %p112
        $region18: #{tpu_custom_call.1} parent=11 // pred_check_branch
          %307 = sbr.rel (%p305) target = $region20
        $region19: #{tpu_custom_call.1} parent=11 // pred_region
          _
        $region20: #{tpu_custom_call.1} parent=11 // pred_fallthru
          _
        // Predicated region
        $region21: #{tpu_custom_call.1} parent=11 // pred_check
          %p308 = pneg %p133
        $region22: #{tpu_custom_call.1} parent=11 // pred_check_branch
          %310 = sbr.rel (%p308) target = $region24
        $region23: #{tpu_custom_call.1} parent=11 // pred_region
          %312 = vsyncadd [#allocation3], 0
          %s313 = sshll.u32 %s3, 4
          %s314 = int_to_ptr.hbm [resolvable:$true] %s313
          %s315 = sshll.u32 [#allocation2], 4
          %s316 = int_to_ptr.vmem [resolvable:$true] %s315
          %321 = dma.hbm_to_vmem [thread:$0]  %s314, 2048, %s316, [#allocation3], 128, 128, 8
        $region24: #{tpu_custom_call.1} parent=11 // pred_fallthru
          _
        // Predicated region
        $region25: #{tpu_custom_call.1} parent=11 // pred_check
          %p322 = pneg %p154
        $region26: #{tpu_custom_call.1} parent=11 // pred_check_branch
          %324 = sbr.rel (%p322) target = $region28
        $region27: #{tpu_custom_call.1} parent=11 // pred_region
          _
        $region28: #{tpu_custom_call.1} parent=11 // pred_fallthru
          _
        // Predicated region
        $region29: #{tpu_custom_call.1} parent=11 // pred_check
          %p325 = pneg %p175
        $region30: #{tpu_custom_call.1} parent=11 // pred_check_branch
          %327 = sbr.rel (%p325) target = $region32
        $region31: #{tpu_custom_call.1} parent=11 // pred_region
          _
        $region32: #{tpu_custom_call.1} parent=11 // pred_fallthru
          _
        // Predicated region
        $region33: #{tpu_custom_call.1} parent=11 // pred_check
          %p328 = pneg %p196
        $region34: #{tpu_custom_call.1} parent=11 // pred_check_branch
          %330 = sbr.rel (%p328) target = $region36
        $region35: #{tpu_custom_call.1} parent=11 // pred_region
          %332 = vsyncadd [#allocation6], 0
          %s333 = sshll.u32 %s6, 4
          %s334 = int_to_ptr.hbm [resolvable:$true] %s333
          %s335 = sshll.u32 [#allocation5], 4
          %s336 = int_to_ptr.vmem [resolvable:$true] %s335
          %341 = dma.hbm_to_vmem [thread:$0]  %s334, 8192, %s336, [#allocation6], 256, 256, 16
        $region36: #{tpu_custom_call.1} parent=11 // pred_fallthru
          _
        // Predicated region
        $region37: #{tpu_custom_call.1} parent=11 // pred_check
          %p342 = pneg %p217
        $region38: #{tpu_custom_call.1} parent=11 // pred_check_branch
          %344 = sbr.rel (%p342) target = $region40
        $region39: #{tpu_custom_call.1} parent=11 // pred_region
          _
        $region40: #{tpu_custom_call.1} parent=11 // pred_fallthru
          _
        // Predicated region
        $region41: #{tpu_custom_call.1} parent=11 // pred_check
          %p345 = pneg %p238
        $region42: #{tpu_custom_call.1} parent=11 // pred_check_branch
          %347 = sbr.rel (%p345) target = $region44
        $region43: #{tpu_custom_call.1} parent=11 // pred_region
          %349 = vsyncadd [#allocation6], 0
          %s350 = sshll.u32 %s8, 4
          %s351 = int_to_ptr.hbm [resolvable:$true] %s350
          %s352 = sshll.u32 [#allocation7], 4
          %s353 = int_to_ptr.vmem [resolvable:$true] %s352
          %358 = dma.hbm_to_vmem [thread:$0]  %s351, 32768, %s353, [#allocation6], 512, 512, 32
        $region44: #{tpu_custom_call.1} parent=11 // pred_fallthru
          _
        // Predicated region
        $region45: #{tpu_custom_call.1} parent=11 // pred_check
          %p359 = pneg %p259
        $region46: #{tpu_custom_call.1} parent=11 // pred_check_branch
          %361 = sbr.rel (%p359) target = $region48
        $region47: #{tpu_custom_call.1} parent=11 // pred_region
          _
        $region48: #{tpu_custom_call.1} parent=11 // pred_fallthru
          _
      $region12: #{tpu_custom_call.1} parent=5 // pred_fallthru
        _
      %p362 = scmp.lt.s32.totalorder %s21, 2
      // Predicated region
      $region49: #{tpu_custom_call.1} parent=5 // pred_check
        %p363 = pneg %p362
      $region50: #{tpu_custom_call.1} parent=5 // pred_check_branch
        %365 = sbr.rel (%p363) target = $region52
      $region51: #{tpu_custom_call.1} parent=5 // pred_region
        // Predicated region
        $region53: #{tpu_custom_call.1} parent=51 // pred_check
          %p366 = pneg %p64
        $region54: #{tpu_custom_call.1} parent=51 // pred_check_branch
          %368 = sbr.rel (%p366) target = $region56
        $region55: #{tpu_custom_call.1} parent=51 // pred_region
          %s369 = sadd.s32 %s29, %s30
          %s370 = smul.u32 32, %s369
          %p371 = scmp.lt.s32.totalorder %s28, 1
          %s372 = scalar_select %p371, %s28, 1
          %p373 = scmp.lt.s32.totalorder %s370, 31
          %s374 = scalar_select %p373, %s370, 31
          %s375 = smul.addr %s372, 32
          %s376 = sadd.s32 %s374, %s375
          %s377 = smul.addr %s376, 4
          %s378 = scalar_lea.vmem %s0, %s377
          %s379 = sadd.s32 %s29, %s30
          %s380 = smul.u32 32, %s379
        $region56: #{tpu_custom_call.1} parent=51 // pred_fallthru
          _
      $region52: #{tpu_custom_call.1} parent=5 // pred_fallthru
        _
      %p381 = scmp.le.s32.totalorder 1, %s21
      %p382 = scmp.lt.s32.totalorder %s21, 3
      %p383 = pnand %p381, %p382
      %p384 = pneg %p383
      // Predicated region
      $region57: #{tpu_custom_call.1} parent=5 // pred_check
        _
      $region58: #{tpu_custom_call.1} parent=5 // pred_check_branch
        %386 = sbr.rel (%p383) target = $region60
      $region59: #{tpu_custom_call.1} parent=5 // pred_region
        %s387 = ssub.s32 %s21, 1
        // Predicated region
        $region61: #{tpu_custom_call.1} parent=59 // pred_check
          %p388 = pneg %p133
        $region62: #{tpu_custom_call.1} parent=59 // pred_check_branch
          %390 = sbr.rel (%p388) target = $region64
        $region63: #{tpu_custom_call.1} parent=59 // pred_region
          %392 = dma.done [#allocation3], 2048
        $region64: #{tpu_custom_call.1} parent=59 // pred_fallthru
          _
        // Predicated region
        $region65: #{tpu_custom_call.1} parent=59 // pred_check
          %p393 = pneg %p196
        $region66: #{tpu_custom_call.1} parent=59 // pred_check_branch
          %395 = sbr.rel (%p393) target = $region68
        $region67: #{tpu_custom_call.1} parent=59 // pred_region
          %397 = dma.done [#allocation6], 8192
        $region68: #{tpu_custom_call.1} parent=59 // pred_fallthru
          _
        // Predicated region
        $region69: #{tpu_custom_call.1} parent=59 // pred_check
          %p398 = pneg %p238
        $region70: #{tpu_custom_call.1} parent=59 // pred_check_branch
          %400 = sbr.rel (%p398) target = $region72
        $region71: #{tpu_custom_call.1} parent=59 // pred_region
          %402 = dma.done [#allocation6], 32768
        $region72: #{tpu_custom_call.1} parent=59 // pred_fallthru
          _
        %s403 = sadd.s32 %s32, %s33
        %s404 = smul.u32 32, %s403
        %p405 = scmp.lt.s32.totalorder %s31, 1
        %s406 = scalar_select %p405, %s31, 1
        %p407 = scmp.lt.s32.totalorder %s404, 31
        %s408 = scalar_select %p407, %s404, 31
        %s409 = smul.addr %s406, 32
        %s410 = sadd.s32 %s408, %s409
        %s411 = smul.addr %s410, 4
        %s412 = scalar_lea.vmem %s0, %s411
        %p413 = pneg %p70
        %p414 = pneg %p67
        %p415 = pneg %p91
        %p416 = pneg %p88
        %p417 = pneg %p112
        %p418 = pneg %p109
        %p419 = pneg %p133
        %p420 = pneg %p130
        %p421 = pneg %p154
        %p422 = pneg %p151
        %p423 = pneg %p175
        %p424 = pneg %p172
        %p425 = pneg %p196
        %p426 = pneg %p193
        %p427 = pneg %p217
        %p428 = pneg %p214
        %p429 = pneg %p238
        %p430 = pneg %p235
        %p431 = pneg %p259
        %p432 = pneg %p256
        %p433 = pneg %p287
        %p434 = pneg %p284
        %s435 = sand.u32 %s274, 1
        %s436 = scalar_lea.sflag [#allocation4], %s435
        %s437 = sand.u32 %s274, 1
        %s438 = smul.addr %s437, 8
        %s439 = scalar_lea.vmem [#allocation8], %s438
        %s440 = sadd.s32 %s32, %s33
        %s441 = smul.u32 32, %s440
        %p442 = scmp.lt.s32.totalorder %s31, 1
        %s443 = scalar_select %p442, %s31, 1
        %p444 = scmp.lt.s32.totalorder %s441, 31
        %s445 = scalar_select %p444, %s441, 31
        %s446 = smul.addr %s443, 32
        %s447 = sadd.s32 %s445, %s446
        %s448 = smul.addr %s447, 4
        %s449 = scalar_lea.vmem %s0, %s448
        %s450 = sadd.s32 %s32, %s33
        %s451 = smul.u32 32, %s450
        %p453 = scmp.eq.s32.totalorder %s33, 0
        // Predicated region
        $region73: #{tpu_custom_call.1} parent=59 // pred_check
          %p454 = pneg %p453
        $region74: #{tpu_custom_call.1} parent=59 // pred_check_branch
          %456 = sbr.rel (%p454) target = $region76
        $region75: #{tpu_custom_call.1} parent=59 // pred_region
          %457 = vst [vmem:[%s439] sm:$0xff] 0.0
        $region76: #{tpu_custom_call.1} parent=59 // pred_fallthru
          _
        %v458 = vld [vmem:[%s449] sm:$0xf]
        %v459 = vld [vmem:[%s449 + $0x4] sm:$0xf]
        %v460 = vld [vmem:[%s449 + $0x8] sm:$0xf]
        %v461 = vld [vmem:[%s449 + $0xc] sm:$0xf]
        %v462 = vld [vmem:[%s449 + $0x10] sm:$0xf]
        %v463 = vld [vmem:[%s449 + $0x14] sm:$0xf]
        %v464 = vld [vmem:[%s449 + $0x18] sm:$0xf]
        %v465 = vld [vmem:[%s449 + $0x1c] sm:$0xf]
        %v466 = vld [vmem:[%s449 + $0x20] sm:$0xf]
        %v467 = vld [vmem:[%s449 + $0x24] sm:$0xf]
        %v468 = vld [vmem:[%s449 + $0x28] sm:$0xf]
        %v469 = vld [vmem:[%s449 + $0x2c] sm:$0xf]
        %v470 = vld [vmem:[%s449 + $0x30] sm:$0xf]
        %v471 = vld [vmem:[%s449 + $0x34] sm:$0xf]
        %v472 = vld [vmem:[%s449 + $0x38] sm:$0xf]
        %v473 = vld [vmem:[%s449 + $0x3c] sm:$0xf]
        %v474 = vld [vmem:[%s449 + $0x40] sm:$0xf]
        %v475 = vld [vmem:[%s449 + $0x44] sm:$0xf]
        %v476 = vld [vmem:[%s449 + $0x48] sm:$0xf]
        %v477 = vld [vmem:[%s449 + $0x4c] sm:$0xf]
        %v478 = vld [vmem:[%s449 + $0x50] sm:$0xf]
        %v479 = vld [vmem:[%s449 + $0x54] sm:$0xf]
        %v480 = vld [vmem:[%s449 + $0x58] sm:$0xf]
        %v481 = vld [vmem:[%s449 + $0x5c] sm:$0xf]
        %v482 = vld [vmem:[%s449 + $0x60] sm:$0xf]
        %v483 = vld [vmem:[%s449 + $0x64] sm:$0xf]
        %v484 = vld [vmem:[%s449 + $0x68] sm:$0xf]
        %v485 = vld [vmem:[%s449 + $0x6c] sm:$0xf]
        %v486 = vld [vmem:[%s449 + $0x70] sm:$0xf]
        %v487 = vld [vmem:[%s449 + $0x74] sm:$0xf]
        %v488 = vld [vmem:[%s449 + $0x78] sm:$0xf]
        %v489 = vld [vmem:[%s449 + $0x7c] sm:$0xf]
        %v490 = vld [vmem:[%s1] sm:$0xf]
        %v491 = vld [vmem:[%s1 + $0x4] sm:$0xf]
        %v492 = vld [vmem:[%s1 + $0x8] sm:$0xf]
        %v493 = vld [vmem:[%s1 + $0xc] sm:$0xf]
        %v494 = vld [vmem:[%s1 + $0x10] sm:$0xf]
        %v495 = vld [vmem:[%s2] sm:$0x1]
        %v497 = vperm.slane %v495, 0
        %v531 = vunpack.c.l.b16 %v458
        %v532 = vunpack.c.l.b16 %v459
        %v533 = vunpack.c.l.b16 %v460
        %v534 = vunpack.c.l.b16 %v461
        %v535 = vunpack.c.l.b16 %v462
        %v536 = vunpack.c.l.b16 %v463
        %v537 = vunpack.c.l.b16 %v464
        %v538 = vunpack.c.l.b16 %v465
        %v539 = vunpack.c.l.b16 %v466
        %v540 = vunpack.c.l.b16 %v467
        %v541 = vunpack.c.l.b16 %v468
        %v542 = vunpack.c.l.b16 %v469
        %v543 = vunpack.c.l.b16 %v470
        %v544 = vunpack.c.l.b16 %v471
        %v545 = vunpack.c.l.b16 %v472
        %v546 = vunpack.c.l.b16 %v473
        %v547 = vunpack.c.l.b16 %v474
        %v548 = vunpack.c.l.b16 %v475
        %v549 = vunpack.c.l.b16 %v476
        %v550 = vunpack.c.l.b16 %v477
        %v551 = vunpack.c.l.b16 %v478
        %v552 = vunpack.c.l.b16 %v479
        %v553 = vunpack.c.l.b16 %v480
        %v554 = vunpack.c.l.b16 %v481
        %v555 = vunpack.c.l.b16 %v482
        %v556 = vunpack.c.l.b16 %v483
        %v557 = vunpack.c.l.b16 %v484
        %v558 = vunpack.c.l.b16 %v485
        %v559 = vunpack.c.l.b16 %v486
        %v560 = vunpack.c.l.b16 %v487
        %v561 = vunpack.c.l.b16 %v488
        %v562 = vunpack.c.l.b16 %v489
        %v563 = vpack.c.b16 %v532, %v531
        %v564 = vpack.c.b16 %v534, %v533
        %v565 = vpack.c.b16 %v536, %v535
        %v566 = vpack.c.b16 %v538, %v537
        %v567 = vpack.c.b16 %v540, %v539
        %v568 = vpack.c.b16 %v542, %v541
        %v569 = vpack.c.b16 %v544, %v543
        %v570 = vpack.c.b16 %v546, %v545
        %v571 = vpack.c.b16 %v548, %v547
        %v572 = vpack.c.b16 %v550, %v549
        %v573 = vpack.c.b16 %v552, %v551
        %v574 = vpack.c.b16 %v554, %v553
        %v575 = vpack.c.b16 %v556, %v555
        %v576 = vpack.c.b16 %v558, %v557
        %v577 = vpack.c.b16 %v560, %v559
        %v578 = vpack.c.b16 %v562, %v561
        %v584 = vunpack.c.l.b16 %v490
        %v585 = vunpack.c.l.b16 %v491
        %v586 = vunpack.c.l.b16 %v492
        %v587 = vunpack.c.l.b16 %v493
        %v588 = vunpack.c.l.b16 %v494
        %v589 = vpack.c.b16 %v585, %v584
        %v590 = vpack.c.b16 %v587, %v586
        %v591 = vpack.c.b16 %v588, %v588
        %vm594 = vcmask 326656
        %v596 = vsel %vm594, %v563, 0
        %v599 = vsel %vm594, %v564, 0
        %v602 = vsel %vm594, %v565, 0
        %v605 = vsel %vm594, %v566, 0
        %v608 = vsel %vm594, %v567, 0
        %v611 = vsel %vm594, %v568, 0
        %v614 = vsel %vm594, %v569, 0
        %v617 = vsel %vm594, %v570, 0
        %v620 = vsel %vm594, %v571, 0
        %v623 = vsel %vm594, %v572, 0
        %v626 = vsel %vm594, %v573, 0
        %v629 = vsel %vm594, %v574, 0
        %v632 = vsel %vm594, %v575, 0
        %v635 = vsel %vm594, %v576, 0
        %v638 = vsel %vm594, %v577, 0
        %v641 = vsel %vm594, %v578, 0
        %vm643 = vcmask 1043456
        %v645 = vsel %vm643, %v591, 0
        %647 = vmatpush.bf16.msra.mxu0 0
        %648 = vmatpush.bf16.msra.mxu0 0
        %649 = vmatpush.bf16.msra.mxu0 0
        %650 = vmatpush.bf16.msra.mxu0 0
        %651 = vmatpush.bf16.msra.mxu0 0
        %652 = vmatpush.bf16.msra.mxu0 %v645
        %653 = vmatpush.bf16.msra.mxu0 %v590
        %654 = vmatpush.bf16.msra.mxu0 %v589
        %655 = vmatmul.bf16.gmra.mxu0 %v596
        %v656 = vpop.f32.mrf.mxu0
        %v657 = vadd.f32 %v497, %v656
        %v658 = vpop.f32.mrf.mxu0
        %v659 = vadd.f32 %v497, %v658
        %660 = vmatmul.bf16.gmra.mxu0 %v599
        %v661 = vpop.f32.mrf.mxu0
        %v662 = vadd.f32 %v497, %v661
        %v663 = vpop.f32.mrf.mxu0
        %v664 = vadd.f32 %v497, %v663
        %665 = vmatmul.bf16.gmra.mxu0 %v602
        %v666 = vpop.f32.mrf.mxu0
        %v667 = vadd.f32 %v497, %v666
        %v668 = vpop.f32.mrf.mxu0
        %v669 = vadd.f32 %v497, %v668
        %670 = vmatmul.bf16.gmra.mxu0 %v605
        %v671 = vpop.f32.mrf.mxu0
        %v672 = vadd.f32 %v497, %v671
        %v673 = vpop.f32.mrf.mxu0
        %v674 = vadd.f32 %v497, %v673
        %675 = vmatmul.bf16.gmra.mxu0 %v608
        %v676 = vpop.f32.mrf.mxu0
        %v677 = vadd.f32 %v497, %v676
        %v678 = vpop.f32.mrf.mxu0
        %v679 = vadd.f32 %v497, %v678
        %680 = vmatmul.bf16.gmra.mxu0 %v611
        %v681 = vpop.f32.mrf.mxu0
        %v682 = vadd.f32 %v497, %v681
        %v683 = vpop.f32.mrf.mxu0
        %v684 = vadd.f32 %v497, %v683
        %685 = vmatmul.bf16.gmra.mxu0 %v614
        %v686 = vpop.f32.mrf.mxu0
        %v687 = vadd.f32 %v497, %v686
        %v688 = vpop.f32.mrf.mxu0
        %v689 = vadd.f32 %v497, %v688
        %690 = vmatmul.bf16.gmra.mxu0 %v617
        %v691 = vpop.f32.mrf.mxu0
        %v692 = vadd.f32 %v497, %v691
        %v693 = vpop.f32.mrf.mxu0
        %v694 = vadd.f32 %v497, %v693
        %695 = vmatmul.bf16.gmra.mxu0 %v620
        %v696 = vpop.f32.mrf.mxu0
        %v697 = vadd.f32 %v497, %v696
        %v698 = vpop.f32.mrf.mxu0
        %v699 = vadd.f32 %v497, %v698
        %700 = vmatmul.bf16.gmra.mxu0 %v623
        %v701 = vpop.f32.mrf.mxu0
        %v702 = vadd.f32 %v497, %v701
        %v703 = vpop.f32.mrf.mxu0
        %v704 = vadd.f32 %v497, %v703
        %705 = vmatmul.bf16.gmra.mxu0 %v626
        %v706 = vpop.f32.mrf.mxu0
        %v707 = vadd.f32 %v497, %v706
        %v708 = vpop.f32.mrf.mxu0
        %v709 = vadd.f32 %v497, %v708
        %710 = vmatmul.bf16.gmra.mxu0 %v629
        %v711 = vpop.f32.mrf.mxu0
        %v712 = vadd.f32 %v497, %v711
        %v713 = vpop.f32.mrf.mxu0
        %v714 = vadd.f32 %v497, %v713
        %715 = vmatmul.bf16.gmra.mxu0 %v632
        %v716 = vpop.f32.mrf.mxu0
        %v717 = vadd.f32 %v497, %v716
        %v718 = vpop.f32.mrf.mxu0
        %v719 = vadd.f32 %v497, %v718
        %720 = vmatmul.bf16.gmra.mxu0 %v635
        %v721 = vpop.f32.mrf.mxu0
        %v722 = vadd.f32 %v497, %v721
        %v723 = vpop.f32.mrf.mxu0
        %v724 = vadd.f32 %v497, %v723
        %725 = vmatmul.bf16.gmra.mxu0 %v638
        %v726 = vpop.f32.mrf.mxu0
        %v727 = vadd.f32 %v497, %v726
        %v728 = vpop.f32.mrf.mxu0
        %v729 = vadd.f32 %v497, %v728
        %730 = vmatmul.bf16.gmra.mxu0 %v641
        %v731 = vpop.f32.mrf.mxu0
        %v732 = vadd.f32 %v497, %v731
        %v733 = vpop.f32.mrf.mxu0
        %v734 = vadd.f32 %v497, %v733
        %735 = vdwg.mxu0
        %v736 = vmax.f32 %v657, 0.0
        %v737 = vmax.f32 %v659, 0.0
        %v738 = vmax.f32 %v662, 0.0
        %v739 = vmax.f32 %v664, 0.0
        %v740 = vmax.f32 %v667, 0.0
        %v741 = vmax.f32 %v669, 0.0
        %v742 = vmax.f32 %v672, 0.0
        %v743 = vmax.f32 %v674, 0.0
        %v744 = vmax.f32 %v677, 0.0
        %v745 = vmax.f32 %v679, 0.0
        %v746 = vmax.f32 %v682, 0.0
        %v747 = vmax.f32 %v684, 0.0
        %v748 = vmax.f32 %v687, 0.0
        %v749 = vmax.f32 %v689, 0.0
        %v750 = vmax.f32 %v692, 0.0
        %v751 = vmax.f32 %v694, 0.0
        %v752 = vmax.f32 %v697, 0.0
        %v753 = vmax.f32 %v699, 0.0
        %v754 = vmax.f32 %v702, 0.0
        %v755 = vmax.f32 %v704, 0.0
        %v756 = vmax.f32 %v707, 0.0
        %v757 = vmax.f32 %v709, 0.0
        %v758 = vmax.f32 %v712, 0.0
        %v759 = vmax.f32 %v714, 0.0
        %v760 = vmax.f32 %v717, 0.0
        %v761 = vmax.f32 %v719, 0.0
        %v762 = vmax.f32 %v722, 0.0
        %v763 = vmax.f32 %v724, 0.0
        %v764 = vmax.f32 %v727, 0.0
        %v765 = vmax.f32 %v729, 0.0
        %v766 = vmax.f32 %v732, 0.0
        %v767 = vmax.f32 %v734, 0.0
        %v768 = vpack.c.bf16 %v737, %v736
        %v769 = vpack.c.bf16 %v739, %v738
        %v770 = vpack.c.bf16 %v741, %v740
        %v771 = vpack.c.bf16 %v743, %v742
        %v772 = vpack.c.bf16 %v745, %v744
        %v773 = vpack.c.bf16 %v747, %v746
        %v774 = vpack.c.bf16 %v749, %v748
        %v775 = vpack.c.bf16 %v751, %v750
        %v776 = vpack.c.bf16 %v753, %v752
        %v777 = vpack.c.bf16 %v755, %v754
        %v778 = vpack.c.bf16 %v757, %v756
        %v779 = vpack.c.bf16 %v759, %v758
        %v780 = vpack.c.bf16 %v761, %v760
        %v781 = vpack.c.bf16 %v763, %v762
        %v782 = vpack.c.bf16 %v765, %v764
        %v783 = vpack.c.bf16 %v767, %v766
        %v784 = vld [vmem:[#allocation2] sm:$0xff]
        %v785 = vld [vmem:[#allocation2 + $0x8] sm:$0xff]
        %v786 = vld [vmem:[#allocation2 + $0x10] sm:$0xff]
        %v787 = vld [vmem:[#allocation2 + $0x18] sm:$0xff]
        %v788 = vld [vmem:[#allocation2 + $0x20] sm:$0xff]
        %v789 = vld [vmem:[#allocation2 + $0x28] sm:$0xff]
        %v790 = vld [vmem:[#allocation2 + $0x30] sm:$0xff]
        %v791 = vld [vmem:[#allocation2 + $0x38] sm:$0xff]
        %v792 = vld [vmem:[#allocation2 + $0x40] sm:$0xff]
        %v793 = vld [vmem:[#allocation2 + $0x48] sm:$0xff]
        %v794 = vld [vmem:[#allocation2 + $0x50] sm:$0xff]
        %v795 = vld [vmem:[#allocation2 + $0x58] sm:$0xff]
        %v796 = vld [vmem:[#allocation2 + $0x60] sm:$0xff]
        %v797 = vld [vmem:[#allocation2 + $0x68] sm:$0xff]
        %v798 = vld [vmem:[#allocation2 + $0x70] sm:$0xff]
        %v799 = vld [vmem:[#allocation2 + $0x78] sm:$0xff]
        %v800 = vld [vmem:[%s4] sm:$0x3]
        %v802 = vperm.slane %v800, 0
        %v803 = vperm.slane %v800, 1
        %v822 = vunpack.c.l.b16 %v784
        %v823 = vunpack.c.h.b16 %v784
        %v824 = vunpack.c.l.b16 %v785
        %v825 = vunpack.c.h.b16 %v785
        %v826 = vunpack.c.l.b16 %v786
        %v827 = vunpack.c.h.b16 %v786
        %v828 = vunpack.c.l.b16 %v787
        %v829 = vunpack.c.h.b16 %v787
        %v830 = vunpack.c.l.b16 %v788
        %v831 = vunpack.c.h.b16 %v788
        %v832 = vunpack.c.l.b16 %v789
        %v833 = vunpack.c.h.b16 %v789
        %v834 = vunpack.c.l.b16 %v790
        %v835 = vunpack.c.h.b16 %v790
        %v836 = vunpack.c.l.b16 %v791
        %v837 = vunpack.c.h.b16 %v791
        %v838 = vunpack.c.l.b16 %v792
        %v839 = vunpack.c.h.b16 %v792
        %v840 = vunpack.c.l.b16 %v793
        %v841 = vunpack.c.h.b16 %v793
        %v842 = vunpack.c.l.b16 %v794
        %v843 = vunpack.c.h.b16 %v794
        %v844 = vunpack.c.l.b16 %v795
        %v845 = vunpack.c.h.b16 %v795
        %v846 = vunpack.c.l.b16 %v796
        %v847 = vunpack.c.h.b16 %v796
        %v848 = vunpack.c.l.b16 %v797
        %v849 = vunpack.c.h.b16 %v797
        %v850 = vunpack.c.l.b16 %v798
        %v851 = vunpack.c.h.b16 %v798
        %v852 = vunpack.c.l.b16 %v799
        %v853 = vunpack.c.h.b16 %v799
        %v854 = vpack.c.b16 %v824, %v822
        %v855 = vpack.c.b16 %v825, %v823
        %v856 = vpack.c.b16 %v828, %v826
        %v857 = vpack.c.b16 %v829, %v827
        %v858 = vpack.c.b16 %v832, %v830
        %v859 = vpack.c.b16 %v833, %v831
        %v860 = vpack.c.b16 %v836, %v834
        %v861 = vpack.c.b16 %v837, %v835
        %v862 = vpack.c.b16 %v840, %v838
        %v863 = vpack.c.b16 %v841, %v839
        %v864 = vpack.c.b16 %v844, %v842
        %v865 = vpack.c.b16 %v845, %v843
        %v866 = vpack.c.b16 %v848, %v846
        %v867 = vpack.c.b16 %v849, %v847
        %v868 = vpack.c.b16 %v852, %v850
        %v869 = vpack.c.b16 %v853, %v851
        %886 = vmatpush.bf16.msra.mxu0 %v868
        %887 = vmatpush.bf16.msra.mxu0 %v866
        %888 = vmatpush.bf16.msra.mxu0 %v864
        %889 = vmatpush.bf16.msra.mxu0 %v862
        %890 = vmatpush.bf16.msra.mxu0 %v860
        %891 = vmatpush.bf16.msra.mxu0 %v858
        %892 = vmatpush.bf16.msra.mxu0 %v856
        %893 = vmatpush.bf16.msra.mxu0 %v854
        %894 = vmatmul.bf16.gmra.mxu0 %v768
        %v895 = vpop.f32.mrf.mxu0
        %v896 = vadd.f32 %v802, %v895
        %v897 = vpop.f32.mrf.mxu0
        %v898 = vadd.f32 %v802, %v897
        %899 = vmatmul.bf16.gmra.mxu0 %v769
        %v900 = vpop.f32.mrf.mxu0
        %v901 = vadd.f32 %v802, %v900
        %v902 = vpop.f32.mrf.mxu0
        %v903 = vadd.f32 %v802, %v902
        %904 = vmatmul.bf16.gmra.mxu0 %v770
        %v905 = vpop.f32.mrf.mxu0
        %v906 = vadd.f32 %v802, %v905
        %v907 = vpop.f32.mrf.mxu0
        %v908 = vadd.f32 %v802, %v907
        %909 = vmatmul.bf16.gmra.mxu0 %v771
        %v910 = vpop.f32.mrf.mxu0
        %v911 = vadd.f32 %v802, %v910
        %v912 = vpop.f32.mrf.mxu0
        %v913 = vadd.f32 %v802, %v912
        %914 = vmatmul.bf16.gmra.mxu0 %v772
        %v915 = vpop.f32.mrf.mxu0
        %v916 = vadd.f32 %v802, %v915
        %v917 = vpop.f32.mrf.mxu0
        %v918 = vadd.f32 %v802, %v917
        %919 = vmatmul.bf16.gmra.mxu0 %v773
        %v920 = vpop.f32.mrf.mxu0
        %v921 = vadd.f32 %v802, %v920
        %v922 = vpop.f32.mrf.mxu0
        %v923 = vadd.f32 %v802, %v922
        %924 = vmatmul.bf16.gmra.mxu0 %v774
        %v925 = vpop.f32.mrf.mxu0
        %v926 = vadd.f32 %v802, %v925
        %v927 = vpop.f32.mrf.mxu0
        %v928 = vadd.f32 %v802, %v927
        %929 = vmatmul.bf16.gmra.mxu0 %v775
        %v930 = vpop.f32.mrf.mxu0
        %v931 = vadd.f32 %v802, %v930
        %v932 = vpop.f32.mrf.mxu0
        %v933 = vadd.f32 %v802, %v932
        %934 = vmatmul.bf16.gmra.mxu0 %v776
        %v935 = vpop.f32.mrf.mxu0
        %v936 = vadd.f32 %v802, %v935
        %v937 = vpop.f32.mrf.mxu0
        %v938 = vadd.f32 %v802, %v937
        %939 = vmatmul.bf16.gmra.mxu0 %v777
        %v940 = vpop.f32.mrf.mxu0
        %v941 = vadd.f32 %v802, %v940
        %v942 = vpop.f32.mrf.mxu0
        %v943 = vadd.f32 %v802, %v942
        %944 = vmatmul.bf16.gmra.mxu0 %v778
        %v945 = vpop.f32.mrf.mxu0
        %v946 = vadd.f32 %v802, %v945
        %v947 = vpop.f32.mrf.mxu0
        %v948 = vadd.f32 %v802, %v947
        %949 = vmatmul.bf16.gmra.mxu0 %v779
        %v950 = vpop.f32.mrf.mxu0
        %v951 = vadd.f32 %v802, %v950
        %v952 = vpop.f32.mrf.mxu0
        %v953 = vadd.f32 %v802, %v952
        %954 = vmatmul.bf16.gmra.mxu0 %v780
        %v955 = vpop.f32.mrf.mxu0
        %v956 = vadd.f32 %v802, %v955
        %v957 = vpop.f32.mrf.mxu0
        %v958 = vadd.f32 %v802, %v957
        %959 = vmatmul.bf16.gmra.mxu0 %v781
        %v960 = vpop.f32.mrf.mxu0
        %v961 = vadd.f32 %v802, %v960
        %v962 = vpop.f32.mrf.mxu0
        %v963 = vadd.f32 %v802, %v962
        %964 = vmatmul.bf16.gmra.mxu0 %v782
        %v965 = vpop.f32.mrf.mxu0
        %v966 = vadd.f32 %v802, %v965
        %v967 = vpop.f32.mrf.mxu0
        %v968 = vadd.f32 %v802, %v967
        %969 = vmatmul.bf16.gmra.mxu0 %v783
        %v970 = vpop.f32.mrf.mxu0
        %v971 = vadd.f32 %v802, %v970
        %v972 = vpop.f32.mrf.mxu0
        %v973 = vadd.f32 %v802, %v972
        %974 = vdwg.mxu0
        %975 = vmatpush.bf16.msra.mxu0 %v869
        %976 = vmatpush.bf16.msra.mxu0 %v867
        %977 = vmatpush.bf16.msra.mxu0 %v865
        %978 = vmatpush.bf16.msra.mxu0 %v863
        %979 = vmatpush.bf16.msra.mxu0 %v861
        %980 = vmatpush.bf16.msra.mxu0 %v859
        %981 = vmatpush.bf16.msra.mxu0 %v857
        %982 = vmatpush.bf16.msra.mxu0 %v855
        %983 = vmatmul.bf16.gmra.mxu0 %v768
        %v984 = vpop.f32.mrf.mxu0
        %v985 = vadd.f32 %v803, %v984
        %v986 = vpop.f32.mrf.mxu0
        %v987 = vadd.f32 %v803, %v986
        %988 = vmatmul.bf16.gmra.mxu0 %v769
        %v989 = vpop.f32.mrf.mxu0
        %v990 = vadd.f32 %v803, %v989
        %v991 = vpop.f32.mrf.mxu0
        %v992 = vadd.f32 %v803, %v991
        %993 = vmatmul.bf16.gmra.mxu0 %v770
        %v994 = vpop.f32.mrf.mxu0
        %v995 = vadd.f32 %v803, %v994
        %v996 = vpop.f32.mrf.mxu0
        %v997 = vadd.f32 %v803, %v996
        %998 = vmatmul.bf16.gmra.mxu0 %v771
        %v999 = vpop.f32.mrf.mxu0
        %v1000 = vadd.f32 %v803, %v999
        %v1001 = vpop.f32.mrf.mxu0
        %v1002 = vadd.f32 %v803, %v1001
        %1003 = vmatmul.bf16.gmra.mxu0 %v772
        %v1004 = vpop.f32.mrf.mxu0
        %v1005 = vadd.f32 %v803, %v1004
        %v1006 = vpop.f32.mrf.mxu0
        %v1007 = vadd.f32 %v803, %v1006
        %1008 = vmatmul.bf16.gmra.mxu0 %v773
        %v1009 = vpop.f32.mrf.mxu0
        %v1010 = vadd.f32 %v803, %v1009
        %v1011 = vpop.f32.mrf.mxu0
        %v1012 = vadd.f32 %v803, %v1011
        %1013 = vmatmul.bf16.gmra.mxu0 %v774
        %v1014 = vpop.f32.mrf.mxu0
        %v1015 = vadd.f32 %v803, %v1014
        %v1016 = vpop.f32.mrf.mxu0
        %v1017 = vadd.f32 %v803, %v1016
        %1018 = vmatmul.bf16.gmra.mxu0 %v775
        %v1019 = vpop.f32.mrf.mxu0
        %v1020 = vadd.f32 %v803, %v1019
        %v1021 = vpop.f32.mrf.mxu0
        %v1022 = vadd.f32 %v803, %v1021
        %1023 = vmatmul.bf16.gmra.mxu0 %v776
        %v1024 = vpop.f32.mrf.mxu0
        %v1025 = vadd.f32 %v803, %v1024
        %v1026 = vpop.f32.mrf.mxu0
        %v1027 = vadd.f32 %v803, %v1026
        %1028 = vmatmul.bf16.gmra.mxu0 %v777
        %v1029 = vpop.f32.mrf.mxu0
        %v1030 = vadd.f32 %v803, %v1029
        %v1031 = vpop.f32.mrf.mxu0
        %v1032 = vadd.f32 %v803, %v1031
        %1033 = vmatmul.bf16.gmra.mxu0 %v778
        %v1034 = vpop.f32.mrf.mxu0
        %v1035 = vadd.f32 %v803, %v1034
        %v1036 = vpop.f32.mrf.mxu0
        %v1037 = vadd.f32 %v803, %v1036
        %1038 = vmatmul.bf16.gmra.mxu0 %v779
        %v1039 = vpop.f32.mrf.mxu0
        %v1040 = vadd.f32 %v803, %v1039
        %v1041 = vpop.f32.mrf.mxu0
        %v1042 = vadd.f32 %v803, %v1041
        %1043 = vmatmul.bf16.gmra.mxu0 %v780
        %v1044 = vpop.f32.mrf.mxu0
        %v1045 = vadd.f32 %v803, %v1044
        %v1046 = vpop.f32.mrf.mxu0
        %v1047 = vadd.f32 %v803, %v1046
        %1048 = vmatmul.bf16.gmra.mxu0 %v781
        %v1049 = vpop.f32.mrf.mxu0
        %v1050 = vadd.f32 %v803, %v1049
        %v1051 = vpop.f32.mrf.mxu0
        %v1052 = vadd.f32 %v803, %v1051
        %1053 = vmatmul.bf16.gmra.mxu0 %v782
        %v1054 = vpop.f32.mrf.mxu0
        %v1055 = vadd.f32 %v803, %v1054
        %v1056 = vpop.f32.mrf.mxu0
        %v1057 = vadd.f32 %v803, %v1056
        %1058 = vmatmul.bf16.gmra.mxu0 %v783
        %v1059 = vpop.f32.mrf.mxu0
        %v1060 = vadd.f32 %v803, %v1059
        %v1061 = vpop.f32.mrf.mxu0
        %v1062 = vadd.f32 %v803, %v1061
        %1063 = vdwg.mxu0
        %v1064 = vmax.f32 %v896, 0.0
        %v1065 = vmax.f32 %v985, 0.0
        %v1066 = vmax.f32 %v898, 0.0
        %v1067 = vmax.f32 %v987, 0.0
        %v1068 = vmax.f32 %v901, 0.0
        %v1069 = vmax.f32 %v990, 0.0
        %v1070 = vmax.f32 %v903, 0.0
        %v1071 = vmax.f32 %v992, 0.0
        %v1072 = vmax.f32 %v906, 0.0
        %v1073 = vmax.f32 %v995, 0.0
        %v1074 = vmax.f32 %v908, 0.0
        %v1075 = vmax.f32 %v997, 0.0
        %v1076 = vmax.f32 %v911, 0.0
        %v1077 = vmax.f32 %v1000, 0.0
        %v1078 = vmax.f32 %v913, 0.0
        %v1079 = vmax.f32 %v1002, 0.0
        %v1080 = vmax.f32 %v916, 0.0
        %v1081 = vmax.f32 %v1005, 0.0
        %v1082 = vmax.f32 %v918, 0.0
        %v1083 = vmax.f32 %v1007, 0.0
        %v1084 = vmax.f32 %v921, 0.0
        %v1085 = vmax.f32 %v1010, 0.0
        %v1086 = vmax.f32 %v923, 0.0
        %v1087 = vmax.f32 %v1012, 0.0
        %v1088 = vmax.f32 %v926, 0.0
        %v1089 = vmax.f32 %v1015, 0.0
        %v1090 = vmax.f32 %v928, 0.0
        %v1091 = vmax.f32 %v1017, 0.0
        %v1092 = vmax.f32 %v931, 0.0
        %v1093 = vmax.f32 %v1020, 0.0
        %v1094 = vmax.f32 %v933, 0.0
        %v1095 = vmax.f32 %v1022, 0.0
        %v1096 = vmax.f32 %v936, 0.0
        %v1097 = vmax.f32 %v1025, 0.0
        %v1098 = vmax.f32 %v938, 0.0
        %v1099 = vmax.f32 %v1027, 0.0
        %v1100 = vmax.f32 %v941, 0.0
        %v1101 = vmax.f32 %v1030, 0.0
        %v1102 = vmax.f32 %v943, 0.0
        %v1103 = vmax.f32 %v1032, 0.0
        %v1104 = vmax.f32 %v946, 0.0
        %v1105 = vmax.f32 %v1035, 0.0
        %v1106 = vmax.f32 %v948, 0.0
        %v1107 = vmax.f32 %v1037, 0.0
        %v1108 = vmax.f32 %v951, 0.0
        %v1109 = vmax.f32 %v1040, 0.0
        %v1110 = vmax.f32 %v953, 0.0
        %v1111 = vmax.f32 %v1042, 0.0
        %v1112 = vmax.f32 %v956, 0.0
        %v1113 = vmax.f32 %v1045, 0.0
        %v1114 = vmax.f32 %v958, 0.0
        %v1115 = vmax.f32 %v1047, 0.0
        %v1116 = vmax.f32 %v961, 0.0
        %v1117 = vmax.f32 %v1050, 0.0
        %v1118 = vmax.f32 %v963, 0.0
        %v1119 = vmax.f32 %v1052, 0.0
        %v1120 = vmax.f32 %v966, 0.0
        %v1121 = vmax.f32 %v1055, 0.0
        %v1122 = vmax.f32 %v968, 0.0
        %v1123 = vmax.f32 %v1057, 0.0
        %v1124 = vmax.f32 %v971, 0.0
        %v1125 = vmax.f32 %v1060, 0.0
        %v1126 = vmax.f32 %v973, 0.0
        %v1127 = vmax.f32 %v1062, 0.0
        %v1128 = vpack.c.bf16 %v1066, %v1064
        %v1129 = vpack.c.bf16 %v1067, %v1065
        %v1130 = vpack.c.bf16 %v1070, %v1068
        %v1131 = vpack.c.bf16 %v1071, %v1069
        %v1132 = vpack.c.bf16 %v1074, %v1072
        %v1133 = vpack.c.bf16 %v1075, %v1073
        %v1134 = vpack.c.bf16 %v1078, %v1076
        %v1135 = vpack.c.bf16 %v1079, %v1077
        %v1136 = vpack.c.bf16 %v1082, %v1080
        %v1137 = vpack.c.bf16 %v1083, %v1081
        %v1138 = vpack.c.bf16 %v1086, %v1084
        %v1139 = vpack.c.bf16 %v1087, %v1085
        %v1140 = vpack.c.bf16 %v1090, %v1088
        %v1141 = vpack.c.bf16 %v1091, %v1089
        %v1142 = vpack.c.bf16 %v1094, %v1092
        %v1143 = vpack.c.bf16 %v1095, %v1093
        %v1144 = vpack.c.bf16 %v1098, %v1096
        %v1145 = vpack.c.bf16 %v1099, %v1097
        %v1146 = vpack.c.bf16 %v1102, %v1100
        %v1147 = vpack.c.bf16 %v1103, %v1101
        %v1148 = vpack.c.bf16 %v1106, %v1104
        %v1149 = vpack.c.bf16 %v1107, %v1105
        %v1150 = vpack.c.bf16 %v1110, %v1108
        %v1151 = vpack.c.bf16 %v1111, %v1109
        %v1152 = vpack.c.bf16 %v1114, %v1112
        %v1153 = vpack.c.bf16 %v1115, %v1113
        %v1154 = vpack.c.bf16 %v1118, %v1116
        %v1155 = vpack.c.bf16 %v1119, %v1117
        %v1156 = vpack.c.bf16 %v1122, %v1120
        %v1157 = vpack.c.bf16 %v1123, %v1121
        %v1158 = vpack.c.bf16 %v1126, %v1124
        %v1159 = vpack.c.bf16 %v1127, %v1125
        %v1160 = vld [vmem:[%s5] sm:$0xff]
        %v1161 = vld [vmem:[%s5 + $0x8] sm:$0xff]
        %v1162 = vld [vmem:[%s5 + $0x10] sm:$0xff]
        %v1163 = vld [vmem:[%s5 + $0x18] sm:$0xff]
        %v1164 = vld [vmem:[%s5 + $0x20] sm:$0xff]
        %v1165 = vld [vmem:[%s5 + $0x28] sm:$0xff]
        %v1166 = vld [vmem:[%s5 + $0x30] sm:$0xff]
        %v1167 = vld [vmem:[%s5 + $0x38] sm:$0xff]
        %v1168 = vld [vmem:[%s5 + $0x40] sm:$0xff]
        %v1169 = vld [vmem:[%s5 + $0x48] sm:$0xff]
        %v1170 = vld [vmem:[%s5 + $0x50] sm:$0xff]
        %v1171 = vld [vmem:[%s5 + $0x58] sm:$0xff]
        %v1172 = vld [vmem:[%s5 + $0x60] sm:$0xff]
        %v1173 = vld [vmem:[%s5 + $0x68] sm:$0xff]
        %v1174 = vld [vmem:[%s5 + $0x70] sm:$0xff]
        %v1175 = vld [vmem:[%s5 + $0x78] sm:$0xff]
        %v1176 = vld [vmem:[%s5 + $0x80] sm:$0xff]
        %v1177 = vld [vmem:[%s5 + $0x88] sm:$0xff]
        %v1178 = vld [vmem:[%s5 + $0x90] sm:$0xff]
        %v1179 = vld [vmem:[%s5 + $0x98] sm:$0xff]
        %v1180 = vld [vmem:[%s5 + $0xa0] sm:$0xff]
        %v1181 = vld [vmem:[%s5 + $0xa8] sm:$0xff]
        %v1182 = vld [vmem:[%s5 + $0xb0] sm:$0xff]
        %v1183 = vld [vmem:[%s5 + $0xb8] sm:$0xff]
        %v1184 = vld [vmem:[%s5 + $0xc0] sm:$0xff]
        %v1185 = vld [vmem:[%s5 + $0xc8] sm:$0xff]
        %v1186 = vld [vmem:[%s5 + $0xd0] sm:$0xff]
        %v1187 = vld [vmem:[%s5 + $0xd8] sm:$0xff]
        %v1188 = vld [vmem:[%s5 + $0xe0] sm:$0xff]
        %v1189 = vld [vmem:[%s5 + $0xe8] sm:$0xff]
        %v1190 = vld [vmem:[%s5 + $0xf0] sm:$0xff]
        %v1191 = vld [vmem:[%s5 + $0xf8] sm:$0xff]
        %v1192 = vld [vmem:[#allocation5] sm:$0xff]
        %v1193 = vld [vmem:[#allocation5 + $0x8] sm:$0xff]
        %v1194 = vld [vmem:[#allocation5 + $0x10] sm:$0xff]
        %v1195 = vld [vmem:[#allocation5 + $0x18] sm:$0xff]
        %v1196 = vld [vmem:[#allocation5 + $0x20] sm:$0xff]
        %v1197 = vld [vmem:[#allocation5 + $0x28] sm:$0xff]
        %v1198 = vld [vmem:[#allocation5 + $0x30] sm:$0xff]
        %v1199 = vld [vmem:[#allocation5 + $0x38] sm:$0xff]
        %v1200 = vld [vmem:[#allocation5 + $0x40] sm:$0xff]
        %v1201 = vld [vmem:[#allocation5 + $0x48] sm:$0xff]
        %v1202 = vld [vmem:[#allocation5 + $0x50] sm:$0xff]
        %v1203 = vld [vmem:[#allocation5 + $0x58] sm:$0xff]
        %v1204 = vld [vmem:[#allocation5 + $0x60] sm:$0xff]
        %v1205 = vld [vmem:[#allocation5 + $0x68] sm:$0xff]
        %v1206 = vld [vmem:[#allocation5 + $0x70] sm:$0xff]
        %v1207 = vld [vmem:[#allocation5 + $0x78] sm:$0xff]
        %v1208 = vld [vmem:[#allocation5 + $0x80] sm:$0xff]
        %v1209 = vld [vmem:[#allocation5 + $0x88] sm:$0xff]
        %v1210 = vld [vmem:[#allocation5 + $0x90] sm:$0xff]
        %v1211 = vld [vmem:[#allocation5 + $0x98] sm:$0xff]
        %v1212 = vld [vmem:[#allocation5 + $0xa0] sm:$0xff]
        %v1213 = vld [vmem:[#allocation5 + $0xa8] sm:$0xff]
        %v1214 = vld [vmem:[#allocation5 + $0xb0] sm:$0xff]
        %v1215 = vld [vmem:[#allocation5 + $0xb8] sm:$0xff]
        %v1216 = vld [vmem:[#allocation5 + $0xc0] sm:$0xff]
        %v1217 = vld [vmem:[#allocation5 + $0xc8] sm:$0xff]
        %v1218 = vld [vmem:[#allocation5 + $0xd0] sm:$0xff]
        %v1219 = vld [vmem:[#allocation5 + $0xd8] sm:$0xff]
        %v1220 = vld [vmem:[#allocation5 + $0xe0] sm:$0xff]
        %v1221 = vld [vmem:[#allocation5 + $0xe8] sm:$0xff]
        %v1222 = vld [vmem:[#allocation5 + $0xf0] sm:$0xff]
        %v1223 = vld [vmem:[#allocation5 + $0xf8] sm:$0xff]
        %v1224 = vld [vmem:[#allocation5 + $0x100] sm:$0xff]
        %v1225 = vld [vmem:[#allocation5 + $0x108] sm:$0xff]
        %v1226 = vld [vmem:[#allocation5 + $0x110] sm:$0xff]
        %v1227 = vld [vmem:[#allocation5 + $0x118] sm:$0xff]
        %v1228 = vld [vmem:[#allocation5 + $0x120] sm:$0xff]
        %v1229 = vld [vmem:[#allocation5 + $0x128] sm:$0xff]
        %v1230 = vld [vmem:[#allocation5 + $0x130] sm:$0xff]
        %v1231 = vld [vmem:[#allocation5 + $0x138] sm:$0xff]
        %v1232 = vld [vmem:[#allocation5 + $0x140] sm:$0xff]
        %v1233 = vld [vmem:[#allocation5 + $0x148] sm:$0xff]
        %v1234 = vld [vmem:[#allocation5 + $0x150] sm:$0xff]
        %v1235 = vld [vmem:[#allocation5 + $0x158] sm:$0xff]
        %v1236 = vld [vmem:[#allocation5 + $0x160] sm:$0xff]
        %v1237 = vld [vmem:[#allocation5 + $0x168] sm:$0xff]
        %v1238 = vld [vmem:[#allocation5 + $0x170] sm:$0xff]
        %v1239 = vld [vmem:[#allocation5 + $0x178] sm:$0xff]
        %v1240 = vld [vmem:[#allocation5 + $0x180] sm:$0xff]
        %v1241 = vld [vmem:[#allocation5 + $0x188] sm:$0xff]
        %v1242 = vld [vmem:[#allocation5 + $0x190] sm:$0xff]
        %v1243 = vld [vmem:[#allocation5 + $0x198] sm:$0xff]
        %v1244 = vld [vmem:[#allocation5 + $0x1a0] sm:$0xff]
        %v1245 = vld [vmem:[#allocation5 + $0x1a8] sm:$0xff]
        %v1246 = vld [vmem:[#allocation5 + $0x1b0] sm:$0xff]
        %v1247 = vld [vmem:[#allocation5 + $0x1b8] sm:$0xff]
        %v1248 = vld [vmem:[#allocation5 + $0x1c0] sm:$0xff]
        %v1249 = vld [vmem:[#allocation5 + $0x1c8] sm:$0xff]
        %v1250 = vld [vmem:[#allocation5 + $0x1d0] sm:$0xff]
        %v1251 = vld [vmem:[#allocation5 + $0x1d8] sm:$0xff]
        %v1252 = vld [vmem:[#allocation5 + $0x1e0] sm:$0xff]
        %v1253 = vld [vmem:[#allocation5 + $0x1e8] sm:$0xff]
        %v1254 = vld [vmem:[#allocation5 + $0x1f0] sm:$0xff]
        %v1255 = vld [vmem:[#allocation5 + $0x1f8] sm:$0xff]
        %v1320 = vunpack.c.l.b16 %v1192
        %v1321 = vunpack.c.h.b16 %v1192
        %v1322 = vunpack.c.l.b16 %v1193
        %v1323 = vunpack.c.h.b16 %v1193
        %v1324 = vunpack.c.l.b16 %v1194
        %v1325 = vunpack.c.h.b16 %v1194
        %v1326 = vunpack.c.l.b16 %v1195
        %v1327 = vunpack.c.h.b16 %v1195
        %v1328 = vunpack.c.l.b16 %v1196
        %v1329 = vunpack.c.h.b16 %v1196
        %v1330 = vunpack.c.l.b16 %v1197
        %v1331 = vunpack.c.h.b16 %v1197
        %v1332 = vunpack.c.l.b16 %v1198
        %v1333 = vunpack.c.h.b16 %v1198
        %v1334 = vunpack.c.l.b16 %v1199
        %v1335 = vunpack.c.h.b16 %v1199
        %v1336 = vunpack.c.l.b16 %v1200
        %v1337 = vunpack.c.h.b16 %v1200
        %v1338 = vunpack.c.l.b16 %v1201
        %v1339 = vunpack.c.h.b16 %v1201
        %v1340 = vunpack.c.l.b16 %v1202
        %v1341 = vunpack.c.h.b16 %v1202
        %v1342 = vunpack.c.l.b16 %v1203
        %v1343 = vunpack.c.h.b16 %v1203
        %v1344 = vunpack.c.l.b16 %v1204
        %v1345 = vunpack.c.h.b16 %v1204
        %v1346 = vunpack.c.l.b16 %v1205
        %v1347 = vunpack.c.h.b16 %v1205
        %v1348 = vunpack.c.l.b16 %v1206
        %v1349 = vunpack.c.h.b16 %v1206
        %v1350 = vunpack.c.l.b16 %v1207
        %v1351 = vunpack.c.h.b16 %v1207
        %v1352 = vunpack.c.l.b16 %v1208
        %v1353 = vunpack.c.h.b16 %v1208
        %v1354 = vunpack.c.l.b16 %v1209
        %v1355 = vunpack.c.h.b16 %v1209
        %v1356 = vunpack.c.l.b16 %v1210
        %v1357 = vunpack.c.h.b16 %v1210
        %v1358 = vunpack.c.l.b16 %v1211
        %v1359 = vunpack.c.h.b16 %v1211
        %v1360 = vunpack.c.l.b16 %v1212
        %v1361 = vunpack.c.h.b16 %v1212
        %v1362 = vunpack.c.l.b16 %v1213
        %v1363 = vunpack.c.h.b16 %v1213
        %v1364 = vunpack.c.l.b16 %v1214
        %v1365 = vunpack.c.h.b16 %v1214
        %v1366 = vunpack.c.l.b16 %v1215
        %v1367 = vunpack.c.h.b16 %v1215
        %v1368 = vunpack.c.l.b16 %v1216
        %v1369 = vunpack.c.h.b16 %v1216
        %v1370 = vunpack.c.l.b16 %v1217
        %v1371 = vunpack.c.h.b16 %v1217
        %v1372 = vunpack.c.l.b16 %v1218
        %v1373 = vunpack.c.h.b16 %v1218
        %v1374 = vunpack.c.l.b16 %v1219
        %v1375 = vunpack.c.h.b16 %v1219
        %v1376 = vunpack.c.l.b16 %v1220
        %v1377 = vunpack.c.h.b16 %v1220
        %v1378 = vunpack.c.l.b16 %v1221
        %v1379 = vunpack.c.h.b16 %v1221
        %v1380 = vunpack.c.l.b16 %v1222
        %v1381 = vunpack.c.h.b16 %v1222
        %v1382 = vunpack.c.l.b16 %v1223
        %v1383 = vunpack.c.h.b16 %v1223
        %v1384 = vunpack.c.l.b16 %v1224
        %v1385 = vunpack.c.h.b16 %v1224
        %v1386 = vunpack.c.l.b16 %v1225
        %v1387 = vunpack.c.h.b16 %v1225
        %v1388 = vunpack.c.l.b16 %v1226
        %v1389 = vunpack.c.h.b16 %v1226
        %v1390 = vunpack.c.l.b16 %v1227
        %v1391 = vunpack.c.h.b16 %v1227
        %v1392 = vunpack.c.l.b16 %v1228
        %v1393 = vunpack.c.h.b16 %v1228
        %v1394 = vunpack.c.l.b16 %v1229
        %v1395 = vunpack.c.h.b16 %v1229
        %v1396 = vunpack.c.l.b16 %v1230
        %v1397 = vunpack.c.h.b16 %v1230
        %v1398 = vunpack.c.l.b16 %v1231
        %v1399 = vunpack.c.h.b16 %v1231
        %v1400 = vunpack.c.l.b16 %v1232
        %v1401 = vunpack.c.h.b16 %v1232
        %v1402 = vunpack.c.l.b16 %v1233
        %v1403 = vunpack.c.h.b16 %v1233
        %v1404 = vunpack.c.l.b16 %v1234
        %v1405 = vunpack.c.h.b16 %v1234
        %v1406 = vunpack.c.l.b16 %v1235
        %v1407 = vunpack.c.h.b16 %v1235
        %v1408 = vunpack.c.l.b16 %v1236
        %v1409 = vunpack.c.h.b16 %v1236
        %v1410 = vunpack.c.l.b16 %v1237
        %v1411 = vunpack.c.h.b16 %v1237
        %v1412 = vunpack.c.l.b16 %v1238
        %v1413 = vunpack.c.h.b16 %v1238
        %v1414 = vunpack.c.l.b16 %v1239
        %v1415 = vunpack.c.h.b16 %v1239
        %v1416 = vunpack.c.l.b16 %v1240
        %v1417 = vunpack.c.h.b16 %v1240
        %v1418 = vunpack.c.l.b16 %v1241
        %v1419 = vunpack.c.h.b16 %v1241
        %v1420 = vunpack.c.l.b16 %v1242
        %v1421 = vunpack.c.h.b16 %v1242
        %v1422 = vunpack.c.l.b16 %v1243
        %v1423 = vunpack.c.h.b16 %v1243
        %v1424 = vunpack.c.l.b16 %v1244
        %v1425 = vunpack.c.h.b16 %v1244
        %v1426 = vunpack.c.l.b16 %v1245
        %v1427 = vunpack.c.h.b16 %v1245
        %v1428 = vunpack.c.l.b16 %v1246
        %v1429 = vunpack.c.h.b16 %v1246
        %v1430 = vunpack.c.l.b16 %v1247
        %v1431 = vunpack.c.h.b16 %v1247
        %v1432 = vunpack.c.l.b16 %v1248
        %v1433 = vunpack.c.h.b16 %v1248
        %v1434 = vunpack.c.l.b16 %v1249
        %v1435 = vunpack.c.h.b16 %v1249
        %v1436 = vunpack.c.l.b16 %v1250
        %v1437 = vunpack.c.h.b16 %v1250
        %v1438 = vunpack.c.l.b16 %v1251
        %v1439 = vunpack.c.h.b16 %v1251
        %v1440 = vunpack.c.l.b16 %v1252
        %v1441 = vunpack.c.h.b16 %v1252
        %v1442 = vunpack.c.l.b16 %v1253
        %v1443 = vunpack.c.h.b16 %v1253
        %v1444 = vunpack.c.l.b16 %v1254
        %v1445 = vunpack.c.h.b16 %v1254
        %v1446 = vunpack.c.l.b16 %v1255
        %v1447 = vunpack.c.h.b16 %v1255
        %v1448 = vpack.c.b16 %v1324, %v1320
        %v1449 = vpack.c.b16 %v1325, %v1321
        %v1450 = vpack.c.b16 %v1326, %v1322
        %v1451 = vpack.c.b16 %v1327, %v1323
        %v1452 = vpack.c.b16 %v1332, %v1328
        %v1453 = vpack.c.b16 %v1333, %v1329
        %v1454 = vpack.c.b16 %v1334, %v1330
        %v1455 = vpack.c.b16 %v1335, %v1331
        %v1456 = vpack.c.b16 %v1340, %v1336
        %v1457 = vpack.c.b16 %v1341, %v1337
        %v1458 = vpack.c.b16 %v1342, %v1338
        %v1459 = vpack.c.b16 %v1343, %v1339
        %v1460 = vpack.c.b16 %v1348, %v1344
        %v1461 = vpack.c.b16 %v1349, %v1345
        %v1462 = vpack.c.b16 %v1350, %v1346
        %v1463 = vpack.c.b16 %v1351, %v1347
        %v1464 = vpack.c.b16 %v1356, %v1352
        %v1465 = vpack.c.b16 %v1357, %v1353
        %v1466 = vpack.c.b16 %v1358, %v1354
        %v1467 = vpack.c.b16 %v1359, %v1355
        %v1468 = vpack.c.b16 %v1364, %v1360
        %v1469 = vpack.c.b16 %v1365, %v1361
        %v1470 = vpack.c.b16 %v1366, %v1362
        %v1471 = vpack.c.b16 %v1367, %v1363
        %v1472 = vpack.c.b16 %v1372, %v1368
        %v1473 = vpack.c.b16 %v1373, %v1369
        %v1474 = vpack.c.b16 %v1374, %v1370
        %v1475 = vpack.c.b16 %v1375, %v1371
        %v1476 = vpack.c.b16 %v1380, %v1376
        %v1477 = vpack.c.b16 %v1381, %v1377
        %v1478 = vpack.c.b16 %v1382, %v1378
        %v1479 = vpack.c.b16 %v1383, %v1379
        %v1480 = vpack.c.b16 %v1388, %v1384
        %v1481 = vpack.c.b16 %v1389, %v1385
        %v1482 = vpack.c.b16 %v1390, %v1386
        %v1483 = vpack.c.b16 %v1391, %v1387
        %v1484 = vpack.c.b16 %v1396, %v1392
        %v1485 = vpack.c.b16 %v1397, %v1393
        %v1486 = vpack.c.b16 %v1398, %v1394
        %v1487 = vpack.c.b16 %v1399, %v1395
        %v1488 = vpack.c.b16 %v1404, %v1400
        %v1489 = vpack.c.b16 %v1405, %v1401
        %v1490 = vpack.c.b16 %v1406, %v1402
        %v1491 = vpack.c.b16 %v1407, %v1403
        %v1492 = vpack.c.b16 %v1412, %v1408
        %v1493 = vpack.c.b16 %v1413, %v1409
        %v1494 = vpack.c.b16 %v1414, %v1410
        %v1495 = vpack.c.b16 %v1415, %v1411
        %v1496 = vpack.c.b16 %v1420, %v1416
        %v1497 = vpack.c.b16 %v1421, %v1417
        %v1498 = vpack.c.b16 %v1422, %v1418
        %v1499 = vpack.c.b16 %v1423, %v1419
        %v1500 = vpack.c.b16 %v1428, %v1424
        %v1501 = vpack.c.b16 %v1429, %v1425
        %v1502 = vpack.c.b16 %v1430, %v1426
        %v1503 = vpack.c.b16 %v1431, %v1427
        %v1504 = vpack.c.b16 %v1436, %v1432
        %v1505 = vpack.c.b16 %v1437, %v1433
        %v1506 = vpack.c.b16 %v1438, %v1434
        %v1507 = vpack.c.b16 %v1439, %v1435
        %v1508 = vpack.c.b16 %v1444, %v1440
        %v1509 = vpack.c.b16 %v1445, %v1441
        %v1510 = vpack.c.b16 %v1446, %v1442
        %v1511 = vpack.c.b16 %v1447, %v1443
        %1576 = vmatpush.bf16.msra.mxu0 %v1476
        %1577 = vmatpush.bf16.msra.mxu0 %v1472
        %1578 = vmatpush.bf16.msra.mxu0 %v1468
        %1579 = vmatpush.bf16.msra.mxu0 %v1464
        %1580 = vmatpush.bf16.msra.mxu0 %v1460
        %1581 = vmatpush.bf16.msra.mxu0 %v1456
        %1582 = vmatpush.bf16.msra.mxu0 %v1452
        %1583 = vmatpush.bf16.msra.mxu0 %v1448
        %1584 = vmatmul.bf16.gmra.mxu0 %v1128
        %v1585 = vpop.f32.mrf.mxu0
        %v1586 = vadd.f32 0.0, %v1585
        %v1587 = vpop.f32.mrf.mxu0
        %v1588 = vadd.f32 0.0, %v1587
        %1589 = vmatmul.bf16.gmra.mxu0 %v1130
        %v1590 = vpop.f32.mrf.mxu0
        %v1591 = vadd.f32 0.0, %v1590
        %v1592 = vpop.f32.mrf.mxu0
        %v1593 = vadd.f32 0.0, %v1592
        %1594 = vmatmul.bf16.gmra.mxu0 %v1132
        %v1595 = vpop.f32.mrf.mxu0
        %v1596 = vadd.f32 0.0, %v1595
        %v1597 = vpop.f32.mrf.mxu0
        %v1598 = vadd.f32 0.0, %v1597
        %1599 = vmatmul.bf16.gmra.mxu0 %v1134
        %v1600 = vpop.f32.mrf.mxu0
        %v1601 = vadd.f32 0.0, %v1600
        %v1602 = vpop.f32.mrf.mxu0
        %v1603 = vadd.f32 0.0, %v1602
        %1604 = vmatmul.bf16.gmra.mxu0 %v1136
        %v1605 = vpop.f32.mrf.mxu0
        %v1606 = vadd.f32 0.0, %v1605
        %v1607 = vpop.f32.mrf.mxu0
        %v1608 = vadd.f32 0.0, %v1607
        %1609 = vmatmul.bf16.gmra.mxu0 %v1138
        %v1610 = vpop.f32.mrf.mxu0
        %v1611 = vadd.f32 0.0, %v1610
        %v1612 = vpop.f32.mrf.mxu0
        %v1613 = vadd.f32 0.0, %v1612
        %1614 = vmatmul.bf16.gmra.mxu0 %v1140
        %v1615 = vpop.f32.mrf.mxu0
        %v1616 = vadd.f32 0.0, %v1615
        %v1617 = vpop.f32.mrf.mxu0
        %v1618 = vadd.f32 0.0, %v1617
        %1619 = vmatmul.bf16.gmra.mxu0 %v1142
        %v1620 = vpop.f32.mrf.mxu0
        %v1621 = vadd.f32 0.0, %v1620
        %v1622 = vpop.f32.mrf.mxu0
        %v1623 = vadd.f32 0.0, %v1622
        %1624 = vmatmul.bf16.gmra.mxu0 %v1144
        %v1625 = vpop.f32.mrf.mxu0
        %v1626 = vadd.f32 0.0, %v1625
        %v1627 = vpop.f32.mrf.mxu0
        %v1628 = vadd.f32 0.0, %v1627
        %1629 = vmatmul.bf16.gmra.mxu0 %v1146
        %v1630 = vpop.f32.mrf.mxu0
        %v1631 = vadd.f32 0.0, %v1630
        %v1632 = vpop.f32.mrf.mxu0
        %v1633 = vadd.f32 0.0, %v1632
        %1634 = vmatmul.bf16.gmra.mxu0 %v1148
        %v1635 = vpop.f32.mrf.mxu0
        %v1636 = vadd.f32 0.0, %v1635
        %v1637 = vpop.f32.mrf.mxu0
        %v1638 = vadd.f32 0.0, %v1637
        %1639 = vmatmul.bf16.gmra.mxu0 %v1150
        %v1640 = vpop.f32.mrf.mxu0
        %v1641 = vadd.f32 0.0, %v1640
        %v1642 = vpop.f32.mrf.mxu0
        %v1643 = vadd.f32 0.0, %v1642
        %1644 = vmatmul.bf16.gmra.mxu0 %v1152
        %v1645 = vpop.f32.mrf.mxu0
        %v1646 = vadd.f32 0.0, %v1645
        %v1647 = vpop.f32.mrf.mxu0
        %v1648 = vadd.f32 0.0, %v1647
        %1649 = vmatmul.bf16.gmra.mxu0 %v1154
        %v1650 = vpop.f32.mrf.mxu0
        %v1651 = vadd.f32 0.0, %v1650
        %v1652 = vpop.f32.mrf.mxu0
        %v1653 = vadd.f32 0.0, %v1652
        %1654 = vmatmul.bf16.gmra.mxu0 %v1156
        %v1655 = vpop.f32.mrf.mxu0
        %v1656 = vadd.f32 0.0, %v1655
        %v1657 = vpop.f32.mrf.mxu0
        %v1658 = vadd.f32 0.0, %v1657
        %1659 = vmatmul.bf16.gmra.mxu0 %v1158
        %v1660 = vpop.f32.mrf.mxu0
        %v1661 = vadd.f32 0.0, %v1660
        %v1662 = vpop.f32.mrf.mxu0
        %v1663 = vadd.f32 0.0, %v1662
        %1664 = vdwg.mxu0
        %1665 = vmatpush.bf16.msra.mxu0 %v1508
        %1666 = vmatpush.bf16.msra.mxu0 %v1504
        %1667 = vmatpush.bf16.msra.mxu0 %v1500
        %1668 = vmatpush.bf16.msra.mxu0 %v1496
        %1669 = vmatpush.bf16.msra.mxu0 %v1492
        %1670 = vmatpush.bf16.msra.mxu0 %v1488
        %1671 = vmatpush.bf16.msra.mxu0 %v1484
        %1672 = vmatpush.bf16.msra.mxu0 %v1480
        %1673 = vmatmul.bf16.gmra.mxu0 %v1129
        %v1674 = vpop.f32.mrf.mxu0
        %v1675 = vadd.f32 %v1586, %v1674
        %v1676 = vpop.f32.mrf.mxu0
        %v1677 = vadd.f32 %v1588, %v1676
        %1678 = vmatmul.bf16.gmra.mxu0 %v1131
        %v1679 = vpop.f32.mrf.mxu0
        %v1680 = vadd.f32 %v1591, %v1679
        %v1681 = vpop.f32.mrf.mxu0
        %v1682 = vadd.f32 %v1593, %v1681
        %1683 = vmatmul.bf16.gmra.mxu0 %v1133
        %v1684 = vpop.f32.mrf.mxu0
        %v1685 = vadd.f32 %v1596, %v1684
        %v1686 = vpop.f32.mrf.mxu0
        %v1687 = vadd.f32 %v1598, %v1686
        %1688 = vmatmul.bf16.gmra.mxu0 %v1135
        %v1689 = vpop.f32.mrf.mxu0
        %v1690 = vadd.f32 %v1601, %v1689
        %v1691 = vpop.f32.mrf.mxu0
        %v1692 = vadd.f32 %v1603, %v1691
        %1693 = vmatmul.bf16.gmra.mxu0 %v1137
        %v1694 = vpop.f32.mrf.mxu0
        %v1695 = vadd.f32 %v1606, %v1694
        %v1696 = vpop.f32.mrf.mxu0
        %v1697 = vadd.f32 %v1608, %v1696
        %1698 = vmatmul.bf16.gmra.mxu0 %v1139
        %v1699 = vpop.f32.mrf.mxu0
        %v1700 = vadd.f32 %v1611, %v1699
        %v1701 = vpop.f32.mrf.mxu0
        %v1702 = vadd.f32 %v1613, %v1701
        %1703 = vmatmul.bf16.gmra.mxu0 %v1141
        %v1704 = vpop.f32.mrf.mxu0
        %v1705 = vadd.f32 %v1616, %v1704
        %v1706 = vpop.f32.mrf.mxu0
        %v1707 = vadd.f32 %v1618, %v1706
        %1708 = vmatmul.bf16.gmra.mxu0 %v1143
        %v1709 = vpop.f32.mrf.mxu0
        %v1710 = vadd.f32 %v1621, %v1709
        %v1711 = vpop.f32.mrf.mxu0
        %v1712 = vadd.f32 %v1623, %v1711
        %1713 = vmatmul.bf16.gmra.mxu0 %v1145
        %v1714 = vpop.f32.mrf.mxu0
        %v1715 = vadd.f32 %v1626, %v1714
        %v1716 = vpop.f32.mrf.mxu0
        %v1717 = vadd.f32 %v1628, %v1716
        %1718 = vmatmul.bf16.gmra.mxu0 %v1147
        %v1719 = vpop.f32.mrf.mxu0
        %v1720 = vadd.f32 %v1631, %v1719
        %v1721 = vpop.f32.mrf.mxu0
        %v1722 = vadd.f32 %v1633, %v1721
        %1723 = vmatmul.bf16.gmra.mxu0 %v1149
        %v1724 = vpop.f32.mrf.mxu0
        %v1725 = vadd.f32 %v1636, %v1724
        %v1726 = vpop.f32.mrf.mxu0
        %v1727 = vadd.f32 %v1638, %v1726
        %1728 = vmatmul.bf16.gmra.mxu0 %v1151
        %v1729 = vpop.f32.mrf.mxu0
        %v1730 = vadd.f32 %v1641, %v1729
        %v1731 = vpop.f32.mrf.mxu0
        %v1732 = vadd.f32 %v1643, %v1731
        %1733 = vmatmul.bf16.gmra.mxu0 %v1153
        %v1734 = vpop.f32.mrf.mxu0
        %v1735 = vadd.f32 %v1646, %v1734
        %v1736 = vpop.f32.mrf.mxu0
        %v1737 = vadd.f32 %v1648, %v1736
        %1738 = vmatmul.bf16.gmra.mxu0 %v1155
        %v1739 = vpop.f32.mrf.mxu0
        %v1740 = vadd.f32 %v1651, %v1739
        %v1741 = vpop.f32.mrf.mxu0
        %v1742 = vadd.f32 %v1653, %v1741
        %1743 = vmatmul.bf16.gmra.mxu0 %v1157
        %v1744 = vpop.f32.mrf.mxu0
        %v1745 = vadd.f32 %v1656, %v1744
        %v1746 = vpop.f32.mrf.mxu0
        %v1747 = vadd.f32 %v1658, %v1746
        %1748 = vmatmul.bf16.gmra.mxu0 %v1159
        %v1749 = vpop.f32.mrf.mxu0
        %v1750 = vadd.f32 %v1661, %v1749
        %v1751 = vpop.f32.mrf.mxu0
        %v1752 = vadd.f32 %v1663, %v1751
        %1753 = vdwg.mxu0
        %1754 = vmatpush.bf16.msra.mxu0 %v1477
        %1755 = vmatpush.bf16.msra.mxu0 %v1473
        %1756 = vmatpush.bf16.msra.mxu0 %v1469
        %1757 = vmatpush.bf16.msra.mxu0 %v1465
        %1758 = vmatpush.bf16.msra.mxu0 %v1461
        %1759 = vmatpush.bf16.msra.mxu0 %v1457
        %1760 = vmatpush.bf16.msra.mxu0 %v1453
        %1761 = vmatpush.bf16.msra.mxu0 %v1449
        %1762 = vmatmul.bf16.gmra.mxu0 %v1128
        %v1763 = vpop.f32.mrf.mxu0
        %v1764 = vadd.f32 0.0, %v1763
        %v1765 = vpop.f32.mrf.mxu0
        %v1766 = vadd.f32 0.0, %v1765
        %1767 = vmatmul.bf16.gmra.mxu0 %v1130
        %v1768 = vpop.f32.mrf.mxu0
        %v1769 = vadd.f32 0.0, %v1768
        %v1770 = vpop.f32.mrf.mxu0
        %v1771 = vadd.f32 0.0, %v1770
        %1772 = vmatmul.bf16.gmra.mxu0 %v1132
        %v1773 = vpop.f32.mrf.mxu0
        %v1774 = vadd.f32 0.0, %v1773
        %v1775 = vpop.f32.mrf.mxu0
        %v1776 = vadd.f32 0.0, %v1775
        %1777 = vmatmul.bf16.gmra.mxu0 %v1134
        %v1778 = vpop.f32.mrf.mxu0
        %v1779 = vadd.f32 0.0, %v1778
        %v1780 = vpop.f32.mrf.mxu0
        %v1781 = vadd.f32 0.0, %v1780
        %1782 = vmatmul.bf16.gmra.mxu0 %v1136
        %v1783 = vpop.f32.mrf.mxu0
        %v1784 = vadd.f32 0.0, %v1783
        %v1785 = vpop.f32.mrf.mxu0
        %v1786 = vadd.f32 0.0, %v1785
        %1787 = vmatmul.bf16.gmra.mxu0 %v1138
        %v1788 = vpop.f32.mrf.mxu0
        %v1789 = vadd.f32 0.0, %v1788
        %v1790 = vpop.f32.mrf.mxu0
        %v1791 = vadd.f32 0.0, %v1790
        %1792 = vmatmul.bf16.gmra.mxu0 %v1140
        %v1793 = vpop.f32.mrf.mxu0
        %v1794 = vadd.f32 0.0, %v1793
        %v1795 = vpop.f32.mrf.mxu0
        %v1796 = vadd.f32 0.0, %v1795
        %1797 = vmatmul.bf16.gmra.mxu0 %v1142
        %v1798 = vpop.f32.mrf.mxu0
        %v1799 = vadd.f32 0.0, %v1798
        %v1800 = vpop.f32.mrf.mxu0
        %v1801 = vadd.f32 0.0, %v1800
        %1802 = vmatmul.bf16.gmra.mxu0 %v1144
        %v1803 = vpop.f32.mrf.mxu0
        %v1804 = vadd.f32 0.0, %v1803
        %v1805 = vpop.f32.mrf.mxu0
        %v1806 = vadd.f32 0.0, %v1805
        %1807 = vmatmul.bf16.gmra.mxu0 %v1146
        %v1808 = vpop.f32.mrf.mxu0
        %v1809 = vadd.f32 0.0, %v1808
        %v1810 = vpop.f32.mrf.mxu0
        %v1811 = vadd.f32 0.0, %v1810
        %1812 = vmatmul.bf16.gmra.mxu0 %v1148
        %v1813 = vpop.f32.mrf.mxu0
        %v1814 = vadd.f32 0.0, %v1813
        %v1815 = vpop.f32.mrf.mxu0
        %v1816 = vadd.f32 0.0, %v1815
        %1817 = vmatmul.bf16.gmra.mxu0 %v1150
        %v1818 = vpop.f32.mrf.mxu0
        %v1819 = vadd.f32 0.0, %v1818
        %v1820 = vpop.f32.mrf.mxu0
        %v1821 = vadd.f32 0.0, %v1820
        %1822 = vmatmul.bf16.gmra.mxu0 %v1152
        %v1823 = vpop.f32.mrf.mxu0
        %v1824 = vadd.f32 0.0, %v1823
        %v1825 = vpop.f32.mrf.mxu0
        %v1826 = vadd.f32 0.0, %v1825
        %1827 = vmatmul.bf16.gmra.mxu0 %v1154
        %v1828 = vpop.f32.mrf.mxu0
        %v1829 = vadd.f32 0.0, %v1828
        %v1830 = vpop.f32.mrf.mxu0
        %v1831 = vadd.f32 0.0, %v1830
        %1832 = vmatmul.bf16.gmra.mxu0 %v1156
        %v1833 = vpop.f32.mrf.mxu0
        %v1834 = vadd.f32 0.0, %v1833
        %v1835 = vpop.f32.mrf.mxu0
        %v1836 = vadd.f32 0.0, %v1835
        %1837 = vmatmul.bf16.gmra.mxu0 %v1158
        %v1838 = vpop.f32.mrf.mxu0
        %v1839 = vadd.f32 0.0, %v1838
        %v1840 = vpop.f32.mrf.mxu0
        %v1841 = vadd.f32 0.0, %v1840
        %1842 = vdwg.mxu0
        %1843 = vmatpush.bf16.msra.mxu0 %v1509
        %1844 = vmatpush.bf16.msra.mxu0 %v1505
        %1845 = vmatpush.bf16.msra.mxu0 %v1501
        %1846 = vmatpush.bf16.msra.mxu0 %v1497
        %1847 = vmatpush.bf16.msra.mxu0 %v1493
        %1848 = vmatpush.bf16.msra.mxu0 %v1489
        %1849 = vmatpush.bf16.msra.mxu0 %v1485
        %1850 = vmatpush.bf16.msra.mxu0 %v1481
        %1851 = vmatmul.bf16.gmra.mxu0 %v1129
        %v1852 = vpop.f32.mrf.mxu0
        %v1853 = vadd.f32 %v1764, %v1852
        %v1854 = vpop.f32.mrf.mxu0
        %v1855 = vadd.f32 %v1766, %v1854
        %1856 = vmatmul.bf16.gmra.mxu0 %v1131
        %v1857 = vpop.f32.mrf.mxu0
        %v1858 = vadd.f32 %v1769, %v1857
        %v1859 = vpop.f32.mrf.mxu0
        %v1860 = vadd.f32 %v1771, %v1859
        %1861 = vmatmul.bf16.gmra.mxu0 %v1133
        %v1862 = vpop.f32.mrf.mxu0
        %v1863 = vadd.f32 %v1774, %v1862
        %v1864 = vpop.f32.mrf.mxu0
        %v1865 = vadd.f32 %v1776, %v1864
        %1866 = vmatmul.bf16.gmra.mxu0 %v1135
        %v1867 = vpop.f32.mrf.mxu0
        %v1868 = vadd.f32 %v1779, %v1867
        %v1869 = vpop.f32.mrf.mxu0
        %v1870 = vadd.f32 %v1781, %v1869
        %1871 = vmatmul.bf16.gmra.mxu0 %v1137
        %v1872 = vpop.f32.mrf.mxu0
        %v1873 = vadd.f32 %v1784, %v1872
        %v1874 = vpop.f32.mrf.mxu0
        %v1875 = vadd.f32 %v1786, %v1874
        %1876 = vmatmul.bf16.gmra.mxu0 %v1139
        %v1877 = vpop.f32.mrf.mxu0
        %v1878 = vadd.f32 %v1789, %v1877
        %v1879 = vpop.f32.mrf.mxu0
        %v1880 = vadd.f32 %v1791, %v1879
        %1881 = vmatmul.bf16.gmra.mxu0 %v1141
        %v1882 = vpop.f32.mrf.mxu0
        %v1883 = vadd.f32 %v1794, %v1882
        %v1884 = vpop.f32.mrf.mxu0
        %v1885 = vadd.f32 %v1796, %v1884
        %1886 = vmatmul.bf16.gmra.mxu0 %v1143
        %v1887 = vpop.f32.mrf.mxu0
        %v1888 = vadd.f32 %v1799, %v1887
        %v1889 = vpop.f32.mrf.mxu0
        %v1890 = vadd.f32 %v1801, %v1889
        %1891 = vmatmul.bf16.gmra.mxu0 %v1145
        %v1892 = vpop.f32.mrf.mxu0
        %v1893 = vadd.f32 %v1804, %v1892
        %v1894 = vpop.f32.mrf.mxu0
        %v1895 = vadd.f32 %v1806, %v1894
        %1896 = vmatmul.bf16.gmra.mxu0 %v1147
        %v1897 = vpop.f32.mrf.mxu0
        %v1898 = vadd.f32 %v1809, %v1897
        %v1899 = vpop.f32.mrf.mxu0
        %v1900 = vadd.f32 %v1811, %v1899
        %1901 = vmatmul.bf16.gmra.mxu0 %v1149
        %v1902 = vpop.f32.mrf.mxu0
        %v1903 = vadd.f32 %v1814, %v1902
        %v1904 = vpop.f32.mrf.mxu0
        %v1905 = vadd.f32 %v1816, %v1904
        %1906 = vmatmul.bf16.gmra.mxu0 %v1151
        %v1907 = vpop.f32.mrf.mxu0
        %v1908 = vadd.f32 %v1819, %v1907
        %v1909 = vpop.f32.mrf.mxu0
        %v1910 = vadd.f32 %v1821, %v1909
        %1911 = vmatmul.bf16.gmra.mxu0 %v1153
        %v1912 = vpop.f32.mrf.mxu0
        %v1913 = vadd.f32 %v1824, %v1912
        %v1914 = vpop.f32.mrf.mxu0
        %v1915 = vadd.f32 %v1826, %v1914
        %1916 = vmatmul.bf16.gmra.mxu0 %v1155
        %v1917 = vpop.f32.mrf.mxu0
        %v1918 = vadd.f32 %v1829, %v1917
        %v1919 = vpop.f32.mrf.mxu0
        %v1920 = vadd.f32 %v1831, %v1919
        %1921 = vmatmul.bf16.gmra.mxu0 %v1157
        %v1922 = vpop.f32.mrf.mxu0
        %v1923 = vadd.f32 %v1834, %v1922
        %v1924 = vpop.f32.mrf.mxu0
        %v1925 = vadd.f32 %v1836, %v1924
        %1926 = vmatmul.bf16.gmra.mxu0 %v1159
        %v1927 = vpop.f32.mrf.mxu0
        %v1928 = vadd.f32 %v1839, %v1927
        %v1929 = vpop.f32.mrf.mxu0
        %v1930 = vadd.f32 %v1841, %v1929
        %1931 = vdwg.mxu0
        %1932 = vmatpush.bf16.msra.mxu0 %v1478
        %1933 = vmatpush.bf16.msra.mxu0 %v1474
        %1934 = vmatpush.bf16.msra.mxu0 %v1470
        %1935 = vmatpush.bf16.msra.mxu0 %v1466
        %1936 = vmatpush.bf16.msra.mxu0 %v1462
        %1937 = vmatpush.bf16.msra.mxu0 %v1458
        %1938 = vmatpush.bf16.msra.mxu0 %v1454
        %1939 = vmatpush.bf16.msra.mxu0 %v1450
        %1940 = vmatmul.bf16.gmra.mxu0 %v1128
        %v1941 = vpop.f32.mrf.mxu0
        %v1942 = vadd.f32 0.0, %v1941
        %v1943 = vpop.f32.mrf.mxu0
        %v1944 = vadd.f32 0.0, %v1943
        %1945 = vmatmul.bf16.gmra.mxu0 %v1130
        %v1946 = vpop.f32.mrf.mxu0
        %v1947 = vadd.f32 0.0, %v1946
        %v1948 = vpop.f32.mrf.mxu0
        %v1949 = vadd.f32 0.0, %v1948
        %1950 = vmatmul.bf16.gmra.mxu0 %v1132
        %v1951 = vpop.f32.mrf.mxu0
        %v1952 = vadd.f32 0.0, %v1951
        %v1953 = vpop.f32.mrf.mxu0
        %v1954 = vadd.f32 0.0, %v1953
        %1955 = vmatmul.bf16.gmra.mxu0 %v1134
        %v1956 = vpop.f32.mrf.mxu0
        %v1957 = vadd.f32 0.0, %v1956
        %v1958 = vpop.f32.mrf.mxu0
        %v1959 = vadd.f32 0.0, %v1958
        %1960 = vmatmul.bf16.gmra.mxu0 %v1136
        %v1961 = vpop.f32.mrf.mxu0
        %v1962 = vadd.f32 0.0, %v1961
        %v1963 = vpop.f32.mrf.mxu0
        %v1964 = vadd.f32 0.0, %v1963
        %1965 = vmatmul.bf16.gmra.mxu0 %v1138
        %v1966 = vpop.f32.mrf.mxu0
        %v1967 = vadd.f32 0.0, %v1966
        %v1968 = vpop.f32.mrf.mxu0
        %v1969 = vadd.f32 0.0, %v1968
        %1970 = vmatmul.bf16.gmra.mxu0 %v1140
        %v1971 = vpop.f32.mrf.mxu0
        %v1972 = vadd.f32 0.0, %v1971
        %v1973 = vpop.f32.mrf.mxu0
        %v1974 = vadd.f32 0.0, %v1973
        %1975 = vmatmul.bf16.gmra.mxu0 %v1142
        %v1976 = vpop.f32.mrf.mxu0
        %v1977 = vadd.f32 0.0, %v1976
        %v1978 = vpop.f32.mrf.mxu0
        %v1979 = vadd.f32 0.0, %v1978
        %1980 = vmatmul.bf16.gmra.mxu0 %v1144
        %v1981 = vpop.f32.mrf.mxu0
        %v1982 = vadd.f32 0.0, %v1981
        %v1983 = vpop.f32.mrf.mxu0
        %v1984 = vadd.f32 0.0, %v1983
        %1985 = vmatmul.bf16.gmra.mxu0 %v1146
        %v1986 = vpop.f32.mrf.mxu0
        %v1987 = vadd.f32 0.0, %v1986
        %v1988 = vpop.f32.mrf.mxu0
        %v1989 = vadd.f32 0.0, %v1988
        %1990 = vmatmul.bf16.gmra.mxu0 %v1148
        %v1991 = vpop.f32.mrf.mxu0
        %v1992 = vadd.f32 0.0, %v1991
        %v1993 = vpop.f32.mrf.mxu0
        %v1994 = vadd.f32 0.0, %v1993
        %1995 = vmatmul.bf16.gmra.mxu0 %v1150
        %v1996 = vpop.f32.mrf.mxu0
        %v1997 = vadd.f32 0.0, %v1996
        %v1998 = vpop.f32.mrf.mxu0
        %v1999 = vadd.f32 0.0, %v1998
        %2000 = vmatmul.bf16.gmra.mxu0 %v1152
        %v2001 = vpop.f32.mrf.mxu0
        %v2002 = vadd.f32 0.0, %v2001
        %v2003 = vpop.f32.mrf.mxu0
        %v2004 = vadd.f32 0.0, %v2003
        %2005 = vmatmul.bf16.gmra.mxu0 %v1154
        %v2006 = vpop.f32.mrf.mxu0
        %v2007 = vadd.f32 0.0, %v2006
        %v2008 = vpop.f32.mrf.mxu0
        %v2009 = vadd.f32 0.0, %v2008
        %2010 = vmatmul.bf16.gmra.mxu0 %v1156
        %v2011 = vpop.f32.mrf.mxu0
        %v2012 = vadd.f32 0.0, %v2011
        %v2013 = vpop.f32.mrf.mxu0
        %v2014 = vadd.f32 0.0, %v2013
        %2015 = vmatmul.bf16.gmra.mxu0 %v1158
        %v2016 = vpop.f32.mrf.mxu0
        %v2017 = vadd.f32 0.0, %v2016
        %v2018 = vpop.f32.mrf.mxu0
        %v2019 = vadd.f32 0.0, %v2018
        %2020 = vdwg.mxu0
        %2021 = vmatpush.bf16.msra.mxu0 %v1510
        %2022 = vmatpush.bf16.msra.mxu0 %v1506
        %2023 = vmatpush.bf16.msra.mxu0 %v1502
        %2024 = vmatpush.bf16.msra.mxu0 %v1498
        %2025 = vmatpush.bf16.msra.mxu0 %v1494
        %2026 = vmatpush.bf16.msra.mxu0 %v1490
        %2027 = vmatpush.bf16.msra.mxu0 %v1486
        %2028 = vmatpush.bf16.msra.mxu0 %v1482
        %2029 = vmatmul.bf16.gmra.mxu0 %v1129
        %v2030 = vpop.f32.mrf.mxu0
        %v2031 = vadd.f32 %v1942, %v2030
        %v2032 = vpop.f32.mrf.mxu0
        %v2033 = vadd.f32 %v1944, %v2032
        %2034 = vmatmul.bf16.gmra.mxu0 %v1131
        %v2035 = vpop.f32.mrf.mxu0
        %v2036 = vadd.f32 %v1947, %v2035
        %v2037 = vpop.f32.mrf.mxu0
        %v2038 = vadd.f32 %v1949, %v2037
        %2039 = vmatmul.bf16.gmra.mxu0 %v1133
        %v2040 = vpop.f32.mrf.mxu0
        %v2041 = vadd.f32 %v1952, %v2040
        %v2042 = vpop.f32.mrf.mxu0
        %v2043 = vadd.f32 %v1954, %v2042
        %2044 = vmatmul.bf16.gmra.mxu0 %v1135
        %v2045 = vpop.f32.mrf.mxu0
        %v2046 = vadd.f32 %v1957, %v2045
        %v2047 = vpop.f32.mrf.mxu0
        %v2048 = vadd.f32 %v1959, %v2047
        %2049 = vmatmul.bf16.gmra.mxu0 %v1137
        %v2050 = vpop.f32.mrf.mxu0
        %v2051 = vadd.f32 %v1962, %v2050
        %v2052 = vpop.f32.mrf.mxu0
        %v2053 = vadd.f32 %v1964, %v2052
        %2054 = vmatmul.bf16.gmra.mxu0 %v1139
        %v2055 = vpop.f32.mrf.mxu0
        %v2056 = vadd.f32 %v1967, %v2055
        %v2057 = vpop.f32.mrf.mxu0
        %v2058 = vadd.f32 %v1969, %v2057
        %2059 = vmatmul.bf16.gmra.mxu0 %v1141
        %v2060 = vpop.f32.mrf.mxu0
        %v2061 = vadd.f32 %v1972, %v2060
        %v2062 = vpop.f32.mrf.mxu0
        %v2063 = vadd.f32 %v1974, %v2062
        %2064 = vmatmul.bf16.gmra.mxu0 %v1143
        %v2065 = vpop.f32.mrf.mxu0
        %v2066 = vadd.f32 %v1977, %v2065
        %v2067 = vpop.f32.mrf.mxu0
        %v2068 = vadd.f32 %v1979, %v2067
        %2069 = vmatmul.bf16.gmra.mxu0 %v1145
        %v2070 = vpop.f32.mrf.mxu0
        %v2071 = vadd.f32 %v1982, %v2070
        %v2072 = vpop.f32.mrf.mxu0
        %v2073 = vadd.f32 %v1984, %v2072
        %2074 = vmatmul.bf16.gmra.mxu0 %v1147
        %v2075 = vpop.f32.mrf.mxu0
        %v2076 = vadd.f32 %v1987, %v2075
        %v2077 = vpop.f32.mrf.mxu0
        %v2078 = vadd.f32 %v1989, %v2077
        %2079 = vmatmul.bf16.gmra.mxu0 %v1149
        %v2080 = vpop.f32.mrf.mxu0
        %v2081 = vadd.f32 %v1992, %v2080
        %v2082 = vpop.f32.mrf.mxu0
        %v2083 = vadd.f32 %v1994, %v2082
        %2084 = vmatmul.bf16.gmra.mxu0 %v1151
        %v2085 = vpop.f32.mrf.mxu0
        %v2086 = vadd.f32 %v1997, %v2085
        %v2087 = vpop.f32.mrf.mxu0
        %v2088 = vadd.f32 %v1999, %v2087
        %2089 = vmatmul.bf16.gmra.mxu0 %v1153
        %v2090 = vpop.f32.mrf.mxu0
        %v2091 = vadd.f32 %v2002, %v2090
        %v2092 = vpop.f32.mrf.mxu0
        %v2093 = vadd.f32 %v2004, %v2092
        %2094 = vmatmul.bf16.gmra.mxu0 %v1155
        %v2095 = vpop.f32.mrf.mxu0
        %v2096 = vadd.f32 %v2007, %v2095
        %v2097 = vpop.f32.mrf.mxu0
        %v2098 = vadd.f32 %v2009, %v2097
        %2099 = vmatmul.bf16.gmra.mxu0 %v1157
        %v2100 = vpop.f32.mrf.mxu0
        %v2101 = vadd.f32 %v2012, %v2100
        %v2102 = vpop.f32.mrf.mxu0
        %v2103 = vadd.f32 %v2014, %v2102
        %2104 = vmatmul.bf16.gmra.mxu0 %v1159
        %v2105 = vpop.f32.mrf.mxu0
        %v2106 = vadd.f32 %v2017, %v2105
        %v2107 = vpop.f32.mrf.mxu0
        %v2108 = vadd.f32 %v2019, %v2107
        %2109 = vdwg.mxu0
        %2110 = vmatpush.bf16.msra.mxu0 %v1479
        %2111 = vmatpush.bf16.msra.mxu0 %v1475
        %2112 = vmatpush.bf16.msra.mxu0 %v1471
        %2113 = vmatpush.bf16.msra.mxu0 %v1467
        %2114 = vmatpush.bf16.msra.mxu0 %v1463
        %2115 = vmatpush.bf16.msra.mxu0 %v1459
        %2116 = vmatpush.bf16.msra.mxu0 %v1455
        %2117 = vmatpush.bf16.msra.mxu0 %v1451
        %2118 = vmatmul.bf16.gmra.mxu0 %v1128
        %v2119 = vpop.f32.mrf.mxu0
        %v2120 = vadd.f32 0.0, %v2119
        %v2121 = vpop.f32.mrf.mxu0
        %v2122 = vadd.f32 0.0, %v2121
        %2123 = vmatmul.bf16.gmra.mxu0 %v1130
        %v2124 = vpop.f32.mrf.mxu0
        %v2125 = vadd.f32 0.0, %v2124
        %v2126 = vpop.f32.mrf.mxu0
        %v2127 = vadd.f32 0.0, %v2126
        %2128 = vmatmul.bf16.gmra.mxu0 %v1132
        %v2129 = vpop.f32.mrf.mxu0
        %v2130 = vadd.f32 0.0, %v2129
        %v2131 = vpop.f32.mrf.mxu0
        %v2132 = vadd.f32 0.0, %v2131
        %2133 = vmatmul.bf16.gmra.mxu0 %v1134
        %v2134 = vpop.f32.mrf.mxu0
        %v2135 = vadd.f32 0.0, %v2134
        %v2136 = vpop.f32.mrf.mxu0
        %v2137 = vadd.f32 0.0, %v2136
        %2138 = vmatmul.bf16.gmra.mxu0 %v1136
        %v2139 = vpop.f32.mrf.mxu0
        %v2140 = vadd.f32 0.0, %v2139
        %v2141 = vpop.f32.mrf.mxu0
        %v2142 = vadd.f32 0.0, %v2141
        %2143 = vmatmul.bf16.gmra.mxu0 %v1138
        %v2144 = vpop.f32.mrf.mxu0
        %v2145 = vadd.f32 0.0, %v2144
        %v2146 = vpop.f32.mrf.mxu0
        %v2147 = vadd.f32 0.0, %v2146
        %2148 = vmatmul.bf16.gmra.mxu0 %v1140
        %v2149 = vpop.f32.mrf.mxu0
        %v2150 = vadd.f32 0.0, %v2149
        %v2151 = vpop.f32.mrf.mxu0
        %v2152 = vadd.f32 0.0, %v2151
        %2153 = vmatmul.bf16.gmra.mxu0 %v1142
        %v2154 = vpop.f32.mrf.mxu0
        %v2155 = vadd.f32 0.0, %v2154
        %v2156 = vpop.f32.mrf.mxu0
        %v2157 = vadd.f32 0.0, %v2156
        %2158 = vmatmul.bf16.gmra.mxu0 %v1144
        %v2159 = vpop.f32.mrf.mxu0
        %v2160 = vadd.f32 0.0, %v2159
        %v2161 = vpop.f32.mrf.mxu0
        %v2162 = vadd.f32 0.0, %v2161
        %2163 = vmatmul.bf16.gmra.mxu0 %v1146
        %v2164 = vpop.f32.mrf.mxu0
        %v2165 = vadd.f32 0.0, %v2164
        %v2166 = vpop.f32.mrf.mxu0
        %v2167 = vadd.f32 0.0, %v2166
        %2168 = vmatmul.bf16.gmra.mxu0 %v1148
        %v2169 = vpop.f32.mrf.mxu0
        %v2170 = vadd.f32 0.0, %v2169
        %v2171 = vpop.f32.mrf.mxu0
        %v2172 = vadd.f32 0.0, %v2171
        %2173 = vmatmul.bf16.gmra.mxu0 %v1150
        %v2174 = vpop.f32.mrf.mxu0
        %v2175 = vadd.f32 0.0, %v2174
        %v2176 = vpop.f32.mrf.mxu0
        %v2177 = vadd.f32 0.0, %v2176
        %2178 = vmatmul.bf16.gmra.mxu0 %v1152
        %v2179 = vpop.f32.mrf.mxu0
        %v2180 = vadd.f32 0.0, %v2179
        %v2181 = vpop.f32.mrf.mxu0
        %v2182 = vadd.f32 0.0, %v2181
        %2183 = vmatmul.bf16.gmra.mxu0 %v1154
        %v2184 = vpop.f32.mrf.mxu0
        %v2185 = vadd.f32 0.0, %v2184
        %v2186 = vpop.f32.mrf.mxu0
        %v2187 = vadd.f32 0.0, %v2186
        %2188 = vmatmul.bf16.gmra.mxu0 %v1156
        %v2189 = vpop.f32.mrf.mxu0
        %v2190 = vadd.f32 0.0, %v2189
        %v2191 = vpop.f32.mrf.mxu0
        %v2192 = vadd.f32 0.0, %v2191
        %2193 = vmatmul.bf16.gmra.mxu0 %v1158
        %v2194 = vpop.f32.mrf.mxu0
        %v2195 = vadd.f32 0.0, %v2194
        %v2196 = vpop.f32.mrf.mxu0
        %v2197 = vadd.f32 0.0, %v2196
        %2198 = vdwg.mxu0
        %2199 = vmatpush.bf16.msra.mxu0 %v1511
        %2200 = vmatpush.bf16.msra.mxu0 %v1507
        %2201 = vmatpush.bf16.msra.mxu0 %v1503
        %2202 = vmatpush.bf16.msra.mxu0 %v1499
        %2203 = vmatpush.bf16.msra.mxu0 %v1495
        %2204 = vmatpush.bf16.msra.mxu0 %v1491
        %2205 = vmatpush.bf16.msra.mxu0 %v1487
        %2206 = vmatpush.bf16.msra.mxu0 %v1483
        %2207 = vmatmul.bf16.gmra.mxu0 %v1129
        %v2208 = vpop.f32.mrf.mxu0
        %v2209 = vadd.f32 %v2120, %v2208
        %v2210 = vpop.f32.mrf.mxu0
        %v2211 = vadd.f32 %v2122, %v2210
        %2212 = vmatmul.bf16.gmra.mxu0 %v1131
        %v2213 = vpop.f32.mrf.mxu0
        %v2214 = vadd.f32 %v2125, %v2213
        %v2215 = vpop.f32.mrf.mxu0
        %v2216 = vadd.f32 %v2127, %v2215
        %2217 = vmatmul.bf16.gmra.mxu0 %v1133
        %v2218 = vpop.f32.mrf.mxu0
        %v2219 = vadd.f32 %v2130, %v2218
        %v2220 = vpop.f32.mrf.mxu0
        %v2221 = vadd.f32 %v2132, %v2220
        %2222 = vmatmul.bf16.gmra.mxu0 %v1135
        %v2223 = vpop.f32.mrf.mxu0
        %v2224 = vadd.f32 %v2135, %v2223
        %v2225 = vpop.f32.mrf.mxu0
        %v2226 = vadd.f32 %v2137, %v2225
        %2227 = vmatmul.bf16.gmra.mxu0 %v1137
        %v2228 = vpop.f32.mrf.mxu0
        %v2229 = vadd.f32 %v2140, %v2228
        %v2230 = vpop.f32.mrf.mxu0
        %v2231 = vadd.f32 %v2142, %v2230
        %2232 = vmatmul.bf16.gmra.mxu0 %v1139
        %v2233 = vpop.f32.mrf.mxu0
        %v2234 = vadd.f32 %v2145, %v2233
        %v2235 = vpop.f32.mrf.mxu0
        %v2236 = vadd.f32 %v2147, %v2235
        %2237 = vmatmul.bf16.gmra.mxu0 %v1141
        %v2238 = vpop.f32.mrf.mxu0
        %v2239 = vadd.f32 %v2150, %v2238
        %v2240 = vpop.f32.mrf.mxu0
        %v2241 = vadd.f32 %v2152, %v2240
        %2242 = vmatmul.bf16.gmra.mxu0 %v1143
        %v2243 = vpop.f32.mrf.mxu0
        %v2244 = vadd.f32 %v2155, %v2243
        %v2245 = vpop.f32.mrf.mxu0
        %v2246 = vadd.f32 %v2157, %v2245
        %2247 = vmatmul.bf16.gmra.mxu0 %v1145
        %v2248 = vpop.f32.mrf.mxu0
        %v2249 = vadd.f32 %v2160, %v2248
        %v2250 = vpop.f32.mrf.mxu0
        %v2251 = vadd.f32 %v2162, %v2250
        %2252 = vmatmul.bf16.gmra.mxu0 %v1147
        %v2253 = vpop.f32.mrf.mxu0
        %v2254 = vadd.f32 %v2165, %v2253
        %v2255 = vpop.f32.mrf.mxu0
        %v2256 = vadd.f32 %v2167, %v2255
        %2257 = vmatmul.bf16.gmra.mxu0 %v1149
        %v2258 = vpop.f32.mrf.mxu0
        %v2259 = vadd.f32 %v2170, %v2258
        %v2260 = vpop.f32.mrf.mxu0
        %v2261 = vadd.f32 %v2172, %v2260
        %2262 = vmatmul.bf16.gmra.mxu0 %v1151
        %v2263 = vpop.f32.mrf.mxu0
        %v2264 = vadd.f32 %v2175, %v2263
        %v2265 = vpop.f32.mrf.mxu0
        %v2266 = vadd.f32 %v2177, %v2265
        %2267 = vmatmul.bf16.gmra.mxu0 %v1153
        %v2268 = vpop.f32.mrf.mxu0
        %v2269 = vadd.f32 %v2180, %v2268
        %v2270 = vpop.f32.mrf.mxu0
        %v2271 = vadd.f32 %v2182, %v2270
        %2272 = vmatmul.bf16.gmra.mxu0 %v1155
        %v2273 = vpop.f32.mrf.mxu0
        %v2274 = vadd.f32 %v2185, %v2273
        %v2275 = vpop.f32.mrf.mxu0
        %v2276 = vadd.f32 %v2187, %v2275
        %2277 = vmatmul.bf16.gmra.mxu0 %v1157
        %v2278 = vpop.f32.mrf.mxu0
        %v2279 = vadd.f32 %v2190, %v2278
        %v2280 = vpop.f32.mrf.mxu0
        %v2281 = vadd.f32 %v2192, %v2280
        %2282 = vmatmul.bf16.gmra.mxu0 %v1159
        %v2283 = vpop.f32.mrf.mxu0
        %v2284 = vadd.f32 %v2195, %v2283
        %v2285 = vpop.f32.mrf.mxu0
        %v2286 = vadd.f32 %v2197, %v2285
        %2287 = vdwg.mxu0
        %v2320 = vunpack.c.l.b16 %v1160
        %v2321 = vunpack.c.h.b16 %v1160
        %v2322 = vunpack.c.l.b16 %v1161
        %v2323 = vunpack.c.h.b16 %v1161
        %v2324 = vunpack.c.l.b16 %v1162
        %v2325 = vunpack.c.h.b16 %v1162
        %v2326 = vunpack.c.l.b16 %v1163
        %v2327 = vunpack.c.h.b16 %v1163
        %v2328 = vunpack.c.l.b16 %v1164
        %v2329 = vunpack.c.h.b16 %v1164
        %v2330 = vunpack.c.l.b16 %v1165
        %v2331 = vunpack.c.h.b16 %v1165
        %v2332 = vunpack.c.l.b16 %v1166
        %v2333 = vunpack.c.h.b16 %v1166
        %v2334 = vunpack.c.l.b16 %v1167
        %v2335 = vunpack.c.h.b16 %v1167
        %v2336 = vunpack.c.l.b16 %v1168
        %v2337 = vunpack.c.h.b16 %v1168
        %v2338 = vunpack.c.l.b16 %v1169
        %v2339 = vunpack.c.h.b16 %v1169
        %v2340 = vunpack.c.l.b16 %v1170
        %v2341 = vunpack.c.h.b16 %v1170
        %v2342 = vunpack.c.l.b16 %v1171
        %v2343 = vunpack.c.h.b16 %v1171
        %v2344 = vunpack.c.l.b16 %v1172
        %v2345 = vunpack.c.h.b16 %v1172
        %v2346 = vunpack.c.l.b16 %v1173
        %v2347 = vunpack.c.h.b16 %v1173
        %v2348 = vunpack.c.l.b16 %v1174
        %v2349 = vunpack.c.h.b16 %v1174
        %v2350 = vunpack.c.l.b16 %v1175
        %v2351 = vunpack.c.h.b16 %v1175
        %v2352 = vunpack.c.l.b16 %v1176
        %v2353 = vunpack.c.h.b16 %v1176
        %v2354 = vunpack.c.l.b16 %v1177
        %v2355 = vunpack.c.h.b16 %v1177
        %v2356 = vunpack.c.l.b16 %v1178
        %v2357 = vunpack.c.h.b16 %v1178
        %v2358 = vunpack.c.l.b16 %v1179
        %v2359 = vunpack.c.h.b16 %v1179
        %v2360 = vunpack.c.l.b16 %v1180
        %v2361 = vunpack.c.h.b16 %v1180
        %v2362 = vunpack.c.l.b16 %v1181
        %v2363 = vunpack.c.h.b16 %v1181
        %v2364 = vunpack.c.l.b16 %v1182
        %v2365 = vunpack.c.h.b16 %v1182
        %v2366 = vunpack.c.l.b16 %v1183
        %v2367 = vunpack.c.h.b16 %v1183
        %v2368 = vunpack.c.l.b16 %v1184
        %v2369 = vunpack.c.h.b16 %v1184
        %v2370 = vunpack.c.l.b16 %v1185
        %v2371 = vunpack.c.h.b16 %v1185
        %v2372 = vunpack.c.l.b16 %v1186
        %v2373 = vunpack.c.h.b16 %v1186
        %v2374 = vunpack.c.l.b16 %v1187
        %v2375 = vunpack.c.h.b16 %v1187
        %v2376 = vunpack.c.l.b16 %v1188
        %v2377 = vunpack.c.h.b16 %v1188
        %v2378 = vunpack.c.l.b16 %v1189
        %v2379 = vunpack.c.h.b16 %v1189
        %v2380 = vunpack.c.l.b16 %v1190
        %v2381 = vunpack.c.h.b16 %v1190
        %v2382 = vunpack.c.l.b16 %v1191
        %v2383 = vunpack.c.h.b16 %v1191
        %v2384 = vpack.c.b16 %v2324, %v2320
        %v2385 = vpack.c.b16 %v2325, %v2321
        %v2386 = vpack.c.b16 %v2326, %v2322
        %v2387 = vpack.c.b16 %v2327, %v2323
        %v2388 = vpack.c.b16 %v2332, %v2328
        %v2389 = vpack.c.b16 %v2333, %v2329
        %v2390 = vpack.c.b16 %v2334, %v2330
        %v2391 = vpack.c.b16 %v2335, %v2331
        %v2392 = vpack.c.b16 %v2340, %v2336
        %v2393 = vpack.c.b16 %v2341, %v2337
        %v2394 = vpack.c.b16 %v2342, %v2338
        %v2395 = vpack.c.b16 %v2343, %v2339
        %v2396 = vpack.c.b16 %v2348, %v2344
        %v2397 = vpack.c.b16 %v2349, %v2345
        %v2398 = vpack.c.b16 %v2350, %v2346
        %v2399 = vpack.c.b16 %v2351, %v2347
        %v2400 = vpack.c.b16 %v2356, %v2352
        %v2401 = vpack.c.b16 %v2357, %v2353
        %v2402 = vpack.c.b16 %v2358, %v2354
        %v2403 = vpack.c.b16 %v2359, %v2355
        %v2404 = vpack.c.b16 %v2364, %v2360
        %v2405 = vpack.c.b16 %v2365, %v2361
        %v2406 = vpack.c.b16 %v2366, %v2362
        %v2407 = vpack.c.b16 %v2367, %v2363
        %v2408 = vpack.c.b16 %v2372, %v2368
        %v2409 = vpack.c.b16 %v2373, %v2369
        %v2410 = vpack.c.b16 %v2374, %v2370
        %v2411 = vpack.c.b16 %v2375, %v2371
        %v2412 = vpack.c.b16 %v2380, %v2376
        %v2413 = vpack.c.b16 %v2381, %v2377
        %v2414 = vpack.c.b16 %v2382, %v2378
        %v2415 = vpack.c.b16 %v2383, %v2379
        %2448 = vmatpush.bf16.msra.mxu0 %v2412
        %2449 = vmatpush.bf16.msra.mxu0 %v2408
        %2450 = vmatpush.bf16.msra.mxu0 %v2404
        %2451 = vmatpush.bf16.msra.mxu0 %v2400
        %2452 = vmatpush.bf16.msra.mxu0 %v2396
        %2453 = vmatpush.bf16.msra.mxu0 %v2392
        %2454 = vmatpush.bf16.msra.mxu0 %v2388
        %2455 = vmatpush.bf16.msra.mxu0 %v2384
        %2456 = vmatmul.bf16.gmra.mxu0 %v768
        %v2457 = vpop.f32.mrf.mxu0
        %v2458 = vadd.f32 %v1675, %v2457
        %v2459 = vpop.f32.mrf.mxu0
        %v2460 = vadd.f32 %v1677, %v2459
        %2461 = vmatmul.bf16.gmra.mxu0 %v769
        %v2462 = vpop.f32.mrf.mxu0
        %v2463 = vadd.f32 %v1680, %v2462
        %v2464 = vpop.f32.mrf.mxu0
        %v2465 = vadd.f32 %v1682, %v2464
        %2466 = vmatmul.bf16.gmra.mxu0 %v770
        %v2467 = vpop.f32.mrf.mxu0
        %v2468 = vadd.f32 %v1685, %v2467
        %v2469 = vpop.f32.mrf.mxu0
        %v2470 = vadd.f32 %v1687, %v2469
        %2471 = vmatmul.bf16.gmra.mxu0 %v771
        %v2472 = vpop.f32.mrf.mxu0
        %v2473 = vadd.f32 %v1690, %v2472
        %v2474 = vpop.f32.mrf.mxu0
        %v2475 = vadd.f32 %v1692, %v2474
        %2476 = vmatmul.bf16.gmra.mxu0 %v772
        %v2477 = vpop.f32.mrf.mxu0
        %v2478 = vadd.f32 %v1695, %v2477
        %v2479 = vpop.f32.mrf.mxu0
        %v2480 = vadd.f32 %v1697, %v2479
        %2481 = vmatmul.bf16.gmra.mxu0 %v773
        %v2482 = vpop.f32.mrf.mxu0
        %v2483 = vadd.f32 %v1700, %v2482
        %v2484 = vpop.f32.mrf.mxu0
        %v2485 = vadd.f32 %v1702, %v2484
        %2486 = vmatmul.bf16.gmra.mxu0 %v774
        %v2487 = vpop.f32.mrf.mxu0
        %v2488 = vadd.f32 %v1705, %v2487
        %v2489 = vpop.f32.mrf.mxu0
        %v2490 = vadd.f32 %v1707, %v2489
        %2491 = vmatmul.bf16.gmra.mxu0 %v775
        %v2492 = vpop.f32.mrf.mxu0
        %v2493 = vadd.f32 %v1710, %v2492
        %v2494 = vpop.f32.mrf.mxu0
        %v2495 = vadd.f32 %v1712, %v2494
        %2496 = vmatmul.bf16.gmra.mxu0 %v776
        %v2497 = vpop.f32.mrf.mxu0
        %v2498 = vadd.f32 %v1715, %v2497
        %v2499 = vpop.f32.mrf.mxu0
        %v2500 = vadd.f32 %v1717, %v2499
        %2501 = vmatmul.bf16.gmra.mxu0 %v777
        %v2502 = vpop.f32.mrf.mxu0
        %v2503 = vadd.f32 %v1720, %v2502
        %v2504 = vpop.f32.mrf.mxu0
        %v2505 = vadd.f32 %v1722, %v2504
        %2506 = vmatmul.bf16.gmra.mxu0 %v778
        %v2507 = vpop.f32.mrf.mxu0
        %v2508 = vadd.f32 %v1725, %v2507
        %v2509 = vpop.f32.mrf.mxu0
        %v2510 = vadd.f32 %v1727, %v2509
        %2511 = vmatmul.bf16.gmra.mxu0 %v779
        %v2512 = vpop.f32.mrf.mxu0
        %v2513 = vadd.f32 %v1730, %v2512
        %v2514 = vpop.f32.mrf.mxu0
        %v2515 = vadd.f32 %v1732, %v2514
        %2516 = vmatmul.bf16.gmra.mxu0 %v780
        %v2517 = vpop.f32.mrf.mxu0
        %v2518 = vadd.f32 %v1735, %v2517
        %v2519 = vpop.f32.mrf.mxu0
        %v2520 = vadd.f32 %v1737, %v2519
        %2521 = vmatmul.bf16.gmra.mxu0 %v781
        %v2522 = vpop.f32.mrf.mxu0
        %v2523 = vadd.f32 %v1740, %v2522
        %v2524 = vpop.f32.mrf.mxu0
        %v2525 = vadd.f32 %v1742, %v2524
        %2526 = vmatmul.bf16.gmra.mxu0 %v782
        %v2527 = vpop.f32.mrf.mxu0
        %v2528 = vadd.f32 %v1745, %v2527
        %v2529 = vpop.f32.mrf.mxu0
        %v2530 = vadd.f32 %v1747, %v2529
        %2531 = vmatmul.bf16.gmra.mxu0 %v783
        %v2532 = vpop.f32.mrf.mxu0
        %v2533 = vadd.f32 %v1750, %v2532
        %v2534 = vpop.f32.mrf.mxu0
        %v2535 = vadd.f32 %v1752, %v2534
        %2536 = vdwg.mxu0
        %2537 = vmatpush.bf16.msra.mxu0 %v2413
        %2538 = vmatpush.bf16.msra.mxu0 %v2409
        %2539 = vmatpush.bf16.msra.mxu0 %v2405
        %2540 = vmatpush.bf16.msra.mxu0 %v2401
        %2541 = vmatpush.bf16.msra.mxu0 %v2397
        %2542 = vmatpush.bf16.msra.mxu0 %v2393
        %2543 = vmatpush.bf16.msra.mxu0 %v2389
        %2544 = vmatpush.bf16.msra.mxu0 %v2385
        %2545 = vmatmul.bf16.gmra.mxu0 %v768
        %v2546 = vpop.f32.mrf.mxu0
        %v2547 = vadd.f32 %v1853, %v2546
        %v2548 = vpop.f32.mrf.mxu0
        %v2549 = vadd.f32 %v1855, %v2548
        %2550 = vmatmul.bf16.gmra.mxu0 %v769
        %v2551 = vpop.f32.mrf.mxu0
        %v2552 = vadd.f32 %v1858, %v2551
        %v2553 = vpop.f32.mrf.mxu0
        %v2554 = vadd.f32 %v1860, %v2553
        %2555 = vmatmul.bf16.gmra.mxu0 %v770
        %v2556 = vpop.f32.mrf.mxu0
        %v2557 = vadd.f32 %v1863, %v2556
        %v2558 = vpop.f32.mrf.mxu0
        %v2559 = vadd.f32 %v1865, %v2558
        %2560 = vmatmul.bf16.gmra.mxu0 %v771
        %v2561 = vpop.f32.mrf.mxu0
        %v2562 = vadd.f32 %v1868, %v2561
        %v2563 = vpop.f32.mrf.mxu0
        %v2564 = vadd.f32 %v1870, %v2563
        %2565 = vmatmul.bf16.gmra.mxu0 %v772
        %v2566 = vpop.f32.mrf.mxu0
        %v2567 = vadd.f32 %v1873, %v2566
        %v2568 = vpop.f32.mrf.mxu0
        %v2569 = vadd.f32 %v1875, %v2568
        %2570 = vmatmul.bf16.gmra.mxu0 %v773
        %v2571 = vpop.f32.mrf.mxu0
        %v2572 = vadd.f32 %v1878, %v2571
        %v2573 = vpop.f32.mrf.mxu0
        %v2574 = vadd.f32 %v1880, %v2573
        %2575 = vmatmul.bf16.gmra.mxu0 %v774
        %v2576 = vpop.f32.mrf.mxu0
        %v2577 = vadd.f32 %v1883, %v2576
        %v2578 = vpop.f32.mrf.mxu0
        %v2579 = vadd.f32 %v1885, %v2578
        %2580 = vmatmul.bf16.gmra.mxu0 %v775
        %v2581 = vpop.f32.mrf.mxu0
        %v2582 = vadd.f32 %v1888, %v2581
        %v2583 = vpop.f32.mrf.mxu0
        %v2584 = vadd.f32 %v1890, %v2583
        %2585 = vmatmul.bf16.gmra.mxu0 %v776
        %v2586 = vpop.f32.mrf.mxu0
        %v2587 = vadd.f32 %v1893, %v2586
        %v2588 = vpop.f32.mrf.mxu0
        %v2589 = vadd.f32 %v1895, %v2588
        %2590 = vmatmul.bf16.gmra.mxu0 %v777
        %v2591 = vpop.f32.mrf.mxu0
        %v2592 = vadd.f32 %v1898, %v2591
        %v2593 = vpop.f32.mrf.mxu0
        %v2594 = vadd.f32 %v1900, %v2593
        %2595 = vmatmul.bf16.gmra.mxu0 %v778
        %v2596 = vpop.f32.mrf.mxu0
        %v2597 = vadd.f32 %v1903, %v2596
        %v2598 = vpop.f32.mrf.mxu0
        %v2599 = vadd.f32 %v1905, %v2598
        %2600 = vmatmul.bf16.gmra.mxu0 %v779
        %v2601 = vpop.f32.mrf.mxu0
        %v2602 = vadd.f32 %v1908, %v2601
        %v2603 = vpop.f32.mrf.mxu0
        %v2604 = vadd.f32 %v1910, %v2603
        %2605 = vmatmul.bf16.gmra.mxu0 %v780
        %v2606 = vpop.f32.mrf.mxu0
        %v2607 = vadd.f32 %v1913, %v2606
        %v2608 = vpop.f32.mrf.mxu0
        %v2609 = vadd.f32 %v1915, %v2608
        %2610 = vmatmul.bf16.gmra.mxu0 %v781
        %v2611 = vpop.f32.mrf.mxu0
        %v2612 = vadd.f32 %v1918, %v2611
        %v2613 = vpop.f32.mrf.mxu0
        %v2614 = vadd.f32 %v1920, %v2613
        %2615 = vmatmul.bf16.gmra.mxu0 %v782
        %v2616 = vpop.f32.mrf.mxu0
        %v2617 = vadd.f32 %v1923, %v2616
        %v2618 = vpop.f32.mrf.mxu0
        %v2619 = vadd.f32 %v1925, %v2618
        %2620 = vmatmul.bf16.gmra.mxu0 %v783
        %v2621 = vpop.f32.mrf.mxu0
        %v2622 = vadd.f32 %v1928, %v2621
        %v2623 = vpop.f32.mrf.mxu0
        %v2624 = vadd.f32 %v1930, %v2623
        %2625 = vdwg.mxu0
        %2626 = vmatpush.bf16.msra.mxu0 %v2414
        %2627 = vmatpush.bf16.msra.mxu0 %v2410
        %2628 = vmatpush.bf16.msra.mxu0 %v2406
        %2629 = vmatpush.bf16.msra.mxu0 %v2402
        %2630 = vmatpush.bf16.msra.mxu0 %v2398
        %2631 = vmatpush.bf16.msra.mxu0 %v2394
        %2632 = vmatpush.bf16.msra.mxu0 %v2390
        %2633 = vmatpush.bf16.msra.mxu0 %v2386
        %2634 = vmatmul.bf16.gmra.mxu0 %v768
        %v2635 = vpop.f32.mrf.mxu0
        %v2636 = vadd.f32 %v2031, %v2635
        %v2637 = vpop.f32.mrf.mxu0
        %v2638 = vadd.f32 %v2033, %v2637
        %2639 = vmatmul.bf16.gmra.mxu0 %v769
        %v2640 = vpop.f32.mrf.mxu0
        %v2641 = vadd.f32 %v2036, %v2640
        %v2642 = vpop.f32.mrf.mxu0
        %v2643 = vadd.f32 %v2038, %v2642
        %2644 = vmatmul.bf16.gmra.mxu0 %v770
        %v2645 = vpop.f32.mrf.mxu0
        %v2646 = vadd.f32 %v2041, %v2645
        %v2647 = vpop.f32.mrf.mxu0
        %v2648 = vadd.f32 %v2043, %v2647
        %2649 = vmatmul.bf16.gmra.mxu0 %v771
        %v2650 = vpop.f32.mrf.mxu0
        %v2651 = vadd.f32 %v2046, %v2650
        %v2652 = vpop.f32.mrf.mxu0
        %v2653 = vadd.f32 %v2048, %v2652
        %2654 = vmatmul.bf16.gmra.mxu0 %v772
        %v2655 = vpop.f32.mrf.mxu0
        %v2656 = vadd.f32 %v2051, %v2655
        %v2657 = vpop.f32.mrf.mxu0
        %v2658 = vadd.f32 %v2053, %v2657
        %2659 = vmatmul.bf16.gmra.mxu0 %v773
        %v2660 = vpop.f32.mrf.mxu0
        %v2661 = vadd.f32 %v2056, %v2660
        %v2662 = vpop.f32.mrf.mxu0
        %v2663 = vadd.f32 %v2058, %v2662
        %2664 = vmatmul.bf16.gmra.mxu0 %v774
        %v2665 = vpop.f32.mrf.mxu0
        %v2666 = vadd.f32 %v2061, %v2665
        %v2667 = vpop.f32.mrf.mxu0
        %v2668 = vadd.f32 %v2063, %v2667
        %2669 = vmatmul.bf16.gmra.mxu0 %v775
        %v2670 = vpop.f32.mrf.mxu0
        %v2671 = vadd.f32 %v2066, %v2670
        %v2672 = vpop.f32.mrf.mxu0
        %v2673 = vadd.f32 %v2068, %v2672
        %2674 = vmatmul.bf16.gmra.mxu0 %v776
        %v2675 = vpop.f32.mrf.mxu0
        %v2676 = vadd.f32 %v2071, %v2675
        %v2677 = vpop.f32.mrf.mxu0
        %v2678 = vadd.f32 %v2073, %v2677
        %2679 = vmatmul.bf16.gmra.mxu0 %v777
        %v2680 = vpop.f32.mrf.mxu0
        %v2681 = vadd.f32 %v2076, %v2680
        %v2682 = vpop.f32.mrf.mxu0
        %v2683 = vadd.f32 %v2078, %v2682
        %2684 = vmatmul.bf16.gmra.mxu0 %v778
        %v2685 = vpop.f32.mrf.mxu0
        %v2686 = vadd.f32 %v2081, %v2685
        %v2687 = vpop.f32.mrf.mxu0
        %v2688 = vadd.f32 %v2083, %v2687
        %2689 = vmatmul.bf16.gmra.mxu0 %v779
        %v2690 = vpop.f32.mrf.mxu0
        %v2691 = vadd.f32 %v2086, %v2690
        %v2692 = vpop.f32.mrf.mxu0
        %v2693 = vadd.f32 %v2088, %v2692
        %2694 = vmatmul.bf16.gmra.mxu0 %v780
        %v2695 = vpop.f32.mrf.mxu0
        %v2696 = vadd.f32 %v2091, %v2695
        %v2697 = vpop.f32.mrf.mxu0
        %v2698 = vadd.f32 %v2093, %v2697
        %2699 = vmatmul.bf16.gmra.mxu0 %v781
        %v2700 = vpop.f32.mrf.mxu0
        %v2701 = vadd.f32 %v2096, %v2700
        %v2702 = vpop.f32.mrf.mxu0
        %v2703 = vadd.f32 %v2098, %v2702
        %2704 = vmatmul.bf16.gmra.mxu0 %v782
        %v2705 = vpop.f32.mrf.mxu0
        %v2706 = vadd.f32 %v2101, %v2705
        %v2707 = vpop.f32.mrf.mxu0
        %v2708 = vadd.f32 %v2103, %v2707
        %2709 = vmatmul.bf16.gmra.mxu0 %v783
        %v2710 = vpop.f32.mrf.mxu0
        %v2711 = vadd.f32 %v2106, %v2710
        %v2712 = vpop.f32.mrf.mxu0
        %v2713 = vadd.f32 %v2108, %v2712
        %2714 = vdwg.mxu0
        %2715 = vmatpush.bf16.msra.mxu0 %v2415
        %2716 = vmatpush.bf16.msra.mxu0 %v2411
        %2717 = vmatpush.bf16.msra.mxu0 %v2407
        %2718 = vmatpush.bf16.msra.mxu0 %v2403
        %2719 = vmatpush.bf16.msra.mxu0 %v2399
        %2720 = vmatpush.bf16.msra.mxu0 %v2395
        %2721 = vmatpush.bf16.msra.mxu0 %v2391
        %2722 = vmatpush.bf16.msra.mxu0 %v2387
        %2723 = vmatmul.bf16.gmra.mxu0 %v768
        %v2724 = vpop.f32.mrf.mxu0
        %v2725 = vadd.f32 %v2209, %v2724
        %v2726 = vpop.f32.mrf.mxu0
        %v2727 = vadd.f32 %v2211, %v2726
        %2728 = vmatmul.bf16.gmra.mxu0 %v769
        %v2729 = vpop.f32.mrf.mxu0
        %v2730 = vadd.f32 %v2214, %v2729
        %v2731 = vpop.f32.mrf.mxu0
        %v2732 = vadd.f32 %v2216, %v2731
        %2733 = vmatmul.bf16.gmra.mxu0 %v770
        %v2734 = vpop.f32.mrf.mxu0
        %v2735 = vadd.f32 %v2219, %v2734
        %v2736 = vpop.f32.mrf.mxu0
        %v2737 = vadd.f32 %v2221, %v2736
        %2738 = vmatmul.bf16.gmra.mxu0 %v771
        %v2739 = vpop.f32.mrf.mxu0
        %v2740 = vadd.f32 %v2224, %v2739
        %v2741 = vpop.f32.mrf.mxu0
        %v2742 = vadd.f32 %v2226, %v2741
        %2743 = vmatmul.bf16.gmra.mxu0 %v772
        %v2744 = vpop.f32.mrf.mxu0
        %v2745 = vadd.f32 %v2229, %v2744
        %v2746 = vpop.f32.mrf.mxu0
        %v2747 = vadd.f32 %v2231, %v2746
        %2748 = vmatmul.bf16.gmra.mxu0 %v773
        %v2749 = vpop.f32.mrf.mxu0
        %v2750 = vadd.f32 %v2234, %v2749
        %v2751 = vpop.f32.mrf.mxu0
        %v2752 = vadd.f32 %v2236, %v2751
        %2753 = vmatmul.bf16.gmra.mxu0 %v774
        %v2754 = vpop.f32.mrf.mxu0
        %v2755 = vadd.f32 %v2239, %v2754
        %v2756 = vpop.f32.mrf.mxu0
        %v2757 = vadd.f32 %v2241, %v2756
        %2758 = vmatmul.bf16.gmra.mxu0 %v775
        %v2759 = vpop.f32.mrf.mxu0
        %v2760 = vadd.f32 %v2244, %v2759
        %v2761 = vpop.f32.mrf.mxu0
        %v2762 = vadd.f32 %v2246, %v2761
        %2763 = vmatmul.bf16.gmra.mxu0 %v776
        %v2764 = vpop.f32.mrf.mxu0
        %v2765 = vadd.f32 %v2249, %v2764
        %v2766 = vpop.f32.mrf.mxu0
        %v2767 = vadd.f32 %v2251, %v2766
        %2768 = vmatmul.bf16.gmra.mxu0 %v777
        %v2769 = vpop.f32.mrf.mxu0
        %v2770 = vadd.f32 %v2254, %v2769
        %v2771 = vpop.f32.mrf.mxu0
        %v2772 = vadd.f32 %v2256, %v2771
        %2773 = vmatmul.bf16.gmra.mxu0 %v778
        %v2774 = vpop.f32.mrf.mxu0
        %v2775 = vadd.f32 %v2259, %v2774
        %v2776 = vpop.f32.mrf.mxu0
        %v2777 = vadd.f32 %v2261, %v2776
        %2778 = vmatmul.bf16.gmra.mxu0 %v779
        %v2779 = vpop.f32.mrf.mxu0
        %v2780 = vadd.f32 %v2264, %v2779
        %v2781 = vpop.f32.mrf.mxu0
        %v2782 = vadd.f32 %v2266, %v2781
        %2783 = vmatmul.bf16.gmra.mxu0 %v780
        %v2784 = vpop.f32.mrf.mxu0
        %v2785 = vadd.f32 %v2269, %v2784
        %v2786 = vpop.f32.mrf.mxu0
        %v2787 = vadd.f32 %v2271, %v2786
        %2788 = vmatmul.bf16.gmra.mxu0 %v781
        %v2789 = vpop.f32.mrf.mxu0
        %v2790 = vadd.f32 %v2274, %v2789
        %v2791 = vpop.f32.mrf.mxu0
        %v2792 = vadd.f32 %v2276, %v2791
        %2793 = vmatmul.bf16.gmra.mxu0 %v782
        %v2794 = vpop.f32.mrf.mxu0
        %v2795 = vadd.f32 %v2279, %v2794
        %v2796 = vpop.f32.mrf.mxu0
        %v2797 = vadd.f32 %v2281, %v2796
        %2798 = vmatmul.bf16.gmra.mxu0 %v783
        %v2799 = vpop.f32.mrf.mxu0
        %v2800 = vadd.f32 %v2284, %v2799
        %v2801 = vpop.f32.mrf.mxu0
        %v2802 = vadd.f32 %v2286, %v2801
        %2803 = vdwg.mxu0
        %v2804 = vld [vmem:[%s7] sm:$0xf]
        %v2806 = vperm.slane %v2804, 0
        %v2807 = vperm.slane %v2804, 1
        %v2808 = vperm.slane %v2804, 2
        %v2809 = vperm.slane %v2804, 3
        %v2814 = vadd.f32 %v2458, %v2806
        %v2815 = vadd.f32 %v2547, %v2807
        %v2816 = vadd.f32 %v2636, %v2808
        %v2817 = vadd.f32 %v2725, %v2809
        %v2818 = vadd.f32 %v2460, %v2806
        %v2819 = vadd.f32 %v2549, %v2807
        %v2820 = vadd.f32 %v2638, %v2808
        %v2821 = vadd.f32 %v2727, %v2809
        %v2822 = vadd.f32 %v2463, %v2806
        %v2823 = vadd.f32 %v2552, %v2807
        %v2824 = vadd.f32 %v2641, %v2808
        %v2825 = vadd.f32 %v2730, %v2809
        %v2826 = vadd.f32 %v2465, %v2806
        %v2827 = vadd.f32 %v2554, %v2807
        %v2828 = vadd.f32 %v2643, %v2808
        %v2829 = vadd.f32 %v2732, %v2809
        %v2830 = vadd.f32 %v2468, %v2806
        %v2831 = vadd.f32 %v2557, %v2807
        %v2832 = vadd.f32 %v2646, %v2808
        %v2833 = vadd.f32 %v2735, %v2809
        %v2834 = vadd.f32 %v2470, %v2806
        %v2835 = vadd.f32 %v2559, %v2807
        %v2836 = vadd.f32 %v2648, %v2808
        %v2837 = vadd.f32 %v2737, %v2809
        %v2838 = vadd.f32 %v2473, %v2806
        %v2839 = vadd.f32 %v2562, %v2807
        %v2840 = vadd.f32 %v2651, %v2808
        %v2841 = vadd.f32 %v2740, %v2809
        %v2842 = vadd.f32 %v2475, %v2806
        %v2843 = vadd.f32 %v2564, %v2807
        %v2844 = vadd.f32 %v2653, %v2808
        %v2845 = vadd.f32 %v2742, %v2809
        %v2846 = vadd.f32 %v2478, %v2806
        %v2847 = vadd.f32 %v2567, %v2807
        %v2848 = vadd.f32 %v2656, %v2808
        %v2849 = vadd.f32 %v2745, %v2809
        %v2850 = vadd.f32 %v2480, %v2806
        %v2851 = vadd.f32 %v2569, %v2807
        %v2852 = vadd.f32 %v2658, %v2808
        %v2853 = vadd.f32 %v2747, %v2809
        %v2854 = vadd.f32 %v2483, %v2806
        %v2855 = vadd.f32 %v2572, %v2807
        %v2856 = vadd.f32 %v2661, %v2808
        %v2857 = vadd.f32 %v2750, %v2809
        %v2858 = vadd.f32 %v2485, %v2806
        %v2859 = vadd.f32 %v2574, %v2807
        %v2860 = vadd.f32 %v2663, %v2808
        %v2861 = vadd.f32 %v2752, %v2809
        %v2862 = vadd.f32 %v2488, %v2806
        %v2863 = vadd.f32 %v2577, %v2807
        %v2864 = vadd.f32 %v2666, %v2808
        %v2865 = vadd.f32 %v2755, %v2809
        %v2866 = vadd.f32 %v2490, %v2806
        %v2867 = vadd.f32 %v2579, %v2807
        %v2868 = vadd.f32 %v2668, %v2808
        %v2869 = vadd.f32 %v2757, %v2809
        %v2870 = vadd.f32 %v2493, %v2806
        %v2871 = vadd.f32 %v2582, %v2807
        %v2872 = vadd.f32 %v2671, %v2808
        %v2873 = vadd.f32 %v2760, %v2809
        %v2874 = vadd.f32 %v2495, %v2806
        %v2875 = vadd.f32 %v2584, %v2807
        %v2876 = vadd.f32 %v2673, %v2808
        %v2877 = vadd.f32 %v2762, %v2809
        %v2878 = vadd.f32 %v2498, %v2806
        %v2879 = vadd.f32 %v2587, %v2807
        %v2880 = vadd.f32 %v2676, %v2808
        %v2881 = vadd.f32 %v2765, %v2809
        %v2882 = vadd.f32 %v2500, %v2806
        %v2883 = vadd.f32 %v2589, %v2807
        %v2884 = vadd.f32 %v2678, %v2808
        %v2885 = vadd.f32 %v2767, %v2809
        %v2886 = vadd.f32 %v2503, %v2806
        %v2887 = vadd.f32 %v2592, %v2807
        %v2888 = vadd.f32 %v2681, %v2808
        %v2889 = vadd.f32 %v2770, %v2809
        %v2890 = vadd.f32 %v2505, %v2806
        %v2891 = vadd.f32 %v2594, %v2807
        %v2892 = vadd.f32 %v2683, %v2808
        %v2893 = vadd.f32 %v2772, %v2809
        %v2894 = vadd.f32 %v2508, %v2806
        %v2895 = vadd.f32 %v2597, %v2807
        %v2896 = vadd.f32 %v2686, %v2808
        %v2897 = vadd.f32 %v2775, %v2809
        %v2898 = vadd.f32 %v2510, %v2806
        %v2899 = vadd.f32 %v2599, %v2807
        %v2900 = vadd.f32 %v2688, %v2808
        %v2901 = vadd.f32 %v2777, %v2809
        %v2902 = vadd.f32 %v2513, %v2806
        %v2903 = vadd.f32 %v2602, %v2807
        %v2904 = vadd.f32 %v2691, %v2808
        %v2905 = vadd.f32 %v2780, %v2809
        %v2906 = vadd.f32 %v2515, %v2806
        %v2907 = vadd.f32 %v2604, %v2807
        %v2908 = vadd.f32 %v2693, %v2808
        %v2909 = vadd.f32 %v2782, %v2809
        %v2910 = vadd.f32 %v2518, %v2806
        %v2911 = vadd.f32 %v2607, %v2807
        %v2912 = vadd.f32 %v2696, %v2808
        %v2913 = vadd.f32 %v2785, %v2809
        %v2914 = vadd.f32 %v2520, %v2806
        %v2915 = vadd.f32 %v2609, %v2807
        %v2916 = vadd.f32 %v2698, %v2808
        %v2917 = vadd.f32 %v2787, %v2809
        %v2918 = vadd.f32 %v2523, %v2806
        %v2919 = vadd.f32 %v2612, %v2807
        %v2920 = vadd.f32 %v2701, %v2808
        %v2921 = vadd.f32 %v2790, %v2809
        %v2922 = vadd.f32 %v2525, %v2806
        %v2923 = vadd.f32 %v2614, %v2807
        %v2924 = vadd.f32 %v2703, %v2808
        %v2925 = vadd.f32 %v2792, %v2809
        %v2926 = vadd.f32 %v2528, %v2806
        %v2927 = vadd.f32 %v2617, %v2807
        %v2928 = vadd.f32 %v2706, %v2808
        %v2929 = vadd.f32 %v2795, %v2809
        %v2930 = vadd.f32 %v2530, %v2806
        %v2931 = vadd.f32 %v2619, %v2807
        %v2932 = vadd.f32 %v2708, %v2808
        %v2933 = vadd.f32 %v2797, %v2809
        %v2934 = vadd.f32 %v2533, %v2806
        %v2935 = vadd.f32 %v2622, %v2807
        %v2936 = vadd.f32 %v2711, %v2808
        %v2937 = vadd.f32 %v2800, %v2809
        %v2938 = vadd.f32 %v2535, %v2806
        %v2939 = vadd.f32 %v2624, %v2807
        %v2940 = vadd.f32 %v2713, %v2808
        %v2941 = vadd.f32 %v2802, %v2809
        %v2942 = vmax.f32 %v2814, 0.0
        %v2943 = vmax.f32 %v2815, 0.0
        %v2944 = vmax.f32 %v2816, 0.0
        %v2945 = vmax.f32 %v2817, 0.0
        %v2946 = vmax.f32 %v2818, 0.0
        %v2947 = vmax.f32 %v2819, 0.0
        %v2948 = vmax.f32 %v2820, 0.0
        %v2949 = vmax.f32 %v2821, 0.0
        %v2950 = vmax.f32 %v2822, 0.0
        %v2951 = vmax.f32 %v2823, 0.0
        %v2952 = vmax.f32 %v2824, 0.0
        %v2953 = vmax.f32 %v2825, 0.0
        %v2954 = vmax.f32 %v2826, 0.0
        %v2955 = vmax.f32 %v2827, 0.0
        %v2956 = vmax.f32 %v2828, 0.0
        %v2957 = vmax.f32 %v2829, 0.0
        %v2958 = vmax.f32 %v2830, 0.0
        %v2959 = vmax.f32 %v2831, 0.0
        %v2960 = vmax.f32 %v2832, 0.0
        %v2961 = vmax.f32 %v2833, 0.0
        %v2962 = vmax.f32 %v2834, 0.0
        %v2963 = vmax.f32 %v2835, 0.0
        %v2964 = vmax.f32 %v2836, 0.0
        %v2965 = vmax.f32 %v2837, 0.0
        %v2966 = vmax.f32 %v2838, 0.0
        %v2967 = vmax.f32 %v2839, 0.0
        %v2968 = vmax.f32 %v2840, 0.0
        %v2969 = vmax.f32 %v2841, 0.0
        %v2970 = vmax.f32 %v2842, 0.0
        %v2971 = vmax.f32 %v2843, 0.0
        %v2972 = vmax.f32 %v2844, 0.0
        %v2973 = vmax.f32 %v2845, 0.0
        %v2974 = vmax.f32 %v2846, 0.0
        %v2975 = vmax.f32 %v2847, 0.0
        %v2976 = vmax.f32 %v2848, 0.0
        %v2977 = vmax.f32 %v2849, 0.0
        %v2978 = vmax.f32 %v2850, 0.0
        %v2979 = vmax.f32 %v2851, 0.0
        %v2980 = vmax.f32 %v2852, 0.0
        %v2981 = vmax.f32 %v2853, 0.0
        %v2982 = vmax.f32 %v2854, 0.0
        %v2983 = vmax.f32 %v2855, 0.0
        %v2984 = vmax.f32 %v2856, 0.0
        %v2985 = vmax.f32 %v2857, 0.0
        %v2986 = vmax.f32 %v2858, 0.0
        %v2987 = vmax.f32 %v2859, 0.0
        %v2988 = vmax.f32 %v2860, 0.0
        %v2989 = vmax.f32 %v2861, 0.0
        %v2990 = vmax.f32 %v2862, 0.0
        %v2991 = vmax.f32 %v2863, 0.0
        %v2992 = vmax.f32 %v2864, 0.0
        %v2993 = vmax.f32 %v2865, 0.0
        %v2994 = vmax.f32 %v2866, 0.0
        %v2995 = vmax.f32 %v2867, 0.0
        %v2996 = vmax.f32 %v2868, 0.0
        %v2997 = vmax.f32 %v2869, 0.0
        %v2998 = vmax.f32 %v2870, 0.0
        %v2999 = vmax.f32 %v2871, 0.0
        %v3000 = vmax.f32 %v2872, 0.0
        %v3001 = vmax.f32 %v2873, 0.0
        %v3002 = vmax.f32 %v2874, 0.0
        %v3003 = vmax.f32 %v2875, 0.0
        %v3004 = vmax.f32 %v2876, 0.0
        %v3005 = vmax.f32 %v2877, 0.0
        %v3006 = vmax.f32 %v2878, 0.0
        %v3007 = vmax.f32 %v2879, 0.0
        %v3008 = vmax.f32 %v2880, 0.0
        %v3009 = vmax.f32 %v2881, 0.0
        %v3010 = vmax.f32 %v2882, 0.0
        %v3011 = vmax.f32 %v2883, 0.0
        %v3012 = vmax.f32 %v2884, 0.0
        %v3013 = vmax.f32 %v2885, 0.0
        %v3014 = vmax.f32 %v2886, 0.0
        %v3015 = vmax.f32 %v2887, 0.0
        %v3016 = vmax.f32 %v2888, 0.0
        %v3017 = vmax.f32 %v2889, 0.0
        %v3018 = vmax.f32 %v2890, 0.0
        %v3019 = vmax.f32 %v2891, 0.0
        %v3020 = vmax.f32 %v2892, 0.0
        %v3021 = vmax.f32 %v2893, 0.0
        %v3022 = vmax.f32 %v2894, 0.0
        %v3023 = vmax.f32 %v2895, 0.0
        %v3024 = vmax.f32 %v2896, 0.0
        %v3025 = vmax.f32 %v2897, 0.0
        %v3026 = vmax.f32 %v2898, 0.0
        %v3027 = vmax.f32 %v2899, 0.0
        %v3028 = vmax.f32 %v2900, 0.0
        %v3029 = vmax.f32 %v2901, 0.0
        %v3030 = vmax.f32 %v2902, 0.0
        %v3031 = vmax.f32 %v2903, 0.0
        %v3032 = vmax.f32 %v2904, 0.0
        %v3033 = vmax.f32 %v2905, 0.0
        %v3034 = vmax.f32 %v2906, 0.0
        %v3035 = vmax.f32 %v2907, 0.0
        %v3036 = vmax.f32 %v2908, 0.0
        %v3037 = vmax.f32 %v2909, 0.0
        %v3038 = vmax.f32 %v2910, 0.0
        %v3039 = vmax.f32 %v2911, 0.0
        %v3040 = vmax.f32 %v2912, 0.0
        %v3041 = vmax.f32 %v2913, 0.0
        %v3042 = vmax.f32 %v2914, 0.0
        %v3043 = vmax.f32 %v2915, 0.0
        %v3044 = vmax.f32 %v2916, 0.0
        %v3045 = vmax.f32 %v2917, 0.0
        %v3046 = vmax.f32 %v2918, 0.0
        %v3047 = vmax.f32 %v2919, 0.0
        %v3048 = vmax.f32 %v2920, 0.0
        %v3049 = vmax.f32 %v2921, 0.0
        %v3050 = vmax.f32 %v2922, 0.0
        %v3051 = vmax.f32 %v2923, 0.0
        %v3052 = vmax.f32 %v2924, 0.0
        %v3053 = vmax.f32 %v2925, 0.0
        %v3054 = vmax.f32 %v2926, 0.0
        %v3055 = vmax.f32 %v2927, 0.0
        %v3056 = vmax.f32 %v2928, 0.0
        %v3057 = vmax.f32 %v2929, 0.0
        %v3058 = vmax.f32 %v2930, 0.0
        %v3059 = vmax.f32 %v2931, 0.0
        %v3060 = vmax.f32 %v2932, 0.0
        %v3061 = vmax.f32 %v2933, 0.0
        %v3062 = vmax.f32 %v2934, 0.0
        %v3063 = vmax.f32 %v2935, 0.0
        %v3064 = vmax.f32 %v2936, 0.0
        %v3065 = vmax.f32 %v2937, 0.0
        %v3066 = vmax.f32 %v2938, 0.0
        %v3067 = vmax.f32 %v2939, 0.0
        %v3068 = vmax.f32 %v2940, 0.0
        %v3069 = vmax.f32 %v2941, 0.0
        %v3070 = vpack.c.bf16 %v2946, %v2942
        %v3071 = vpack.c.bf16 %v2947, %v2943
        %v3072 = vpack.c.bf16 %v2948, %v2944
        %v3073 = vpack.c.bf16 %v2949, %v2945
        %v3074 = vpack.c.bf16 %v2954, %v2950
        %v3075 = vpack.c.bf16 %v2955, %v2951
        %v3076 = vpack.c.bf16 %v2956, %v2952
        %v3077 = vpack.c.bf16 %v2957, %v2953
        %v3078 = vpack.c.bf16 %v2962, %v2958
        %v3079 = vpack.c.bf16 %v2963, %v2959
        %v3080 = vpack.c.bf16 %v2964, %v2960
        %v3081 = vpack.c.bf16 %v2965, %v2961
        %v3082 = vpack.c.bf16 %v2970, %v2966
        %v3083 = vpack.c.bf16 %v2971, %v2967
        %v3084 = vpack.c.bf16 %v2972, %v2968
        %v3085 = vpack.c.bf16 %v2973, %v2969
        %v3086 = vpack.c.bf16 %v2978, %v2974
        %v3087 = vpack.c.bf16 %v2979, %v2975
        %v3088 = vpack.c.bf16 %v2980, %v2976
        %v3089 = vpack.c.bf16 %v2981, %v2977
        %v3090 = vpack.c.bf16 %v2986, %v2982
        %v3091 = vpack.c.bf16 %v2987, %v2983
        %v3092 = vpack.c.bf16 %v2988, %v2984
        %v3093 = vpack.c.bf16 %v2989, %v2985
        %v3094 = vpack.c.bf16 %v2994, %v2990
        %v3095 = vpack.c.bf16 %v2995, %v2991
        %v3096 = vpack.c.bf16 %v2996, %v2992
        %v3097 = vpack.c.bf16 %v2997, %v2993
        %v3098 = vpack.c.bf16 %v3002, %v2998
        %v3099 = vpack.c.bf16 %v3003, %v2999
        %v3100 = vpack.c.bf16 %v3004, %v3000
        %v3101 = vpack.c.bf16 %v3005, %v3001
        %v3102 = vpack.c.bf16 %v3010, %v3006
        %v3103 = vpack.c.bf16 %v3011, %v3007
        %v3104 = vpack.c.bf16 %v3012, %v3008
        %v3105 = vpack.c.bf16 %v3013, %v3009
        %v3106 = vpack.c.bf16 %v3018, %v3014
        %v3107 = vpack.c.bf16 %v3019, %v3015
        %v3108 = vpack.c.bf16 %v3020, %v3016
        %v3109 = vpack.c.bf16 %v3021, %v3017
        %v3110 = vpack.c.bf16 %v3026, %v3022
        %v3111 = vpack.c.bf16 %v3027, %v3023
        %v3112 = vpack.c.bf16 %v3028, %v3024
        %v3113 = vpack.c.bf16 %v3029, %v3025
        %v3114 = vpack.c.bf16 %v3034, %v3030
        %v3115 = vpack.c.bf16 %v3035, %v3031
        %v3116 = vpack.c.bf16 %v3036, %v3032
        %v3117 = vpack.c.bf16 %v3037, %v3033
        %v3118 = vpack.c.bf16 %v3042, %v3038
        %v3119 = vpack.c.bf16 %v3043, %v3039
        %v3120 = vpack.c.bf16 %v3044, %v3040
        %v3121 = vpack.c.bf16 %v3045, %v3041
        %v3122 = vpack.c.bf16 %v3050, %v3046
        %v3123 = vpack.c.bf16 %v3051, %v3047
        %v3124 = vpack.c.bf16 %v3052, %v3048
        %v3125 = vpack.c.bf16 %v3053, %v3049
        %v3126 = vpack.c.bf16 %v3058, %v3054
        %v3127 = vpack.c.bf16 %v3059, %v3055
        %v3128 = vpack.c.bf16 %v3060, %v3056
        %v3129 = vpack.c.bf16 %v3061, %v3057
        %v3130 = vpack.c.bf16 %v3066, %v3062
        %v3131 = vpack.c.bf16 %v3067, %v3063
        %v3132 = vpack.c.bf16 %v3068, %v3064
        %v3133 = vpack.c.bf16 %v3069, %v3065
        %v3134 = vld [vmem:[#allocation7] sm:$0xff]
        %v3135 = vld [vmem:[#allocation7 + $0x8] sm:$0xff]
        %v3136 = vld [vmem:[#allocation7 + $0x10] sm:$0xff]
        %v3137 = vld [vmem:[#allocation7 + $0x18] sm:$0xff]
        %v3138 = vld [vmem:[#allocation7 + $0x20] sm:$0xff]
        %v3139 = vld [vmem:[#allocation7 + $0x28] sm:$0xff]
        %v3140 = vld [vmem:[#allocation7 + $0x30] sm:$0xff]
        %v3141 = vld [vmem:[#allocation7 + $0x38] sm:$0xff]
        %v3142 = vld [vmem:[#allocation7 + $0x40] sm:$0xff]
        %v3143 = vld [vmem:[#allocation7 + $0x48] sm:$0xff]
        %v3144 = vld [vmem:[#allocation7 + $0x50] sm:$0xff]
        %v3145 = vld [vmem:[#allocation7 + $0x58] sm:$0xff]
        %v3146 = vld [vmem:[#allocation7 + $0x60] sm:$0xff]
        %v3147 = vld [vmem:[#allocation7 + $0x68] sm:$0xff]
        %v3148 = vld [vmem:[#allocation7 + $0x70] sm:$0xff]
        %v3149 = vld [vmem:[#allocation7 + $0x78] sm:$0xff]
        %v3150 = vld [vmem:[#allocation7 + $0x80] sm:$0xff]
        %v3151 = vld [vmem:[#allocation7 + $0x88] sm:$0xff]
        %v3152 = vld [vmem:[#allocation7 + $0x90] sm:$0xff]
        %v3153 = vld [vmem:[#allocation7 + $0x98] sm:$0xff]
        %v3154 = vld [vmem:[#allocation7 + $0xa0] sm:$0xff]
        %v3155 = vld [vmem:[#allocation7 + $0xa8] sm:$0xff]
        %v3156 = vld [vmem:[#allocation7 + $0xb0] sm:$0xff]
        %v3157 = vld [vmem:[#allocation7 + $0xb8] sm:$0xff]
        %v3158 = vld [vmem:[#allocation7 + $0xc0] sm:$0xff]
        %v3159 = vld [vmem:[#allocation7 + $0xc8] sm:$0xff]
        %v3160 = vld [vmem:[#allocation7 + $0xd0] sm:$0xff]
        %v3161 = vld [vmem:[#allocation7 + $0xd8] sm:$0xff]
        %v3162 = vld [vmem:[#allocation7 + $0xe0] sm:$0xff]
        %v3163 = vld [vmem:[#allocation7 + $0xe8] sm:$0xff]
        %v3164 = vld [vmem:[#allocation7 + $0xf0] sm:$0xff]
        %v3165 = vld [vmem:[#allocation7 + $0xf8] sm:$0xff]
        %v3166 = vld [vmem:[#allocation7 + $0x100] sm:$0xff]
        %v3167 = vld [vmem:[#allocation7 + $0x108] sm:$0xff]
        %v3168 = vld [vmem:[#allocation7 + $0x110] sm:$0xff]
        %v3169 = vld [vmem:[#allocation7 + $0x118] sm:$0xff]
        %v3170 = vld [vmem:[#allocation7 + $0x120] sm:$0xff]
        %v3171 = vld [vmem:[#allocation7 + $0x128] sm:$0xff]
        %v3172 = vld [vmem:[#allocation7 + $0x130] sm:$0xff]
        %v3173 = vld [vmem:[#allocation7 + $0x138] sm:$0xff]
        %v3174 = vld [vmem:[#allocation7 + $0x140] sm:$0xff]
        %v3175 = vld [vmem:[#allocation7 + $0x148] sm:$0xff]
        %v3176 = vld [vmem:[#allocation7 + $0x150] sm:$0xff]
        %v3177 = vld [vmem:[#allocation7 + $0x158] sm:$0xff]
        %v3178 = vld [vmem:[#allocation7 + $0x160] sm:$0xff]
        %v3179 = vld [vmem:[#allocation7 + $0x168] sm:$0xff]
        %v3180 = vld [vmem:[#allocation7 + $0x170] sm:$0xff]
        %v3181 = vld [vmem:[#allocation7 + $0x178] sm:$0xff]
        %v3182 = vld [vmem:[#allocation7 + $0x180] sm:$0xff]
        %v3183 = vld [vmem:[#allocation7 + $0x188] sm:$0xff]
        %v3184 = vld [vmem:[#allocation7 + $0x190] sm:$0xff]
        %v3185 = vld [vmem:[#allocation7 + $0x198] sm:$0xff]
        %v3186 = vld [vmem:[#allocation7 + $0x1a0] sm:$0xff]
        %v3187 = vld [vmem:[#allocation7 + $0x1a8] sm:$0xff]
        %v3188 = vld [vmem:[#allocation7 + $0x1b0] sm:$0xff]
        %v3189 = vld [vmem:[#allocation7 + $0x1b8] sm:$0xff]
        %v3190 = vld [vmem:[#allocation7 + $0x1c0] sm:$0xff]
        %v3191 = vld [vmem:[#allocation7 + $0x1c8] sm:$0xff]
        %v3192 = vld [vmem:[#allocation7 + $0x1d0] sm:$0xff]
        %v3193 = vld [vmem:[#allocation7 + $0x1d8] sm:$0xff]
        %v3194 = vld [vmem:[#allocation7 + $0x1e0] sm:$0xff]
        %v3195 = vld [vmem:[#allocation7 + $0x1e8] sm:$0xff]
        %v3196 = vld [vmem:[#allocation7 + $0x1f0] sm:$0xff]
        %v3197 = vld [vmem:[#allocation7 + $0x1f8] sm:$0xff]
        %v3198 = vld [vmem:[#allocation7 + $0x200] sm:$0xff]
        %v3199 = vld [vmem:[#allocation7 + $0x208] sm:$0xff]
        %v3200 = vld [vmem:[#allocation7 + $0x210] sm:$0xff]
        %v3201 = vld [vmem:[#allocation7 + $0x218] sm:$0xff]
        %v3202 = vld [vmem:[#allocation7 + $0x220] sm:$0xff]
        %v3203 = vld [vmem:[#allocation7 + $0x228] sm:$0xff]
        %v3204 = vld [vmem:[#allocation7 + $0x230] sm:$0xff]
        %v3205 = vld [vmem:[#allocation7 + $0x238] sm:$0xff]
        %v3206 = vld [vmem:[#allocation7 + $0x240] sm:$0xff]
        %v3207 = vld [vmem:[#allocation7 + $0x248] sm:$0xff]
        %v3208 = vld [vmem:[#allocation7 + $0x250] sm:$0xff]
        %v3209 = vld [vmem:[#allocation7 + $0x258] sm:$0xff]
        %v3210 = vld [vmem:[#allocation7 + $0x260] sm:$0xff]
        %v3211 = vld [vmem:[#allocation7 + $0x268] sm:$0xff]
        %v3212 = vld [vmem:[#allocation7 + $0x270] sm:$0xff]
        %v3213 = vld [vmem:[#allocation7 + $0x278] sm:$0xff]
        %v3214 = vld [vmem:[#allocation7 + $0x280] sm:$0xff]
        %v3215 = vld [vmem:[#allocation7 + $0x288] sm:$0xff]
        %v3216 = vld [vmem:[#allocation7 + $0x290] sm:$0xff]
        %v3217 = vld [vmem:[#allocation7 + $0x298] sm:$0xff]
        %v3218 = vld [vmem:[#allocation7 + $0x2a0] sm:$0xff]
        %v3219 = vld [vmem:[#allocation7 + $0x2a8] sm:$0xff]
        %v3220 = vld [vmem:[#allocation7 + $0x2b0] sm:$0xff]
        %v3221 = vld [vmem:[#allocation7 + $0x2b8] sm:$0xff]
        %v3222 = vld [vmem:[#allocation7 + $0x2c0] sm:$0xff]
        %v3223 = vld [vmem:[#allocation7 + $0x2c8] sm:$0xff]
        %v3224 = vld [vmem:[#allocation7 + $0x2d0] sm:$0xff]
        %v3225 = vld [vmem:[#allocation7 + $0x2d8] sm:$0xff]
        %v3226 = vld [vmem:[#allocation7 + $0x2e0] sm:$0xff]
        %v3227 = vld [vmem:[#allocation7 + $0x2e8] sm:$0xff]
        %v3228 = vld [vmem:[#allocation7 + $0x2f0] sm:$0xff]
        %v3229 = vld [vmem:[#allocation7 + $0x2f8] sm:$0xff]
        %v3230 = vld [vmem:[#allocation7 + $0x300] sm:$0xff]
        %v3231 = vld [vmem:[#allocation7 + $0x308] sm:$0xff]
        %v3232 = vld [vmem:[#allocation7 + $0x310] sm:$0xff]
        %v3233 = vld [vmem:[#allocation7 + $0x318] sm:$0xff]
        %v3234 = vld [vmem:[#allocation7 + $0x320] sm:$0xff]
        %v3235 = vld [vmem:[#allocation7 + $0x328] sm:$0xff]
        %v3236 = vld [vmem:[#allocation7 + $0x330] sm:$0xff]
        %v3237 = vld [vmem:[#allocation7 + $0x338] sm:$0xff]
        %v3238 = vld [vmem:[#allocation7 + $0x340] sm:$0xff]
        %v3239 = vld [vmem:[#allocation7 + $0x348] sm:$0xff]
        %v3240 = vld [vmem:[#allocation7 + $0x350] sm:$0xff]
        %v3241 = vld [vmem:[#allocation7 + $0x358] sm:$0xff]
        %v3242 = vld [vmem:[#allocation7 + $0x360] sm:$0xff]
        %v3243 = vld [vmem:[#allocation7 + $0x368] sm:$0xff]
        %v3244 = vld [vmem:[#allocation7 + $0x370] sm:$0xff]
        %v3245 = vld [vmem:[#allocation7 + $0x378] sm:$0xff]
        %v3246 = vld [vmem:[#allocation7 + $0x380] sm:$0xff]
        %v3247 = vld [vmem:[#allocation7 + $0x388] sm:$0xff]
        %v3248 = vld [vmem:[#allocation7 + $0x390] sm:$0xff]
        %v3249 = vld [vmem:[#allocation7 + $0x398] sm:$0xff]
        %v3250 = vld [vmem:[#allocation7 + $0x3a0] sm:$0xff]
        %v3251 = vld [vmem:[#allocation7 + $0x3a8] sm:$0xff]
        %v3252 = vld [vmem:[#allocation7 + $0x3b0] sm:$0xff]
        %v3253 = vld [vmem:[#allocation7 + $0x3b8] sm:$0xff]
        %v3254 = vld [vmem:[#allocation7 + $0x3c0] sm:$0xff]
        %v3255 = vld [vmem:[#allocation7 + $0x3c8] sm:$0xff]
        %v3256 = vld [vmem:[#allocation7 + $0x3d0] sm:$0xff]
        %v3257 = vld [vmem:[#allocation7 + $0x3d8] sm:$0xff]
        %v3258 = vld [vmem:[#allocation7 + $0x3e0] sm:$0xff]
        %v3259 = vld [vmem:[#allocation7 + $0x3e8] sm:$0xff]
        %v3260 = vld [vmem:[#allocation7 + $0x3f0] sm:$0xff]
        %v3261 = vld [vmem:[#allocation7 + $0x3f8] sm:$0xff]
        %v3262 = vld [vmem:[#allocation7 + $0x400] sm:$0xff]
        %v3263 = vld [vmem:[#allocation7 + $0x408] sm:$0xff]
        %v3264 = vld [vmem:[#allocation7 + $0x410] sm:$0xff]
        %v3265 = vld [vmem:[#allocation7 + $0x418] sm:$0xff]
        %v3266 = vld [vmem:[#allocation7 + $0x420] sm:$0xff]
        %v3267 = vld [vmem:[#allocation7 + $0x428] sm:$0xff]
        %v3268 = vld [vmem:[#allocation7 + $0x430] sm:$0xff]
        %v3269 = vld [vmem:[#allocation7 + $0x438] sm:$0xff]
        %v3270 = vld [vmem:[#allocation7 + $0x440] sm:$0xff]
        %v3271 = vld [vmem:[#allocation7 + $0x448] sm:$0xff]
        %v3272 = vld [vmem:[#allocation7 + $0x450] sm:$0xff]
        %v3273 = vld [vmem:[#allocation7 + $0x458] sm:$0xff]
        %v3274 = vld [vmem:[#allocation7 + $0x460] sm:$0xff]
        %v3275 = vld [vmem:[#allocation7 + $0x468] sm:$0xff]
        %v3276 = vld [vmem:[#allocation7 + $0x470] sm:$0xff]
        %v3277 = vld [vmem:[#allocation7 + $0x478] sm:$0xff]
        %v3278 = vld [vmem:[#allocation7 + $0x480] sm:$0xff]
        %v3279 = vld [vmem:[#allocation7 + $0x488] sm:$0xff]
        %v3280 = vld [vmem:[#allocation7 + $0x490] sm:$0xff]
        %v3281 = vld [vmem:[#allocation7 + $0x498] sm:$0xff]
        %v3282 = vld [vmem:[#allocation7 + $0x4a0] sm:$0xff]
        %v3283 = vld [vmem:[#allocation7 + $0x4a8] sm:$0xff]
        %v3284 = vld [vmem:[#allocation7 + $0x4b0] sm:$0xff]
        %v3285 = vld [vmem:[#allocation7 + $0x4b8] sm:$0xff]
        %v3286 = vld [vmem:[#allocation7 + $0x4c0] sm:$0xff]
        %v3287 = vld [vmem:[#allocation7 + $0x4c8] sm:$0xff]
        %v3288 = vld [vmem:[#allocation7 + $0x4d0] sm:$0xff]
        %v3289 = vld [vmem:[#allocation7 + $0x4d8] sm:$0xff]
        %v3290 = vld [vmem:[#allocation7 + $0x4e0] sm:$0xff]
        %v3291 = vld [vmem:[#allocation7 + $0x4e8] sm:$0xff]
        %v3292 = vld [vmem:[#allocation7 + $0x4f0] sm:$0xff]
        %v3293 = vld [vmem:[#allocation7 + $0x4f8] sm:$0xff]
        %v3294 = vld [vmem:[#allocation7 + $0x500] sm:$0xff]
        %v3295 = vld [vmem:[#allocation7 + $0x508] sm:$0xff]
        %v3296 = vld [vmem:[#allocation7 + $0x510] sm:$0xff]
        %v3297 = vld [vmem:[#allocation7 + $0x518] sm:$0xff]
        %v3298 = vld [vmem:[#allocation7 + $0x520] sm:$0xff]
        %v3299 = vld [vmem:[#allocation7 + $0x528] sm:$0xff]
        %v3300 = vld [vmem:[#allocation7 + $0x530] sm:$0xff]
        %v3301 = vld [vmem:[#allocation7 + $0x538] sm:$0xff]
        %v3302 = vld [vmem:[#allocation7 + $0x540] sm:$0xff]
        %v3303 = vld [vmem:[#allocation7 + $0x548] sm:$0xff]
        %v3304 = vld [vmem:[#allocation7 + $0x550] sm:$0xff]
        %v3305 = vld [vmem:[#allocation7 + $0x558] sm:$0xff]
        %v3306 = vld [vmem:[#allocation7 + $0x560] sm:$0xff]
        %v3307 = vld [vmem:[#allocation7 + $0x568] sm:$0xff]
        %v3308 = vld [vmem:[#allocation7 + $0x570] sm:$0xff]
        %v3309 = vld [vmem:[#allocation7 + $0x578] sm:$0xff]
        %v3310 = vld [vmem:[#allocation7 + $0x580] sm:$0xff]
        %v3311 = vld [vmem:[#allocation7 + $0x588] sm:$0xff]
        %v3312 = vld [vmem:[#allocation7 + $0x590] sm:$0xff]
        %v3313 = vld [vmem:[#allocation7 + $0x598] sm:$0xff]
        %v3314 = vld [vmem:[#allocation7 + $0x5a0] sm:$0xff]
        %v3315 = vld [vmem:[#allocation7 + $0x5a8] sm:$0xff]
        %v3316 = vld [vmem:[#allocation7 + $0x5b0] sm:$0xff]
        %v3317 = vld [vmem:[#allocation7 + $0x5b8] sm:$0xff]
        %v3318 = vld [vmem:[#allocation7 + $0x5c0] sm:$0xff]
        %v3319 = vld [vmem:[#allocation7 + $0x5c8] sm:$0xff]
        %v3320 = vld [vmem:[#allocation7 + $0x5d0] sm:$0xff]
        %v3321 = vld [vmem:[#allocation7 + $0x5d8] sm:$0xff]
        %v3322 = vld [vmem:[#allocation7 + $0x5e0] sm:$0xff]
        %v3323 = vld [vmem:[#allocation7 + $0x5e8] sm:$0xff]
        %v3324 = vld [vmem:[#allocation7 + $0x5f0] sm:$0xff]
        %v3325 = vld [vmem:[#allocation7 + $0x5f8] sm:$0xff]
        %v3326 = vld [vmem:[#allocation7 + $0x600] sm:$0xff]
        %v3327 = vld [vmem:[#allocation7 + $0x608] sm:$0xff]
        %v3328 = vld [vmem:[#allocation7 + $0x610] sm:$0xff]
        %v3329 = vld [vmem:[#allocation7 + $0x618] sm:$0xff]
        %v3330 = vld [vmem:[#allocation7 + $0x620] sm:$0xff]
        %v3331 = vld [vmem:[#allocation7 + $0x628] sm:$0xff]
        %v3332 = vld [vmem:[#allocation7 + $0x630] sm:$0xff]
        %v3333 = vld [vmem:[#allocation7 + $0x638] sm:$0xff]
        %v3334 = vld [vmem:[#allocation7 + $0x640] sm:$0xff]
        %v3335 = vld [vmem:[#allocation7 + $0x648] sm:$0xff]
        %v3336 = vld [vmem:[#allocation7 + $0x650] sm:$0xff]
        %v3337 = vld [vmem:[#allocation7 + $0x658] sm:$0xff]
        %v3338 = vld [vmem:[#allocation7 + $0x660] sm:$0xff]
        %v3339 = vld [vmem:[#allocation7 + $0x668] sm:$0xff]
        %v3340 = vld [vmem:[#allocation7 + $0x670] sm:$0xff]
        %v3341 = vld [vmem:[#allocation7 + $0x678] sm:$0xff]
        %v3342 = vld [vmem:[#allocation7 + $0x680] sm:$0xff]
        %v3343 = vld [vmem:[#allocation7 + $0x688] sm:$0xff]
        %v3344 = vld [vmem:[#allocation7 + $0x690] sm:$0xff]
        %v3345 = vld [vmem:[#allocation7 + $0x698] sm:$0xff]
        %v3346 = vld [vmem:[#allocation7 + $0x6a0] sm:$0xff]
        %v3347 = vld [vmem:[#allocation7 + $0x6a8] sm:$0xff]
        %v3348 = vld [vmem:[#allocation7 + $0x6b0] sm:$0xff]
        %v3349 = vld [vmem:[#allocation7 + $0x6b8] sm:$0xff]
        %v3350 = vld [vmem:[#allocation7 + $0x6c0] sm:$0xff]
        %v3351 = vld [vmem:[#allocation7 + $0x6c8] sm:$0xff]
        %v3352 = vld [vmem:[#allocation7 + $0x6d0] sm:$0xff]
        %v3353 = vld [vmem:[#allocation7 + $0x6d8] sm:$0xff]
        %v3354 = vld [vmem:[#allocation7 + $0x6e0] sm:$0xff]
        %v3355 = vld [vmem:[#allocation7 + $0x6e8] sm:$0xff]
        %v3356 = vld [vmem:[#allocation7 + $0x6f0] sm:$0xff]
        %v3357 = vld [vmem:[#allocation7 + $0x6f8] sm:$0xff]
        %v3358 = vld [vmem:[#allocation7 + $0x700] sm:$0xff]
        %v3359 = vld [vmem:[#allocation7 + $0x708] sm:$0xff]
        %v3360 = vld [vmem:[#allocation7 + $0x710] sm:$0xff]
        %v3361 = vld [vmem:[#allocation7 + $0x718] sm:$0xff]
        %v3362 = vld [vmem:[#allocation7 + $0x720] sm:$0xff]
        %v3363 = vld [vmem:[#allocation7 + $0x728] sm:$0xff]
        %v3364 = vld [vmem:[#allocation7 + $0x730] sm:$0xff]
        %v3365 = vld [vmem:[#allocation7 + $0x738] sm:$0xff]
        %v3366 = vld [vmem:[#allocation7 + $0x740] sm:$0xff]
        %v3367 = vld [vmem:[#allocation7 + $0x748] sm:$0xff]
        %v3368 = vld [vmem:[#allocation7 + $0x750] sm:$0xff]
        %v3369 = vld [vmem:[#allocation7 + $0x758] sm:$0xff]
        %v3370 = vld [vmem:[#allocation7 + $0x760] sm:$0xff]
        %v3371 = vld [vmem:[#allocation7 + $0x768] sm:$0xff]
        %v3372 = vld [vmem:[#allocation7 + $0x770] sm:$0xff]
        %v3373 = vld [vmem:[#allocation7 + $0x778] sm:$0xff]
        %v3374 = vld [vmem:[#allocation7 + $0x780] sm:$0xff]
        %v3375 = vld [vmem:[#allocation7 + $0x788] sm:$0xff]
        %v3376 = vld [vmem:[#allocation7 + $0x790] sm:$0xff]
        %v3377 = vld [vmem:[#allocation7 + $0x798] sm:$0xff]
        %v3378 = vld [vmem:[#allocation7 + $0x7a0] sm:$0xff]
        %v3379 = vld [vmem:[#allocation7 + $0x7a8] sm:$0xff]
        %v3380 = vld [vmem:[#allocation7 + $0x7b0] sm:$0xff]
        %v3381 = vld [vmem:[#allocation7 + $0x7b8] sm:$0xff]
        %v3382 = vld [vmem:[#allocation7 + $0x7c0] sm:$0xff]
        %v3383 = vld [vmem:[#allocation7 + $0x7c8] sm:$0xff]
        %v3384 = vld [vmem:[#allocation7 + $0x7d0] sm:$0xff]
        %v3385 = vld [vmem:[#allocation7 + $0x7d8] sm:$0xff]
        %v3386 = vld [vmem:[#allocation7 + $0x7e0] sm:$0xff]
        %v3387 = vld [vmem:[#allocation7 + $0x7e8] sm:$0xff]
        %v3388 = vld [vmem:[#allocation7 + $0x7f0] sm:$0xff]
        %v3389 = vld [vmem:[#allocation7 + $0x7f8] sm:$0xff]
        %v3390 = vld [vmem:[%s9] sm:$0xff]
        %v3392 = vperm.slane %v3390, 0
        %v3393 = vperm.slane %v3390, 1
        %v3394 = vperm.slane %v3390, 2
        %v3395 = vperm.slane %v3390, 3
        %v3396 = vperm.slane %v3390, 4
        %v3397 = vperm.slane %v3390, 5
        %v3398 = vperm.slane %v3390, 6
        %v3399 = vperm.slane %v3390, 7
        %v3664 = vunpack.c.l.b16 %v3134
        %v3665 = vunpack.c.h.b16 %v3134
        %v3666 = vunpack.c.l.b16 %v3135
        %v3667 = vunpack.c.h.b16 %v3135
        %v3668 = vunpack.c.l.b16 %v3136
        %v3669 = vunpack.c.h.b16 %v3136
        %v3670 = vunpack.c.l.b16 %v3137
        %v3671 = vunpack.c.h.b16 %v3137
        %v3672 = vunpack.c.l.b16 %v3138
        %v3673 = vunpack.c.h.b16 %v3138
        %v3674 = vunpack.c.l.b16 %v3139
        %v3675 = vunpack.c.h.b16 %v3139
        %v3676 = vunpack.c.l.b16 %v3140
        %v3677 = vunpack.c.h.b16 %v3140
        %v3678 = vunpack.c.l.b16 %v3141
        %v3679 = vunpack.c.h.b16 %v3141
        %v3680 = vunpack.c.l.b16 %v3142
        %v3681 = vunpack.c.h.b16 %v3142
        %v3682 = vunpack.c.l.b16 %v3143
        %v3683 = vunpack.c.h.b16 %v3143
        %v3684 = vunpack.c.l.b16 %v3144
        %v3685 = vunpack.c.h.b16 %v3144
        %v3686 = vunpack.c.l.b16 %v3145
        %v3687 = vunpack.c.h.b16 %v3145
        %v3688 = vunpack.c.l.b16 %v3146
        %v3689 = vunpack.c.h.b16 %v3146
        %v3690 = vunpack.c.l.b16 %v3147
        %v3691 = vunpack.c.h.b16 %v3147
        %v3692 = vunpack.c.l.b16 %v3148
        %v3693 = vunpack.c.h.b16 %v3148
        %v3694 = vunpack.c.l.b16 %v3149
        %v3695 = vunpack.c.h.b16 %v3149
        %v3696 = vunpack.c.l.b16 %v3150
        %v3697 = vunpack.c.h.b16 %v3150
        %v3698 = vunpack.c.l.b16 %v3151
        %v3699 = vunpack.c.h.b16 %v3151
        %v3700 = vunpack.c.l.b16 %v3152
        %v3701 = vunpack.c.h.b16 %v3152
        %v3702 = vunpack.c.l.b16 %v3153
        %v3703 = vunpack.c.h.b16 %v3153
        %v3704 = vunpack.c.l.b16 %v3154
        %v3705 = vunpack.c.h.b16 %v3154
        %v3706 = vunpack.c.l.b16 %v3155
        %v3707 = vunpack.c.h.b16 %v3155
        %v3708 = vunpack.c.l.b16 %v3156
        %v3709 = vunpack.c.h.b16 %v3156
        %v3710 = vunpack.c.l.b16 %v3157
        %v3711 = vunpack.c.h.b16 %v3157
        %v3712 = vunpack.c.l.b16 %v3158
        %v3713 = vunpack.c.h.b16 %v3158
        %v3714 = vunpack.c.l.b16 %v3159
        %v3715 = vunpack.c.h.b16 %v3159
        %v3716 = vunpack.c.l.b16 %v3160
        %v3717 = vunpack.c.h.b16 %v3160
        %v3718 = vunpack.c.l.b16 %v3161
        %v3719 = vunpack.c.h.b16 %v3161
        %v3720 = vunpack.c.l.b16 %v3162
        %v3721 = vunpack.c.h.b16 %v3162
        %v3722 = vunpack.c.l.b16 %v3163
        %v3723 = vunpack.c.h.b16 %v3163
        %v3724 = vunpack.c.l.b16 %v3164
        %v3725 = vunpack.c.h.b16 %v3164
        %v3726 = vunpack.c.l.b16 %v3165
        %v3727 = vunpack.c.h.b16 %v3165
        %v3728 = vunpack.c.l.b16 %v3166
        %v3729 = vunpack.c.h.b16 %v3166
        %v3730 = vunpack.c.l.b16 %v3167
        %v3731 = vunpack.c.h.b16 %v3167
        %v3732 = vunpack.c.l.b16 %v3168
        %v3733 = vunpack.c.h.b16 %v3168
        %v3734 = vunpack.c.l.b16 %v3169
        %v3735 = vunpack.c.h.b16 %v3169
        %v3736 = vunpack.c.l.b16 %v3170
        %v3737 = vunpack.c.h.b16 %v3170
        %v3738 = vunpack.c.l.b16 %v3171
        %v3739 = vunpack.c.h.b16 %v3171
        %v3740 = vunpack.c.l.b16 %v3172
        %v3741 = vunpack.c.h.b16 %v3172
        %v3742 = vunpack.c.l.b16 %v3173
        %v3743 = vunpack.c.h.b16 %v3173
        %v3744 = vunpack.c.l.b16 %v3174
        %v3745 = vunpack.c.h.b16 %v3174
        %v3746 = vunpack.c.l.b16 %v3175
        %v3747 = vunpack.c.h.b16 %v3175
        %v3748 = vunpack.c.l.b16 %v3176
        %v3749 = vunpack.c.h.b16 %v3176
        %v3750 = vunpack.c.l.b16 %v3177
        %v3751 = vunpack.c.h.b16 %v3177
        %v3752 = vunpack.c.l.b16 %v3178
        %v3753 = vunpack.c.h.b16 %v3178
        %v3754 = vunpack.c.l.b16 %v3179
        %v3755 = vunpack.c.h.b16 %v3179
        %v3756 = vunpack.c.l.b16 %v3180
        %v3757 = vunpack.c.h.b16 %v3180
        %v3758 = vunpack.c.l.b16 %v3181
        %v3759 = vunpack.c.h.b16 %v3181
        %v3760 = vunpack.c.l.b16 %v3182
        %v3761 = vunpack.c.h.b16 %v3182
        %v3762 = vunpack.c.l.b16 %v3183
        %v3763 = vunpack.c.h.b16 %v3183
        %v3764 = vunpack.c.l.b16 %v3184
        %v3765 = vunpack.c.h.b16 %v3184
        %v3766 = vunpack.c.l.b16 %v3185
        %v3767 = vunpack.c.h.b16 %v3185
        %v3768 = vunpack.c.l.b16 %v3186
        %v3769 = vunpack.c.h.b16 %v3186
        %v3770 = vunpack.c.l.b16 %v3187
        %v3771 = vunpack.c.h.b16 %v3187
        %v3772 = vunpack.c.l.b16 %v3188
        %v3773 = vunpack.c.h.b16 %v3188
        %v3774 = vunpack.c.l.b16 %v3189
        %v3775 = vunpack.c.h.b16 %v3189
        %v3776 = vunpack.c.l.b16 %v3190
        %v3777 = vunpack.c.h.b16 %v3190
        %v3778 = vunpack.c.l.b16 %v3191
        %v3779 = vunpack.c.h.b16 %v3191
        %v3780 = vunpack.c.l.b16 %v3192
        %v3781 = vunpack.c.h.b16 %v3192
        %v3782 = vunpack.c.l.b16 %v3193
        %v3783 = vunpack.c.h.b16 %v3193
        %v3784 = vunpack.c.l.b16 %v3194
        %v3785 = vunpack.c.h.b16 %v3194
        %v3786 = vunpack.c.l.b16 %v3195
        %v3787 = vunpack.c.h.b16 %v3195
        %v3788 = vunpack.c.l.b16 %v3196
        %v3789 = vunpack.c.h.b16 %v3196
        %v3790 = vunpack.c.l.b16 %v3197
        %v3791 = vunpack.c.h.b16 %v3197
        %v3792 = vunpack.c.l.b16 %v3198
        %v3793 = vunpack.c.h.b16 %v3198
        %v3794 = vunpack.c.l.b16 %v3199
        %v3795 = vunpack.c.h.b16 %v3199
        %v3796 = vunpack.c.l.b16 %v3200
        %v3797 = vunpack.c.h.b16 %v3200
        %v3798 = vunpack.c.l.b16 %v3201
        %v3799 = vunpack.c.h.b16 %v3201
        %v3800 = vunpack.c.l.b16 %v3202
        %v3801 = vunpack.c.h.b16 %v3202
        %v3802 = vunpack.c.l.b16 %v3203
        %v3803 = vunpack.c.h.b16 %v3203
        %v3804 = vunpack.c.l.b16 %v3204
        %v3805 = vunpack.c.h.b16 %v3204
        %v3806 = vunpack.c.l.b16 %v3205
        %v3807 = vunpack.c.h.b16 %v3205
        %v3808 = vunpack.c.l.b16 %v3206
        %v3809 = vunpack.c.h.b16 %v3206
        %v3810 = vunpack.c.l.b16 %v3207
        %v3811 = vunpack.c.h.b16 %v3207
        %v3812 = vunpack.c.l.b16 %v3208
        %v3813 = vunpack.c.h.b16 %v3208
        %v3814 = vunpack.c.l.b16 %v3209
        %v3815 = vunpack.c.h.b16 %v3209
        %v3816 = vunpack.c.l.b16 %v3210
        %v3817 = vunpack.c.h.b16 %v3210
        %v3818 = vunpack.c.l.b16 %v3211
        %v3819 = vunpack.c.h.b16 %v3211
        %v3820 = vunpack.c.l.b16 %v3212
        %v3821 = vunpack.c.h.b16 %v3212
        %v3822 = vunpack.c.l.b16 %v3213
        %v3823 = vunpack.c.h.b16 %v3213
        %v3824 = vunpack.c.l.b16 %v3214
        %v3825 = vunpack.c.h.b16 %v3214
        %v3826 = vunpack.c.l.b16 %v3215
        %v3827 = vunpack.c.h.b16 %v3215
        %v3828 = vunpack.c.l.b16 %v3216
        %v3829 = vunpack.c.h.b16 %v3216
        %v3830 = vunpack.c.l.b16 %v3217
        %v3831 = vunpack.c.h.b16 %v3217
        %v3832 = vunpack.c.l.b16 %v3218
        %v3833 = vunpack.c.h.b16 %v3218
        %v3834 = vunpack.c.l.b16 %v3219
        %v3835 = vunpack.c.h.b16 %v3219
        %v3836 = vunpack.c.l.b16 %v3220
        %v3837 = vunpack.c.h.b16 %v3220
        %v3838 = vunpack.c.l.b16 %v3221
        %v3839 = vunpack.c.h.b16 %v3221
        %v3840 = vunpack.c.l.b16 %v3222
        %v3841 = vunpack.c.h.b16 %v3222
        %v3842 = vunpack.c.l.b16 %v3223
        %v3843 = vunpack.c.h.b16 %v3223
        %v3844 = vunpack.c.l.b16 %v3224
        %v3845 = vunpack.c.h.b16 %v3224
        %v3846 = vunpack.c.l.b16 %v3225
        %v3847 = vunpack.c.h.b16 %v3225
        %v3848 = vunpack.c.l.b16 %v3226
        %v3849 = vunpack.c.h.b16 %v3226
        %v3850 = vunpack.c.l.b16 %v3227
        %v3851 = vunpack.c.h.b16 %v3227
        %v3852 = vunpack.c.l.b16 %v3228
        %v3853 = vunpack.c.h.b16 %v3228
        %v3854 = vunpack.c.l.b16 %v3229
        %v3855 = vunpack.c.h.b16 %v3229
        %v3856 = vunpack.c.l.b16 %v3230
        %v3857 = vunpack.c.h.b16 %v3230
        %v3858 = vunpack.c.l.b16 %v3231
        %v3859 = vunpack.c.h.b16 %v3231
        %v3860 = vunpack.c.l.b16 %v3232
        %v3861 = vunpack.c.h.b16 %v3232
        %v3862 = vunpack.c.l.b16 %v3233
        %v3863 = vunpack.c.h.b16 %v3233
        %v3864 = vunpack.c.l.b16 %v3234
        %v3865 = vunpack.c.h.b16 %v3234
        %v3866 = vunpack.c.l.b16 %v3235
        %v3867 = vunpack.c.h.b16 %v3235
        %v3868 = vunpack.c.l.b16 %v3236
        %v3869 = vunpack.c.h.b16 %v3236
        %v3870 = vunpack.c.l.b16 %v3237
        %v3871 = vunpack.c.h.b16 %v3237
        %v3872 = vunpack.c.l.b16 %v3238
        %v3873 = vunpack.c.h.b16 %v3238
        %v3874 = vunpack.c.l.b16 %v3239
        %v3875 = vunpack.c.h.b16 %v3239
        %v3876 = vunpack.c.l.b16 %v3240
        %v3877 = vunpack.c.h.b16 %v3240
        %v3878 = vunpack.c.l.b16 %v3241
        %v3879 = vunpack.c.h.b16 %v3241
        %v3880 = vunpack.c.l.b16 %v3242
        %v3881 = vunpack.c.h.b16 %v3242
        %v3882 = vunpack.c.l.b16 %v3243
        %v3883 = vunpack.c.h.b16 %v3243
        %v3884 = vunpack.c.l.b16 %v3244
        %v3885 = vunpack.c.h.b16 %v3244
        %v3886 = vunpack.c.l.b16 %v3245
        %v3887 = vunpack.c.h.b16 %v3245
        %v3888 = vunpack.c.l.b16 %v3246
        %v3889 = vunpack.c.h.b16 %v3246
        %v3890 = vunpack.c.l.b16 %v3247
        %v3891 = vunpack.c.h.b16 %v3247
        %v3892 = vunpack.c.l.b16 %v3248
        %v3893 = vunpack.c.h.b16 %v3248
        %v3894 = vunpack.c.l.b16 %v3249
        %v3895 = vunpack.c.h.b16 %v3249
        %v3896 = vunpack.c.l.b16 %v3250
        %v3897 = vunpack.c.h.b16 %v3250
        %v3898 = vunpack.c.l.b16 %v3251
        %v3899 = vunpack.c.h.b16 %v3251
        %v3900 = vunpack.c.l.b16 %v3252
        %v3901 = vunpack.c.h.b16 %v3252
        %v3902 = vunpack.c.l.b16 %v3253
        %v3903 = vunpack.c.h.b16 %v3253
        %v3904 = vunpack.c.l.b16 %v3254
        %v3905 = vunpack.c.h.b16 %v3254
        %v3906 = vunpack.c.l.b16 %v3255
        %v3907 = vunpack.c.h.b16 %v3255
        %v3908 = vunpack.c.l.b16 %v3256
        %v3909 = vunpack.c.h.b16 %v3256
        %v3910 = vunpack.c.l.b16 %v3257
        %v3911 = vunpack.c.h.b16 %v3257
        %v3912 = vunpack.c.l.b16 %v3258
        %v3913 = vunpack.c.h.b16 %v3258
        %v3914 = vunpack.c.l.b16 %v3259
        %v3915 = vunpack.c.h.b16 %v3259
        %v3916 = vunpack.c.l.b16 %v3260
        %v3917 = vunpack.c.h.b16 %v3260
        %v3918 = vunpack.c.l.b16 %v3261
        %v3919 = vunpack.c.h.b16 %v3261
        %v3920 = vunpack.c.l.b16 %v3262
        %v3921 = vunpack.c.h.b16 %v3262
        %v3922 = vunpack.c.l.b16 %v3263
        %v3923 = vunpack.c.h.b16 %v3263
        %v3924 = vunpack.c.l.b16 %v3264
        %v3925 = vunpack.c.h.b16 %v3264
        %v3926 = vunpack.c.l.b16 %v3265
        %v3927 = vunpack.c.h.b16 %v3265
        %v3928 = vunpack.c.l.b16 %v3266
        %v3929 = vunpack.c.h.b16 %v3266
        %v3930 = vunpack.c.l.b16 %v3267
        %v3931 = vunpack.c.h.b16 %v3267
        %v3932 = vunpack.c.l.b16 %v3268
        %v3933 = vunpack.c.h.b16 %v3268
        %v3934 = vunpack.c.l.b16 %v3269
        %v3935 = vunpack.c.h.b16 %v3269
        %v3936 = vunpack.c.l.b16 %v3270
        %v3937 = vunpack.c.h.b16 %v3270
        %v3938 = vunpack.c.l.b16 %v3271
        %v3939 = vunpack.c.h.b16 %v3271
        %v3940 = vunpack.c.l.b16 %v3272
        %v3941 = vunpack.c.h.b16 %v3272
        %v3942 = vunpack.c.l.b16 %v3273
        %v3943 = vunpack.c.h.b16 %v3273
        %v3944 = vunpack.c.l.b16 %v3274
        %v3945 = vunpack.c.h.b16 %v3274
        %v3946 = vunpack.c.l.b16 %v3275
        %v3947 = vunpack.c.h.b16 %v3275
        %v3948 = vunpack.c.l.b16 %v3276
        %v3949 = vunpack.c.h.b16 %v3276
        %v3950 = vunpack.c.l.b16 %v3277
        %v3951 = vunpack.c.h.b16 %v3277
        %v3952 = vunpack.c.l.b16 %v3278
        %v3953 = vunpack.c.h.b16 %v3278
        %v3954 = vunpack.c.l.b16 %v3279
        %v3955 = vunpack.c.h.b16 %v3279
        %v3956 = vunpack.c.l.b16 %v3280
        %v3957 = vunpack.c.h.b16 %v3280
        %v3958 = vunpack.c.l.b16 %v3281
        %v3959 = vunpack.c.h.b16 %v3281
        %v3960 = vunpack.c.l.b16 %v3282
        %v3961 = vunpack.c.h.b16 %v3282
        %v3962 = vunpack.c.l.b16 %v3283
        %v3963 = vunpack.c.h.b16 %v3283
        %v3964 = vunpack.c.l.b16 %v3284
        %v3965 = vunpack.c.h.b16 %v3284
        %v3966 = vunpack.c.l.b16 %v3285
        %v3967 = vunpack.c.h.b16 %v3285
        %v3968 = vunpack.c.l.b16 %v3286
        %v3969 = vunpack.c.h.b16 %v3286
        %v3970 = vunpack.c.l.b16 %v3287
        %v3971 = vunpack.c.h.b16 %v3287
        %v3972 = vunpack.c.l.b16 %v3288
        %v3973 = vunpack.c.h.b16 %v3288
        %v3974 = vunpack.c.l.b16 %v3289
        %v3975 = vunpack.c.h.b16 %v3289
        %v3976 = vunpack.c.l.b16 %v3290
        %v3977 = vunpack.c.h.b16 %v3290
        %v3978 = vunpack.c.l.b16 %v3291
        %v3979 = vunpack.c.h.b16 %v3291
        %v3980 = vunpack.c.l.b16 %v3292
        %v3981 = vunpack.c.h.b16 %v3292
        %v3982 = vunpack.c.l.b16 %v3293
        %v3983 = vunpack.c.h.b16 %v3293
        %v3984 = vunpack.c.l.b16 %v3294
        %v3985 = vunpack.c.h.b16 %v3294
        %v3986 = vunpack.c.l.b16 %v3295
        %v3987 = vunpack.c.h.b16 %v3295
        %v3988 = vunpack.c.l.b16 %v3296
        %v3989 = vunpack.c.h.b16 %v3296
        %v3990 = vunpack.c.l.b16 %v3297
        %v3991 = vunpack.c.h.b16 %v3297
        %v3992 = vunpack.c.l.b16 %v3298
        %v3993 = vunpack.c.h.b16 %v3298
        %v3994 = vunpack.c.l.b16 %v3299
        %v3995 = vunpack.c.h.b16 %v3299
        %v3996 = vunpack.c.l.b16 %v3300
        %v3997 = vunpack.c.h.b16 %v3300
        %v3998 = vunpack.c.l.b16 %v3301
        %v3999 = vunpack.c.h.b16 %v3301
        %v4000 = vunpack.c.l.b16 %v3302
        %v4001 = vunpack.c.h.b16 %v3302
        %v4002 = vunpack.c.l.b16 %v3303
        %v4003 = vunpack.c.h.b16 %v3303
        %v4004 = vunpack.c.l.b16 %v3304
        %v4005 = vunpack.c.h.b16 %v3304
        %v4006 = vunpack.c.l.b16 %v3305
        %v4007 = vunpack.c.h.b16 %v3305
        %v4008 = vunpack.c.l.b16 %v3306
        %v4009 = vunpack.c.h.b16 %v3306
        %v4010 = vunpack.c.l.b16 %v3307
        %v4011 = vunpack.c.h.b16 %v3307
        %v4012 = vunpack.c.l.b16 %v3308
        %v4013 = vunpack.c.h.b16 %v3308
        %v4014 = vunpack.c.l.b16 %v3309
        %v4015 = vunpack.c.h.b16 %v3309
        %v4016 = vunpack.c.l.b16 %v3310
        %v4017 = vunpack.c.h.b16 %v3310
        %v4018 = vunpack.c.l.b16 %v3311
        %v4019 = vunpack.c.h.b16 %v3311
        %v4020 = vunpack.c.l.b16 %v3312
        %v4021 = vunpack.c.h.b16 %v3312
        %v4022 = vunpack.c.l.b16 %v3313
        %v4023 = vunpack.c.h.b16 %v3313
        %v4024 = vunpack.c.l.b16 %v3314
        %v4025 = vunpack.c.h.b16 %v3314
        %v4026 = vunpack.c.l.b16 %v3315
        %v4027 = vunpack.c.h.b16 %v3315
        %v4028 = vunpack.c.l.b16 %v3316
        %v4029 = vunpack.c.h.b16 %v3316
        %v4030 = vunpack.c.l.b16 %v3317
        %v4031 = vunpack.c.h.b16 %v3317
        %v4032 = vunpack.c.l.b16 %v3318
        %v4033 = vunpack.c.h.b16 %v3318
        %v4034 = vunpack.c.l.b16 %v3319
        %v4035 = vunpack.c.h.b16 %v3319
        %v4036 = vunpack.c.l.b16 %v3320
        %v4037 = vunpack.c.h.b16 %v3320
        %v4038 = vunpack.c.l.b16 %v3321
        %v4039 = vunpack.c.h.b16 %v3321
        %v4040 = vunpack.c.l.b16 %v3322
        %v4041 = vunpack.c.h.b16 %v3322
        %v4042 = vunpack.c.l.b16 %v3323
        %v4043 = vunpack.c.h.b16 %v3323
        %v4044 = vunpack.c.l.b16 %v3324
        %v4045 = vunpack.c.h.b16 %v3324
        %v4046 = vunpack.c.l.b16 %v3325
        %v4047 = vunpack.c.h.b16 %v3325
        %v4048 = vunpack.c.l.b16 %v3326
        %v4049 = vunpack.c.h.b16 %v3326
        %v4050 = vunpack.c.l.b16 %v3327
        %v4051 = vunpack.c.h.b16 %v3327
        %v4052 = vunpack.c.l.b16 %v3328
        %v4053 = vunpack.c.h.b16 %v3328
        %v4054 = vunpack.c.l.b16 %v3329
        %v4055 = vunpack.c.h.b16 %v3329
        %v4056 = vunpack.c.l.b16 %v3330
        %v4057 = vunpack.c.h.b16 %v3330
        %v4058 = vunpack.c.l.b16 %v3331
        %v4059 = vunpack.c.h.b16 %v3331
        %v4060 = vunpack.c.l.b16 %v3332
        %v4061 = vunpack.c.h.b16 %v3332
        %v4062 = vunpack.c.l.b16 %v3333
        %v4063 = vunpack.c.h.b16 %v3333
        %v4064 = vunpack.c.l.b16 %v3334
        %v4065 = vunpack.c.h.b16 %v3334
        %v4066 = vunpack.c.l.b16 %v3335
        %v4067 = vunpack.c.h.b16 %v3335
        %v4068 = vunpack.c.l.b16 %v3336
        %v4069 = vunpack.c.h.b16 %v3336
        %v4070 = vunpack.c.l.b16 %v3337
        %v4071 = vunpack.c.h.b16 %v3337
        %v4072 = vunpack.c.l.b16 %v3338
        %v4073 = vunpack.c.h.b16 %v3338
        %v4074 = vunpack.c.l.b16 %v3339
        %v4075 = vunpack.c.h.b16 %v3339
        %v4076 = vunpack.c.l.b16 %v3340
        %v4077 = vunpack.c.h.b16 %v3340
        %v4078 = vunpack.c.l.b16 %v3341
        %v4079 = vunpack.c.h.b16 %v3341
        %v4080 = vunpack.c.l.b16 %v3342
        %v4081 = vunpack.c.h.b16 %v3342
        %v4082 = vunpack.c.l.b16 %v3343
        %v4083 = vunpack.c.h.b16 %v3343
        %v4084 = vunpack.c.l.b16 %v3344
        %v4085 = vunpack.c.h.b16 %v3344
        %v4086 = vunpack.c.l.b16 %v3345
        %v4087 = vunpack.c.h.b16 %v3345
        %v4088 = vunpack.c.l.b16 %v3346
        %v4089 = vunpack.c.h.b16 %v3346
        %v4090 = vunpack.c.l.b16 %v3347
        %v4091 = vunpack.c.h.b16 %v3347
        %v4092 = vunpack.c.l.b16 %v3348
        %v4093 = vunpack.c.h.b16 %v3348
        %v4094 = vunpack.c.l.b16 %v3349
        %v4095 = vunpack.c.h.b16 %v3349
        %v4096 = vunpack.c.l.b16 %v3350
        %v4097 = vunpack.c.h.b16 %v3350
        %v4098 = vunpack.c.l.b16 %v3351
        %v4099 = vunpack.c.h.b16 %v3351
        %v4100 = vunpack.c.l.b16 %v3352
        %v4101 = vunpack.c.h.b16 %v3352
        %v4102 = vunpack.c.l.b16 %v3353
        %v4103 = vunpack.c.h.b16 %v3353
        %v4104 = vunpack.c.l.b16 %v3354
        %v4105 = vunpack.c.h.b16 %v3354
        %v4106 = vunpack.c.l.b16 %v3355
        %v4107 = vunpack.c.h.b16 %v3355
        %v4108 = vunpack.c.l.b16 %v3356
        %v4109 = vunpack.c.h.b16 %v3356
        %v4110 = vunpack.c.l.b16 %v3357
        %v4111 = vunpack.c.h.b16 %v3357
        %v4112 = vunpack.c.l.b16 %v3358
        %v4113 = vunpack.c.h.b16 %v3358
        %v4114 = vunpack.c.l.b16 %v3359
        %v4115 = vunpack.c.h.b16 %v3359
        %v4116 = vunpack.c.l.b16 %v3360
        %v4117 = vunpack.c.h.b16 %v3360
        %v4118 = vunpack.c.l.b16 %v3361
        %v4119 = vunpack.c.h.b16 %v3361
        %v4120 = vunpack.c.l.b16 %v3362
        %v4121 = vunpack.c.h.b16 %v3362
        %v4122 = vunpack.c.l.b16 %v3363
        %v4123 = vunpack.c.h.b16 %v3363
        %v4124 = vunpack.c.l.b16 %v3364
        %v4125 = vunpack.c.h.b16 %v3364
        %v4126 = vunpack.c.l.b16 %v3365
        %v4127 = vunpack.c.h.b16 %v3365
        %v4128 = vunpack.c.l.b16 %v3366
        %v4129 = vunpack.c.h.b16 %v3366
        %v4130 = vunpack.c.l.b16 %v3367
        %v4131 = vunpack.c.h.b16 %v3367
        %v4132 = vunpack.c.l.b16 %v3368
        %v4133 = vunpack.c.h.b16 %v3368
        %v4134 = vunpack.c.l.b16 %v3369
        %v4135 = vunpack.c.h.b16 %v3369
        %v4136 = vunpack.c.l.b16 %v3370
        %v4137 = vunpack.c.h.b16 %v3370
        %v4138 = vunpack.c.l.b16 %v3371
        %v4139 = vunpack.c.h.b16 %v3371
        %v4140 = vunpack.c.l.b16 %v3372
        %v4141 = vunpack.c.h.b16 %v3372
        %v4142 = vunpack.c.l.b16 %v3373
        %v4143 = vunpack.c.h.b16 %v3373
        %v4144 = vunpack.c.l.b16 %v3374
        %v4145 = vunpack.c.h.b16 %v3374
        %v4146 = vunpack.c.l.b16 %v3375
        %v4147 = vunpack.c.h.b16 %v3375
        %v4148 = vunpack.c.l.b16 %v3376
        %v4149 = vunpack.c.h.b16 %v3376
        %v4150 = vunpack.c.l.b16 %v3377
        %v4151 = vunpack.c.h.b16 %v3377
        %v4152 = vunpack.c.l.b16 %v3378
        %v4153 = vunpack.c.h.b16 %v3378
        %v4154 = vunpack.c.l.b16 %v3379
        %v4155 = vunpack.c.h.b16 %v3379
        %v4156 = vunpack.c.l.b16 %v3380
        %v4157 = vunpack.c.h.b16 %v3380
        %v4158 = vunpack.c.l.b16 %v3381
        %v4159 = vunpack.c.h.b16 %v3381
        %v4160 = vunpack.c.l.b16 %v3382
        %v4161 = vunpack.c.h.b16 %v3382
        %v4162 = vunpack.c.l.b16 %v3383
        %v4163 = vunpack.c.h.b16 %v3383
        %v4164 = vunpack.c.l.b16 %v3384
        %v4165 = vunpack.c.h.b16 %v3384
        %v4166 = vunpack.c.l.b16 %v3385
        %v4167 = vunpack.c.h.b16 %v3385
        %v4168 = vunpack.c.l.b16 %v3386
        %v4169 = vunpack.c.h.b16 %v3386
        %v4170 = vunpack.c.l.b16 %v3387
        %v4171 = vunpack.c.h.b16 %v3387
        %v4172 = vunpack.c.l.b16 %v3388
        %v4173 = vunpack.c.h.b16 %v3388
        %v4174 = vunpack.c.l.b16 %v3389
        %v4175 = vunpack.c.h.b16 %v3389
        %v4176 = vpack.c.b16 %v3672, %v3664
        %v4177 = vpack.c.b16 %v3673, %v3665
        %v4178 = vpack.c.b16 %v3674, %v3666
        %v4179 = vpack.c.b16 %v3675, %v3667
        %v4180 = vpack.c.b16 %v3676, %v3668
        %v4181 = vpack.c.b16 %v3677, %v3669
        %v4182 = vpack.c.b16 %v3678, %v3670
        %v4183 = vpack.c.b16 %v3679, %v3671
        %v4184 = vpack.c.b16 %v3688, %v3680
        %v4185 = vpack.c.b16 %v3689, %v3681
        %v4186 = vpack.c.b16 %v3690, %v3682
        %v4187 = vpack.c.b16 %v3691, %v3683
        %v4188 = vpack.c.b16 %v3692, %v3684
        %v4189 = vpack.c.b16 %v3693, %v3685
        %v4190 = vpack.c.b16 %v3694, %v3686
        %v4191 = vpack.c.b16 %v3695, %v3687
        %v4192 = vpack.c.b16 %v3704, %v3696
        %v4193 = vpack.c.b16 %v3705, %v3697
        %v4194 = vpack.c.b16 %v3706, %v3698
        %v4195 = vpack.c.b16 %v3707, %v3699
        %v4196 = vpack.c.b16 %v3708, %v3700
        %v4197 = vpack.c.b16 %v3709, %v3701
        %v4198 = vpack.c.b16 %v3710, %v3702
        %v4199 = vpack.c.b16 %v3711, %v3703
        %v4200 = vpack.c.b16 %v3720, %v3712
        %v4201 = vpack.c.b16 %v3721, %v3713
        %v4202 = vpack.c.b16 %v3722, %v3714
        %v4203 = vpack.c.b16 %v3723, %v3715
        %v4204 = vpack.c.b16 %v3724, %v3716
        %v4205 = vpack.c.b16 %v3725, %v3717
        %v4206 = vpack.c.b16 %v3726, %v3718
        %v4207 = vpack.c.b16 %v3727, %v3719
        %v4208 = vpack.c.b16 %v3736, %v3728
        %v4209 = vpack.c.b16 %v3737, %v3729
        %v4210 = vpack.c.b16 %v3738, %v3730
        %v4211 = vpack.c.b16 %v3739, %v3731
        %v4212 = vpack.c.b16 %v3740, %v3732
        %v4213 = vpack.c.b16 %v3741, %v3733
        %v4214 = vpack.c.b16 %v3742, %v3734
        %v4215 = vpack.c.b16 %v3743, %v3735
        %v4216 = vpack.c.b16 %v3752, %v3744
        %v4217 = vpack.c.b16 %v3753, %v3745
        %v4218 = vpack.c.b16 %v3754, %v3746
        %v4219 = vpack.c.b16 %v3755, %v3747
        %v4220 = vpack.c.b16 %v3756, %v3748
        %v4221 = vpack.c.b16 %v3757, %v3749
        %v4222 = vpack.c.b16 %v3758, %v3750
        %v4223 = vpack.c.b16 %v3759, %v3751
        %v4224 = vpack.c.b16 %v3768, %v3760
        %v4225 = vpack.c.b16 %v3769, %v3761
        %v4226 = vpack.c.b16 %v3770, %v3762
        %v4227 = vpack.c.b16 %v3771, %v3763
        %v4228 = vpack.c.b16 %v3772, %v3764
        %v4229 = vpack.c.b16 %v3773, %v3765
        %v4230 = vpack.c.b16 %v3774, %v3766
        %v4231 = vpack.c.b16 %v3775, %v3767
        %v4232 = vpack.c.b16 %v3784, %v3776
        %v4233 = vpack.c.b16 %v3785, %v3777
        %v4234 = vpack.c.b16 %v3786, %v3778
        %v4235 = vpack.c.b16 %v3787, %v3779
        %v4236 = vpack.c.b16 %v3788, %v3780
        %v4237 = vpack.c.b16 %v3789, %v3781
        %v4238 = vpack.c.b16 %v3790, %v3782
        %v4239 = vpack.c.b16 %v3791, %v3783
        %v4240 = vpack.c.b16 %v3800, %v3792
        %v4241 = vpack.c.b16 %v3801, %v3793
        %v4242 = vpack.c.b16 %v3802, %v3794
        %v4243 = vpack.c.b16 %v3803, %v3795
        %v4244 = vpack.c.b16 %v3804, %v3796
        %v4245 = vpack.c.b16 %v3805, %v3797
        %v4246 = vpack.c.b16 %v3806, %v3798
        %v4247 = vpack.c.b16 %v3807, %v3799
        %v4248 = vpack.c.b16 %v3816, %v3808
        %v4249 = vpack.c.b16 %v3817, %v3809
        %v4250 = vpack.c.b16 %v3818, %v3810
        %v4251 = vpack.c.b16 %v3819, %v3811
        %v4252 = vpack.c.b16 %v3820, %v3812
        %v4253 = vpack.c.b16 %v3821, %v3813
        %v4254 = vpack.c.b16 %v3822, %v3814
        %v4255 = vpack.c.b16 %v3823, %v3815
        %v4256 = vpack.c.b16 %v3832, %v3824
        %v4257 = vpack.c.b16 %v3833, %v3825
        %v4258 = vpack.c.b16 %v3834, %v3826
        %v4259 = vpack.c.b16 %v3835, %v3827
        %v4260 = vpack.c.b16 %v3836, %v3828
        %v4261 = vpack.c.b16 %v3837, %v3829
        %v4262 = vpack.c.b16 %v3838, %v3830
        %v4263 = vpack.c.b16 %v3839, %v3831
        %v4264 = vpack.c.b16 %v3848, %v3840
        %v4265 = vpack.c.b16 %v3849, %v3841
        %v4266 = vpack.c.b16 %v3850, %v3842
        %v4267 = vpack.c.b16 %v3851, %v3843
        %v4268 = vpack.c.b16 %v3852, %v3844
        %v4269 = vpack.c.b16 %v3853, %v3845
        %v4270 = vpack.c.b16 %v3854, %v3846
        %v4271 = vpack.c.b16 %v3855, %v3847
        %v4272 = vpack.c.b16 %v3864, %v3856
        %v4273 = vpack.c.b16 %v3865, %v3857
        %v4274 = vpack.c.b16 %v3866, %v3858
        %v4275 = vpack.c.b16 %v3867, %v3859
        %v4276 = vpack.c.b16 %v3868, %v3860
        %v4277 = vpack.c.b16 %v3869, %v3861
        %v4278 = vpack.c.b16 %v3870, %v3862
        %v4279 = vpack.c.b16 %v3871, %v3863
        %v4280 = vpack.c.b16 %v3880, %v3872
        %v4281 = vpack.c.b16 %v3881, %v3873
        %v4282 = vpack.c.b16 %v3882, %v3874
        %v4283 = vpack.c.b16 %v3883, %v3875
        %v4284 = vpack.c.b16 %v3884, %v3876
        %v4285 = vpack.c.b16 %v3885, %v3877
        %v4286 = vpack.c.b16 %v3886, %v3878
        %v4287 = vpack.c.b16 %v3887, %v3879
        %v4288 = vpack.c.b16 %v3896, %v3888
        %v4289 = vpack.c.b16 %v3897, %v3889
        %v4290 = vpack.c.b16 %v3898, %v3890
        %v4291 = vpack.c.b16 %v3899, %v3891
        %v4292 = vpack.c.b16 %v3900, %v3892
        %v4293 = vpack.c.b16 %v3901, %v3893
        %v4294 = vpack.c.b16 %v3902, %v3894
        %v4295 = vpack.c.b16 %v3903, %v3895
        %v4296 = vpack.c.b16 %v3912, %v3904
        %v4297 = vpack.c.b16 %v3913, %v3905
        %v4298 = vpack.c.b16 %v3914, %v3906
        %v4299 = vpack.c.b16 %v3915, %v3907
        %v4300 = vpack.c.b16 %v3916, %v3908
        %v4301 = vpack.c.b16 %v3917, %v3909
        %v4302 = vpack.c.b16 %v3918, %v3910
        %v4303 = vpack.c.b16 %v3919, %v3911
        %v4304 = vpack.c.b16 %v3928, %v3920
        %v4305 = vpack.c.b16 %v3929, %v3921
        %v4306 = vpack.c.b16 %v3930, %v3922
        %v4307 = vpack.c.b16 %v3931, %v3923
        %v4308 = vpack.c.b16 %v3932, %v3924
        %v4309 = vpack.c.b16 %v3933, %v3925
        %v4310 = vpack.c.b16 %v3934, %v3926
        %v4311 = vpack.c.b16 %v3935, %v3927
        %v4312 = vpack.c.b16 %v3944, %v3936
        %v4313 = vpack.c.b16 %v3945, %v3937
        %v4314 = vpack.c.b16 %v3946, %v3938
        %v4315 = vpack.c.b16 %v3947, %v3939
        %v4316 = vpack.c.b16 %v3948, %v3940
        %v4317 = vpack.c.b16 %v3949, %v3941
        %v4318 = vpack.c.b16 %v3950, %v3942
        %v4319 = vpack.c.b16 %v3951, %v3943
        %v4320 = vpack.c.b16 %v3960, %v3952
        %v4321 = vpack.c.b16 %v3961, %v3953
        %v4322 = vpack.c.b16 %v3962, %v3954
        %v4323 = vpack.c.b16 %v3963, %v3955
        %v4324 = vpack.c.b16 %v3964, %v3956
        %v4325 = vpack.c.b16 %v3965, %v3957
        %v4326 = vpack.c.b16 %v3966, %v3958
        %v4327 = vpack.c.b16 %v3967, %v3959
        %v4328 = vpack.c.b16 %v3976, %v3968
        %v4329 = vpack.c.b16 %v3977, %v3969
        %v4330 = vpack.c.b16 %v3978, %v3970
        %v4331 = vpack.c.b16 %v3979, %v3971
        %v4332 = vpack.c.b16 %v3980, %v3972
        %v4333 = vpack.c.b16 %v3981, %v3973
        %v4334 = vpack.c.b16 %v3982, %v3974
        %v4335 = vpack.c.b16 %v3983, %v3975
        %v4336 = vpack.c.b16 %v3992, %v3984
        %v4337 = vpack.c.b16 %v3993, %v3985
        %v4338 = vpack.c.b16 %v3994, %v3986
        %v4339 = vpack.c.b16 %v3995, %v3987
        %v4340 = vpack.c.b16 %v3996, %v3988
        %v4341 = vpack.c.b16 %v3997, %v3989
        %v4342 = vpack.c.b16 %v3998, %v3990
        %v4343 = vpack.c.b16 %v3999, %v3991
        %v4344 = vpack.c.b16 %v4008, %v4000
        %v4345 = vpack.c.b16 %v4009, %v4001
        %v4346 = vpack.c.b16 %v4010, %v4002
        %v4347 = vpack.c.b16 %v4011, %v4003
        %v4348 = vpack.c.b16 %v4012, %v4004
        %v4349 = vpack.c.b16 %v4013, %v4005
        %v4350 = vpack.c.b16 %v4014, %v4006
        %v4351 = vpack.c.b16 %v4015, %v4007
        %v4352 = vpack.c.b16 %v4024, %v4016
        %v4353 = vpack.c.b16 %v4025, %v4017
        %v4354 = vpack.c.b16 %v4026, %v4018
        %v4355 = vpack.c.b16 %v4027, %v4019
        %v4356 = vpack.c.b16 %v4028, %v4020
        %v4357 = vpack.c.b16 %v4029, %v4021
        %v4358 = vpack.c.b16 %v4030, %v4022
        %v4359 = vpack.c.b16 %v4031, %v4023
        %v4360 = vpack.c.b16 %v4040, %v4032
        %v4361 = vpack.c.b16 %v4041, %v4033
        %v4362 = vpack.c.b16 %v4042, %v4034
        %v4363 = vpack.c.b16 %v4043, %v4035
        %v4364 = vpack.c.b16 %v4044, %v4036
        %v4365 = vpack.c.b16 %v4045, %v4037
        %v4366 = vpack.c.b16 %v4046, %v4038
        %v4367 = vpack.c.b16 %v4047, %v4039
        %v4368 = vpack.c.b16 %v4056, %v4048
        %v4369 = vpack.c.b16 %v4057, %v4049
        %v4370 = vpack.c.b16 %v4058, %v4050
        %v4371 = vpack.c.b16 %v4059, %v4051
        %v4372 = vpack.c.b16 %v4060, %v4052
        %v4373 = vpack.c.b16 %v4061, %v4053
        %v4374 = vpack.c.b16 %v4062, %v4054
        %v4375 = vpack.c.b16 %v4063, %v4055
        %v4376 = vpack.c.b16 %v4072, %v4064
        %v4377 = vpack.c.b16 %v4073, %v4065
        %v4378 = vpack.c.b16 %v4074, %v4066
        %v4379 = vpack.c.b16 %v4075, %v4067
        %v4380 = vpack.c.b16 %v4076, %v4068
        %v4381 = vpack.c.b16 %v4077, %v4069
        %v4382 = vpack.c.b16 %v4078, %v4070
        %v4383 = vpack.c.b16 %v4079, %v4071
        %v4384 = vpack.c.b16 %v4088, %v4080
        %v4385 = vpack.c.b16 %v4089, %v4081
        %v4386 = vpack.c.b16 %v4090, %v4082
        %v4387 = vpack.c.b16 %v4091, %v4083
        %v4388 = vpack.c.b16 %v4092, %v4084
        %v4389 = vpack.c.b16 %v4093, %v4085
        %v4390 = vpack.c.b16 %v4094, %v4086
        %v4391 = vpack.c.b16 %v4095, %v4087
        %v4392 = vpack.c.b16 %v4104, %v4096
        %v4393 = vpack.c.b16 %v4105, %v4097
        %v4394 = vpack.c.b16 %v4106, %v4098
        %v4395 = vpack.c.b16 %v4107, %v4099
        %v4396 = vpack.c.b16 %v4108, %v4100
        %v4397 = vpack.c.b16 %v4109, %v4101
        %v4398 = vpack.c.b16 %v4110, %v4102
        %v4399 = vpack.c.b16 %v4111, %v4103
        %v4400 = vpack.c.b16 %v4120, %v4112
        %v4401 = vpack.c.b16 %v4121, %v4113
        %v4402 = vpack.c.b16 %v4122, %v4114
        %v4403 = vpack.c.b16 %v4123, %v4115
        %v4404 = vpack.c.b16 %v4124, %v4116
        %v4405 = vpack.c.b16 %v4125, %v4117
        %v4406 = vpack.c.b16 %v4126, %v4118
        %v4407 = vpack.c.b16 %v4127, %v4119
        %v4408 = vpack.c.b16 %v4136, %v4128
        %v4409 = vpack.c.b16 %v4137, %v4129
        %v4410 = vpack.c.b16 %v4138, %v4130
        %v4411 = vpack.c.b16 %v4139, %v4131
        %v4412 = vpack.c.b16 %v4140, %v4132
        %v4413 = vpack.c.b16 %v4141, %v4133
        %v4414 = vpack.c.b16 %v4142, %v4134
        %v4415 = vpack.c.b16 %v4143, %v4135
        %v4416 = vpack.c.b16 %v4152, %v4144
        %v4417 = vpack.c.b16 %v4153, %v4145
        %v4418 = vpack.c.b16 %v4154, %v4146
        %v4419 = vpack.c.b16 %v4155, %v4147
        %v4420 = vpack.c.b16 %v4156, %v4148
        %v4421 = vpack.c.b16 %v4157, %v4149
        %v4422 = vpack.c.b16 %v4158, %v4150
        %v4423 = vpack.c.b16 %v4159, %v4151
        %v4424 = vpack.c.b16 %v4168, %v4160
        %v4425 = vpack.c.b16 %v4169, %v4161
        %v4426 = vpack.c.b16 %v4170, %v4162
        %v4427 = vpack.c.b16 %v4171, %v4163
        %v4428 = vpack.c.b16 %v4172, %v4164
        %v4429 = vpack.c.b16 %v4173, %v4165
        %v4430 = vpack.c.b16 %v4174, %v4166
        %v4431 = vpack.c.b16 %v4175, %v4167
        %4688 = vmatpush.bf16.msra.mxu0 %v4232
        %4689 = vmatpush.bf16.msra.mxu0 %v4224
        %4690 = vmatpush.bf16.msra.mxu0 %v4216
        %4691 = vmatpush.bf16.msra.mxu0 %v4208
        %4692 = vmatpush.bf16.msra.mxu0 %v4200
        %4693 = vmatpush.bf16.msra.mxu0 %v4192
        %4694 = vmatpush.bf16.msra.mxu0 %v4184
        %4695 = vmatpush.bf16.msra.mxu0 %v4176
        %4696 = vmatmul.bf16.gmra.mxu0 %v3070
        %v4697 = vpop.f32.mrf.mxu0
        %v4698 = vadd.f32 %v3392, %v4697
        %v4699 = vpop.f32.mrf.mxu0
        %v4700 = vadd.f32 %v3392, %v4699
        %4701 = vmatmul.bf16.gmra.mxu0 %v3074
        %v4702 = vpop.f32.mrf.mxu0
        %v4703 = vadd.f32 %v3392, %v4702
        %v4704 = vpop.f32.mrf.mxu0
        %v4705 = vadd.f32 %v3392, %v4704
        %4706 = vmatmul.bf16.gmra.mxu0 %v3078
        %v4707 = vpop.f32.mrf.mxu0
        %v4708 = vadd.f32 %v3392, %v4707
        %v4709 = vpop.f32.mrf.mxu0
        %v4710 = vadd.f32 %v3392, %v4709
        %4711 = vmatmul.bf16.gmra.mxu0 %v3082
        %v4712 = vpop.f32.mrf.mxu0
        %v4713 = vadd.f32 %v3392, %v4712
        %v4714 = vpop.f32.mrf.mxu0
        %v4715 = vadd.f32 %v3392, %v4714
        %4716 = vmatmul.bf16.gmra.mxu0 %v3086
        %v4717 = vpop.f32.mrf.mxu0
        %v4718 = vadd.f32 %v3392, %v4717
        %v4719 = vpop.f32.mrf.mxu0
        %v4720 = vadd.f32 %v3392, %v4719
        %4721 = vmatmul.bf16.gmra.mxu0 %v3090
        %v4722 = vpop.f32.mrf.mxu0
        %v4723 = vadd.f32 %v3392, %v4722
        %v4724 = vpop.f32.mrf.mxu0
        %v4725 = vadd.f32 %v3392, %v4724
        %4726 = vmatmul.bf16.gmra.mxu0 %v3094
        %v4727 = vpop.f32.mrf.mxu0
        %v4728 = vadd.f32 %v3392, %v4727
        %v4729 = vpop.f32.mrf.mxu0
        %v4730 = vadd.f32 %v3392, %v4729
        %4731 = vmatmul.bf16.gmra.mxu0 %v3098
        %v4732 = vpop.f32.mrf.mxu0
        %v4733 = vadd.f32 %v3392, %v4732
        %v4734 = vpop.f32.mrf.mxu0
        %v4735 = vadd.f32 %v3392, %v4734
        %4736 = vmatmul.bf16.gmra.mxu0 %v3102
        %v4737 = vpop.f32.mrf.mxu0
        %v4738 = vadd.f32 %v3392, %v4737
        %v4739 = vpop.f32.mrf.mxu0
        %v4740 = vadd.f32 %v3392, %v4739
        %4741 = vmatmul.bf16.gmra.mxu0 %v3106
        %v4742 = vpop.f32.mrf.mxu0
        %v4743 = vadd.f32 %v3392, %v4742
        %v4744 = vpop.f32.mrf.mxu0
        %v4745 = vadd.f32 %v3392, %v4744
        %4746 = vmatmul.bf16.gmra.mxu0 %v3110
        %v4747 = vpop.f32.mrf.mxu0
        %v4748 = vadd.f32 %v3392, %v4747
        %v4749 = vpop.f32.mrf.mxu0
        %v4750 = vadd.f32 %v3392, %v4749
        %4751 = vmatmul.bf16.gmra.mxu0 %v3114
        %v4752 = vpop.f32.mrf.mxu0
        %v4753 = vadd.f32 %v3392, %v4752
        %v4754 = vpop.f32.mrf.mxu0
        %v4755 = vadd.f32 %v3392, %v4754
        %4756 = vmatmul.bf16.gmra.mxu0 %v3118
        %v4757 = vpop.f32.mrf.mxu0
        %v4758 = vadd.f32 %v3392, %v4757
        %v4759 = vpop.f32.mrf.mxu0
        %v4760 = vadd.f32 %v3392, %v4759
        %4761 = vmatmul.bf16.gmra.mxu0 %v3122
        %v4762 = vpop.f32.mrf.mxu0
        %v4763 = vadd.f32 %v3392, %v4762
        %v4764 = vpop.f32.mrf.mxu0
        %v4765 = vadd.f32 %v3392, %v4764
        %4766 = vmatmul.bf16.gmra.mxu0 %v3126
        %v4767 = vpop.f32.mrf.mxu0
        %v4768 = vadd.f32 %v3392, %v4767
        %v4769 = vpop.f32.mrf.mxu0
        %v4770 = vadd.f32 %v3392, %v4769
        %4771 = vmatmul.bf16.gmra.mxu0 %v3130
        %v4772 = vpop.f32.mrf.mxu0
        %v4773 = vadd.f32 %v3392, %v4772
        %v4774 = vpop.f32.mrf.mxu0
        %v4775 = vadd.f32 %v3392, %v4774
        %4776 = vdwg.mxu0
        %4777 = vmatpush.bf16.msra.mxu0 %v4296
        %4778 = vmatpush.bf16.msra.mxu0 %v4288
        %4779 = vmatpush.bf16.msra.mxu0 %v4280
        %4780 = vmatpush.bf16.msra.mxu0 %v4272
        %4781 = vmatpush.bf16.msra.mxu0 %v4264
        %4782 = vmatpush.bf16.msra.mxu0 %v4256
        %4783 = vmatpush.bf16.msra.mxu0 %v4248
        %4784 = vmatpush.bf16.msra.mxu0 %v4240
        %4785 = vmatmul.bf16.gmra.mxu0 %v3071
        %v4786 = vpop.f32.mrf.mxu0
        %v4787 = vadd.f32 %v4698, %v4786
        %v4788 = vpop.f32.mrf.mxu0
        %v4789 = vadd.f32 %v4700, %v4788
        %4790 = vmatmul.bf16.gmra.mxu0 %v3075
        %v4791 = vpop.f32.mrf.mxu0
        %v4792 = vadd.f32 %v4703, %v4791
        %v4793 = vpop.f32.mrf.mxu0
        %v4794 = vadd.f32 %v4705, %v4793
        %4795 = vmatmul.bf16.gmra.mxu0 %v3079
        %v4796 = vpop.f32.mrf.mxu0
        %v4797 = vadd.f32 %v4708, %v4796
        %v4798 = vpop.f32.mrf.mxu0
        %v4799 = vadd.f32 %v4710, %v4798
        %4800 = vmatmul.bf16.gmra.mxu0 %v3083
        %v4801 = vpop.f32.mrf.mxu0
        %v4802 = vadd.f32 %v4713, %v4801
        %v4803 = vpop.f32.mrf.mxu0
        %v4804 = vadd.f32 %v4715, %v4803
        %4805 = vmatmul.bf16.gmra.mxu0 %v3087
        %v4806 = vpop.f32.mrf.mxu0
        %v4807 = vadd.f32 %v4718, %v4806
        %v4808 = vpop.f32.mrf.mxu0
        %v4809 = vadd.f32 %v4720, %v4808
        %4810 = vmatmul.bf16.gmra.mxu0 %v3091
        %v4811 = vpop.f32.mrf.mxu0
        %v4812 = vadd.f32 %v4723, %v4811
        %v4813 = vpop.f32.mrf.mxu0
        %v4814 = vadd.f32 %v4725, %v4813
        %4815 = vmatmul.bf16.gmra.mxu0 %v3095
        %v4816 = vpop.f32.mrf.mxu0
        %v4817 = vadd.f32 %v4728, %v4816
        %v4818 = vpop.f32.mrf.mxu0
        %v4819 = vadd.f32 %v4730, %v4818
        %4820 = vmatmul.bf16.gmra.mxu0 %v3099
        %v4821 = vpop.f32.mrf.mxu0
        %v4822 = vadd.f32 %v4733, %v4821
        %v4823 = vpop.f32.mrf.mxu0
        %v4824 = vadd.f32 %v4735, %v4823
        %4825 = vmatmul.bf16.gmra.mxu0 %v3103
        %v4826 = vpop.f32.mrf.mxu0
        %v4827 = vadd.f32 %v4738, %v4826
        %v4828 = vpop.f32.mrf.mxu0
        %v4829 = vadd.f32 %v4740, %v4828
        %4830 = vmatmul.bf16.gmra.mxu0 %v3107
        %v4831 = vpop.f32.mrf.mxu0
        %v4832 = vadd.f32 %v4743, %v4831
        %v4833 = vpop.f32.mrf.mxu0
        %v4834 = vadd.f32 %v4745, %v4833
        %4835 = vmatmul.bf16.gmra.mxu0 %v3111
        %v4836 = vpop.f32.mrf.mxu0
        %v4837 = vadd.f32 %v4748, %v4836
        %v4838 = vpop.f32.mrf.mxu0
        %v4839 = vadd.f32 %v4750, %v4838
        %4840 = vmatmul.bf16.gmra.mxu0 %v3115
        %v4841 = vpop.f32.mrf.mxu0
        %v4842 = vadd.f32 %v4753, %v4841
        %v4843 = vpop.f32.mrf.mxu0
        %v4844 = vadd.f32 %v4755, %v4843
        %4845 = vmatmul.bf16.gmra.mxu0 %v3119
        %v4846 = vpop.f32.mrf.mxu0
        %v4847 = vadd.f32 %v4758, %v4846
        %v4848 = vpop.f32.mrf.mxu0
        %v4849 = vadd.f32 %v4760, %v4848
        %4850 = vmatmul.bf16.gmra.mxu0 %v3123
        %v4851 = vpop.f32.mrf.mxu0
        %v4852 = vadd.f32 %v4763, %v4851
        %v4853 = vpop.f32.mrf.mxu0
        %v4854 = vadd.f32 %v4765, %v4853
        %4855 = vmatmul.bf16.gmra.mxu0 %v3127
        %v4856 = vpop.f32.mrf.mxu0
        %v4857 = vadd.f32 %v4768, %v4856
        %v4858 = vpop.f32.mrf.mxu0
        %v4859 = vadd.f32 %v4770, %v4858
        %4860 = vmatmul.bf16.gmra.mxu0 %v3131
        %v4861 = vpop.f32.mrf.mxu0
        %v4862 = vadd.f32 %v4773, %v4861
        %v4863 = vpop.f32.mrf.mxu0
        %v4864 = vadd.f32 %v4775, %v4863
        %4865 = vdwg.mxu0
        %4866 = vmatpush.bf16.msra.mxu0 %v4360
        %4867 = vmatpush.bf16.msra.mxu0 %v4352
        %4868 = vmatpush.bf16.msra.mxu0 %v4344
        %4869 = vmatpush.bf16.msra.mxu0 %v4336
        %4870 = vmatpush.bf16.msra.mxu0 %v4328
        %4871 = vmatpush.bf16.msra.mxu0 %v4320
        %4872 = vmatpush.bf16.msra.mxu0 %v4312
        %4873 = vmatpush.bf16.msra.mxu0 %v4304
        %4874 = vmatmul.bf16.gmra.mxu0 %v3072
        %v4875 = vpop.f32.mrf.mxu0
        %v4876 = vadd.f32 %v4787, %v4875
        %v4877 = vpop.f32.mrf.mxu0
        %v4878 = vadd.f32 %v4789, %v4877
        %4879 = vmatmul.bf16.gmra.mxu0 %v3076
        %v4880 = vpop.f32.mrf.mxu0
        %v4881 = vadd.f32 %v4792, %v4880
        %v4882 = vpop.f32.mrf.mxu0
        %v4883 = vadd.f32 %v4794, %v4882
        %4884 = vmatmul.bf16.gmra.mxu0 %v3080
        %v4885 = vpop.f32.mrf.mxu0
        %v4886 = vadd.f32 %v4797, %v4885
        %v4887 = vpop.f32.mrf.mxu0
        %v4888 = vadd.f32 %v4799, %v4887
        %4889 = vmatmul.bf16.gmra.mxu0 %v3084
        %v4890 = vpop.f32.mrf.mxu0
        %v4891 = vadd.f32 %v4802, %v4890
        %v4892 = vpop.f32.mrf.mxu0
        %v4893 = vadd.f32 %v4804, %v4892
        %4894 = vmatmul.bf16.gmra.mxu0 %v3088
        %v4895 = vpop.f32.mrf.mxu0
        %v4896 = vadd.f32 %v4807, %v4895
        %v4897 = vpop.f32.mrf.mxu0
        %v4898 = vadd.f32 %v4809, %v4897
        %4899 = vmatmul.bf16.gmra.mxu0 %v3092
        %v4900 = vpop.f32.mrf.mxu0
        %v4901 = vadd.f32 %v4812, %v4900
        %v4902 = vpop.f32.mrf.mxu0
        %v4903 = vadd.f32 %v4814, %v4902
        %4904 = vmatmul.bf16.gmra.mxu0 %v3096
        %v4905 = vpop.f32.mrf.mxu0
        %v4906 = vadd.f32 %v4817, %v4905
        %v4907 = vpop.f32.mrf.mxu0
        %v4908 = vadd.f32 %v4819, %v4907
        %4909 = vmatmul.bf16.gmra.mxu0 %v3100
        %v4910 = vpop.f32.mrf.mxu0
        %v4911 = vadd.f32 %v4822, %v4910
        %v4912 = vpop.f32.mrf.mxu0
        %v4913 = vadd.f32 %v4824, %v4912
        %4914 = vmatmul.bf16.gmra.mxu0 %v3104
        %v4915 = vpop.f32.mrf.mxu0
        %v4916 = vadd.f32 %v4827, %v4915
        %v4917 = vpop.f32.mrf.mxu0
        %v4918 = vadd.f32 %v4829, %v4917
        %4919 = vmatmul.bf16.gmra.mxu0 %v3108
        %v4920 = vpop.f32.mrf.mxu0
        %v4921 = vadd.f32 %v4832, %v4920
        %v4922 = vpop.f32.mrf.mxu0
        %v4923 = vadd.f32 %v4834, %v4922
        %4924 = vmatmul.bf16.gmra.mxu0 %v3112
        %v4925 = vpop.f32.mrf.mxu0
        %v4926 = vadd.f32 %v4837, %v4925
        %v4927 = vpop.f32.mrf.mxu0
        %v4928 = vadd.f32 %v4839, %v4927
        %4929 = vmatmul.bf16.gmra.mxu0 %v3116
        %v4930 = vpop.f32.mrf.mxu0
        %v4931 = vadd.f32 %v4842, %v4930
        %v4932 = vpop.f32.mrf.mxu0
        %v4933 = vadd.f32 %v4844, %v4932
        %4934 = vmatmul.bf16.gmra.mxu0 %v3120
        %v4935 = vpop.f32.mrf.mxu0
        %v4936 = vadd.f32 %v4847, %v4935
        %v4937 = vpop.f32.mrf.mxu0
        %v4938 = vadd.f32 %v4849, %v4937
        %4939 = vmatmul.bf16.gmra.mxu0 %v3124
        %v4940 = vpop.f32.mrf.mxu0
        %v4941 = vadd.f32 %v4852, %v4940
        %v4942 = vpop.f32.mrf.mxu0
        %v4943 = vadd.f32 %v4854, %v4942
        %4944 = vmatmul.bf16.gmra.mxu0 %v3128
        %v4945 = vpop.f32.mrf.mxu0
        %v4946 = vadd.f32 %v4857, %v4945
        %v4947 = vpop.f32.mrf.mxu0
        %v4948 = vadd.f32 %v4859, %v4947
        %4949 = vmatmul.bf16.gmra.mxu0 %v3132
        %v4950 = vpop.f32.mrf.mxu0
        %v4951 = vadd.f32 %v4862, %v4950
        %v4952 = vpop.f32.mrf.mxu0
        %v4953 = vadd.f32 %v4864, %v4952
        %4954 = vdwg.mxu0
        %4955 = vmatpush.bf16.msra.mxu0 %v4424
        %4956 = vmatpush.bf16.msra.mxu0 %v4416
        %4957 = vmatpush.bf16.msra.mxu0 %v4408
        %4958 = vmatpush.bf16.msra.mxu0 %v4400
        %4959 = vmatpush.bf16.msra.mxu0 %v4392
        %4960 = vmatpush.bf16.msra.mxu0 %v4384
        %4961 = vmatpush.bf16.msra.mxu0 %v4376
        %4962 = vmatpush.bf16.msra.mxu0 %v4368
        %4963 = vmatmul.bf16.gmra.mxu0 %v3073
        %v4964 = vpop.f32.mrf.mxu0
        %v4965 = vadd.f32 %v4876, %v4964
        %v4966 = vpop.f32.mrf.mxu0
        %v4967 = vadd.f32 %v4878, %v4966
        %4968 = vmatmul.bf16.gmra.mxu0 %v3077
        %v4969 = vpop.f32.mrf.mxu0
        %v4970 = vadd.f32 %v4881, %v4969
        %v4971 = vpop.f32.mrf.mxu0
        %v4972 = vadd.f32 %v4883, %v4971
        %4973 = vmatmul.bf16.gmra.mxu0 %v3081
        %v4974 = vpop.f32.mrf.mxu0
        %v4975 = vadd.f32 %v4886, %v4974
        %v4976 = vpop.f32.mrf.mxu0
        %v4977 = vadd.f32 %v4888, %v4976
        %4978 = vmatmul.bf16.gmra.mxu0 %v3085
        %v4979 = vpop.f32.mrf.mxu0
        %v4980 = vadd.f32 %v4891, %v4979
        %v4981 = vpop.f32.mrf.mxu0
        %v4982 = vadd.f32 %v4893, %v4981
        %4983 = vmatmul.bf16.gmra.mxu0 %v3089
        %v4984 = vpop.f32.mrf.mxu0
        %v4985 = vadd.f32 %v4896, %v4984
        %v4986 = vpop.f32.mrf.mxu0
        %v4987 = vadd.f32 %v4898, %v4986
        %4988 = vmatmul.bf16.gmra.mxu0 %v3093
        %v4989 = vpop.f32.mrf.mxu0
        %v4990 = vadd.f32 %v4901, %v4989
        %v4991 = vpop.f32.mrf.mxu0
        %v4992 = vadd.f32 %v4903, %v4991
        %4993 = vmatmul.bf16.gmra.mxu0 %v3097
        %v4994 = vpop.f32.mrf.mxu0
        %v4995 = vadd.f32 %v4906, %v4994
        %v4996 = vpop.f32.mrf.mxu0
        %v4997 = vadd.f32 %v4908, %v4996
        %4998 = vmatmul.bf16.gmra.mxu0 %v3101
        %v4999 = vpop.f32.mrf.mxu0
        %v5000 = vadd.f32 %v4911, %v4999
        %v5001 = vpop.f32.mrf.mxu0
        %v5002 = vadd.f32 %v4913, %v5001
        %5003 = vmatmul.bf16.gmra.mxu0 %v3105
        %v5004 = vpop.f32.mrf.mxu0
        %v5005 = vadd.f32 %v4916, %v5004
        %v5006 = vpop.f32.mrf.mxu0
        %v5007 = vadd.f32 %v4918, %v5006
        %5008 = vmatmul.bf16.gmra.mxu0 %v3109
        %v5009 = vpop.f32.mrf.mxu0
        %v5010 = vadd.f32 %v4921, %v5009
        %v5011 = vpop.f32.mrf.mxu0
        %v5012 = vadd.f32 %v4923, %v5011
        %5013 = vmatmul.bf16.gmra.mxu0 %v3113
        %v5014 = vpop.f32.mrf.mxu0
        %v5015 = vadd.f32 %v4926, %v5014
        %v5016 = vpop.f32.mrf.mxu0
        %v5017 = vadd.f32 %v4928, %v5016
        %5018 = vmatmul.bf16.gmra.mxu0 %v3117
        %v5019 = vpop.f32.mrf.mxu0
        %v5020 = vadd.f32 %v4931, %v5019
        %v5021 = vpop.f32.mrf.mxu0
        %v5022 = vadd.f32 %v4933, %v5021
        %5023 = vmatmul.bf16.gmra.mxu0 %v3121
        %v5024 = vpop.f32.mrf.mxu0
        %v5025 = vadd.f32 %v4936, %v5024
        %v5026 = vpop.f32.mrf.mxu0
        %v5027 = vadd.f32 %v4938, %v5026
        %5028 = vmatmul.bf16.gmra.mxu0 %v3125
        %v5029 = vpop.f32.mrf.mxu0
        %v5030 = vadd.f32 %v4941, %v5029
        %v5031 = vpop.f32.mrf.mxu0
        %v5032 = vadd.f32 %v4943, %v5031
        %5033 = vmatmul.bf16.gmra.mxu0 %v3129
        %v5034 = vpop.f32.mrf.mxu0
        %v5035 = vadd.f32 %v4946, %v5034
        %v5036 = vpop.f32.mrf.mxu0
        %v5037 = vadd.f32 %v4948, %v5036
        %5038 = vmatmul.bf16.gmra.mxu0 %v3133
        %v5039 = vpop.f32.mrf.mxu0
        %v5040 = vadd.f32 %v4951, %v5039
        %v5041 = vpop.f32.mrf.mxu0
        %v5042 = vadd.f32 %v4953, %v5041
        %5043 = vdwg.mxu0
        %5044 = vmatpush.bf16.msra.mxu0 %v4233
        %5045 = vmatpush.bf16.msra.mxu0 %v4225
        %5046 = vmatpush.bf16.msra.mxu0 %v4217
        %5047 = vmatpush.bf16.msra.mxu0 %v4209
        %5048 = vmatpush.bf16.msra.mxu0 %v4201
        %5049 = vmatpush.bf16.msra.mxu0 %v4193
        %5050 = vmatpush.bf16.msra.mxu0 %v4185
        %5051 = vmatpush.bf16.msra.mxu0 %v4177
        %5052 = vmatmul.bf16.gmra.mxu0 %v3070
        %v5053 = vpop.f32.mrf.mxu0
        %v5054 = vadd.f32 %v3393, %v5053
        %v5055 = vpop.f32.mrf.mxu0
        %v5056 = vadd.f32 %v3393, %v5055
        %5057 = vmatmul.bf16.gmra.mxu0 %v3074
        %v5058 = vpop.f32.mrf.mxu0
        %v5059 = vadd.f32 %v3393, %v5058
        %v5060 = vpop.f32.mrf.mxu0
        %v5061 = vadd.f32 %v3393, %v5060
        %5062 = vmatmul.bf16.gmra.mxu0 %v3078
        %v5063 = vpop.f32.mrf.mxu0
        %v5064 = vadd.f32 %v3393, %v5063
        %v5065 = vpop.f32.mrf.mxu0
        %v5066 = vadd.f32 %v3393, %v5065
        %5067 = vmatmul.bf16.gmra.mxu0 %v3082
        %v5068 = vpop.f32.mrf.mxu0
        %v5069 = vadd.f32 %v3393, %v5068
        %v5070 = vpop.f32.mrf.mxu0
        %v5071 = vadd.f32 %v3393, %v5070
        %5072 = vmatmul.bf16.gmra.mxu0 %v3086
        %v5073 = vpop.f32.mrf.mxu0
        %v5074 = vadd.f32 %v3393, %v5073
        %v5075 = vpop.f32.mrf.mxu0
        %v5076 = vadd.f32 %v3393, %v5075
        %5077 = vmatmul.bf16.gmra.mxu0 %v3090
        %v5078 = vpop.f32.mrf.mxu0
        %v5079 = vadd.f32 %v3393, %v5078
        %v5080 = vpop.f32.mrf.mxu0
        %v5081 = vadd.f32 %v3393, %v5080
        %5082 = vmatmul.bf16.gmra.mxu0 %v3094
        %v5083 = vpop.f32.mrf.mxu0
        %v5084 = vadd.f32 %v3393, %v5083
        %v5085 = vpop.f32.mrf.mxu0
        %v5086 = vadd.f32 %v3393, %v5085
        %5087 = vmatmul.bf16.gmra.mxu0 %v3098
        %v5088 = vpop.f32.mrf.mxu0
        %v5089 = vadd.f32 %v3393, %v5088
        %v5090 = vpop.f32.mrf.mxu0
        %v5091 = vadd.f32 %v3393, %v5090
        %5092 = vmatmul.bf16.gmra.mxu0 %v3102
        %v5093 = vpop.f32.mrf.mxu0
        %v5094 = vadd.f32 %v3393, %v5093
        %v5095 = vpop.f32.mrf.mxu0
        %v5096 = vadd.f32 %v3393, %v5095
        %5097 = vmatmul.bf16.gmra.mxu0 %v3106
        %v5098 = vpop.f32.mrf.mxu0
        %v5099 = vadd.f32 %v3393, %v5098
        %v5100 = vpop.f32.mrf.mxu0
        %v5101 = vadd.f32 %v3393, %v5100
        %5102 = vmatmul.bf16.gmra.mxu0 %v3110
        %v5103 = vpop.f32.mrf.mxu0
        %v5104 = vadd.f32 %v3393, %v5103
        %v5105 = vpop.f32.mrf.mxu0
        %v5106 = vadd.f32 %v3393, %v5105
        %5107 = vmatmul.bf16.gmra.mxu0 %v3114
        %v5108 = vpop.f32.mrf.mxu0
        %v5109 = vadd.f32 %v3393, %v5108
        %v5110 = vpop.f32.mrf.mxu0
        %v5111 = vadd.f32 %v3393, %v5110
        %5112 = vmatmul.bf16.gmra.mxu0 %v3118
        %v5113 = vpop.f32.mrf.mxu0
        %v5114 = vadd.f32 %v3393, %v5113
        %v5115 = vpop.f32.mrf.mxu0
        %v5116 = vadd.f32 %v3393, %v5115
        %5117 = vmatmul.bf16.gmra.mxu0 %v3122
        %v5118 = vpop.f32.mrf.mxu0
        %v5119 = vadd.f32 %v3393, %v5118
        %v5120 = vpop.f32.mrf.mxu0
        %v5121 = vadd.f32 %v3393, %v5120
        %5122 = vmatmul.bf16.gmra.mxu0 %v3126
        %v5123 = vpop.f32.mrf.mxu0
        %v5124 = vadd.f32 %v3393, %v5123
        %v5125 = vpop.f32.mrf.mxu0
        %v5126 = vadd.f32 %v3393, %v5125
        %5127 = vmatmul.bf16.gmra.mxu0 %v3130
        %v5128 = vpop.f32.mrf.mxu0
        %v5129 = vadd.f32 %v3393, %v5128
        %v5130 = vpop.f32.mrf.mxu0
        %v5131 = vadd.f32 %v3393, %v5130
        %5132 = vdwg.mxu0
        %5133 = vmatpush.bf16.msra.mxu0 %v4297
        %5134 = vmatpush.bf16.msra.mxu0 %v4289
        %5135 = vmatpush.bf16.msra.mxu0 %v4281
        %5136 = vmatpush.bf16.msra.mxu0 %v4273
        %5137 = vmatpush.bf16.msra.mxu0 %v4265
        %5138 = vmatpush.bf16.msra.mxu0 %v4257
        %5139 = vmatpush.bf16.msra.mxu0 %v4249
        %5140 = vmatpush.bf16.msra.mxu0 %v4241
        %5141 = vmatmul.bf16.gmra.mxu0 %v3071
        %v5142 = vpop.f32.mrf.mxu0
        %v5143 = vadd.f32 %v5054, %v5142
        %v5144 = vpop.f32.mrf.mxu0
        %v5145 = vadd.f32 %v5056, %v5144
        %5146 = vmatmul.bf16.gmra.mxu0 %v3075
        %v5147 = vpop.f32.mrf.mxu0
        %v5148 = vadd.f32 %v5059, %v5147
        %v5149 = vpop.f32.mrf.mxu0
        %v5150 = vadd.f32 %v5061, %v5149
        %5151 = vmatmul.bf16.gmra.mxu0 %v3079
        %v5152 = vpop.f32.mrf.mxu0
        %v5153 = vadd.f32 %v5064, %v5152
        %v5154 = vpop.f32.mrf.mxu0
        %v5155 = vadd.f32 %v5066, %v5154
        %5156 = vmatmul.bf16.gmra.mxu0 %v3083
        %v5157 = vpop.f32.mrf.mxu0
        %v5158 = vadd.f32 %v5069, %v5157
        %v5159 = vpop.f32.mrf.mxu0
        %v5160 = vadd.f32 %v5071, %v5159
        %5161 = vmatmul.bf16.gmra.mxu0 %v3087
        %v5162 = vpop.f32.mrf.mxu0
        %v5163 = vadd.f32 %v5074, %v5162
        %v5164 = vpop.f32.mrf.mxu0
        %v5165 = vadd.f32 %v5076, %v5164
        %5166 = vmatmul.bf16.gmra.mxu0 %v3091
        %v5167 = vpop.f32.mrf.mxu0
        %v5168 = vadd.f32 %v5079, %v5167
        %v5169 = vpop.f32.mrf.mxu0
        %v5170 = vadd.f32 %v5081, %v5169
        %5171 = vmatmul.bf16.gmra.mxu0 %v3095
        %v5172 = vpop.f32.mrf.mxu0
        %v5173 = vadd.f32 %v5084, %v5172
        %v5174 = vpop.f32.mrf.mxu0
        %v5175 = vadd.f32 %v5086, %v5174
        %5176 = vmatmul.bf16.gmra.mxu0 %v3099
        %v5177 = vpop.f32.mrf.mxu0
        %v5178 = vadd.f32 %v5089, %v5177
        %v5179 = vpop.f32.mrf.mxu0
        %v5180 = vadd.f32 %v5091, %v5179
        %5181 = vmatmul.bf16.gmra.mxu0 %v3103
        %v5182 = vpop.f32.mrf.mxu0
        %v5183 = vadd.f32 %v5094, %v5182
        %v5184 = vpop.f32.mrf.mxu0
        %v5185 = vadd.f32 %v5096, %v5184
        %5186 = vmatmul.bf16.gmra.mxu0 %v3107
        %v5187 = vpop.f32.mrf.mxu0
        %v5188 = vadd.f32 %v5099, %v5187
        %v5189 = vpop.f32.mrf.mxu0
        %v5190 = vadd.f32 %v5101, %v5189
        %5191 = vmatmul.bf16.gmra.mxu0 %v3111
        %v5192 = vpop.f32.mrf.mxu0
        %v5193 = vadd.f32 %v5104, %v5192
        %v5194 = vpop.f32.mrf.mxu0
        %v5195 = vadd.f32 %v5106, %v5194
        %5196 = vmatmul.bf16.gmra.mxu0 %v3115
        %v5197 = vpop.f32.mrf.mxu0
        %v5198 = vadd.f32 %v5109, %v5197
        %v5199 = vpop.f32.mrf.mxu0
        %v5200 = vadd.f32 %v5111, %v5199
        %5201 = vmatmul.bf16.gmra.mxu0 %v3119
        %v5202 = vpop.f32.mrf.mxu0
        %v5203 = vadd.f32 %v5114, %v5202
        %v5204 = vpop.f32.mrf.mxu0
        %v5205 = vadd.f32 %v5116, %v5204
        %5206 = vmatmul.bf16.gmra.mxu0 %v3123
        %v5207 = vpop.f32.mrf.mxu0
        %v5208 = vadd.f32 %v5119, %v5207
        %v5209 = vpop.f32.mrf.mxu0
        %v5210 = vadd.f32 %v5121, %v5209
        %5211 = vmatmul.bf16.gmra.mxu0 %v3127
        %v5212 = vpop.f32.mrf.mxu0
        %v5213 = vadd.f32 %v5124, %v5212
        %v5214 = vpop.f32.mrf.mxu0
        %v5215 = vadd.f32 %v5126, %v5214
        %5216 = vmatmul.bf16.gmra.mxu0 %v3131
        %v5217 = vpop.f32.mrf.mxu0
        %v5218 = vadd.f32 %v5129, %v5217
        %v5219 = vpop.f32.mrf.mxu0
        %v5220 = vadd.f32 %v5131, %v5219
        %5221 = vdwg.mxu0
        %5222 = vmatpush.bf16.msra.mxu0 %v4361
        %5223 = vmatpush.bf16.msra.mxu0 %v4353
        %5224 = vmatpush.bf16.msra.mxu0 %v4345
        %5225 = vmatpush.bf16.msra.mxu0 %v4337
        %5226 = vmatpush.bf16.msra.mxu0 %v4329
        %5227 = vmatpush.bf16.msra.mxu0 %v4321
        %5228 = vmatpush.bf16.msra.mxu0 %v4313
        %5229 = vmatpush.bf16.msra.mxu0 %v4305
        %5230 = vmatmul.bf16.gmra.mxu0 %v3072
        %v5231 = vpop.f32.mrf.mxu0
        %v5232 = vadd.f32 %v5143, %v5231
        %v5233 = vpop.f32.mrf.mxu0
        %v5234 = vadd.f32 %v5145, %v5233
        %5235 = vmatmul.bf16.gmra.mxu0 %v3076
        %v5236 = vpop.f32.mrf.mxu0
        %v5237 = vadd.f32 %v5148, %v5236
        %v5238 = vpop.f32.mrf.mxu0
        %v5239 = vadd.f32 %v5150, %v5238
        %5240 = vmatmul.bf16.gmra.mxu0 %v3080
        %v5241 = vpop.f32.mrf.mxu0
        %v5242 = vadd.f32 %v5153, %v5241
        %v5243 = vpop.f32.mrf.mxu0
        %v5244 = vadd.f32 %v5155, %v5243
        %5245 = vmatmul.bf16.gmra.mxu0 %v3084
        %v5246 = vpop.f32.mrf.mxu0
        %v5247 = vadd.f32 %v5158, %v5246
        %v5248 = vpop.f32.mrf.mxu0
        %v5249 = vadd.f32 %v5160, %v5248
        %5250 = vmatmul.bf16.gmra.mxu0 %v3088
        %v5251 = vpop.f32.mrf.mxu0
        %v5252 = vadd.f32 %v5163, %v5251
        %v5253 = vpop.f32.mrf.mxu0
        %v5254 = vadd.f32 %v5165, %v5253
        %5255 = vmatmul.bf16.gmra.mxu0 %v3092
        %v5256 = vpop.f32.mrf.mxu0
        %v5257 = vadd.f32 %v5168, %v5256
        %v5258 = vpop.f32.mrf.mxu0
        %v5259 = vadd.f32 %v5170, %v5258
        %5260 = vmatmul.bf16.gmra.mxu0 %v3096
        %v5261 = vpop.f32.mrf.mxu0
        %v5262 = vadd.f32 %v5173, %v5261
        %v5263 = vpop.f32.mrf.mxu0
        %v5264 = vadd.f32 %v5175, %v5263
        %5265 = vmatmul.bf16.gmra.mxu0 %v3100
        %v5266 = vpop.f32.mrf.mxu0
        %v5267 = vadd.f32 %v5178, %v5266
        %v5268 = vpop.f32.mrf.mxu0
        %v5269 = vadd.f32 %v5180, %v5268
        %5270 = vmatmul.bf16.gmra.mxu0 %v3104
        %v5271 = vpop.f32.mrf.mxu0
        %v5272 = vadd.f32 %v5183, %v5271
        %v5273 = vpop.f32.mrf.mxu0
        %v5274 = vadd.f32 %v5185, %v5273
        %5275 = vmatmul.bf16.gmra.mxu0 %v3108
        %v5276 = vpop.f32.mrf.mxu0
        %v5277 = vadd.f32 %v5188, %v5276
        %v5278 = vpop.f32.mrf.mxu0
        %v5279 = vadd.f32 %v5190, %v5278
        %5280 = vmatmul.bf16.gmra.mxu0 %v3112
        %v5281 = vpop.f32.mrf.mxu0
        %v5282 = vadd.f32 %v5193, %v5281
        %v5283 = vpop.f32.mrf.mxu0
        %v5284 = vadd.f32 %v5195, %v5283
        %5285 = vmatmul.bf16.gmra.mxu0 %v3116
        %v5286 = vpop.f32.mrf.mxu0
        %v5287 = vadd.f32 %v5198, %v5286
        %v5288 = vpop.f32.mrf.mxu0
        %v5289 = vadd.f32 %v5200, %v5288
        %5290 = vmatmul.bf16.gmra.mxu0 %v3120
        %v5291 = vpop.f32.mrf.mxu0
        %v5292 = vadd.f32 %v5203, %v5291
        %v5293 = vpop.f32.mrf.mxu0
        %v5294 = vadd.f32 %v5205, %v5293
        %5295 = vmatmul.bf16.gmra.mxu0 %v3124
        %v5296 = vpop.f32.mrf.mxu0
        %v5297 = vadd.f32 %v5208, %v5296
        %v5298 = vpop.f32.mrf.mxu0
        %v5299 = vadd.f32 %v5210, %v5298
        %5300 = vmatmul.bf16.gmra.mxu0 %v3128
        %v5301 = vpop.f32.mrf.mxu0
        %v5302 = vadd.f32 %v5213, %v5301
        %v5303 = vpop.f32.mrf.mxu0
        %v5304 = vadd.f32 %v5215, %v5303
        %5305 = vmatmul.bf16.gmra.mxu0 %v3132
        %v5306 = vpop.f32.mrf.mxu0
        %v5307 = vadd.f32 %v5218, %v5306
        %v5308 = vpop.f32.mrf.mxu0
        %v5309 = vadd.f32 %v5220, %v5308
        %5310 = vdwg.mxu0
        %5311 = vmatpush.bf16.msra.mxu0 %v4425
        %5312 = vmatpush.bf16.msra.mxu0 %v4417
        %5313 = vmatpush.bf16.msra.mxu0 %v4409
        %5314 = vmatpush.bf16.msra.mxu0 %v4401
        %5315 = vmatpush.bf16.msra.mxu0 %v4393
        %5316 = vmatpush.bf16.msra.mxu0 %v4385
        %5317 = vmatpush.bf16.msra.mxu0 %v4377
        %5318 = vmatpush.bf16.msra.mxu0 %v4369
        %5319 = vmatmul.bf16.gmra.mxu0 %v3073
        %v5320 = vpop.f32.mrf.mxu0
        %v5321 = vadd.f32 %v5232, %v5320
        %v5322 = vpop.f32.mrf.mxu0
        %v5323 = vadd.f32 %v5234, %v5322
        %5324 = vmatmul.bf16.gmra.mxu0 %v3077
        %v5325 = vpop.f32.mrf.mxu0
        %v5326 = vadd.f32 %v5237, %v5325
        %v5327 = vpop.f32.mrf.mxu0
        %v5328 = vadd.f32 %v5239, %v5327
        %5329 = vmatmul.bf16.gmra.mxu0 %v3081
        %v5330 = vpop.f32.mrf.mxu0
        %v5331 = vadd.f32 %v5242, %v5330
        %v5332 = vpop.f32.mrf.mxu0
        %v5333 = vadd.f32 %v5244, %v5332
        %5334 = vmatmul.bf16.gmra.mxu0 %v3085
        %v5335 = vpop.f32.mrf.mxu0
        %v5336 = vadd.f32 %v5247, %v5335
        %v5337 = vpop.f32.mrf.mxu0
        %v5338 = vadd.f32 %v5249, %v5337
        %5339 = vmatmul.bf16.gmra.mxu0 %v3089
        %v5340 = vpop.f32.mrf.mxu0
        %v5341 = vadd.f32 %v5252, %v5340
        %v5342 = vpop.f32.mrf.mxu0
        %v5343 = vadd.f32 %v5254, %v5342
        %5344 = vmatmul.bf16.gmra.mxu0 %v3093
        %v5345 = vpop.f32.mrf.mxu0
        %v5346 = vadd.f32 %v5257, %v5345
        %v5347 = vpop.f32.mrf.mxu0
        %v5348 = vadd.f32 %v5259, %v5347
        %5349 = vmatmul.bf16.gmra.mxu0 %v3097
        %v5350 = vpop.f32.mrf.mxu0
        %v5351 = vadd.f32 %v5262, %v5350
        %v5352 = vpop.f32.mrf.mxu0
        %v5353 = vadd.f32 %v5264, %v5352
        %5354 = vmatmul.bf16.gmra.mxu0 %v3101
        %v5355 = vpop.f32.mrf.mxu0
        %v5356 = vadd.f32 %v5267, %v5355
        %v5357 = vpop.f32.mrf.mxu0
        %v5358 = vadd.f32 %v5269, %v5357
        %5359 = vmatmul.bf16.gmra.mxu0 %v3105
        %v5360 = vpop.f32.mrf.mxu0
        %v5361 = vadd.f32 %v5272, %v5360
        %v5362 = vpop.f32.mrf.mxu0
        %v5363 = vadd.f32 %v5274, %v5362
        %5364 = vmatmul.bf16.gmra.mxu0 %v3109
        %v5365 = vpop.f32.mrf.mxu0
        %v5366 = vadd.f32 %v5277, %v5365
        %v5367 = vpop.f32.mrf.mxu0
        %v5368 = vadd.f32 %v5279, %v5367
        %5369 = vmatmul.bf16.gmra.mxu0 %v3113
        %v5370 = vpop.f32.mrf.mxu0
        %v5371 = vadd.f32 %v5282, %v5370
        %v5372 = vpop.f32.mrf.mxu0
        %v5373 = vadd.f32 %v5284, %v5372
        %5374 = vmatmul.bf16.gmra.mxu0 %v3117
        %v5375 = vpop.f32.mrf.mxu0
        %v5376 = vadd.f32 %v5287, %v5375
        %v5377 = vpop.f32.mrf.mxu0
        %v5378 = vadd.f32 %v5289, %v5377
        %5379 = vmatmul.bf16.gmra.mxu0 %v3121
        %v5380 = vpop.f32.mrf.mxu0
        %v5381 = vadd.f32 %v5292, %v5380
        %v5382 = vpop.f32.mrf.mxu0
        %v5383 = vadd.f32 %v5294, %v5382
        %5384 = vmatmul.bf16.gmra.mxu0 %v3125
        %v5385 = vpop.f32.mrf.mxu0
        %v5386 = vadd.f32 %v5297, %v5385
        %v5387 = vpop.f32.mrf.mxu0
        %v5388 = vadd.f32 %v5299, %v5387
        %5389 = vmatmul.bf16.gmra.mxu0 %v3129
        %v5390 = vpop.f32.mrf.mxu0
        %v5391 = vadd.f32 %v5302, %v5390
        %v5392 = vpop.f32.mrf.mxu0
        %v5393 = vadd.f32 %v5304, %v5392
        %5394 = vmatmul.bf16.gmra.mxu0 %v3133
        %v5395 = vpop.f32.mrf.mxu0
        %v5396 = vadd.f32 %v5307, %v5395
        %v5397 = vpop.f32.mrf.mxu0
        %v5398 = vadd.f32 %v5309, %v5397
        %5399 = vdwg.mxu0
        %5400 = vmatpush.bf16.msra.mxu0 %v4234
        %5401 = vmatpush.bf16.msra.mxu0 %v4226
        %5402 = vmatpush.bf16.msra.mxu0 %v4218
        %5403 = vmatpush.bf16.msra.mxu0 %v4210
        %5404 = vmatpush.bf16.msra.mxu0 %v4202
        %5405 = vmatpush.bf16.msra.mxu0 %v4194
        %5406 = vmatpush.bf16.msra.mxu0 %v4186
        %5407 = vmatpush.bf16.msra.mxu0 %v4178
        %5408 = vmatmul.bf16.gmra.mxu0 %v3070
        %v5409 = vpop.f32.mrf.mxu0
        %v5410 = vadd.f32 %v3394, %v5409
        %v5411 = vpop.f32.mrf.mxu0
        %v5412 = vadd.f32 %v3394, %v5411
        %5413 = vmatmul.bf16.gmra.mxu0 %v3074
        %v5414 = vpop.f32.mrf.mxu0
        %v5415 = vadd.f32 %v3394, %v5414
        %v5416 = vpop.f32.mrf.mxu0
        %v5417 = vadd.f32 %v3394, %v5416
        %5418 = vmatmul.bf16.gmra.mxu0 %v3078
        %v5419 = vpop.f32.mrf.mxu0
        %v5420 = vadd.f32 %v3394, %v5419
        %v5421 = vpop.f32.mrf.mxu0
        %v5422 = vadd.f32 %v3394, %v5421
        %5423 = vmatmul.bf16.gmra.mxu0 %v3082
        %v5424 = vpop.f32.mrf.mxu0
        %v5425 = vadd.f32 %v3394, %v5424
        %v5426 = vpop.f32.mrf.mxu0
        %v5427 = vadd.f32 %v3394, %v5426
        %5428 = vmatmul.bf16.gmra.mxu0 %v3086
        %v5429 = vpop.f32.mrf.mxu0
        %v5430 = vadd.f32 %v3394, %v5429
        %v5431 = vpop.f32.mrf.mxu0
        %v5432 = vadd.f32 %v3394, %v5431
        %5433 = vmatmul.bf16.gmra.mxu0 %v3090
        %v5434 = vpop.f32.mrf.mxu0
        %v5435 = vadd.f32 %v3394, %v5434
        %v5436 = vpop.f32.mrf.mxu0
        %v5437 = vadd.f32 %v3394, %v5436
        %5438 = vmatmul.bf16.gmra.mxu0 %v3094
        %v5439 = vpop.f32.mrf.mxu0
        %v5440 = vadd.f32 %v3394, %v5439
        %v5441 = vpop.f32.mrf.mxu0
        %v5442 = vadd.f32 %v3394, %v5441
        %5443 = vmatmul.bf16.gmra.mxu0 %v3098
        %v5444 = vpop.f32.mrf.mxu0
        %v5445 = vadd.f32 %v3394, %v5444
        %v5446 = vpop.f32.mrf.mxu0
        %v5447 = vadd.f32 %v3394, %v5446
        %5448 = vmatmul.bf16.gmra.mxu0 %v3102
        %v5449 = vpop.f32.mrf.mxu0
        %v5450 = vadd.f32 %v3394, %v5449
        %v5451 = vpop.f32.mrf.mxu0
        %v5452 = vadd.f32 %v3394, %v5451
        %5453 = vmatmul.bf16.gmra.mxu0 %v3106
        %v5454 = vpop.f32.mrf.mxu0
        %v5455 = vadd.f32 %v3394, %v5454
        %v5456 = vpop.f32.mrf.mxu0
        %v5457 = vadd.f32 %v3394, %v5456
        %5458 = vmatmul.bf16.gmra.mxu0 %v3110
        %v5459 = vpop.f32.mrf.mxu0
        %v5460 = vadd.f32 %v3394, %v5459
        %v5461 = vpop.f32.mrf.mxu0
        %v5462 = vadd.f32 %v3394, %v5461
        %5463 = vmatmul.bf16.gmra.mxu0 %v3114
        %v5464 = vpop.f32.mrf.mxu0
        %v5465 = vadd.f32 %v3394, %v5464
        %v5466 = vpop.f32.mrf.mxu0
        %v5467 = vadd.f32 %v3394, %v5466
        %5468 = vmatmul.bf16.gmra.mxu0 %v3118
        %v5469 = vpop.f32.mrf.mxu0
        %v5470 = vadd.f32 %v3394, %v5469
        %v5471 = vpop.f32.mrf.mxu0
        %v5472 = vadd.f32 %v3394, %v5471
        %5473 = vmatmul.bf16.gmra.mxu0 %v3122
        %v5474 = vpop.f32.mrf.mxu0
        %v5475 = vadd.f32 %v3394, %v5474
        %v5476 = vpop.f32.mrf.mxu0
        %v5477 = vadd.f32 %v3394, %v5476
        %5478 = vmatmul.bf16.gmra.mxu0 %v3126
        %v5479 = vpop.f32.mrf.mxu0
        %v5480 = vadd.f32 %v3394, %v5479
        %v5481 = vpop.f32.mrf.mxu0
        %v5482 = vadd.f32 %v3394, %v5481
        %5483 = vmatmul.bf16.gmra.mxu0 %v3130
        %v5484 = vpop.f32.mrf.mxu0
        %v5485 = vadd.f32 %v3394, %v5484
        %v5486 = vpop.f32.mrf.mxu0
        %v5487 = vadd.f32 %v3394, %v5486
        %5488 = vdwg.mxu0
        %5489 = vmatpush.bf16.msra.mxu0 %v4298
        %5490 = vmatpush.bf16.msra.mxu0 %v4290
        %5491 = vmatpush.bf16.msra.mxu0 %v4282
        %5492 = vmatpush.bf16.msra.mxu0 %v4274
        %5493 = vmatpush.bf16.msra.mxu0 %v4266
        %5494 = vmatpush.bf16.msra.mxu0 %v4258
        %5495 = vmatpush.bf16.msra.mxu0 %v4250
        %5496 = vmatpush.bf16.msra.mxu0 %v4242
        %5497 = vmatmul.bf16.gmra.mxu0 %v3071
        %v5498 = vpop.f32.mrf.mxu0
        %v5499 = vadd.f32 %v5410, %v5498
        %v5500 = vpop.f32.mrf.mxu0
        %v5501 = vadd.f32 %v5412, %v5500
        %5502 = vmatmul.bf16.gmra.mxu0 %v3075
        %v5503 = vpop.f32.mrf.mxu0
        %v5504 = vadd.f32 %v5415, %v5503
        %v5505 = vpop.f32.mrf.mxu0
        %v5506 = vadd.f32 %v5417, %v5505
        %5507 = vmatmul.bf16.gmra.mxu0 %v3079
        %v5508 = vpop.f32.mrf.mxu0
        %v5509 = vadd.f32 %v5420, %v5508
        %v5510 = vpop.f32.mrf.mxu0
        %v5511 = vadd.f32 %v5422, %v5510
        %5512 = vmatmul.bf16.gmra.mxu0 %v3083
        %v5513 = vpop.f32.mrf.mxu0
        %v5514 = vadd.f32 %v5425, %v5513
        %v5515 = vpop.f32.mrf.mxu0
        %v5516 = vadd.f32 %v5427, %v5515
        %5517 = vmatmul.bf16.gmra.mxu0 %v3087
        %v5518 = vpop.f32.mrf.mxu0
        %v5519 = vadd.f32 %v5430, %v5518
        %v5520 = vpop.f32.mrf.mxu0
        %v5521 = vadd.f32 %v5432, %v5520
        %5522 = vmatmul.bf16.gmra.mxu0 %v3091
        %v5523 = vpop.f32.mrf.mxu0
        %v5524 = vadd.f32 %v5435, %v5523
        %v5525 = vpop.f32.mrf.mxu0
        %v5526 = vadd.f32 %v5437, %v5525
        %5527 = vmatmul.bf16.gmra.mxu0 %v3095
        %v5528 = vpop.f32.mrf.mxu0
        %v5529 = vadd.f32 %v5440, %v5528
        %v5530 = vpop.f32.mrf.mxu0
        %v5531 = vadd.f32 %v5442, %v5530
        %5532 = vmatmul.bf16.gmra.mxu0 %v3099
        %v5533 = vpop.f32.mrf.mxu0
        %v5534 = vadd.f32 %v5445, %v5533
        %v5535 = vpop.f32.mrf.mxu0
        %v5536 = vadd.f32 %v5447, %v5535
        %5537 = vmatmul.bf16.gmra.mxu0 %v3103
        %v5538 = vpop.f32.mrf.mxu0
        %v5539 = vadd.f32 %v5450, %v5538
        %v5540 = vpop.f32.mrf.mxu0
        %v5541 = vadd.f32 %v5452, %v5540
        %5542 = vmatmul.bf16.gmra.mxu0 %v3107
        %v5543 = vpop.f32.mrf.mxu0
        %v5544 = vadd.f32 %v5455, %v5543
        %v5545 = vpop.f32.mrf.mxu0
        %v5546 = vadd.f32 %v5457, %v5545
        %5547 = vmatmul.bf16.gmra.mxu0 %v3111
        %v5548 = vpop.f32.mrf.mxu0
        %v5549 = vadd.f32 %v5460, %v5548
        %v5550 = vpop.f32.mrf.mxu0
        %v5551 = vadd.f32 %v5462, %v5550
        %5552 = vmatmul.bf16.gmra.mxu0 %v3115
        %v5553 = vpop.f32.mrf.mxu0
        %v5554 = vadd.f32 %v5465, %v5553
        %v5555 = vpop.f32.mrf.mxu0
        %v5556 = vadd.f32 %v5467, %v5555
        %5557 = vmatmul.bf16.gmra.mxu0 %v3119
        %v5558 = vpop.f32.mrf.mxu0
        %v5559 = vadd.f32 %v5470, %v5558
        %v5560 = vpop.f32.mrf.mxu0
        %v5561 = vadd.f32 %v5472, %v5560
        %5562 = vmatmul.bf16.gmra.mxu0 %v3123
        %v5563 = vpop.f32.mrf.mxu0
        %v5564 = vadd.f32 %v5475, %v5563
        %v5565 = vpop.f32.mrf.mxu0
        %v5566 = vadd.f32 %v5477, %v5565
        %5567 = vmatmul.bf16.gmra.mxu0 %v3127
        %v5568 = vpop.f32.mrf.mxu0
        %v5569 = vadd.f32 %v5480, %v5568
        %v5570 = vpop.f32.mrf.mxu0
        %v5571 = vadd.f32 %v5482, %v5570
        %5572 = vmatmul.bf16.gmra.mxu0 %v3131
        %v5573 = vpop.f32.mrf.mxu0
        %v5574 = vadd.f32 %v5485, %v5573
        %v5575 = vpop.f32.mrf.mxu0
        %v5576 = vadd.f32 %v5487, %v5575
        %5577 = vdwg.mxu0
        %5578 = vmatpush.bf16.msra.mxu0 %v4362
        %5579 = vmatpush.bf16.msra.mxu0 %v4354
        %5580 = vmatpush.bf16.msra.mxu0 %v4346
        %5581 = vmatpush.bf16.msra.mxu0 %v4338
        %5582 = vmatpush.bf16.msra.mxu0 %v4330
        %5583 = vmatpush.bf16.msra.mxu0 %v4322
        %5584 = vmatpush.bf16.msra.mxu0 %v4314
        %5585 = vmatpush.bf16.msra.mxu0 %v4306
        %5586 = vmatmul.bf16.gmra.mxu0 %v3072
        %v5587 = vpop.f32.mrf.mxu0
        %v5588 = vadd.f32 %v5499, %v5587
        %v5589 = vpop.f32.mrf.mxu0
        %v5590 = vadd.f32 %v5501, %v5589
        %5591 = vmatmul.bf16.gmra.mxu0 %v3076
        %v5592 = vpop.f32.mrf.mxu0
        %v5593 = vadd.f32 %v5504, %v5592
        %v5594 = vpop.f32.mrf.mxu0
        %v5595 = vadd.f32 %v5506, %v5594
        %5596 = vmatmul.bf16.gmra.mxu0 %v3080
        %v5597 = vpop.f32.mrf.mxu0
        %v5598 = vadd.f32 %v5509, %v5597
        %v5599 = vpop.f32.mrf.mxu0
        %v5600 = vadd.f32 %v5511, %v5599
        %5601 = vmatmul.bf16.gmra.mxu0 %v3084
        %v5602 = vpop.f32.mrf.mxu0
        %v5603 = vadd.f32 %v5514, %v5602
        %v5604 = vpop.f32.mrf.mxu0
        %v5605 = vadd.f32 %v5516, %v5604
        %5606 = vmatmul.bf16.gmra.mxu0 %v3088
        %v5607 = vpop.f32.mrf.mxu0
        %v5608 = vadd.f32 %v5519, %v5607
        %v5609 = vpop.f32.mrf.mxu0
        %v5610 = vadd.f32 %v5521, %v5609
        %5611 = vmatmul.bf16.gmra.mxu0 %v3092
        %v5612 = vpop.f32.mrf.mxu0
        %v5613 = vadd.f32 %v5524, %v5612
        %v5614 = vpop.f32.mrf.mxu0
        %v5615 = vadd.f32 %v5526, %v5614
        %5616 = vmatmul.bf16.gmra.mxu0 %v3096
        %v5617 = vpop.f32.mrf.mxu0
        %v5618 = vadd.f32 %v5529, %v5617
        %v5619 = vpop.f32.mrf.mxu0
        %v5620 = vadd.f32 %v5531, %v5619
        %5621 = vmatmul.bf16.gmra.mxu0 %v3100
        %v5622 = vpop.f32.mrf.mxu0
        %v5623 = vadd.f32 %v5534, %v5622
        %v5624 = vpop.f32.mrf.mxu0
        %v5625 = vadd.f32 %v5536, %v5624
        %5626 = vmatmul.bf16.gmra.mxu0 %v3104
        %v5627 = vpop.f32.mrf.mxu0
        %v5628 = vadd.f32 %v5539, %v5627
        %v5629 = vpop.f32.mrf.mxu0
        %v5630 = vadd.f32 %v5541, %v5629
        %5631 = vmatmul.bf16.gmra.mxu0 %v3108
        %v5632 = vpop.f32.mrf.mxu0
        %v5633 = vadd.f32 %v5544, %v5632
        %v5634 = vpop.f32.mrf.mxu0
        %v5635 = vadd.f32 %v5546, %v5634
        %5636 = vmatmul.bf16.gmra.mxu0 %v3112
        %v5637 = vpop.f32.mrf.mxu0
        %v5638 = vadd.f32 %v5549, %v5637
        %v5639 = vpop.f32.mrf.mxu0
        %v5640 = vadd.f32 %v5551, %v5639
        %5641 = vmatmul.bf16.gmra.mxu0 %v3116
        %v5642 = vpop.f32.mrf.mxu0
        %v5643 = vadd.f32 %v5554, %v5642
        %v5644 = vpop.f32.mrf.mxu0
        %v5645 = vadd.f32 %v5556, %v5644
        %5646 = vmatmul.bf16.gmra.mxu0 %v3120
        %v5647 = vpop.f32.mrf.mxu0
        %v5648 = vadd.f32 %v5559, %v5647
        %v5649 = vpop.f32.mrf.mxu0
        %v5650 = vadd.f32 %v5561, %v5649
        %5651 = vmatmul.bf16.gmra.mxu0 %v3124
        %v5652 = vpop.f32.mrf.mxu0
        %v5653 = vadd.f32 %v5564, %v5652
        %v5654 = vpop.f32.mrf.mxu0
        %v5655 = vadd.f32 %v5566, %v5654
        %5656 = vmatmul.bf16.gmra.mxu0 %v3128
        %v5657 = vpop.f32.mrf.mxu0
        %v5658 = vadd.f32 %v5569, %v5657
        %v5659 = vpop.f32.mrf.mxu0
        %v5660 = vadd.f32 %v5571, %v5659
        %5661 = vmatmul.bf16.gmra.mxu0 %v3132
        %v5662 = vpop.f32.mrf.mxu0
        %v5663 = vadd.f32 %v5574, %v5662
        %v5664 = vpop.f32.mrf.mxu0
        %v5665 = vadd.f32 %v5576, %v5664
        %5666 = vdwg.mxu0
        %5667 = vmatpush.bf16.msra.mxu0 %v4426
        %5668 = vmatpush.bf16.msra.mxu0 %v4418
        %5669 = vmatpush.bf16.msra.mxu0 %v4410
        %5670 = vmatpush.bf16.msra.mxu0 %v4402
        %5671 = vmatpush.bf16.msra.mxu0 %v4394
        %5672 = vmatpush.bf16.msra.mxu0 %v4386
        %5673 = vmatpush.bf16.msra.mxu0 %v4378
        %5674 = vmatpush.bf16.msra.mxu0 %v4370
        %5675 = vmatmul.bf16.gmra.mxu0 %v3073
        %v5676 = vpop.f32.mrf.mxu0
        %v5677 = vadd.f32 %v5588, %v5676
        %v5678 = vpop.f32.mrf.mxu0
        %v5679 = vadd.f32 %v5590, %v5678
        %5680 = vmatmul.bf16.gmra.mxu0 %v3077
        %v5681 = vpop.f32.mrf.mxu0
        %v5682 = vadd.f32 %v5593, %v5681
        %v5683 = vpop.f32.mrf.mxu0
        %v5684 = vadd.f32 %v5595, %v5683
        %5685 = vmatmul.bf16.gmra.mxu0 %v3081
        %v5686 = vpop.f32.mrf.mxu0
        %v5687 = vadd.f32 %v5598, %v5686
        %v5688 = vpop.f32.mrf.mxu0
        %v5689 = vadd.f32 %v5600, %v5688
        %5690 = vmatmul.bf16.gmra.mxu0 %v3085
        %v5691 = vpop.f32.mrf.mxu0
        %v5692 = vadd.f32 %v5603, %v5691
        %v5693 = vpop.f32.mrf.mxu0
        %v5694 = vadd.f32 %v5605, %v5693
        %5695 = vmatmul.bf16.gmra.mxu0 %v3089
        %v5696 = vpop.f32.mrf.mxu0
        %v5697 = vadd.f32 %v5608, %v5696
        %v5698 = vpop.f32.mrf.mxu0
        %v5699 = vadd.f32 %v5610, %v5698
        %5700 = vmatmul.bf16.gmra.mxu0 %v3093
        %v5701 = vpop.f32.mrf.mxu0
        %v5702 = vadd.f32 %v5613, %v5701
        %v5703 = vpop.f32.mrf.mxu0
        %v5704 = vadd.f32 %v5615, %v5703
        %5705 = vmatmul.bf16.gmra.mxu0 %v3097
        %v5706 = vpop.f32.mrf.mxu0
        %v5707 = vadd.f32 %v5618, %v5706
        %v5708 = vpop.f32.mrf.mxu0
        %v5709 = vadd.f32 %v5620, %v5708
        %5710 = vmatmul.bf16.gmra.mxu0 %v3101
        %v5711 = vpop.f32.mrf.mxu0
        %v5712 = vadd.f32 %v5623, %v5711
        %v5713 = vpop.f32.mrf.mxu0
        %v5714 = vadd.f32 %v5625, %v5713
        %5715 = vmatmul.bf16.gmra.mxu0 %v3105
        %v5716 = vpop.f32.mrf.mxu0
        %v5717 = vadd.f32 %v5628, %v5716
        %v5718 = vpop.f32.mrf.mxu0
        %v5719 = vadd.f32 %v5630, %v5718
        %5720 = vmatmul.bf16.gmra.mxu0 %v3109
        %v5721 = vpop.f32.mrf.mxu0
        %v5722 = vadd.f32 %v5633, %v5721
        %v5723 = vpop.f32.mrf.mxu0
        %v5724 = vadd.f32 %v5635, %v5723
        %5725 = vmatmul.bf16.gmra.mxu0 %v3113
        %v5726 = vpop.f32.mrf.mxu0
        %v5727 = vadd.f32 %v5638, %v5726
        %v5728 = vpop.f32.mrf.mxu0
        %v5729 = vadd.f32 %v5640, %v5728
        %5730 = vmatmul.bf16.gmra.mxu0 %v3117
        %v5731 = vpop.f32.mrf.mxu0
        %v5732 = vadd.f32 %v5643, %v5731
        %v5733 = vpop.f32.mrf.mxu0
        %v5734 = vadd.f32 %v5645, %v5733
        %5735 = vmatmul.bf16.gmra.mxu0 %v3121
        %v5736 = vpop.f32.mrf.mxu0
        %v5737 = vadd.f32 %v5648, %v5736
        %v5738 = vpop.f32.mrf.mxu0
        %v5739 = vadd.f32 %v5650, %v5738
        %5740 = vmatmul.bf16.gmra.mxu0 %v3125
        %v5741 = vpop.f32.mrf.mxu0
        %v5742 = vadd.f32 %v5653, %v5741
        %v5743 = vpop.f32.mrf.mxu0
        %v5744 = vadd.f32 %v5655, %v5743
        %5745 = vmatmul.bf16.gmra.mxu0 %v3129
        %v5746 = vpop.f32.mrf.mxu0
        %v5747 = vadd.f32 %v5658, %v5746
        %v5748 = vpop.f32.mrf.mxu0
        %v5749 = vadd.f32 %v5660, %v5748
        %5750 = vmatmul.bf16.gmra.mxu0 %v3133
        %v5751 = vpop.f32.mrf.mxu0
        %v5752 = vadd.f32 %v5663, %v5751
        %v5753 = vpop.f32.mrf.mxu0
        %v5754 = vadd.f32 %v5665, %v5753
        %5755 = vdwg.mxu0
        %5756 = vmatpush.bf16.msra.mxu0 %v4235
        %5757 = vmatpush.bf16.msra.mxu0 %v4227
        %5758 = vmatpush.bf16.msra.mxu0 %v4219
        %5759 = vmatpush.bf16.msra.mxu0 %v4211
        %5760 = vmatpush.bf16.msra.mxu0 %v4203
        %5761 = vmatpush.bf16.msra.mxu0 %v4195
        %5762 = vmatpush.bf16.msra.mxu0 %v4187
        %5763 = vmatpush.bf16.msra.mxu0 %v4179
        %5764 = vmatmul.bf16.gmra.mxu0 %v3070
        %v5765 = vpop.f32.mrf.mxu0
        %v5766 = vadd.f32 %v3395, %v5765
        %v5767 = vpop.f32.mrf.mxu0
        %v5768 = vadd.f32 %v3395, %v5767
        %5769 = vmatmul.bf16.gmra.mxu0 %v3074
        %v5770 = vpop.f32.mrf.mxu0
        %v5771 = vadd.f32 %v3395, %v5770
        %v5772 = vpop.f32.mrf.mxu0
        %v5773 = vadd.f32 %v3395, %v5772
        %5774 = vmatmul.bf16.gmra.mxu0 %v3078
        %v5775 = vpop.f32.mrf.mxu0
        %v5776 = vadd.f32 %v3395, %v5775
        %v5777 = vpop.f32.mrf.mxu0
        %v5778 = vadd.f32 %v3395, %v5777
        %5779 = vmatmul.bf16.gmra.mxu0 %v3082
        %v5780 = vpop.f32.mrf.mxu0
        %v5781 = vadd.f32 %v3395, %v5780
        %v5782 = vpop.f32.mrf.mxu0
        %v5783 = vadd.f32 %v3395, %v5782
        %5784 = vmatmul.bf16.gmra.mxu0 %v3086
        %v5785 = vpop.f32.mrf.mxu0
        %v5786 = vadd.f32 %v3395, %v5785
        %v5787 = vpop.f32.mrf.mxu0
        %v5788 = vadd.f32 %v3395, %v5787
        %5789 = vmatmul.bf16.gmra.mxu0 %v3090
        %v5790 = vpop.f32.mrf.mxu0
        %v5791 = vadd.f32 %v3395, %v5790
        %v5792 = vpop.f32.mrf.mxu0
        %v5793 = vadd.f32 %v3395, %v5792
        %5794 = vmatmul.bf16.gmra.mxu0 %v3094
        %v5795 = vpop.f32.mrf.mxu0
        %v5796 = vadd.f32 %v3395, %v5795
        %v5797 = vpop.f32.mrf.mxu0
        %v5798 = vadd.f32 %v3395, %v5797
        %5799 = vmatmul.bf16.gmra.mxu0 %v3098
        %v5800 = vpop.f32.mrf.mxu0
        %v5801 = vadd.f32 %v3395, %v5800
        %v5802 = vpop.f32.mrf.mxu0
        %v5803 = vadd.f32 %v3395, %v5802
        %5804 = vmatmul.bf16.gmra.mxu0 %v3102
        %v5805 = vpop.f32.mrf.mxu0
        %v5806 = vadd.f32 %v3395, %v5805
        %v5807 = vpop.f32.mrf.mxu0
        %v5808 = vadd.f32 %v3395, %v5807
        %5809 = vmatmul.bf16.gmra.mxu0 %v3106
        %v5810 = vpop.f32.mrf.mxu0
        %v5811 = vadd.f32 %v3395, %v5810
        %v5812 = vpop.f32.mrf.mxu0
        %v5813 = vadd.f32 %v3395, %v5812
        %5814 = vmatmul.bf16.gmra.mxu0 %v3110
        %v5815 = vpop.f32.mrf.mxu0
        %v5816 = vadd.f32 %v3395, %v5815
        %v5817 = vpop.f32.mrf.mxu0
        %v5818 = vadd.f32 %v3395, %v5817
        %5819 = vmatmul.bf16.gmra.mxu0 %v3114
        %v5820 = vpop.f32.mrf.mxu0
        %v5821 = vadd.f32 %v3395, %v5820
        %v5822 = vpop.f32.mrf.mxu0
        %v5823 = vadd.f32 %v3395, %v5822
        %5824 = vmatmul.bf16.gmra.mxu0 %v3118
        %v5825 = vpop.f32.mrf.mxu0
        %v5826 = vadd.f32 %v3395, %v5825
        %v5827 = vpop.f32.mrf.mxu0
        %v5828 = vadd.f32 %v3395, %v5827
        %5829 = vmatmul.bf16.gmra.mxu0 %v3122
        %v5830 = vpop.f32.mrf.mxu0
        %v5831 = vadd.f32 %v3395, %v5830
        %v5832 = vpop.f32.mrf.mxu0
        %v5833 = vadd.f32 %v3395, %v5832
        %5834 = vmatmul.bf16.gmra.mxu0 %v3126
        %v5835 = vpop.f32.mrf.mxu0
        %v5836 = vadd.f32 %v3395, %v5835
        %v5837 = vpop.f32.mrf.mxu0
        %v5838 = vadd.f32 %v3395, %v5837
        %5839 = vmatmul.bf16.gmra.mxu0 %v3130
        %v5840 = vpop.f32.mrf.mxu0
        %v5841 = vadd.f32 %v3395, %v5840
        %v5842 = vpop.f32.mrf.mxu0
        %v5843 = vadd.f32 %v3395, %v5842
        %5844 = vdwg.mxu0
        %5845 = vmatpush.bf16.msra.mxu0 %v4299
        %5846 = vmatpush.bf16.msra.mxu0 %v4291
        %5847 = vmatpush.bf16.msra.mxu0 %v4283
        %5848 = vmatpush.bf16.msra.mxu0 %v4275
        %5849 = vmatpush.bf16.msra.mxu0 %v4267
        %5850 = vmatpush.bf16.msra.mxu0 %v4259
        %5851 = vmatpush.bf16.msra.mxu0 %v4251
        %5852 = vmatpush.bf16.msra.mxu0 %v4243
        %5853 = vmatmul.bf16.gmra.mxu0 %v3071
        %v5854 = vpop.f32.mrf.mxu0
        %v5855 = vadd.f32 %v5766, %v5854
        %v5856 = vpop.f32.mrf.mxu0
        %v5857 = vadd.f32 %v5768, %v5856
        %5858 = vmatmul.bf16.gmra.mxu0 %v3075
        %v5859 = vpop.f32.mrf.mxu0
        %v5860 = vadd.f32 %v5771, %v5859
        %v5861 = vpop.f32.mrf.mxu0
        %v5862 = vadd.f32 %v5773, %v5861
        %5863 = vmatmul.bf16.gmra.mxu0 %v3079
        %v5864 = vpop.f32.mrf.mxu0
        %v5865 = vadd.f32 %v5776, %v5864
        %v5866 = vpop.f32.mrf.mxu0
        %v5867 = vadd.f32 %v5778, %v5866
        %5868 = vmatmul.bf16.gmra.mxu0 %v3083
        %v5869 = vpop.f32.mrf.mxu0
        %v5870 = vadd.f32 %v5781, %v5869
        %v5871 = vpop.f32.mrf.mxu0
        %v5872 = vadd.f32 %v5783, %v5871
        %5873 = vmatmul.bf16.gmra.mxu0 %v3087
        %v5874 = vpop.f32.mrf.mxu0
        %v5875 = vadd.f32 %v5786, %v5874
        %v5876 = vpop.f32.mrf.mxu0
        %v5877 = vadd.f32 %v5788, %v5876
        %5878 = vmatmul.bf16.gmra.mxu0 %v3091
        %v5879 = vpop.f32.mrf.mxu0
        %v5880 = vadd.f32 %v5791, %v5879
        %v5881 = vpop.f32.mrf.mxu0
        %v5882 = vadd.f32 %v5793, %v5881
        %5883 = vmatmul.bf16.gmra.mxu0 %v3095
        %v5884 = vpop.f32.mrf.mxu0
        %v5885 = vadd.f32 %v5796, %v5884
        %v5886 = vpop.f32.mrf.mxu0
        %v5887 = vadd.f32 %v5798, %v5886
        %5888 = vmatmul.bf16.gmra.mxu0 %v3099
        %v5889 = vpop.f32.mrf.mxu0
        %v5890 = vadd.f32 %v5801, %v5889
        %v5891 = vpop.f32.mrf.mxu0
        %v5892 = vadd.f32 %v5803, %v5891
        %5893 = vmatmul.bf16.gmra.mxu0 %v3103
        %v5894 = vpop.f32.mrf.mxu0
        %v5895 = vadd.f32 %v5806, %v5894
        %v5896 = vpop.f32.mrf.mxu0
        %v5897 = vadd.f32 %v5808, %v5896
        %5898 = vmatmul.bf16.gmra.mxu0 %v3107
        %v5899 = vpop.f32.mrf.mxu0
        %v5900 = vadd.f32 %v5811, %v5899
        %v5901 = vpop.f32.mrf.mxu0
        %v5902 = vadd.f32 %v5813, %v5901
        %5903 = vmatmul.bf16.gmra.mxu0 %v3111
        %v5904 = vpop.f32.mrf.mxu0
        %v5905 = vadd.f32 %v5816, %v5904
        %v5906 = vpop.f32.mrf.mxu0
        %v5907 = vadd.f32 %v5818, %v5906
        %5908 = vmatmul.bf16.gmra.mxu0 %v3115
        %v5909 = vpop.f32.mrf.mxu0
        %v5910 = vadd.f32 %v5821, %v5909
        %v5911 = vpop.f32.mrf.mxu0
        %v5912 = vadd.f32 %v5823, %v5911
        %5913 = vmatmul.bf16.gmra.mxu0 %v3119
        %v5914 = vpop.f32.mrf.mxu0
        %v5915 = vadd.f32 %v5826, %v5914
        %v5916 = vpop.f32.mrf.mxu0
        %v5917 = vadd.f32 %v5828, %v5916
        %5918 = vmatmul.bf16.gmra.mxu0 %v3123
        %v5919 = vpop.f32.mrf.mxu0
        %v5920 = vadd.f32 %v5831, %v5919
        %v5921 = vpop.f32.mrf.mxu0
        %v5922 = vadd.f32 %v5833, %v5921
        %5923 = vmatmul.bf16.gmra.mxu0 %v3127
        %v5924 = vpop.f32.mrf.mxu0
        %v5925 = vadd.f32 %v5836, %v5924
        %v5926 = vpop.f32.mrf.mxu0
        %v5927 = vadd.f32 %v5838, %v5926
        %5928 = vmatmul.bf16.gmra.mxu0 %v3131
        %v5929 = vpop.f32.mrf.mxu0
        %v5930 = vadd.f32 %v5841, %v5929
        %v5931 = vpop.f32.mrf.mxu0
        %v5932 = vadd.f32 %v5843, %v5931
        %5933 = vdwg.mxu0
        %5934 = vmatpush.bf16.msra.mxu0 %v4363
        %5935 = vmatpush.bf16.msra.mxu0 %v4355
        %5936 = vmatpush.bf16.msra.mxu0 %v4347
        %5937 = vmatpush.bf16.msra.mxu0 %v4339
        %5938 = vmatpush.bf16.msra.mxu0 %v4331
        %5939 = vmatpush.bf16.msra.mxu0 %v4323
        %5940 = vmatpush.bf16.msra.mxu0 %v4315
        %5941 = vmatpush.bf16.msra.mxu0 %v4307
        %5942 = vmatmul.bf16.gmra.mxu0 %v3072
        %v5943 = vpop.f32.mrf.mxu0
        %v5944 = vadd.f32 %v5855, %v5943
        %v5945 = vpop.f32.mrf.mxu0
        %v5946 = vadd.f32 %v5857, %v5945
        %5947 = vmatmul.bf16.gmra.mxu0 %v3076
        %v5948 = vpop.f32.mrf.mxu0
        %v5949 = vadd.f32 %v5860, %v5948
        %v5950 = vpop.f32.mrf.mxu0
        %v5951 = vadd.f32 %v5862, %v5950
        %5952 = vmatmul.bf16.gmra.mxu0 %v3080
        %v5953 = vpop.f32.mrf.mxu0
        %v5954 = vadd.f32 %v5865, %v5953
        %v5955 = vpop.f32.mrf.mxu0
        %v5956 = vadd.f32 %v5867, %v5955
        %5957 = vmatmul.bf16.gmra.mxu0 %v3084
        %v5958 = vpop.f32.mrf.mxu0
        %v5959 = vadd.f32 %v5870, %v5958
        %v5960 = vpop.f32.mrf.mxu0
        %v5961 = vadd.f32 %v5872, %v5960
        %5962 = vmatmul.bf16.gmra.mxu0 %v3088
        %v5963 = vpop.f32.mrf.mxu0
        %v5964 = vadd.f32 %v5875, %v5963
        %v5965 = vpop.f32.mrf.mxu0
        %v5966 = vadd.f32 %v5877, %v5965
        %5967 = vmatmul.bf16.gmra.mxu0 %v3092
        %v5968 = vpop.f32.mrf.mxu0
        %v5969 = vadd.f32 %v5880, %v5968
        %v5970 = vpop.f32.mrf.mxu0
        %v5971 = vadd.f32 %v5882, %v5970
        %5972 = vmatmul.bf16.gmra.mxu0 %v3096
        %v5973 = vpop.f32.mrf.mxu0
        %v5974 = vadd.f32 %v5885, %v5973
        %v5975 = vpop.f32.mrf.mxu0
        %v5976 = vadd.f32 %v5887, %v5975
        %5977 = vmatmul.bf16.gmra.mxu0 %v3100
        %v5978 = vpop.f32.mrf.mxu0
        %v5979 = vadd.f32 %v5890, %v5978
        %v5980 = vpop.f32.mrf.mxu0
        %v5981 = vadd.f32 %v5892, %v5980
        %5982 = vmatmul.bf16.gmra.mxu0 %v3104
        %v5983 = vpop.f32.mrf.mxu0
        %v5984 = vadd.f32 %v5895, %v5983
        %v5985 = vpop.f32.mrf.mxu0
        %v5986 = vadd.f32 %v5897, %v5985
        %5987 = vmatmul.bf16.gmra.mxu0 %v3108
        %v5988 = vpop.f32.mrf.mxu0
        %v5989 = vadd.f32 %v5900, %v5988
        %v5990 = vpop.f32.mrf.mxu0
        %v5991 = vadd.f32 %v5902, %v5990
        %5992 = vmatmul.bf16.gmra.mxu0 %v3112
        %v5993 = vpop.f32.mrf.mxu0
        %v5994 = vadd.f32 %v5905, %v5993
        %v5995 = vpop.f32.mrf.mxu0
        %v5996 = vadd.f32 %v5907, %v5995
        %5997 = vmatmul.bf16.gmra.mxu0 %v3116
        %v5998 = vpop.f32.mrf.mxu0
        %v5999 = vadd.f32 %v5910, %v5998
        %v6000 = vpop.f32.mrf.mxu0
        %v6001 = vadd.f32 %v5912, %v6000
        %6002 = vmatmul.bf16.gmra.mxu0 %v3120
        %v6003 = vpop.f32.mrf.mxu0
        %v6004 = vadd.f32 %v5915, %v6003
        %v6005 = vpop.f32.mrf.mxu0
        %v6006 = vadd.f32 %v5917, %v6005
        %6007 = vmatmul.bf16.gmra.mxu0 %v3124
        %v6008 = vpop.f32.mrf.mxu0
        %v6009 = vadd.f32 %v5920, %v6008
        %v6010 = vpop.f32.mrf.mxu0
        %v6011 = vadd.f32 %v5922, %v6010
        %6012 = vmatmul.bf16.gmra.mxu0 %v3128
        %v6013 = vpop.f32.mrf.mxu0
        %v6014 = vadd.f32 %v5925, %v6013
        %v6015 = vpop.f32.mrf.mxu0
        %v6016 = vadd.f32 %v5927, %v6015
        %6017 = vmatmul.bf16.gmra.mxu0 %v3132
        %v6018 = vpop.f32.mrf.mxu0
        %v6019 = vadd.f32 %v5930, %v6018
        %v6020 = vpop.f32.mrf.mxu0
        %v6021 = vadd.f32 %v5932, %v6020
        %6022 = vdwg.mxu0
        %6023 = vmatpush.bf16.msra.mxu0 %v4427
        %6024 = vmatpush.bf16.msra.mxu0 %v4419
        %6025 = vmatpush.bf16.msra.mxu0 %v4411
        %6026 = vmatpush.bf16.msra.mxu0 %v4403
        %6027 = vmatpush.bf16.msra.mxu0 %v4395
        %6028 = vmatpush.bf16.msra.mxu0 %v4387
        %6029 = vmatpush.bf16.msra.mxu0 %v4379
        %6030 = vmatpush.bf16.msra.mxu0 %v4371
        %6031 = vmatmul.bf16.gmra.mxu0 %v3073
        %v6032 = vpop.f32.mrf.mxu0
        %v6033 = vadd.f32 %v5944, %v6032
        %v6034 = vpop.f32.mrf.mxu0
        %v6035 = vadd.f32 %v5946, %v6034
        %6036 = vmatmul.bf16.gmra.mxu0 %v3077
        %v6037 = vpop.f32.mrf.mxu0
        %v6038 = vadd.f32 %v5949, %v6037
        %v6039 = vpop.f32.mrf.mxu0
        %v6040 = vadd.f32 %v5951, %v6039
        %6041 = vmatmul.bf16.gmra.mxu0 %v3081
        %v6042 = vpop.f32.mrf.mxu0
        %v6043 = vadd.f32 %v5954, %v6042
        %v6044 = vpop.f32.mrf.mxu0
        %v6045 = vadd.f32 %v5956, %v6044
        %6046 = vmatmul.bf16.gmra.mxu0 %v3085
        %v6047 = vpop.f32.mrf.mxu0
        %v6048 = vadd.f32 %v5959, %v6047
        %v6049 = vpop.f32.mrf.mxu0
        %v6050 = vadd.f32 %v5961, %v6049
        %6051 = vmatmul.bf16.gmra.mxu0 %v3089
        %v6052 = vpop.f32.mrf.mxu0
        %v6053 = vadd.f32 %v5964, %v6052
        %v6054 = vpop.f32.mrf.mxu0
        %v6055 = vadd.f32 %v5966, %v6054
        %6056 = vmatmul.bf16.gmra.mxu0 %v3093
        %v6057 = vpop.f32.mrf.mxu0
        %v6058 = vadd.f32 %v5969, %v6057
        %v6059 = vpop.f32.mrf.mxu0
        %v6060 = vadd.f32 %v5971, %v6059
        %6061 = vmatmul.bf16.gmra.mxu0 %v3097
        %v6062 = vpop.f32.mrf.mxu0
        %v6063 = vadd.f32 %v5974, %v6062
        %v6064 = vpop.f32.mrf.mxu0
        %v6065 = vadd.f32 %v5976, %v6064
        %6066 = vmatmul.bf16.gmra.mxu0 %v3101
        %v6067 = vpop.f32.mrf.mxu0
        %v6068 = vadd.f32 %v5979, %v6067
        %v6069 = vpop.f32.mrf.mxu0
        %v6070 = vadd.f32 %v5981, %v6069
        %6071 = vmatmul.bf16.gmra.mxu0 %v3105
        %v6072 = vpop.f32.mrf.mxu0
        %v6073 = vadd.f32 %v5984, %v6072
        %v6074 = vpop.f32.mrf.mxu0
        %v6075 = vadd.f32 %v5986, %v6074
        %6076 = vmatmul.bf16.gmra.mxu0 %v3109
        %v6077 = vpop.f32.mrf.mxu0
        %v6078 = vadd.f32 %v5989, %v6077
        %v6079 = vpop.f32.mrf.mxu0
        %v6080 = vadd.f32 %v5991, %v6079
        %6081 = vmatmul.bf16.gmra.mxu0 %v3113
        %v6082 = vpop.f32.mrf.mxu0
        %v6083 = vadd.f32 %v5994, %v6082
        %v6084 = vpop.f32.mrf.mxu0
        %v6085 = vadd.f32 %v5996, %v6084
        %6086 = vmatmul.bf16.gmra.mxu0 %v3117
        %v6087 = vpop.f32.mrf.mxu0
        %v6088 = vadd.f32 %v5999, %v6087
        %v6089 = vpop.f32.mrf.mxu0
        %v6090 = vadd.f32 %v6001, %v6089
        %6091 = vmatmul.bf16.gmra.mxu0 %v3121
        %v6092 = vpop.f32.mrf.mxu0
        %v6093 = vadd.f32 %v6004, %v6092
        %v6094 = vpop.f32.mrf.mxu0
        %v6095 = vadd.f32 %v6006, %v6094
        %6096 = vmatmul.bf16.gmra.mxu0 %v3125
        %v6097 = vpop.f32.mrf.mxu0
        %v6098 = vadd.f32 %v6009, %v6097
        %v6099 = vpop.f32.mrf.mxu0
        %v6100 = vadd.f32 %v6011, %v6099
        %6101 = vmatmul.bf16.gmra.mxu0 %v3129
        %v6102 = vpop.f32.mrf.mxu0
        %v6103 = vadd.f32 %v6014, %v6102
        %v6104 = vpop.f32.mrf.mxu0
        %v6105 = vadd.f32 %v6016, %v6104
        %6106 = vmatmul.bf16.gmra.mxu0 %v3133
        %v6107 = vpop.f32.mrf.mxu0
        %v6108 = vadd.f32 %v6019, %v6107
        %v6109 = vpop.f32.mrf.mxu0
        %v6110 = vadd.f32 %v6021, %v6109
        %6111 = vdwg.mxu0
        %6112 = vmatpush.bf16.msra.mxu0 %v4236
        %6113 = vmatpush.bf16.msra.mxu0 %v4228
        %6114 = vmatpush.bf16.msra.mxu0 %v4220
        %6115 = vmatpush.bf16.msra.mxu0 %v4212
        %6116 = vmatpush.bf16.msra.mxu0 %v4204
        %6117 = vmatpush.bf16.msra.mxu0 %v4196
        %6118 = vmatpush.bf16.msra.mxu0 %v4188
        %6119 = vmatpush.bf16.msra.mxu0 %v4180
        %6120 = vmatmul.bf16.gmra.mxu0 %v3070
        %v6121 = vpop.f32.mrf.mxu0
        %v6122 = vadd.f32 %v3396, %v6121
        %v6123 = vpop.f32.mrf.mxu0
        %v6124 = vadd.f32 %v3396, %v6123
        %6125 = vmatmul.bf16.gmra.mxu0 %v3074
        %v6126 = vpop.f32.mrf.mxu0
        %v6127 = vadd.f32 %v3396, %v6126
        %v6128 = vpop.f32.mrf.mxu0
        %v6129 = vadd.f32 %v3396, %v6128
        %6130 = vmatmul.bf16.gmra.mxu0 %v3078
        %v6131 = vpop.f32.mrf.mxu0
        %v6132 = vadd.f32 %v3396, %v6131
        %v6133 = vpop.f32.mrf.mxu0
        %v6134 = vadd.f32 %v3396, %v6133
        %6135 = vmatmul.bf16.gmra.mxu0 %v3082
        %v6136 = vpop.f32.mrf.mxu0
        %v6137 = vadd.f32 %v3396, %v6136
        %v6138 = vpop.f32.mrf.mxu0
        %v6139 = vadd.f32 %v3396, %v6138
        %6140 = vmatmul.bf16.gmra.mxu0 %v3086
        %v6141 = vpop.f32.mrf.mxu0
        %v6142 = vadd.f32 %v3396, %v6141
        %v6143 = vpop.f32.mrf.mxu0
        %v6144 = vadd.f32 %v3396, %v6143
        %6145 = vmatmul.bf16.gmra.mxu0 %v3090
        %v6146 = vpop.f32.mrf.mxu0
        %v6147 = vadd.f32 %v3396, %v6146
        %v6148 = vpop.f32.mrf.mxu0
        %v6149 = vadd.f32 %v3396, %v6148
        %6150 = vmatmul.bf16.gmra.mxu0 %v3094
        %v6151 = vpop.f32.mrf.mxu0
        %v6152 = vadd.f32 %v3396, %v6151
        %v6153 = vpop.f32.mrf.mxu0
        %v6154 = vadd.f32 %v3396, %v6153
        %6155 = vmatmul.bf16.gmra.mxu0 %v3098
        %v6156 = vpop.f32.mrf.mxu0
        %v6157 = vadd.f32 %v3396, %v6156
        %v6158 = vpop.f32.mrf.mxu0
        %v6159 = vadd.f32 %v3396, %v6158
        %6160 = vmatmul.bf16.gmra.mxu0 %v3102
        %v6161 = vpop.f32.mrf.mxu0
        %v6162 = vadd.f32 %v3396, %v6161
        %v6163 = vpop.f32.mrf.mxu0
        %v6164 = vadd.f32 %v3396, %v6163
        %6165 = vmatmul.bf16.gmra.mxu0 %v3106
        %v6166 = vpop.f32.mrf.mxu0
        %v6167 = vadd.f32 %v3396, %v6166
        %v6168 = vpop.f32.mrf.mxu0
        %v6169 = vadd.f32 %v3396, %v6168
        %6170 = vmatmul.bf16.gmra.mxu0 %v3110
        %v6171 = vpop.f32.mrf.mxu0
        %v6172 = vadd.f32 %v3396, %v6171
        %v6173 = vpop.f32.mrf.mxu0
        %v6174 = vadd.f32 %v3396, %v6173
        %6175 = vmatmul.bf16.gmra.mxu0 %v3114
        %v6176 = vpop.f32.mrf.mxu0
        %v6177 = vadd.f32 %v3396, %v6176
        %v6178 = vpop.f32.mrf.mxu0
        %v6179 = vadd.f32 %v3396, %v6178
        %6180 = vmatmul.bf16.gmra.mxu0 %v3118
        %v6181 = vpop.f32.mrf.mxu0
        %v6182 = vadd.f32 %v3396, %v6181
        %v6183 = vpop.f32.mrf.mxu0
        %v6184 = vadd.f32 %v3396, %v6183
        %6185 = vmatmul.bf16.gmra.mxu0 %v3122
        %v6186 = vpop.f32.mrf.mxu0
        %v6187 = vadd.f32 %v3396, %v6186
        %v6188 = vpop.f32.mrf.mxu0
        %v6189 = vadd.f32 %v3396, %v6188
        %6190 = vmatmul.bf16.gmra.mxu0 %v3126
        %v6191 = vpop.f32.mrf.mxu0
        %v6192 = vadd.f32 %v3396, %v6191
        %v6193 = vpop.f32.mrf.mxu0
        %v6194 = vadd.f32 %v3396, %v6193
        %6195 = vmatmul.bf16.gmra.mxu0 %v3130
        %v6196 = vpop.f32.mrf.mxu0
        %v6197 = vadd.f32 %v3396, %v6196
        %v6198 = vpop.f32.mrf.mxu0
        %v6199 = vadd.f32 %v3396, %v6198
        %6200 = vdwg.mxu0
        %6201 = vmatpush.bf16.msra.mxu0 %v4300
        %6202 = vmatpush.bf16.msra.mxu0 %v4292
        %6203 = vmatpush.bf16.msra.mxu0 %v4284
        %6204 = vmatpush.bf16.msra.mxu0 %v4276
        %6205 = vmatpush.bf16.msra.mxu0 %v4268
        %6206 = vmatpush.bf16.msra.mxu0 %v4260
        %6207 = vmatpush.bf16.msra.mxu0 %v4252
        %6208 = vmatpush.bf16.msra.mxu0 %v4244
        %6209 = vmatmul.bf16.gmra.mxu0 %v3071
        %v6210 = vpop.f32.mrf.mxu0
        %v6211 = vadd.f32 %v6122, %v6210
        %v6212 = vpop.f32.mrf.mxu0
        %v6213 = vadd.f32 %v6124, %v6212
        %6214 = vmatmul.bf16.gmra.mxu0 %v3075
        %v6215 = vpop.f32.mrf.mxu0
        %v6216 = vadd.f32 %v6127, %v6215
        %v6217 = vpop.f32.mrf.mxu0
        %v6218 = vadd.f32 %v6129, %v6217
        %6219 = vmatmul.bf16.gmra.mxu0 %v3079
        %v6220 = vpop.f32.mrf.mxu0
        %v6221 = vadd.f32 %v6132, %v6220
        %v6222 = vpop.f32.mrf.mxu0
        %v6223 = vadd.f32 %v6134, %v6222
        %6224 = vmatmul.bf16.gmra.mxu0 %v3083
        %v6225 = vpop.f32.mrf.mxu0
        %v6226 = vadd.f32 %v6137, %v6225
        %v6227 = vpop.f32.mrf.mxu0
        %v6228 = vadd.f32 %v6139, %v6227
        %6229 = vmatmul.bf16.gmra.mxu0 %v3087
        %v6230 = vpop.f32.mrf.mxu0
        %v6231 = vadd.f32 %v6142, %v6230
        %v6232 = vpop.f32.mrf.mxu0
        %v6233 = vadd.f32 %v6144, %v6232
        %6234 = vmatmul.bf16.gmra.mxu0 %v3091
        %v6235 = vpop.f32.mrf.mxu0
        %v6236 = vadd.f32 %v6147, %v6235
        %v6237 = vpop.f32.mrf.mxu0
        %v6238 = vadd.f32 %v6149, %v6237
        %6239 = vmatmul.bf16.gmra.mxu0 %v3095
        %v6240 = vpop.f32.mrf.mxu0
        %v6241 = vadd.f32 %v6152, %v6240
        %v6242 = vpop.f32.mrf.mxu0
        %v6243 = vadd.f32 %v6154, %v6242
        %6244 = vmatmul.bf16.gmra.mxu0 %v3099
        %v6245 = vpop.f32.mrf.mxu0
        %v6246 = vadd.f32 %v6157, %v6245
        %v6247 = vpop.f32.mrf.mxu0
        %v6248 = vadd.f32 %v6159, %v6247
        %6249 = vmatmul.bf16.gmra.mxu0 %v3103
        %v6250 = vpop.f32.mrf.mxu0
        %v6251 = vadd.f32 %v6162, %v6250
        %v6252 = vpop.f32.mrf.mxu0
        %v6253 = vadd.f32 %v6164, %v6252
        %6254 = vmatmul.bf16.gmra.mxu0 %v3107
        %v6255 = vpop.f32.mrf.mxu0
        %v6256 = vadd.f32 %v6167, %v6255
        %v6257 = vpop.f32.mrf.mxu0
        %v6258 = vadd.f32 %v6169, %v6257
        %6259 = vmatmul.bf16.gmra.mxu0 %v3111
        %v6260 = vpop.f32.mrf.mxu0
        %v6261 = vadd.f32 %v6172, %v6260
        %v6262 = vpop.f32.mrf.mxu0
        %v6263 = vadd.f32 %v6174, %v6262
        %6264 = vmatmul.bf16.gmra.mxu0 %v3115
        %v6265 = vpop.f32.mrf.mxu0
        %v6266 = vadd.f32 %v6177, %v6265
        %v6267 = vpop.f32.mrf.mxu0
        %v6268 = vadd.f32 %v6179, %v6267
        %6269 = vmatmul.bf16.gmra.mxu0 %v3119
        %v6270 = vpop.f32.mrf.mxu0
        %v6271 = vadd.f32 %v6182, %v6270
        %v6272 = vpop.f32.mrf.mxu0
        %v6273 = vadd.f32 %v6184, %v6272
        %6274 = vmatmul.bf16.gmra.mxu0 %v3123
        %v6275 = vpop.f32.mrf.mxu0
        %v6276 = vadd.f32 %v6187, %v6275
        %v6277 = vpop.f32.mrf.mxu0
        %v6278 = vadd.f32 %v6189, %v6277
        %6279 = vmatmul.bf16.gmra.mxu0 %v3127
        %v6280 = vpop.f32.mrf.mxu0
        %v6281 = vadd.f32 %v6192, %v6280
        %v6282 = vpop.f32.mrf.mxu0
        %v6283 = vadd.f32 %v6194, %v6282
        %6284 = vmatmul.bf16.gmra.mxu0 %v3131
        %v6285 = vpop.f32.mrf.mxu0
        %v6286 = vadd.f32 %v6197, %v6285
        %v6287 = vpop.f32.mrf.mxu0
        %v6288 = vadd.f32 %v6199, %v6287
        %6289 = vdwg.mxu0
        %6290 = vmatpush.bf16.msra.mxu0 %v4364
        %6291 = vmatpush.bf16.msra.mxu0 %v4356
        %6292 = vmatpush.bf16.msra.mxu0 %v4348
        %6293 = vmatpush.bf16.msra.mxu0 %v4340
        %6294 = vmatpush.bf16.msra.mxu0 %v4332
        %6295 = vmatpush.bf16.msra.mxu0 %v4324
        %6296 = vmatpush.bf16.msra.mxu0 %v4316
        %6297 = vmatpush.bf16.msra.mxu0 %v4308
        %6298 = vmatmul.bf16.gmra.mxu0 %v3072
        %v6299 = vpop.f32.mrf.mxu0
        %v6300 = vadd.f32 %v6211, %v6299
        %v6301 = vpop.f32.mrf.mxu0
        %v6302 = vadd.f32 %v6213, %v6301
        %6303 = vmatmul.bf16.gmra.mxu0 %v3076
        %v6304 = vpop.f32.mrf.mxu0
        %v6305 = vadd.f32 %v6216, %v6304
        %v6306 = vpop.f32.mrf.mxu0
        %v6307 = vadd.f32 %v6218, %v6306
        %6308 = vmatmul.bf16.gmra.mxu0 %v3080
        %v6309 = vpop.f32.mrf.mxu0
        %v6310 = vadd.f32 %v6221, %v6309
        %v6311 = vpop.f32.mrf.mxu0
        %v6312 = vadd.f32 %v6223, %v6311
        %6313 = vmatmul.bf16.gmra.mxu0 %v3084
        %v6314 = vpop.f32.mrf.mxu0
        %v6315 = vadd.f32 %v6226, %v6314
        %v6316 = vpop.f32.mrf.mxu0
        %v6317 = vadd.f32 %v6228, %v6316
        %6318 = vmatmul.bf16.gmra.mxu0 %v3088
        %v6319 = vpop.f32.mrf.mxu0
        %v6320 = vadd.f32 %v6231, %v6319
        %v6321 = vpop.f32.mrf.mxu0
        %v6322 = vadd.f32 %v6233, %v6321
        %6323 = vmatmul.bf16.gmra.mxu0 %v3092
        %v6324 = vpop.f32.mrf.mxu0
        %v6325 = vadd.f32 %v6236, %v6324
        %v6326 = vpop.f32.mrf.mxu0
        %v6327 = vadd.f32 %v6238, %v6326
        %6328 = vmatmul.bf16.gmra.mxu0 %v3096
        %v6329 = vpop.f32.mrf.mxu0
        %v6330 = vadd.f32 %v6241, %v6329
        %v6331 = vpop.f32.mrf.mxu0
        %v6332 = vadd.f32 %v6243, %v6331
        %6333 = vmatmul.bf16.gmra.mxu0 %v3100
        %v6334 = vpop.f32.mrf.mxu0
        %v6335 = vadd.f32 %v6246, %v6334
        %v6336 = vpop.f32.mrf.mxu0
        %v6337 = vadd.f32 %v6248, %v6336
        %6338 = vmatmul.bf16.gmra.mxu0 %v3104
        %v6339 = vpop.f32.mrf.mxu0
        %v6340 = vadd.f32 %v6251, %v6339
        %v6341 = vpop.f32.mrf.mxu0
        %v6342 = vadd.f32 %v6253, %v6341
        %6343 = vmatmul.bf16.gmra.mxu0 %v3108
        %v6344 = vpop.f32.mrf.mxu0
        %v6345 = vadd.f32 %v6256, %v6344
        %v6346 = vpop.f32.mrf.mxu0
        %v6347 = vadd.f32 %v6258, %v6346
        %6348 = vmatmul.bf16.gmra.mxu0 %v3112
        %v6349 = vpop.f32.mrf.mxu0
        %v6350 = vadd.f32 %v6261, %v6349
        %v6351 = vpop.f32.mrf.mxu0
        %v6352 = vadd.f32 %v6263, %v6351
        %6353 = vmatmul.bf16.gmra.mxu0 %v3116
        %v6354 = vpop.f32.mrf.mxu0
        %v6355 = vadd.f32 %v6266, %v6354
        %v6356 = vpop.f32.mrf.mxu0
        %v6357 = vadd.f32 %v6268, %v6356
        %6358 = vmatmul.bf16.gmra.mxu0 %v3120
        %v6359 = vpop.f32.mrf.mxu0
        %v6360 = vadd.f32 %v6271, %v6359
        %v6361 = vpop.f32.mrf.mxu0
        %v6362 = vadd.f32 %v6273, %v6361
        %6363 = vmatmul.bf16.gmra.mxu0 %v3124
        %v6364 = vpop.f32.mrf.mxu0
        %v6365 = vadd.f32 %v6276, %v6364
        %v6366 = vpop.f32.mrf.mxu0
        %v6367 = vadd.f32 %v6278, %v6366
        %6368 = vmatmul.bf16.gmra.mxu0 %v3128
        %v6369 = vpop.f32.mrf.mxu0
        %v6370 = vadd.f32 %v6281, %v6369
        %v6371 = vpop.f32.mrf.mxu0
        %v6372 = vadd.f32 %v6283, %v6371
        %6373 = vmatmul.bf16.gmra.mxu0 %v3132
        %v6374 = vpop.f32.mrf.mxu0
        %v6375 = vadd.f32 %v6286, %v6374
        %v6376 = vpop.f32.mrf.mxu0
        %v6377 = vadd.f32 %v6288, %v6376
        %6378 = vdwg.mxu0
        %6379 = vmatpush.bf16.msra.mxu0 %v4428
        %6380 = vmatpush.bf16.msra.mxu0 %v4420
        %6381 = vmatpush.bf16.msra.mxu0 %v4412
        %6382 = vmatpush.bf16.msra.mxu0 %v4404
        %6383 = vmatpush.bf16.msra.mxu0 %v4396
        %6384 = vmatpush.bf16.msra.mxu0 %v4388
        %6385 = vmatpush.bf16.msra.mxu0 %v4380
        %6386 = vmatpush.bf16.msra.mxu0 %v4372
        %6387 = vmatmul.bf16.gmra.mxu0 %v3073
        %v6388 = vpop.f32.mrf.mxu0
        %v6389 = vadd.f32 %v6300, %v6388
        %v6390 = vpop.f32.mrf.mxu0
        %v6391 = vadd.f32 %v6302, %v6390
        %6392 = vmatmul.bf16.gmra.mxu0 %v3077
        %v6393 = vpop.f32.mrf.mxu0
        %v6394 = vadd.f32 %v6305, %v6393
        %v6395 = vpop.f32.mrf.mxu0
        %v6396 = vadd.f32 %v6307, %v6395
        %6397 = vmatmul.bf16.gmra.mxu0 %v3081
        %v6398 = vpop.f32.mrf.mxu0
        %v6399 = vadd.f32 %v6310, %v6398
        %v6400 = vpop.f32.mrf.mxu0
        %v6401 = vadd.f32 %v6312, %v6400
        %6402 = vmatmul.bf16.gmra.mxu0 %v3085
        %v6403 = vpop.f32.mrf.mxu0
        %v6404 = vadd.f32 %v6315, %v6403
        %v6405 = vpop.f32.mrf.mxu0
        %v6406 = vadd.f32 %v6317, %v6405
        %6407 = vmatmul.bf16.gmra.mxu0 %v3089
        %v6408 = vpop.f32.mrf.mxu0
        %v6409 = vadd.f32 %v6320, %v6408
        %v6410 = vpop.f32.mrf.mxu0
        %v6411 = vadd.f32 %v6322, %v6410
        %6412 = vmatmul.bf16.gmra.mxu0 %v3093
        %v6413 = vpop.f32.mrf.mxu0
        %v6414 = vadd.f32 %v6325, %v6413
        %v6415 = vpop.f32.mrf.mxu0
        %v6416 = vadd.f32 %v6327, %v6415
        %6417 = vmatmul.bf16.gmra.mxu0 %v3097
        %v6418 = vpop.f32.mrf.mxu0
        %v6419 = vadd.f32 %v6330, %v6418
        %v6420 = vpop.f32.mrf.mxu0
        %v6421 = vadd.f32 %v6332, %v6420
        %6422 = vmatmul.bf16.gmra.mxu0 %v3101
        %v6423 = vpop.f32.mrf.mxu0
        %v6424 = vadd.f32 %v6335, %v6423
        %v6425 = vpop.f32.mrf.mxu0
        %v6426 = vadd.f32 %v6337, %v6425
        %6427 = vmatmul.bf16.gmra.mxu0 %v3105
        %v6428 = vpop.f32.mrf.mxu0
        %v6429 = vadd.f32 %v6340, %v6428
        %v6430 = vpop.f32.mrf.mxu0
        %v6431 = vadd.f32 %v6342, %v6430
        %6432 = vmatmul.bf16.gmra.mxu0 %v3109
        %v6433 = vpop.f32.mrf.mxu0
        %v6434 = vadd.f32 %v6345, %v6433
        %v6435 = vpop.f32.mrf.mxu0
        %v6436 = vadd.f32 %v6347, %v6435
        %6437 = vmatmul.bf16.gmra.mxu0 %v3113
        %v6438 = vpop.f32.mrf.mxu0
        %v6439 = vadd.f32 %v6350, %v6438
        %v6440 = vpop.f32.mrf.mxu0
        %v6441 = vadd.f32 %v6352, %v6440
        %6442 = vmatmul.bf16.gmra.mxu0 %v3117
        %v6443 = vpop.f32.mrf.mxu0
        %v6444 = vadd.f32 %v6355, %v6443
        %v6445 = vpop.f32.mrf.mxu0
        %v6446 = vadd.f32 %v6357, %v6445
        %6447 = vmatmul.bf16.gmra.mxu0 %v3121
        %v6448 = vpop.f32.mrf.mxu0
        %v6449 = vadd.f32 %v6360, %v6448
        %v6450 = vpop.f32.mrf.mxu0
        %v6451 = vadd.f32 %v6362, %v6450
        %6452 = vmatmul.bf16.gmra.mxu0 %v3125
        %v6453 = vpop.f32.mrf.mxu0
        %v6454 = vadd.f32 %v6365, %v6453
        %v6455 = vpop.f32.mrf.mxu0
        %v6456 = vadd.f32 %v6367, %v6455
        %6457 = vmatmul.bf16.gmra.mxu0 %v3129
        %v6458 = vpop.f32.mrf.mxu0
        %v6459 = vadd.f32 %v6370, %v6458
        %v6460 = vpop.f32.mrf.mxu0
        %v6461 = vadd.f32 %v6372, %v6460
        %6462 = vmatmul.bf16.gmra.mxu0 %v3133
        %v6463 = vpop.f32.mrf.mxu0
        %v6464 = vadd.f32 %v6375, %v6463
        %v6465 = vpop.f32.mrf.mxu0
        %v6466 = vadd.f32 %v6377, %v6465
        %6467 = vdwg.mxu0
        %6468 = vmatpush.bf16.msra.mxu0 %v4237
        %6469 = vmatpush.bf16.msra.mxu0 %v4229
        %6470 = vmatpush.bf16.msra.mxu0 %v4221
        %6471 = vmatpush.bf16.msra.mxu0 %v4213
        %6472 = vmatpush.bf16.msra.mxu0 %v4205
        %6473 = vmatpush.bf16.msra.mxu0 %v4197
        %6474 = vmatpush.bf16.msra.mxu0 %v4189
        %6475 = vmatpush.bf16.msra.mxu0 %v4181
        %6476 = vmatmul.bf16.gmra.mxu0 %v3070
        %v6477 = vpop.f32.mrf.mxu0
        %v6478 = vadd.f32 %v3397, %v6477
        %v6479 = vpop.f32.mrf.mxu0
        %v6480 = vadd.f32 %v3397, %v6479
        %6481 = vmatmul.bf16.gmra.mxu0 %v3074
        %v6482 = vpop.f32.mrf.mxu0
        %v6483 = vadd.f32 %v3397, %v6482
        %v6484 = vpop.f32.mrf.mxu0
        %v6485 = vadd.f32 %v3397, %v6484
        %6486 = vmatmul.bf16.gmra.mxu0 %v3078
        %v6487 = vpop.f32.mrf.mxu0
        %v6488 = vadd.f32 %v3397, %v6487
        %v6489 = vpop.f32.mrf.mxu0
        %v6490 = vadd.f32 %v3397, %v6489
        %6491 = vmatmul.bf16.gmra.mxu0 %v3082
        %v6492 = vpop.f32.mrf.mxu0
        %v6493 = vadd.f32 %v3397, %v6492
        %v6494 = vpop.f32.mrf.mxu0
        %v6495 = vadd.f32 %v3397, %v6494
        %6496 = vmatmul.bf16.gmra.mxu0 %v3086
        %v6497 = vpop.f32.mrf.mxu0
        %v6498 = vadd.f32 %v3397, %v6497
        %v6499 = vpop.f32.mrf.mxu0
        %v6500 = vadd.f32 %v3397, %v6499
        %6501 = vmatmul.bf16.gmra.mxu0 %v3090
        %v6502 = vpop.f32.mrf.mxu0
        %v6503 = vadd.f32 %v3397, %v6502
        %v6504 = vpop.f32.mrf.mxu0
        %v6505 = vadd.f32 %v3397, %v6504
        %6506 = vmatmul.bf16.gmra.mxu0 %v3094
        %v6507 = vpop.f32.mrf.mxu0
        %v6508 = vadd.f32 %v3397, %v6507
        %v6509 = vpop.f32.mrf.mxu0
        %v6510 = vadd.f32 %v3397, %v6509
        %6511 = vmatmul.bf16.gmra.mxu0 %v3098
        %v6512 = vpop.f32.mrf.mxu0
        %v6513 = vadd.f32 %v3397, %v6512
        %v6514 = vpop.f32.mrf.mxu0
        %v6515 = vadd.f32 %v3397, %v6514
        %6516 = vmatmul.bf16.gmra.mxu0 %v3102
        %v6517 = vpop.f32.mrf.mxu0
        %v6518 = vadd.f32 %v3397, %v6517
        %v6519 = vpop.f32.mrf.mxu0
        %v6520 = vadd.f32 %v3397, %v6519
        %6521 = vmatmul.bf16.gmra.mxu0 %v3106
        %v6522 = vpop.f32.mrf.mxu0
        %v6523 = vadd.f32 %v3397, %v6522
        %v6524 = vpop.f32.mrf.mxu0
        %v6525 = vadd.f32 %v3397, %v6524
        %6526 = vmatmul.bf16.gmra.mxu0 %v3110
        %v6527 = vpop.f32.mrf.mxu0
        %v6528 = vadd.f32 %v3397, %v6527
        %v6529 = vpop.f32.mrf.mxu0
        %v6530 = vadd.f32 %v3397, %v6529
        %6531 = vmatmul.bf16.gmra.mxu0 %v3114
        %v6532 = vpop.f32.mrf.mxu0
        %v6533 = vadd.f32 %v3397, %v6532
        %v6534 = vpop.f32.mrf.mxu0
        %v6535 = vadd.f32 %v3397, %v6534
        %6536 = vmatmul.bf16.gmra.mxu0 %v3118
        %v6537 = vpop.f32.mrf.mxu0
        %v6538 = vadd.f32 %v3397, %v6537
        %v6539 = vpop.f32.mrf.mxu0
        %v6540 = vadd.f32 %v3397, %v6539
        %6541 = vmatmul.bf16.gmra.mxu0 %v3122
        %v6542 = vpop.f32.mrf.mxu0
        %v6543 = vadd.f32 %v3397, %v6542
        %v6544 = vpop.f32.mrf.mxu0
        %v6545 = vadd.f32 %v3397, %v6544
        %6546 = vmatmul.bf16.gmra.mxu0 %v3126
        %v6547 = vpop.f32.mrf.mxu0
        %v6548 = vadd.f32 %v3397, %v6547
        %v6549 = vpop.f32.mrf.mxu0
        %v6550 = vadd.f32 %v3397, %v6549
        %6551 = vmatmul.bf16.gmra.mxu0 %v3130
        %v6552 = vpop.f32.mrf.mxu0
        %v6553 = vadd.f32 %v3397, %v6552
        %v6554 = vpop.f32.mrf.mxu0
        %v6555 = vadd.f32 %v3397, %v6554
        %6556 = vdwg.mxu0
        %6557 = vmatpush.bf16.msra.mxu0 %v4301
        %6558 = vmatpush.bf16.msra.mxu0 %v4293
        %6559 = vmatpush.bf16.msra.mxu0 %v4285
        %6560 = vmatpush.bf16.msra.mxu0 %v4277
        %6561 = vmatpush.bf16.msra.mxu0 %v4269
        %6562 = vmatpush.bf16.msra.mxu0 %v4261
        %6563 = vmatpush.bf16.msra.mxu0 %v4253
        %6564 = vmatpush.bf16.msra.mxu0 %v4245
        %6565 = vmatmul.bf16.gmra.mxu0 %v3071
        %v6566 = vpop.f32.mrf.mxu0
        %v6567 = vadd.f32 %v6478, %v6566
        %v6568 = vpop.f32.mrf.mxu0
        %v6569 = vadd.f32 %v6480, %v6568
        %6570 = vmatmul.bf16.gmra.mxu0 %v3075
        %v6571 = vpop.f32.mrf.mxu0
        %v6572 = vadd.f32 %v6483, %v6571
        %v6573 = vpop.f32.mrf.mxu0
        %v6574 = vadd.f32 %v6485, %v6573
        %6575 = vmatmul.bf16.gmra.mxu0 %v3079
        %v6576 = vpop.f32.mrf.mxu0
        %v6577 = vadd.f32 %v6488, %v6576
        %v6578 = vpop.f32.mrf.mxu0
        %v6579 = vadd.f32 %v6490, %v6578
        %6580 = vmatmul.bf16.gmra.mxu0 %v3083
        %v6581 = vpop.f32.mrf.mxu0
        %v6582 = vadd.f32 %v6493, %v6581
        %v6583 = vpop.f32.mrf.mxu0
        %v6584 = vadd.f32 %v6495, %v6583
        %6585 = vmatmul.bf16.gmra.mxu0 %v3087
        %v6586 = vpop.f32.mrf.mxu0
        %v6587 = vadd.f32 %v6498, %v6586
        %v6588 = vpop.f32.mrf.mxu0
        %v6589 = vadd.f32 %v6500, %v6588
        %6590 = vmatmul.bf16.gmra.mxu0 %v3091
        %v6591 = vpop.f32.mrf.mxu0
        %v6592 = vadd.f32 %v6503, %v6591
        %v6593 = vpop.f32.mrf.mxu0
        %v6594 = vadd.f32 %v6505, %v6593
        %6595 = vmatmul.bf16.gmra.mxu0 %v3095
        %v6596 = vpop.f32.mrf.mxu0
        %v6597 = vadd.f32 %v6508, %v6596
        %v6598 = vpop.f32.mrf.mxu0
        %v6599 = vadd.f32 %v6510, %v6598
        %6600 = vmatmul.bf16.gmra.mxu0 %v3099
        %v6601 = vpop.f32.mrf.mxu0
        %v6602 = vadd.f32 %v6513, %v6601
        %v6603 = vpop.f32.mrf.mxu0
        %v6604 = vadd.f32 %v6515, %v6603
        %6605 = vmatmul.bf16.gmra.mxu0 %v3103
        %v6606 = vpop.f32.mrf.mxu0
        %v6607 = vadd.f32 %v6518, %v6606
        %v6608 = vpop.f32.mrf.mxu0
        %v6609 = vadd.f32 %v6520, %v6608
        %6610 = vmatmul.bf16.gmra.mxu0 %v3107
        %v6611 = vpop.f32.mrf.mxu0
        %v6612 = vadd.f32 %v6523, %v6611
        %v6613 = vpop.f32.mrf.mxu0
        %v6614 = vadd.f32 %v6525, %v6613
        %6615 = vmatmul.bf16.gmra.mxu0 %v3111
        %v6616 = vpop.f32.mrf.mxu0
        %v6617 = vadd.f32 %v6528, %v6616
        %v6618 = vpop.f32.mrf.mxu0
        %v6619 = vadd.f32 %v6530, %v6618
        %6620 = vmatmul.bf16.gmra.mxu0 %v3115
        %v6621 = vpop.f32.mrf.mxu0
        %v6622 = vadd.f32 %v6533, %v6621
        %v6623 = vpop.f32.mrf.mxu0
        %v6624 = vadd.f32 %v6535, %v6623
        %6625 = vmatmul.bf16.gmra.mxu0 %v3119
        %v6626 = vpop.f32.mrf.mxu0
        %v6627 = vadd.f32 %v6538, %v6626
        %v6628 = vpop.f32.mrf.mxu0
        %v6629 = vadd.f32 %v6540, %v6628
        %6630 = vmatmul.bf16.gmra.mxu0 %v3123
        %v6631 = vpop.f32.mrf.mxu0
        %v6632 = vadd.f32 %v6543, %v6631
        %v6633 = vpop.f32.mrf.mxu0
        %v6634 = vadd.f32 %v6545, %v6633
        %6635 = vmatmul.bf16.gmra.mxu0 %v3127
        %v6636 = vpop.f32.mrf.mxu0
        %v6637 = vadd.f32 %v6548, %v6636
        %v6638 = vpop.f32.mrf.mxu0
        %v6639 = vadd.f32 %v6550, %v6638
        %6640 = vmatmul.bf16.gmra.mxu0 %v3131
        %v6641 = vpop.f32.mrf.mxu0
        %v6642 = vadd.f32 %v6553, %v6641
        %v6643 = vpop.f32.mrf.mxu0
        %v6644 = vadd.f32 %v6555, %v6643
        %6645 = vdwg.mxu0
        %6646 = vmatpush.bf16.msra.mxu0 %v4365
        %6647 = vmatpush.bf16.msra.mxu0 %v4357
        %6648 = vmatpush.bf16.msra.mxu0 %v4349
        %6649 = vmatpush.bf16.msra.mxu0 %v4341
        %6650 = vmatpush.bf16.msra.mxu0 %v4333
        %6651 = vmatpush.bf16.msra.mxu0 %v4325
        %6652 = vmatpush.bf16.msra.mxu0 %v4317
        %6653 = vmatpush.bf16.msra.mxu0 %v4309
        %6654 = vmatmul.bf16.gmra.mxu0 %v3072
        %v6655 = vpop.f32.mrf.mxu0
        %v6656 = vadd.f32 %v6567, %v6655
        %v6657 = vpop.f32.mrf.mxu0
        %v6658 = vadd.f32 %v6569, %v6657
        %6659 = vmatmul.bf16.gmra.mxu0 %v3076
        %v6660 = vpop.f32.mrf.mxu0
        %v6661 = vadd.f32 %v6572, %v6660
        %v6662 = vpop.f32.mrf.mxu0
        %v6663 = vadd.f32 %v6574, %v6662
        %6664 = vmatmul.bf16.gmra.mxu0 %v3080
        %v6665 = vpop.f32.mrf.mxu0
        %v6666 = vadd.f32 %v6577, %v6665
        %v6667 = vpop.f32.mrf.mxu0
        %v6668 = vadd.f32 %v6579, %v6667
        %6669 = vmatmul.bf16.gmra.mxu0 %v3084
        %v6670 = vpop.f32.mrf.mxu0
        %v6671 = vadd.f32 %v6582, %v6670
        %v6672 = vpop.f32.mrf.mxu0
        %v6673 = vadd.f32 %v6584, %v6672
        %6674 = vmatmul.bf16.gmra.mxu0 %v3088
        %v6675 = vpop.f32.mrf.mxu0
        %v6676 = vadd.f32 %v6587, %v6675
        %v6677 = vpop.f32.mrf.mxu0
        %v6678 = vadd.f32 %v6589, %v6677
        %6679 = vmatmul.bf16.gmra.mxu0 %v3092
        %v6680 = vpop.f32.mrf.mxu0
        %v6681 = vadd.f32 %v6592, %v6680
        %v6682 = vpop.f32.mrf.mxu0
        %v6683 = vadd.f32 %v6594, %v6682
        %6684 = vmatmul.bf16.gmra.mxu0 %v3096
        %v6685 = vpop.f32.mrf.mxu0
        %v6686 = vadd.f32 %v6597, %v6685
        %v6687 = vpop.f32.mrf.mxu0
        %v6688 = vadd.f32 %v6599, %v6687
        %6689 = vmatmul.bf16.gmra.mxu0 %v3100
        %v6690 = vpop.f32.mrf.mxu0
        %v6691 = vadd.f32 %v6602, %v6690
        %v6692 = vpop.f32.mrf.mxu0
        %v6693 = vadd.f32 %v6604, %v6692
        %6694 = vmatmul.bf16.gmra.mxu0 %v3104
        %v6695 = vpop.f32.mrf.mxu0
        %v6696 = vadd.f32 %v6607, %v6695
        %v6697 = vpop.f32.mrf.mxu0
        %v6698 = vadd.f32 %v6609, %v6697
        %6699 = vmatmul.bf16.gmra.mxu0 %v3108
        %v6700 = vpop.f32.mrf.mxu0
        %v6701 = vadd.f32 %v6612, %v6700
        %v6702 = vpop.f32.mrf.mxu0
        %v6703 = vadd.f32 %v6614, %v6702
        %6704 = vmatmul.bf16.gmra.mxu0 %v3112
        %v6705 = vpop.f32.mrf.mxu0
        %v6706 = vadd.f32 %v6617, %v6705
        %v6707 = vpop.f32.mrf.mxu0
        %v6708 = vadd.f32 %v6619, %v6707
        %6709 = vmatmul.bf16.gmra.mxu0 %v3116
        %v6710 = vpop.f32.mrf.mxu0
        %v6711 = vadd.f32 %v6622, %v6710
        %v6712 = vpop.f32.mrf.mxu0
        %v6713 = vadd.f32 %v6624, %v6712
        %6714 = vmatmul.bf16.gmra.mxu0 %v3120
        %v6715 = vpop.f32.mrf.mxu0
        %v6716 = vadd.f32 %v6627, %v6715
        %v6717 = vpop.f32.mrf.mxu0
        %v6718 = vadd.f32 %v6629, %v6717
        %6719 = vmatmul.bf16.gmra.mxu0 %v3124
        %v6720 = vpop.f32.mrf.mxu0
        %v6721 = vadd.f32 %v6632, %v6720
        %v6722 = vpop.f32.mrf.mxu0
        %v6723 = vadd.f32 %v6634, %v6722
        %6724 = vmatmul.bf16.gmra.mxu0 %v3128
        %v6725 = vpop.f32.mrf.mxu0
        %v6726 = vadd.f32 %v6637, %v6725
        %v6727 = vpop.f32.mrf.mxu0
        %v6728 = vadd.f32 %v6639, %v6727
        %6729 = vmatmul.bf16.gmra.mxu0 %v3132
        %v6730 = vpop.f32.mrf.mxu0
        %v6731 = vadd.f32 %v6642, %v6730
        %v6732 = vpop.f32.mrf.mxu0
        %v6733 = vadd.f32 %v6644, %v6732
        %6734 = vdwg.mxu0
        %6735 = vmatpush.bf16.msra.mxu0 %v4429
        %6736 = vmatpush.bf16.msra.mxu0 %v4421
        %6737 = vmatpush.bf16.msra.mxu0 %v4413
        %6738 = vmatpush.bf16.msra.mxu0 %v4405
        %6739 = vmatpush.bf16.msra.mxu0 %v4397
        %6740 = vmatpush.bf16.msra.mxu0 %v4389
        %6741 = vmatpush.bf16.msra.mxu0 %v4381
        %6742 = vmatpush.bf16.msra.mxu0 %v4373
        %6743 = vmatmul.bf16.gmra.mxu0 %v3073
        %v6744 = vpop.f32.mrf.mxu0
        %v6745 = vadd.f32 %v6656, %v6744
        %v6746 = vpop.f32.mrf.mxu0
        %v6747 = vadd.f32 %v6658, %v6746
        %6748 = vmatmul.bf16.gmra.mxu0 %v3077
        %v6749 = vpop.f32.mrf.mxu0
        %v6750 = vadd.f32 %v6661, %v6749
        %v6751 = vpop.f32.mrf.mxu0
        %v6752 = vadd.f32 %v6663, %v6751
        %6753 = vmatmul.bf16.gmra.mxu0 %v3081
        %v6754 = vpop.f32.mrf.mxu0
        %v6755 = vadd.f32 %v6666, %v6754
        %v6756 = vpop.f32.mrf.mxu0
        %v6757 = vadd.f32 %v6668, %v6756
        %6758 = vmatmul.bf16.gmra.mxu0 %v3085
        %v6759 = vpop.f32.mrf.mxu0
        %v6760 = vadd.f32 %v6671, %v6759
        %v6761 = vpop.f32.mrf.mxu0
        %v6762 = vadd.f32 %v6673, %v6761
        %6763 = vmatmul.bf16.gmra.mxu0 %v3089
        %v6764 = vpop.f32.mrf.mxu0
        %v6765 = vadd.f32 %v6676, %v6764
        %v6766 = vpop.f32.mrf.mxu0
        %v6767 = vadd.f32 %v6678, %v6766
        %6768 = vmatmul.bf16.gmra.mxu0 %v3093
        %v6769 = vpop.f32.mrf.mxu0
        %v6770 = vadd.f32 %v6681, %v6769
        %v6771 = vpop.f32.mrf.mxu0
        %v6772 = vadd.f32 %v6683, %v6771
        %6773 = vmatmul.bf16.gmra.mxu0 %v3097
        %v6774 = vpop.f32.mrf.mxu0
        %v6775 = vadd.f32 %v6686, %v6774
        %v6776 = vpop.f32.mrf.mxu0
        %v6777 = vadd.f32 %v6688, %v6776
        %6778 = vmatmul.bf16.gmra.mxu0 %v3101
        %v6779 = vpop.f32.mrf.mxu0
        %v6780 = vadd.f32 %v6691, %v6779
        %v6781 = vpop.f32.mrf.mxu0
        %v6782 = vadd.f32 %v6693, %v6781
        %6783 = vmatmul.bf16.gmra.mxu0 %v3105
        %v6784 = vpop.f32.mrf.mxu0
        %v6785 = vadd.f32 %v6696, %v6784
        %v6786 = vpop.f32.mrf.mxu0
        %v6787 = vadd.f32 %v6698, %v6786
        %6788 = vmatmul.bf16.gmra.mxu0 %v3109
        %v6789 = vpop.f32.mrf.mxu0
        %v6790 = vadd.f32 %v6701, %v6789
        %v6791 = vpop.f32.mrf.mxu0
        %v6792 = vadd.f32 %v6703, %v6791
        %6793 = vmatmul.bf16.gmra.mxu0 %v3113
        %v6794 = vpop.f32.mrf.mxu0
        %v6795 = vadd.f32 %v6706, %v6794
        %v6796 = vpop.f32.mrf.mxu0
        %v6797 = vadd.f32 %v6708, %v6796
        %6798 = vmatmul.bf16.gmra.mxu0 %v3117
        %v6799 = vpop.f32.mrf.mxu0
        %v6800 = vadd.f32 %v6711, %v6799
        %v6801 = vpop.f32.mrf.mxu0
        %v6802 = vadd.f32 %v6713, %v6801
        %6803 = vmatmul.bf16.gmra.mxu0 %v3121
        %v6804 = vpop.f32.mrf.mxu0
        %v6805 = vadd.f32 %v6716, %v6804
        %v6806 = vpop.f32.mrf.mxu0
        %v6807 = vadd.f32 %v6718, %v6806
        %6808 = vmatmul.bf16.gmra.mxu0 %v3125
        %v6809 = vpop.f32.mrf.mxu0
        %v6810 = vadd.f32 %v6721, %v6809
        %v6811 = vpop.f32.mrf.mxu0
        %v6812 = vadd.f32 %v6723, %v6811
        %6813 = vmatmul.bf16.gmra.mxu0 %v3129
        %v6814 = vpop.f32.mrf.mxu0
        %v6815 = vadd.f32 %v6726, %v6814
        %v6816 = vpop.f32.mrf.mxu0
        %v6817 = vadd.f32 %v6728, %v6816
        %6818 = vmatmul.bf16.gmra.mxu0 %v3133
        %v6819 = vpop.f32.mrf.mxu0
        %v6820 = vadd.f32 %v6731, %v6819
        %v6821 = vpop.f32.mrf.mxu0
        %v6822 = vadd.f32 %v6733, %v6821
        %6823 = vdwg.mxu0
        %6824 = vmatpush.bf16.msra.mxu0 %v4238
        %6825 = vmatpush.bf16.msra.mxu0 %v4230
        %6826 = vmatpush.bf16.msra.mxu0 %v4222
        %6827 = vmatpush.bf16.msra.mxu0 %v4214
        %6828 = vmatpush.bf16.msra.mxu0 %v4206
        %6829 = vmatpush.bf16.msra.mxu0 %v4198
        %6830 = vmatpush.bf16.msra.mxu0 %v4190
        %6831 = vmatpush.bf16.msra.mxu0 %v4182
        %6832 = vmatmul.bf16.gmra.mxu0 %v3070
        %v6833 = vpop.f32.mrf.mxu0
        %v6834 = vadd.f32 %v3398, %v6833
        %v6835 = vpop.f32.mrf.mxu0
        %v6836 = vadd.f32 %v3398, %v6835
        %6837 = vmatmul.bf16.gmra.mxu0 %v3074
        %v6838 = vpop.f32.mrf.mxu0
        %v6839 = vadd.f32 %v3398, %v6838
        %v6840 = vpop.f32.mrf.mxu0
        %v6841 = vadd.f32 %v3398, %v6840
        %6842 = vmatmul.bf16.gmra.mxu0 %v3078
        %v6843 = vpop.f32.mrf.mxu0
        %v6844 = vadd.f32 %v3398, %v6843
        %v6845 = vpop.f32.mrf.mxu0
        %v6846 = vadd.f32 %v3398, %v6845
        %6847 = vmatmul.bf16.gmra.mxu0 %v3082
        %v6848 = vpop.f32.mrf.mxu0
        %v6849 = vadd.f32 %v3398, %v6848
        %v6850 = vpop.f32.mrf.mxu0
        %v6851 = vadd.f32 %v3398, %v6850
        %6852 = vmatmul.bf16.gmra.mxu0 %v3086
        %v6853 = vpop.f32.mrf.mxu0
        %v6854 = vadd.f32 %v3398, %v6853
        %v6855 = vpop.f32.mrf.mxu0
        %v6856 = vadd.f32 %v3398, %v6855
        %6857 = vmatmul.bf16.gmra.mxu0 %v3090
        %v6858 = vpop.f32.mrf.mxu0
        %v6859 = vadd.f32 %v3398, %v6858
        %v6860 = vpop.f32.mrf.mxu0
        %v6861 = vadd.f32 %v3398, %v6860
        %6862 = vmatmul.bf16.gmra.mxu0 %v3094
        %v6863 = vpop.f32.mrf.mxu0
        %v6864 = vadd.f32 %v3398, %v6863
        %v6865 = vpop.f32.mrf.mxu0
        %v6866 = vadd.f32 %v3398, %v6865
        %6867 = vmatmul.bf16.gmra.mxu0 %v3098
        %v6868 = vpop.f32.mrf.mxu0
        %v6869 = vadd.f32 %v3398, %v6868
        %v6870 = vpop.f32.mrf.mxu0
        %v6871 = vadd.f32 %v3398, %v6870
        %6872 = vmatmul.bf16.gmra.mxu0 %v3102
        %v6873 = vpop.f32.mrf.mxu0
        %v6874 = vadd.f32 %v3398, %v6873
        %v6875 = vpop.f32.mrf.mxu0
        %v6876 = vadd.f32 %v3398, %v6875
        %6877 = vmatmul.bf16.gmra.mxu0 %v3106
        %v6878 = vpop.f32.mrf.mxu0
        %v6879 = vadd.f32 %v3398, %v6878
        %v6880 = vpop.f32.mrf.mxu0
        %v6881 = vadd.f32 %v3398, %v6880
        %6882 = vmatmul.bf16.gmra.mxu0 %v3110
        %v6883 = vpop.f32.mrf.mxu0
        %v6884 = vadd.f32 %v3398, %v6883
        %v6885 = vpop.f32.mrf.mxu0
        %v6886 = vadd.f32 %v3398, %v6885
        %6887 = vmatmul.bf16.gmra.mxu0 %v3114
        %v6888 = vpop.f32.mrf.mxu0
        %v6889 = vadd.f32 %v3398, %v6888
        %v6890 = vpop.f32.mrf.mxu0
        %v6891 = vadd.f32 %v3398, %v6890
        %6892 = vmatmul.bf16.gmra.mxu0 %v3118
        %v6893 = vpop.f32.mrf.mxu0
        %v6894 = vadd.f32 %v3398, %v6893
        %v6895 = vpop.f32.mrf.mxu0
        %v6896 = vadd.f32 %v3398, %v6895
        %6897 = vmatmul.bf16.gmra.mxu0 %v3122
        %v6898 = vpop.f32.mrf.mxu0
        %v6899 = vadd.f32 %v3398, %v6898
        %v6900 = vpop.f32.mrf.mxu0
        %v6901 = vadd.f32 %v3398, %v6900
        %6902 = vmatmul.bf16.gmra.mxu0 %v3126
        %v6903 = vpop.f32.mrf.mxu0
        %v6904 = vadd.f32 %v3398, %v6903
        %v6905 = vpop.f32.mrf.mxu0
        %v6906 = vadd.f32 %v3398, %v6905
        %6907 = vmatmul.bf16.gmra.mxu0 %v3130
        %v6908 = vpop.f32.mrf.mxu0
        %v6909 = vadd.f32 %v3398, %v6908
        %v6910 = vpop.f32.mrf.mxu0
        %v6911 = vadd.f32 %v3398, %v6910
        %6912 = vdwg.mxu0
        %6913 = vmatpush.bf16.msra.mxu0 %v4302
        %6914 = vmatpush.bf16.msra.mxu0 %v4294
        %6915 = vmatpush.bf16.msra.mxu0 %v4286
        %6916 = vmatpush.bf16.msra.mxu0 %v4278
        %6917 = vmatpush.bf16.msra.mxu0 %v4270
        %6918 = vmatpush.bf16.msra.mxu0 %v4262
        %6919 = vmatpush.bf16.msra.mxu0 %v4254
        %6920 = vmatpush.bf16.msra.mxu0 %v4246
        %6921 = vmatmul.bf16.gmra.mxu0 %v3071
        %v6922 = vpop.f32.mrf.mxu0
        %v6923 = vadd.f32 %v6834, %v6922
        %v6924 = vpop.f32.mrf.mxu0
        %v6925 = vadd.f32 %v6836, %v6924
        %6926 = vmatmul.bf16.gmra.mxu0 %v3075
        %v6927 = vpop.f32.mrf.mxu0
        %v6928 = vadd.f32 %v6839, %v6927
        %v6929 = vpop.f32.mrf.mxu0
        %v6930 = vadd.f32 %v6841, %v6929
        %6931 = vmatmul.bf16.gmra.mxu0 %v3079
        %v6932 = vpop.f32.mrf.mxu0
        %v6933 = vadd.f32 %v6844, %v6932
        %v6934 = vpop.f32.mrf.mxu0
        %v6935 = vadd.f32 %v6846, %v6934
        %6936 = vmatmul.bf16.gmra.mxu0 %v3083
        %v6937 = vpop.f32.mrf.mxu0
        %v6938 = vadd.f32 %v6849, %v6937
        %v6939 = vpop.f32.mrf.mxu0
        %v6940 = vadd.f32 %v6851, %v6939
        %6941 = vmatmul.bf16.gmra.mxu0 %v3087
        %v6942 = vpop.f32.mrf.mxu0
        %v6943 = vadd.f32 %v6854, %v6942
        %v6944 = vpop.f32.mrf.mxu0
        %v6945 = vadd.f32 %v6856, %v6944
        %6946 = vmatmul.bf16.gmra.mxu0 %v3091
        %v6947 = vpop.f32.mrf.mxu0
        %v6948 = vadd.f32 %v6859, %v6947
        %v6949 = vpop.f32.mrf.mxu0
        %v6950 = vadd.f32 %v6861, %v6949
        %6951 = vmatmul.bf16.gmra.mxu0 %v3095
        %v6952 = vpop.f32.mrf.mxu0
        %v6953 = vadd.f32 %v6864, %v6952
        %v6954 = vpop.f32.mrf.mxu0
        %v6955 = vadd.f32 %v6866, %v6954
        %6956 = vmatmul.bf16.gmra.mxu0 %v3099
        %v6957 = vpop.f32.mrf.mxu0
        %v6958 = vadd.f32 %v6869, %v6957
        %v6959 = vpop.f32.mrf.mxu0
        %v6960 = vadd.f32 %v6871, %v6959
        %6961 = vmatmul.bf16.gmra.mxu0 %v3103
        %v6962 = vpop.f32.mrf.mxu0
        %v6963 = vadd.f32 %v6874, %v6962
        %v6964 = vpop.f32.mrf.mxu0
        %v6965 = vadd.f32 %v6876, %v6964
        %6966 = vmatmul.bf16.gmra.mxu0 %v3107
        %v6967 = vpop.f32.mrf.mxu0
        %v6968 = vadd.f32 %v6879, %v6967
        %v6969 = vpop.f32.mrf.mxu0
        %v6970 = vadd.f32 %v6881, %v6969
        %6971 = vmatmul.bf16.gmra.mxu0 %v3111
        %v6972 = vpop.f32.mrf.mxu0
        %v6973 = vadd.f32 %v6884, %v6972
        %v6974 = vpop.f32.mrf.mxu0
        %v6975 = vadd.f32 %v6886, %v6974
        %6976 = vmatmul.bf16.gmra.mxu0 %v3115
        %v6977 = vpop.f32.mrf.mxu0
        %v6978 = vadd.f32 %v6889, %v6977
        %v6979 = vpop.f32.mrf.mxu0
        %v6980 = vadd.f32 %v6891, %v6979
        %6981 = vmatmul.bf16.gmra.mxu0 %v3119
        %v6982 = vpop.f32.mrf.mxu0
        %v6983 = vadd.f32 %v6894, %v6982
        %v6984 = vpop.f32.mrf.mxu0
        %v6985 = vadd.f32 %v6896, %v6984
        %6986 = vmatmul.bf16.gmra.mxu0 %v3123
        %v6987 = vpop.f32.mrf.mxu0
        %v6988 = vadd.f32 %v6899, %v6987
        %v6989 = vpop.f32.mrf.mxu0
        %v6990 = vadd.f32 %v6901, %v6989
        %6991 = vmatmul.bf16.gmra.mxu0 %v3127
        %v6992 = vpop.f32.mrf.mxu0
        %v6993 = vadd.f32 %v6904, %v6992
        %v6994 = vpop.f32.mrf.mxu0
        %v6995 = vadd.f32 %v6906, %v6994
        %6996 = vmatmul.bf16.gmra.mxu0 %v3131
        %v6997 = vpop.f32.mrf.mxu0
        %v6998 = vadd.f32 %v6909, %v6997
        %v6999 = vpop.f32.mrf.mxu0
        %v7000 = vadd.f32 %v6911, %v6999
        %7001 = vdwg.mxu0
        %7002 = vmatpush.bf16.msra.mxu0 %v4366
        %7003 = vmatpush.bf16.msra.mxu0 %v4358
        %7004 = vmatpush.bf16.msra.mxu0 %v4350
        %7005 = vmatpush.bf16.msra.mxu0 %v4342
        %7006 = vmatpush.bf16.msra.mxu0 %v4334
        %7007 = vmatpush.bf16.msra.mxu0 %v4326
        %7008 = vmatpush.bf16.msra.mxu0 %v4318
        %7009 = vmatpush.bf16.msra.mxu0 %v4310
        %7010 = vmatmul.bf16.gmra.mxu0 %v3072
        %v7011 = vpop.f32.mrf.mxu0
        %v7012 = vadd.f32 %v6923, %v7011
        %v7013 = vpop.f32.mrf.mxu0
        %v7014 = vadd.f32 %v6925, %v7013
        %7015 = vmatmul.bf16.gmra.mxu0 %v3076
        %v7016 = vpop.f32.mrf.mxu0
        %v7017 = vadd.f32 %v6928, %v7016
        %v7018 = vpop.f32.mrf.mxu0
        %v7019 = vadd.f32 %v6930, %v7018
        %7020 = vmatmul.bf16.gmra.mxu0 %v3080
        %v7021 = vpop.f32.mrf.mxu0
        %v7022 = vadd.f32 %v6933, %v7021
        %v7023 = vpop.f32.mrf.mxu0
        %v7024 = vadd.f32 %v6935, %v7023
        %7025 = vmatmul.bf16.gmra.mxu0 %v3084
        %v7026 = vpop.f32.mrf.mxu0
        %v7027 = vadd.f32 %v6938, %v7026
        %v7028 = vpop.f32.mrf.mxu0
        %v7029 = vadd.f32 %v6940, %v7028
        %7030 = vmatmul.bf16.gmra.mxu0 %v3088
        %v7031 = vpop.f32.mrf.mxu0
        %v7032 = vadd.f32 %v6943, %v7031
        %v7033 = vpop.f32.mrf.mxu0
        %v7034 = vadd.f32 %v6945, %v7033
        %7035 = vmatmul.bf16.gmra.mxu0 %v3092
        %v7036 = vpop.f32.mrf.mxu0
        %v7037 = vadd.f32 %v6948, %v7036
        %v7038 = vpop.f32.mrf.mxu0
        %v7039 = vadd.f32 %v6950, %v7038
        %7040 = vmatmul.bf16.gmra.mxu0 %v3096
        %v7041 = vpop.f32.mrf.mxu0
        %v7042 = vadd.f32 %v6953, %v7041
        %v7043 = vpop.f32.mrf.mxu0
        %v7044 = vadd.f32 %v6955, %v7043
        %7045 = vmatmul.bf16.gmra.mxu0 %v3100
        %v7046 = vpop.f32.mrf.mxu0
        %v7047 = vadd.f32 %v6958, %v7046
        %v7048 = vpop.f32.mrf.mxu0
        %v7049 = vadd.f32 %v6960, %v7048
        %7050 = vmatmul.bf16.gmra.mxu0 %v3104
        %v7051 = vpop.f32.mrf.mxu0
        %v7052 = vadd.f32 %v6963, %v7051
        %v7053 = vpop.f32.mrf.mxu0
        %v7054 = vadd.f32 %v6965, %v7053
        %7055 = vmatmul.bf16.gmra.mxu0 %v3108
        %v7056 = vpop.f32.mrf.mxu0
        %v7057 = vadd.f32 %v6968, %v7056
        %v7058 = vpop.f32.mrf.mxu0
        %v7059 = vadd.f32 %v6970, %v7058
        %7060 = vmatmul.bf16.gmra.mxu0 %v3112
        %v7061 = vpop.f32.mrf.mxu0
        %v7062 = vadd.f32 %v6973, %v7061
        %v7063 = vpop.f32.mrf.mxu0
        %v7064 = vadd.f32 %v6975, %v7063
        %7065 = vmatmul.bf16.gmra.mxu0 %v3116
        %v7066 = vpop.f32.mrf.mxu0
        %v7067 = vadd.f32 %v6978, %v7066
        %v7068 = vpop.f32.mrf.mxu0
        %v7069 = vadd.f32 %v6980, %v7068
        %7070 = vmatmul.bf16.gmra.mxu0 %v3120
        %v7071 = vpop.f32.mrf.mxu0
        %v7072 = vadd.f32 %v6983, %v7071
        %v7073 = vpop.f32.mrf.mxu0
        %v7074 = vadd.f32 %v6985, %v7073
        %7075 = vmatmul.bf16.gmra.mxu0 %v3124
        %v7076 = vpop.f32.mrf.mxu0
        %v7077 = vadd.f32 %v6988, %v7076
        %v7078 = vpop.f32.mrf.mxu0
        %v7079 = vadd.f32 %v6990, %v7078
        %7080 = vmatmul.bf16.gmra.mxu0 %v3128
        %v7081 = vpop.f32.mrf.mxu0
        %v7082 = vadd.f32 %v6993, %v7081
        %v7083 = vpop.f32.mrf.mxu0
        %v7084 = vadd.f32 %v6995, %v7083
        %7085 = vmatmul.bf16.gmra.mxu0 %v3132
        %v7086 = vpop.f32.mrf.mxu0
        %v7087 = vadd.f32 %v6998, %v7086
        %v7088 = vpop.f32.mrf.mxu0
        %v7089 = vadd.f32 %v7000, %v7088
        %7090 = vdwg.mxu0
        %7091 = vmatpush.bf16.msra.mxu0 %v4430
        %7092 = vmatpush.bf16.msra.mxu0 %v4422
        %7093 = vmatpush.bf16.msra.mxu0 %v4414
        %7094 = vmatpush.bf16.msra.mxu0 %v4406
        %7095 = vmatpush.bf16.msra.mxu0 %v4398
        %7096 = vmatpush.bf16.msra.mxu0 %v4390
        %7097 = vmatpush.bf16.msra.mxu0 %v4382
        %7098 = vmatpush.bf16.msra.mxu0 %v4374
        %7099 = vmatmul.bf16.gmra.mxu0 %v3073
        %v7100 = vpop.f32.mrf.mxu0
        %v7101 = vadd.f32 %v7012, %v7100
        %v7102 = vpop.f32.mrf.mxu0
        %v7103 = vadd.f32 %v7014, %v7102
        %7104 = vmatmul.bf16.gmra.mxu0 %v3077
        %v7105 = vpop.f32.mrf.mxu0
        %v7106 = vadd.f32 %v7017, %v7105
        %v7107 = vpop.f32.mrf.mxu0
        %v7108 = vadd.f32 %v7019, %v7107
        %7109 = vmatmul.bf16.gmra.mxu0 %v3081
        %v7110 = vpop.f32.mrf.mxu0
        %v7111 = vadd.f32 %v7022, %v7110
        %v7112 = vpop.f32.mrf.mxu0
        %v7113 = vadd.f32 %v7024, %v7112
        %7114 = vmatmul.bf16.gmra.mxu0 %v3085
        %v7115 = vpop.f32.mrf.mxu0
        %v7116 = vadd.f32 %v7027, %v7115
        %v7117 = vpop.f32.mrf.mxu0
        %v7118 = vadd.f32 %v7029, %v7117
        %7119 = vmatmul.bf16.gmra.mxu0 %v3089
        %v7120 = vpop.f32.mrf.mxu0
        %v7121 = vadd.f32 %v7032, %v7120
        %v7122 = vpop.f32.mrf.mxu0
        %v7123 = vadd.f32 %v7034, %v7122
        %7124 = vmatmul.bf16.gmra.mxu0 %v3093
        %v7125 = vpop.f32.mrf.mxu0
        %v7126 = vadd.f32 %v7037, %v7125
        %v7127 = vpop.f32.mrf.mxu0
        %v7128 = vadd.f32 %v7039, %v7127
        %7129 = vmatmul.bf16.gmra.mxu0 %v3097
        %v7130 = vpop.f32.mrf.mxu0
        %v7131 = vadd.f32 %v7042, %v7130
        %v7132 = vpop.f32.mrf.mxu0
        %v7133 = vadd.f32 %v7044, %v7132
        %7134 = vmatmul.bf16.gmra.mxu0 %v3101
        %v7135 = vpop.f32.mrf.mxu0
        %v7136 = vadd.f32 %v7047, %v7135
        %v7137 = vpop.f32.mrf.mxu0
        %v7138 = vadd.f32 %v7049, %v7137
        %7139 = vmatmul.bf16.gmra.mxu0 %v3105
        %v7140 = vpop.f32.mrf.mxu0
        %v7141 = vadd.f32 %v7052, %v7140
        %v7142 = vpop.f32.mrf.mxu0
        %v7143 = vadd.f32 %v7054, %v7142
        %7144 = vmatmul.bf16.gmra.mxu0 %v3109
        %v7145 = vpop.f32.mrf.mxu0
        %v7146 = vadd.f32 %v7057, %v7145
        %v7147 = vpop.f32.mrf.mxu0
        %v7148 = vadd.f32 %v7059, %v7147
        %7149 = vmatmul.bf16.gmra.mxu0 %v3113
        %v7150 = vpop.f32.mrf.mxu0
        %v7151 = vadd.f32 %v7062, %v7150
        %v7152 = vpop.f32.mrf.mxu0
        %v7153 = vadd.f32 %v7064, %v7152
        %7154 = vmatmul.bf16.gmra.mxu0 %v3117
        %v7155 = vpop.f32.mrf.mxu0
        %v7156 = vadd.f32 %v7067, %v7155
        %v7157 = vpop.f32.mrf.mxu0
        %v7158 = vadd.f32 %v7069, %v7157
        %7159 = vmatmul.bf16.gmra.mxu0 %v3121
        %v7160 = vpop.f32.mrf.mxu0
        %v7161 = vadd.f32 %v7072, %v7160
        %v7162 = vpop.f32.mrf.mxu0
        %v7163 = vadd.f32 %v7074, %v7162
        %7164 = vmatmul.bf16.gmra.mxu0 %v3125
        %v7165 = vpop.f32.mrf.mxu0
        %v7166 = vadd.f32 %v7077, %v7165
        %v7167 = vpop.f32.mrf.mxu0
        %v7168 = vadd.f32 %v7079, %v7167
        %7169 = vmatmul.bf16.gmra.mxu0 %v3129
        %v7170 = vpop.f32.mrf.mxu0
        %v7171 = vadd.f32 %v7082, %v7170
        %v7172 = vpop.f32.mrf.mxu0
        %v7173 = vadd.f32 %v7084, %v7172
        %7174 = vmatmul.bf16.gmra.mxu0 %v3133
        %v7175 = vpop.f32.mrf.mxu0
        %v7176 = vadd.f32 %v7087, %v7175
        %v7177 = vpop.f32.mrf.mxu0
        %v7178 = vadd.f32 %v7089, %v7177
        %7179 = vdwg.mxu0
        %7180 = vmatpush.bf16.msra.mxu0 %v4239
        %7181 = vmatpush.bf16.msra.mxu0 %v4231
        %7182 = vmatpush.bf16.msra.mxu0 %v4223
        %7183 = vmatpush.bf16.msra.mxu0 %v4215
        %7184 = vmatpush.bf16.msra.mxu0 %v4207
        %7185 = vmatpush.bf16.msra.mxu0 %v4199
        %7186 = vmatpush.bf16.msra.mxu0 %v4191
        %7187 = vmatpush.bf16.msra.mxu0 %v4183
        %7188 = vmatmul.bf16.gmra.mxu0 %v3070
        %v7189 = vpop.f32.mrf.mxu0
        %v7190 = vadd.f32 %v3399, %v7189
        %v7191 = vpop.f32.mrf.mxu0
        %v7192 = vadd.f32 %v3399, %v7191
        %7193 = vmatmul.bf16.gmra.mxu0 %v3074
        %v7194 = vpop.f32.mrf.mxu0
        %v7195 = vadd.f32 %v3399, %v7194
        %v7196 = vpop.f32.mrf.mxu0
        %v7197 = vadd.f32 %v3399, %v7196
        %7198 = vmatmul.bf16.gmra.mxu0 %v3078
        %v7199 = vpop.f32.mrf.mxu0
        %v7200 = vadd.f32 %v3399, %v7199
        %v7201 = vpop.f32.mrf.mxu0
        %v7202 = vadd.f32 %v3399, %v7201
        %7203 = vmatmul.bf16.gmra.mxu0 %v3082
        %v7204 = vpop.f32.mrf.mxu0
        %v7205 = vadd.f32 %v3399, %v7204
        %v7206 = vpop.f32.mrf.mxu0
        %v7207 = vadd.f32 %v3399, %v7206
        %7208 = vmatmul.bf16.gmra.mxu0 %v3086
        %v7209 = vpop.f32.mrf.mxu0
        %v7210 = vadd.f32 %v3399, %v7209
        %v7211 = vpop.f32.mrf.mxu0
        %v7212 = vadd.f32 %v3399, %v7211
        %7213 = vmatmul.bf16.gmra.mxu0 %v3090
        %v7214 = vpop.f32.mrf.mxu0
        %v7215 = vadd.f32 %v3399, %v7214
        %v7216 = vpop.f32.mrf.mxu0
        %v7217 = vadd.f32 %v3399, %v7216
        %7218 = vmatmul.bf16.gmra.mxu0 %v3094
        %v7219 = vpop.f32.mrf.mxu0
        %v7220 = vadd.f32 %v3399, %v7219
        %v7221 = vpop.f32.mrf.mxu0
        %v7222 = vadd.f32 %v3399, %v7221
        %7223 = vmatmul.bf16.gmra.mxu0 %v3098
        %v7224 = vpop.f32.mrf.mxu0
        %v7225 = vadd.f32 %v3399, %v7224
        %v7226 = vpop.f32.mrf.mxu0
        %v7227 = vadd.f32 %v3399, %v7226
        %7228 = vmatmul.bf16.gmra.mxu0 %v3102
        %v7229 = vpop.f32.mrf.mxu0
        %v7230 = vadd.f32 %v3399, %v7229
        %v7231 = vpop.f32.mrf.mxu0
        %v7232 = vadd.f32 %v3399, %v7231
        %7233 = vmatmul.bf16.gmra.mxu0 %v3106
        %v7234 = vpop.f32.mrf.mxu0
        %v7235 = vadd.f32 %v3399, %v7234
        %v7236 = vpop.f32.mrf.mxu0
        %v7237 = vadd.f32 %v3399, %v7236
        %7238 = vmatmul.bf16.gmra.mxu0 %v3110
        %v7239 = vpop.f32.mrf.mxu0
        %v7240 = vadd.f32 %v3399, %v7239
        %v7241 = vpop.f32.mrf.mxu0
        %v7242 = vadd.f32 %v3399, %v7241
        %7243 = vmatmul.bf16.gmra.mxu0 %v3114
        %v7244 = vpop.f32.mrf.mxu0
        %v7245 = vadd.f32 %v3399, %v7244
        %v7246 = vpop.f32.mrf.mxu0
        %v7247 = vadd.f32 %v3399, %v7246
        %7248 = vmatmul.bf16.gmra.mxu0 %v3118
        %v7249 = vpop.f32.mrf.mxu0
        %v7250 = vadd.f32 %v3399, %v7249
        %v7251 = vpop.f32.mrf.mxu0
        %v7252 = vadd.f32 %v3399, %v7251
        %7253 = vmatmul.bf16.gmra.mxu0 %v3122
        %v7254 = vpop.f32.mrf.mxu0
        %v7255 = vadd.f32 %v3399, %v7254
        %v7256 = vpop.f32.mrf.mxu0
        %v7257 = vadd.f32 %v3399, %v7256
        %7258 = vmatmul.bf16.gmra.mxu0 %v3126
        %v7259 = vpop.f32.mrf.mxu0
        %v7260 = vadd.f32 %v3399, %v7259
        %v7261 = vpop.f32.mrf.mxu0
        %v7262 = vadd.f32 %v3399, %v7261
        %7263 = vmatmul.bf16.gmra.mxu0 %v3130
        %v7264 = vpop.f32.mrf.mxu0
        %v7265 = vadd.f32 %v3399, %v7264
        %v7266 = vpop.f32.mrf.mxu0
        %v7267 = vadd.f32 %v3399, %v7266
        %7268 = vdwg.mxu0
        %7269 = vmatpush.bf16.msra.mxu0 %v4303
        %7270 = vmatpush.bf16.msra.mxu0 %v4295
        %7271 = vmatpush.bf16.msra.mxu0 %v4287
        %7272 = vmatpush.bf16.msra.mxu0 %v4279
        %7273 = vmatpush.bf16.msra.mxu0 %v4271
        %7274 = vmatpush.bf16.msra.mxu0 %v4263
        %7275 = vmatpush.bf16.msra.mxu0 %v4255
        %7276 = vmatpush.bf16.msra.mxu0 %v4247
        %7277 = vmatmul.bf16.gmra.mxu0 %v3071
        %v7278 = vpop.f32.mrf.mxu0
        %v7279 = vadd.f32 %v7190, %v7278
        %v7280 = vpop.f32.mrf.mxu0
        %v7281 = vadd.f32 %v7192, %v7280
        %7282 = vmatmul.bf16.gmra.mxu0 %v3075
        %v7283 = vpop.f32.mrf.mxu0
        %v7284 = vadd.f32 %v7195, %v7283
        %v7285 = vpop.f32.mrf.mxu0
        %v7286 = vadd.f32 %v7197, %v7285
        %7287 = vmatmul.bf16.gmra.mxu0 %v3079
        %v7288 = vpop.f32.mrf.mxu0
        %v7289 = vadd.f32 %v7200, %v7288
        %v7290 = vpop.f32.mrf.mxu0
        %v7291 = vadd.f32 %v7202, %v7290
        %7292 = vmatmul.bf16.gmra.mxu0 %v3083
        %v7293 = vpop.f32.mrf.mxu0
        %v7294 = vadd.f32 %v7205, %v7293
        %v7295 = vpop.f32.mrf.mxu0
        %v7296 = vadd.f32 %v7207, %v7295
        %7297 = vmatmul.bf16.gmra.mxu0 %v3087
        %v7298 = vpop.f32.mrf.mxu0
        %v7299 = vadd.f32 %v7210, %v7298
        %v7300 = vpop.f32.mrf.mxu0
        %v7301 = vadd.f32 %v7212, %v7300
        %7302 = vmatmul.bf16.gmra.mxu0 %v3091
        %v7303 = vpop.f32.mrf.mxu0
        %v7304 = vadd.f32 %v7215, %v7303
        %v7305 = vpop.f32.mrf.mxu0
        %v7306 = vadd.f32 %v7217, %v7305
        %7307 = vmatmul.bf16.gmra.mxu0 %v3095
        %v7308 = vpop.f32.mrf.mxu0
        %v7309 = vadd.f32 %v7220, %v7308
        %v7310 = vpop.f32.mrf.mxu0
        %v7311 = vadd.f32 %v7222, %v7310
        %7312 = vmatmul.bf16.gmra.mxu0 %v3099
        %v7313 = vpop.f32.mrf.mxu0
        %v7314 = vadd.f32 %v7225, %v7313
        %v7315 = vpop.f32.mrf.mxu0
        %v7316 = vadd.f32 %v7227, %v7315
        %7317 = vmatmul.bf16.gmra.mxu0 %v3103
        %v7318 = vpop.f32.mrf.mxu0
        %v7319 = vadd.f32 %v7230, %v7318
        %v7320 = vpop.f32.mrf.mxu0
        %v7321 = vadd.f32 %v7232, %v7320
        %7322 = vmatmul.bf16.gmra.mxu0 %v3107
        %v7323 = vpop.f32.mrf.mxu0
        %v7324 = vadd.f32 %v7235, %v7323
        %v7325 = vpop.f32.mrf.mxu0
        %v7326 = vadd.f32 %v7237, %v7325
        %7327 = vmatmul.bf16.gmra.mxu0 %v3111
        %v7328 = vpop.f32.mrf.mxu0
        %v7329 = vadd.f32 %v7240, %v7328
        %v7330 = vpop.f32.mrf.mxu0
        %v7331 = vadd.f32 %v7242, %v7330
        %7332 = vmatmul.bf16.gmra.mxu0 %v3115
        %v7333 = vpop.f32.mrf.mxu0
        %v7334 = vadd.f32 %v7245, %v7333
        %v7335 = vpop.f32.mrf.mxu0
        %v7336 = vadd.f32 %v7247, %v7335
        %7337 = vmatmul.bf16.gmra.mxu0 %v3119
        %v7338 = vpop.f32.mrf.mxu0
        %v7339 = vadd.f32 %v7250, %v7338
        %v7340 = vpop.f32.mrf.mxu0
        %v7341 = vadd.f32 %v7252, %v7340
        %7342 = vmatmul.bf16.gmra.mxu0 %v3123
        %v7343 = vpop.f32.mrf.mxu0
        %v7344 = vadd.f32 %v7255, %v7343
        %v7345 = vpop.f32.mrf.mxu0
        %v7346 = vadd.f32 %v7257, %v7345
        %7347 = vmatmul.bf16.gmra.mxu0 %v3127
        %v7348 = vpop.f32.mrf.mxu0
        %v7349 = vadd.f32 %v7260, %v7348
        %v7350 = vpop.f32.mrf.mxu0
        %v7351 = vadd.f32 %v7262, %v7350
        %7352 = vmatmul.bf16.gmra.mxu0 %v3131
        %v7353 = vpop.f32.mrf.mxu0
        %v7354 = vadd.f32 %v7265, %v7353
        %v7355 = vpop.f32.mrf.mxu0
        %v7356 = vadd.f32 %v7267, %v7355
        %7357 = vdwg.mxu0
        %7358 = vmatpush.bf16.msra.mxu0 %v4367
        %7359 = vmatpush.bf16.msra.mxu0 %v4359
        %7360 = vmatpush.bf16.msra.mxu0 %v4351
        %7361 = vmatpush.bf16.msra.mxu0 %v4343
        %7362 = vmatpush.bf16.msra.mxu0 %v4335
        %7363 = vmatpush.bf16.msra.mxu0 %v4327
        %7364 = vmatpush.bf16.msra.mxu0 %v4319
        %7365 = vmatpush.bf16.msra.mxu0 %v4311
        %7366 = vmatmul.bf16.gmra.mxu0 %v3072
        %v7367 = vpop.f32.mrf.mxu0
        %v7368 = vadd.f32 %v7279, %v7367
        %v7369 = vpop.f32.mrf.mxu0
        %v7370 = vadd.f32 %v7281, %v7369
        %7371 = vmatmul.bf16.gmra.mxu0 %v3076
        %v7372 = vpop.f32.mrf.mxu0
        %v7373 = vadd.f32 %v7284, %v7372
        %v7374 = vpop.f32.mrf.mxu0
        %v7375 = vadd.f32 %v7286, %v7374
        %7376 = vmatmul.bf16.gmra.mxu0 %v3080
        %v7377 = vpop.f32.mrf.mxu0
        %v7378 = vadd.f32 %v7289, %v7377
        %v7379 = vpop.f32.mrf.mxu0
        %v7380 = vadd.f32 %v7291, %v7379
        %7381 = vmatmul.bf16.gmra.mxu0 %v3084
        %v7382 = vpop.f32.mrf.mxu0
        %v7383 = vadd.f32 %v7294, %v7382
        %v7384 = vpop.f32.mrf.mxu0
        %v7385 = vadd.f32 %v7296, %v7384
        %7386 = vmatmul.bf16.gmra.mxu0 %v3088
        %v7387 = vpop.f32.mrf.mxu0
        %v7388 = vadd.f32 %v7299, %v7387
        %v7389 = vpop.f32.mrf.mxu0
        %v7390 = vadd.f32 %v7301, %v7389
        %7391 = vmatmul.bf16.gmra.mxu0 %v3092
        %v7392 = vpop.f32.mrf.mxu0
        %v7393 = vadd.f32 %v7304, %v7392
        %v7394 = vpop.f32.mrf.mxu0
        %v7395 = vadd.f32 %v7306, %v7394
        %7396 = vmatmul.bf16.gmra.mxu0 %v3096
        %v7397 = vpop.f32.mrf.mxu0
        %v7398 = vadd.f32 %v7309, %v7397
        %v7399 = vpop.f32.mrf.mxu0
        %v7400 = vadd.f32 %v7311, %v7399
        %7401 = vmatmul.bf16.gmra.mxu0 %v3100
        %v7402 = vpop.f32.mrf.mxu0
        %v7403 = vadd.f32 %v7314, %v7402
        %v7404 = vpop.f32.mrf.mxu0
        %v7405 = vadd.f32 %v7316, %v7404
        %7406 = vmatmul.bf16.gmra.mxu0 %v3104
        %v7407 = vpop.f32.mrf.mxu0
        %v7408 = vadd.f32 %v7319, %v7407
        %v7409 = vpop.f32.mrf.mxu0
        %v7410 = vadd.f32 %v7321, %v7409
        %7411 = vmatmul.bf16.gmra.mxu0 %v3108
        %v7412 = vpop.f32.mrf.mxu0
        %v7413 = vadd.f32 %v7324, %v7412
        %v7414 = vpop.f32.mrf.mxu0
        %v7415 = vadd.f32 %v7326, %v7414
        %7416 = vmatmul.bf16.gmra.mxu0 %v3112
        %v7417 = vpop.f32.mrf.mxu0
        %v7418 = vadd.f32 %v7329, %v7417
        %v7419 = vpop.f32.mrf.mxu0
        %v7420 = vadd.f32 %v7331, %v7419
        %7421 = vmatmul.bf16.gmra.mxu0 %v3116
        %v7422 = vpop.f32.mrf.mxu0
        %v7423 = vadd.f32 %v7334, %v7422
        %v7424 = vpop.f32.mrf.mxu0
        %v7425 = vadd.f32 %v7336, %v7424
        %7426 = vmatmul.bf16.gmra.mxu0 %v3120
        %v7427 = vpop.f32.mrf.mxu0
        %v7428 = vadd.f32 %v7339, %v7427
        %v7429 = vpop.f32.mrf.mxu0
        %v7430 = vadd.f32 %v7341, %v7429
        %7431 = vmatmul.bf16.gmra.mxu0 %v3124
        %v7432 = vpop.f32.mrf.mxu0
        %v7433 = vadd.f32 %v7344, %v7432
        %v7434 = vpop.f32.mrf.mxu0
        %v7435 = vadd.f32 %v7346, %v7434
        %7436 = vmatmul.bf16.gmra.mxu0 %v3128
        %v7437 = vpop.f32.mrf.mxu0
        %v7438 = vadd.f32 %v7349, %v7437
        %v7439 = vpop.f32.mrf.mxu0
        %v7440 = vadd.f32 %v7351, %v7439
        %7441 = vmatmul.bf16.gmra.mxu0 %v3132
        %v7442 = vpop.f32.mrf.mxu0
        %v7443 = vadd.f32 %v7354, %v7442
        %v7444 = vpop.f32.mrf.mxu0
        %v7445 = vadd.f32 %v7356, %v7444
        %7446 = vdwg.mxu0
        %7447 = vmatpush.bf16.msra.mxu0 %v4431
        %7448 = vmatpush.bf16.msra.mxu0 %v4423
        %7449 = vmatpush.bf16.msra.mxu0 %v4415
        %7450 = vmatpush.bf16.msra.mxu0 %v4407
        %7451 = vmatpush.bf16.msra.mxu0 %v4399
        %7452 = vmatpush.bf16.msra.mxu0 %v4391
        %7453 = vmatpush.bf16.msra.mxu0 %v4383
        %7454 = vmatpush.bf16.msra.mxu0 %v4375
        %7455 = vmatmul.bf16.gmra.mxu0 %v3073
        %v7456 = vpop.f32.mrf.mxu0
        %v7457 = vadd.f32 %v7368, %v7456
        %v7458 = vpop.f32.mrf.mxu0
        %v7459 = vadd.f32 %v7370, %v7458
        %7460 = vmatmul.bf16.gmra.mxu0 %v3077
        %v7461 = vpop.f32.mrf.mxu0
        %v7462 = vadd.f32 %v7373, %v7461
        %v7463 = vpop.f32.mrf.mxu0
        %v7464 = vadd.f32 %v7375, %v7463
        %7465 = vmatmul.bf16.gmra.mxu0 %v3081
        %v7466 = vpop.f32.mrf.mxu0
        %v7467 = vadd.f32 %v7378, %v7466
        %v7468 = vpop.f32.mrf.mxu0
        %v7469 = vadd.f32 %v7380, %v7468
        %7470 = vmatmul.bf16.gmra.mxu0 %v3085
        %v7471 = vpop.f32.mrf.mxu0
        %v7472 = vadd.f32 %v7383, %v7471
        %v7473 = vpop.f32.mrf.mxu0
        %v7474 = vadd.f32 %v7385, %v7473
        %7475 = vmatmul.bf16.gmra.mxu0 %v3089
        %v7476 = vpop.f32.mrf.mxu0
        %v7477 = vadd.f32 %v7388, %v7476
        %v7478 = vpop.f32.mrf.mxu0
        %v7479 = vadd.f32 %v7390, %v7478
        %7480 = vmatmul.bf16.gmra.mxu0 %v3093
        %v7481 = vpop.f32.mrf.mxu0
        %v7482 = vadd.f32 %v7393, %v7481
        %v7483 = vpop.f32.mrf.mxu0
        %v7484 = vadd.f32 %v7395, %v7483
        %7485 = vmatmul.bf16.gmra.mxu0 %v3097
        %v7486 = vpop.f32.mrf.mxu0
        %v7487 = vadd.f32 %v7398, %v7486
        %v7488 = vpop.f32.mrf.mxu0
        %v7489 = vadd.f32 %v7400, %v7488
        %7490 = vmatmul.bf16.gmra.mxu0 %v3101
        %v7491 = vpop.f32.mrf.mxu0
        %v7492 = vadd.f32 %v7403, %v7491
        %v7493 = vpop.f32.mrf.mxu0
        %v7494 = vadd.f32 %v7405, %v7493
        %7495 = vmatmul.bf16.gmra.mxu0 %v3105
        %v7496 = vpop.f32.mrf.mxu0
        %v7497 = vadd.f32 %v7408, %v7496
        %v7498 = vpop.f32.mrf.mxu0
        %v7499 = vadd.f32 %v7410, %v7498
        %7500 = vmatmul.bf16.gmra.mxu0 %v3109
        %v7501 = vpop.f32.mrf.mxu0
        %v7502 = vadd.f32 %v7413, %v7501
        %v7503 = vpop.f32.mrf.mxu0
        %v7504 = vadd.f32 %v7415, %v7503
        %7505 = vmatmul.bf16.gmra.mxu0 %v3113
        %v7506 = vpop.f32.mrf.mxu0
        %v7507 = vadd.f32 %v7418, %v7506
        %v7508 = vpop.f32.mrf.mxu0
        %v7509 = vadd.f32 %v7420, %v7508
        %7510 = vmatmul.bf16.gmra.mxu0 %v3117
        %v7511 = vpop.f32.mrf.mxu0
        %v7512 = vadd.f32 %v7423, %v7511
        %v7513 = vpop.f32.mrf.mxu0
        %v7514 = vadd.f32 %v7425, %v7513
        %7515 = vmatmul.bf16.gmra.mxu0 %v3121
        %v7516 = vpop.f32.mrf.mxu0
        %v7517 = vadd.f32 %v7428, %v7516
        %v7518 = vpop.f32.mrf.mxu0
        %v7519 = vadd.f32 %v7430, %v7518
        %7520 = vmatmul.bf16.gmra.mxu0 %v3125
        %v7521 = vpop.f32.mrf.mxu0
        %v7522 = vadd.f32 %v7433, %v7521
        %v7523 = vpop.f32.mrf.mxu0
        %v7524 = vadd.f32 %v7435, %v7523
        %7525 = vmatmul.bf16.gmra.mxu0 %v3129
        %v7526 = vpop.f32.mrf.mxu0
        %v7527 = vadd.f32 %v7438, %v7526
        %v7528 = vpop.f32.mrf.mxu0
        %v7529 = vadd.f32 %v7440, %v7528
        %7530 = vmatmul.bf16.gmra.mxu0 %v3133
        %v7531 = vpop.f32.mrf.mxu0
        %v7532 = vadd.f32 %v7443, %v7531
        %v7533 = vpop.f32.mrf.mxu0
        %v7534 = vadd.f32 %v7445, %v7533
        %7535 = vdwg.mxu0
        %v7536 = vmax.f32 %v4965, 0.0
        %v7537 = vmax.f32 %v5321, 0.0
        %v7538 = vmax.f32 %v5677, 0.0
        %v7539 = vmax.f32 %v6033, 0.0
        %v7540 = vmax.f32 %v6389, 0.0
        %v7541 = vmax.f32 %v6745, 0.0
        %v7542 = vmax.f32 %v7101, 0.0
        %v7543 = vmax.f32 %v7457, 0.0
        %v7544 = vmax.f32 %v4967, 0.0
        %v7545 = vmax.f32 %v5323, 0.0
        %v7546 = vmax.f32 %v5679, 0.0
        %v7547 = vmax.f32 %v6035, 0.0
        %v7548 = vmax.f32 %v6391, 0.0
        %v7549 = vmax.f32 %v6747, 0.0
        %v7550 = vmax.f32 %v7103, 0.0
        %v7551 = vmax.f32 %v7459, 0.0
        %v7552 = vmax.f32 %v4970, 0.0
        %v7553 = vmax.f32 %v5326, 0.0
        %v7554 = vmax.f32 %v5682, 0.0
        %v7555 = vmax.f32 %v6038, 0.0
        %v7556 = vmax.f32 %v6394, 0.0
        %v7557 = vmax.f32 %v6750, 0.0
        %v7558 = vmax.f32 %v7106, 0.0
        %v7559 = vmax.f32 %v7462, 0.0
        %v7560 = vmax.f32 %v4972, 0.0
        %v7561 = vmax.f32 %v5328, 0.0
        %v7562 = vmax.f32 %v5684, 0.0
        %v7563 = vmax.f32 %v6040, 0.0
        %v7564 = vmax.f32 %v6396, 0.0
        %v7565 = vmax.f32 %v6752, 0.0
        %v7566 = vmax.f32 %v7108, 0.0
        %v7567 = vmax.f32 %v7464, 0.0
        %v7568 = vmax.f32 %v4975, 0.0
        %v7569 = vmax.f32 %v5331, 0.0
        %v7570 = vmax.f32 %v5687, 0.0
        %v7571 = vmax.f32 %v6043, 0.0
        %v7572 = vmax.f32 %v6399, 0.0
        %v7573 = vmax.f32 %v6755, 0.0
        %v7574 = vmax.f32 %v7111, 0.0
        %v7575 = vmax.f32 %v7467, 0.0
        %v7576 = vmax.f32 %v4977, 0.0
        %v7577 = vmax.f32 %v5333, 0.0
        %v7578 = vmax.f32 %v5689, 0.0
        %v7579 = vmax.f32 %v6045, 0.0
        %v7580 = vmax.f32 %v6401, 0.0
        %v7581 = vmax.f32 %v6757, 0.0
        %v7582 = vmax.f32 %v7113, 0.0
        %v7583 = vmax.f32 %v7469, 0.0
        %v7584 = vmax.f32 %v4980, 0.0
        %v7585 = vmax.f32 %v5336, 0.0
        %v7586 = vmax.f32 %v5692, 0.0
        %v7587 = vmax.f32 %v6048, 0.0
        %v7588 = vmax.f32 %v6404, 0.0
        %v7589 = vmax.f32 %v6760, 0.0
        %v7590 = vmax.f32 %v7116, 0.0
        %v7591 = vmax.f32 %v7472, 0.0
        %v7592 = vmax.f32 %v4982, 0.0
        %v7593 = vmax.f32 %v5338, 0.0
        %v7594 = vmax.f32 %v5694, 0.0
        %v7595 = vmax.f32 %v6050, 0.0
        %v7596 = vmax.f32 %v6406, 0.0
        %v7597 = vmax.f32 %v6762, 0.0
        %v7598 = vmax.f32 %v7118, 0.0
        %v7599 = vmax.f32 %v7474, 0.0
        %v7600 = vmax.f32 %v4985, 0.0
        %v7601 = vmax.f32 %v5341, 0.0
        %v7602 = vmax.f32 %v5697, 0.0
        %v7603 = vmax.f32 %v6053, 0.0
        %v7604 = vmax.f32 %v6409, 0.0
        %v7605 = vmax.f32 %v6765, 0.0
        %v7606 = vmax.f32 %v7121, 0.0
        %v7607 = vmax.f32 %v7477, 0.0
        %v7608 = vmax.f32 %v4987, 0.0
        %v7609 = vmax.f32 %v5343, 0.0
        %v7610 = vmax.f32 %v5699, 0.0
        %v7611 = vmax.f32 %v6055, 0.0
        %v7612 = vmax.f32 %v6411, 0.0
        %v7613 = vmax.f32 %v6767, 0.0
        %v7614 = vmax.f32 %v7123, 0.0
        %v7615 = vmax.f32 %v7479, 0.0
        %v7616 = vmax.f32 %v4990, 0.0
        %v7617 = vmax.f32 %v5346, 0.0
        %v7618 = vmax.f32 %v5702, 0.0
        %v7619 = vmax.f32 %v6058, 0.0
        %v7620 = vmax.f32 %v6414, 0.0
        %v7621 = vmax.f32 %v6770, 0.0
        %v7622 = vmax.f32 %v7126, 0.0
        %v7623 = vmax.f32 %v7482, 0.0
        %v7624 = vmax.f32 %v4992, 0.0
        %v7625 = vmax.f32 %v5348, 0.0
        %v7626 = vmax.f32 %v5704, 0.0
        %v7627 = vmax.f32 %v6060, 0.0
        %v7628 = vmax.f32 %v6416, 0.0
        %v7629 = vmax.f32 %v6772, 0.0
        %v7630 = vmax.f32 %v7128, 0.0
        %v7631 = vmax.f32 %v7484, 0.0
        %v7632 = vmax.f32 %v4995, 0.0
        %v7633 = vmax.f32 %v5351, 0.0
        %v7634 = vmax.f32 %v5707, 0.0
        %v7635 = vmax.f32 %v6063, 0.0
        %v7636 = vmax.f32 %v6419, 0.0
        %v7637 = vmax.f32 %v6775, 0.0
        %v7638 = vmax.f32 %v7131, 0.0
        %v7639 = vmax.f32 %v7487, 0.0
        %v7640 = vmax.f32 %v4997, 0.0
        %v7641 = vmax.f32 %v5353, 0.0
        %v7642 = vmax.f32 %v5709, 0.0
        %v7643 = vmax.f32 %v6065, 0.0
        %v7644 = vmax.f32 %v6421, 0.0
        %v7645 = vmax.f32 %v6777, 0.0
        %v7646 = vmax.f32 %v7133, 0.0
        %v7647 = vmax.f32 %v7489, 0.0
        %v7648 = vmax.f32 %v5000, 0.0
        %v7649 = vmax.f32 %v5356, 0.0
        %v7650 = vmax.f32 %v5712, 0.0
        %v7651 = vmax.f32 %v6068, 0.0
        %v7652 = vmax.f32 %v6424, 0.0
        %v7653 = vmax.f32 %v6780, 0.0
        %v7654 = vmax.f32 %v7136, 0.0
        %v7655 = vmax.f32 %v7492, 0.0
        %v7656 = vmax.f32 %v5002, 0.0
        %v7657 = vmax.f32 %v5358, 0.0
        %v7658 = vmax.f32 %v5714, 0.0
        %v7659 = vmax.f32 %v6070, 0.0
        %v7660 = vmax.f32 %v6426, 0.0
        %v7661 = vmax.f32 %v6782, 0.0
        %v7662 = vmax.f32 %v7138, 0.0
        %v7663 = vmax.f32 %v7494, 0.0
        %v7664 = vmax.f32 %v5005, 0.0
        %v7665 = vmax.f32 %v5361, 0.0
        %v7666 = vmax.f32 %v5717, 0.0
        %v7667 = vmax.f32 %v6073, 0.0
        %v7668 = vmax.f32 %v6429, 0.0
        %v7669 = vmax.f32 %v6785, 0.0
        %v7670 = vmax.f32 %v7141, 0.0
        %v7671 = vmax.f32 %v7497, 0.0
        %v7672 = vmax.f32 %v5007, 0.0
        %v7673 = vmax.f32 %v5363, 0.0
        %v7674 = vmax.f32 %v5719, 0.0
        %v7675 = vmax.f32 %v6075, 0.0
        %v7676 = vmax.f32 %v6431, 0.0
        %v7677 = vmax.f32 %v6787, 0.0
        %v7678 = vmax.f32 %v7143, 0.0
        %v7679 = vmax.f32 %v7499, 0.0
        %v7680 = vmax.f32 %v5010, 0.0
        %v7681 = vmax.f32 %v5366, 0.0
        %v7682 = vmax.f32 %v5722, 0.0
        %v7683 = vmax.f32 %v6078, 0.0
        %v7684 = vmax.f32 %v6434, 0.0
        %v7685 = vmax.f32 %v6790, 0.0
        %v7686 = vmax.f32 %v7146, 0.0
        %v7687 = vmax.f32 %v7502, 0.0
        %v7688 = vmax.f32 %v5012, 0.0
        %v7689 = vmax.f32 %v5368, 0.0
        %v7690 = vmax.f32 %v5724, 0.0
        %v7691 = vmax.f32 %v6080, 0.0
        %v7692 = vmax.f32 %v6436, 0.0
        %v7693 = vmax.f32 %v6792, 0.0
        %v7694 = vmax.f32 %v7148, 0.0
        %v7695 = vmax.f32 %v7504, 0.0
        %v7696 = vmax.f32 %v5015, 0.0
        %v7697 = vmax.f32 %v5371, 0.0
        %v7698 = vmax.f32 %v5727, 0.0
        %v7699 = vmax.f32 %v6083, 0.0
        %v7700 = vmax.f32 %v6439, 0.0
        %v7701 = vmax.f32 %v6795, 0.0
        %v7702 = vmax.f32 %v7151, 0.0
        %v7703 = vmax.f32 %v7507, 0.0
        %v7704 = vmax.f32 %v5017, 0.0
        %v7705 = vmax.f32 %v5373, 0.0
        %v7706 = vmax.f32 %v5729, 0.0
        %v7707 = vmax.f32 %v6085, 0.0
        %v7708 = vmax.f32 %v6441, 0.0
        %v7709 = vmax.f32 %v6797, 0.0
        %v7710 = vmax.f32 %v7153, 0.0
        %v7711 = vmax.f32 %v7509, 0.0
        %v7712 = vmax.f32 %v5020, 0.0
        %v7713 = vmax.f32 %v5376, 0.0
        %v7714 = vmax.f32 %v5732, 0.0
        %v7715 = vmax.f32 %v6088, 0.0
        %v7716 = vmax.f32 %v6444, 0.0
        %v7717 = vmax.f32 %v6800, 0.0
        %v7718 = vmax.f32 %v7156, 0.0
        %v7719 = vmax.f32 %v7512, 0.0
        %v7720 = vmax.f32 %v5022, 0.0
        %v7721 = vmax.f32 %v5378, 0.0
        %v7722 = vmax.f32 %v5734, 0.0
        %v7723 = vmax.f32 %v6090, 0.0
        %v7724 = vmax.f32 %v6446, 0.0
        %v7725 = vmax.f32 %v6802, 0.0
        %v7726 = vmax.f32 %v7158, 0.0
        %v7727 = vmax.f32 %v7514, 0.0
        %v7728 = vmax.f32 %v5025, 0.0
        %v7729 = vmax.f32 %v5381, 0.0
        %v7730 = vmax.f32 %v5737, 0.0
        %v7731 = vmax.f32 %v6093, 0.0
        %v7732 = vmax.f32 %v6449, 0.0
        %v7733 = vmax.f32 %v6805, 0.0
        %v7734 = vmax.f32 %v7161, 0.0
        %v7735 = vmax.f32 %v7517, 0.0
        %v7736 = vmax.f32 %v5027, 0.0
        %v7737 = vmax.f32 %v5383, 0.0
        %v7738 = vmax.f32 %v5739, 0.0
        %v7739 = vmax.f32 %v6095, 0.0
        %v7740 = vmax.f32 %v6451, 0.0
        %v7741 = vmax.f32 %v6807, 0.0
        %v7742 = vmax.f32 %v7163, 0.0
        %v7743 = vmax.f32 %v7519, 0.0
        %v7744 = vmax.f32 %v5030, 0.0
        %v7745 = vmax.f32 %v5386, 0.0
        %v7746 = vmax.f32 %v5742, 0.0
        %v7747 = vmax.f32 %v6098, 0.0
        %v7748 = vmax.f32 %v6454, 0.0
        %v7749 = vmax.f32 %v6810, 0.0
        %v7750 = vmax.f32 %v7166, 0.0
        %v7751 = vmax.f32 %v7522, 0.0
        %v7752 = vmax.f32 %v5032, 0.0
        %v7753 = vmax.f32 %v5388, 0.0
        %v7754 = vmax.f32 %v5744, 0.0
        %v7755 = vmax.f32 %v6100, 0.0
        %v7756 = vmax.f32 %v6456, 0.0
        %v7757 = vmax.f32 %v6812, 0.0
        %v7758 = vmax.f32 %v7168, 0.0
        %v7759 = vmax.f32 %v7524, 0.0
        %v7760 = vmax.f32 %v5035, 0.0
        %v7761 = vmax.f32 %v5391, 0.0
        %v7762 = vmax.f32 %v5747, 0.0
        %v7763 = vmax.f32 %v6103, 0.0
        %v7764 = vmax.f32 %v6459, 0.0
        %v7765 = vmax.f32 %v6815, 0.0
        %v7766 = vmax.f32 %v7171, 0.0
        %v7767 = vmax.f32 %v7527, 0.0
        %v7768 = vmax.f32 %v5037, 0.0
        %v7769 = vmax.f32 %v5393, 0.0
        %v7770 = vmax.f32 %v5749, 0.0
        %v7771 = vmax.f32 %v6105, 0.0
        %v7772 = vmax.f32 %v6461, 0.0
        %v7773 = vmax.f32 %v6817, 0.0
        %v7774 = vmax.f32 %v7173, 0.0
        %v7775 = vmax.f32 %v7529, 0.0
        %v7776 = vmax.f32 %v5040, 0.0
        %v7777 = vmax.f32 %v5396, 0.0
        %v7778 = vmax.f32 %v5752, 0.0
        %v7779 = vmax.f32 %v6108, 0.0
        %v7780 = vmax.f32 %v6464, 0.0
        %v7781 = vmax.f32 %v6820, 0.0
        %v7782 = vmax.f32 %v7176, 0.0
        %v7783 = vmax.f32 %v7532, 0.0
        %v7784 = vmax.f32 %v5042, 0.0
        %v7785 = vmax.f32 %v5398, 0.0
        %v7786 = vmax.f32 %v5754, 0.0
        %v7787 = vmax.f32 %v6110, 0.0
        %v7788 = vmax.f32 %v6466, 0.0
        %v7789 = vmax.f32 %v6822, 0.0
        %v7790 = vmax.f32 %v7178, 0.0
        %v7791 = vmax.f32 %v7534, 0.0
        %v7792 = vld [vmem:[%s439] sm:$0xff]
        %v7793 = vadd.f32 %v7536, %v7544
        %v7794 = vadd.f32 %v7793, %v7552
        %v7795 = vadd.f32 %v7794, %v7560
        %v7796 = vadd.f32 %v7795, %v7568
        %v7797 = vadd.f32 %v7796, %v7576
        %v7798 = vadd.f32 %v7797, %v7584
        %v7799 = vadd.f32 %v7798, %v7592
        %v7800 = vadd.f32 %v7799, %v7600
        %v7801 = vadd.f32 %v7800, %v7608
        %v7802 = vadd.f32 %v7801, %v7616
        %v7803 = vadd.f32 %v7802, %v7624
        %v7804 = vadd.f32 %v7803, %v7632
        %v7805 = vadd.f32 %v7804, %v7640
        %v7806 = vadd.f32 %v7805, %v7648
        %v7807 = vadd.f32 %v7806, %v7656
        %v7808 = vadd.f32 %v7807, %v7664
        %v7809 = vadd.f32 %v7808, %v7672
        %v7810 = vadd.f32 %v7809, %v7680
        %v7811 = vadd.f32 %v7810, %v7688
        %v7812 = vadd.f32 %v7811, %v7696
        %v7813 = vadd.f32 %v7812, %v7704
        %v7814 = vadd.f32 %v7813, %v7712
        %v7815 = vadd.f32 %v7814, %v7720
        %v7816 = vadd.f32 %v7815, %v7728
        %v7817 = vadd.f32 %v7816, %v7736
        %v7818 = vadd.f32 %v7817, %v7744
        %v7819 = vadd.f32 %v7818, %v7752
        %v7820 = vadd.f32 %v7819, %v7760
        %v7821 = vadd.f32 %v7820, %v7768
        %v7822 = vadd.f32 %v7821, %v7776
        %v7823 = vadd.f32 %v7822, %v7784
        %v7824 = vrot.slane %v7823, 4
        %v7825 = vadd.f32 %v7823, %v7824
        %v7826 = vrot.slane %v7825, 2
        %v7827 = vadd.f32 %v7825, %v7826
        %v7828 = vrot.slane %v7827, 1
        %v7829 = vadd.f32 %v7827, %v7828
        %v7830 = vadd.f32 %v7537, %v7545
        %v7831 = vadd.f32 %v7830, %v7553
        %v7832 = vadd.f32 %v7831, %v7561
        %v7833 = vadd.f32 %v7832, %v7569
        %v7834 = vadd.f32 %v7833, %v7577
        %v7835 = vadd.f32 %v7834, %v7585
        %v7836 = vadd.f32 %v7835, %v7593
        %v7837 = vadd.f32 %v7836, %v7601
        %v7838 = vadd.f32 %v7837, %v7609
        %v7839 = vadd.f32 %v7838, %v7617
        %v7840 = vadd.f32 %v7839, %v7625
        %v7841 = vadd.f32 %v7840, %v7633
        %v7842 = vadd.f32 %v7841, %v7641
        %v7843 = vadd.f32 %v7842, %v7649
        %v7844 = vadd.f32 %v7843, %v7657
        %v7845 = vadd.f32 %v7844, %v7665
        %v7846 = vadd.f32 %v7845, %v7673
        %v7847 = vadd.f32 %v7846, %v7681
        %v7848 = vadd.f32 %v7847, %v7689
        %v7849 = vadd.f32 %v7848, %v7697
        %v7850 = vadd.f32 %v7849, %v7705
        %v7851 = vadd.f32 %v7850, %v7713
        %v7852 = vadd.f32 %v7851, %v7721
        %v7853 = vadd.f32 %v7852, %v7729
        %v7854 = vadd.f32 %v7853, %v7737
        %v7855 = vadd.f32 %v7854, %v7745
        %v7856 = vadd.f32 %v7855, %v7753
        %v7857 = vadd.f32 %v7856, %v7761
        %v7858 = vadd.f32 %v7857, %v7769
        %v7859 = vadd.f32 %v7858, %v7777
        %v7860 = vadd.f32 %v7859, %v7785
        %v7861 = vrot.slane %v7860, 4
        %v7862 = vadd.f32 %v7860, %v7861
        %v7863 = vrot.slane %v7862, 2
        %v7864 = vadd.f32 %v7862, %v7863
        %v7865 = vrot.slane %v7864, 1
        %v7866 = vadd.f32 %v7864, %v7865
        %v7867 = vadd.f32 %v7538, %v7546
        %v7868 = vadd.f32 %v7867, %v7554
        %v7869 = vadd.f32 %v7868, %v7562
        %v7870 = vadd.f32 %v7869, %v7570
        %v7871 = vadd.f32 %v7870, %v7578
        %v7872 = vadd.f32 %v7871, %v7586
        %v7873 = vadd.f32 %v7872, %v7594
        %v7874 = vadd.f32 %v7873, %v7602
        %v7875 = vadd.f32 %v7874, %v7610
        %v7876 = vadd.f32 %v7875, %v7618
        %v7877 = vadd.f32 %v7876, %v7626
        %v7878 = vadd.f32 %v7877, %v7634
        %v7879 = vadd.f32 %v7878, %v7642
        %v7880 = vadd.f32 %v7879, %v7650
        %v7881 = vadd.f32 %v7880, %v7658
        %v7882 = vadd.f32 %v7881, %v7666
        %v7883 = vadd.f32 %v7882, %v7674
        %v7884 = vadd.f32 %v7883, %v7682
        %v7885 = vadd.f32 %v7884, %v7690
        %v7886 = vadd.f32 %v7885, %v7698
        %v7887 = vadd.f32 %v7886, %v7706
        %v7888 = vadd.f32 %v7887, %v7714
        %v7889 = vadd.f32 %v7888, %v7722
        %v7890 = vadd.f32 %v7889, %v7730
        %v7891 = vadd.f32 %v7890, %v7738
        %v7892 = vadd.f32 %v7891, %v7746
        %v7893 = vadd.f32 %v7892, %v7754
        %v7894 = vadd.f32 %v7893, %v7762
        %v7895 = vadd.f32 %v7894, %v7770
        %v7896 = vadd.f32 %v7895, %v7778
        %v7897 = vadd.f32 %v7896, %v7786
        %v7898 = vrot.slane %v7897, 4
        %v7899 = vadd.f32 %v7897, %v7898
        %v7900 = vrot.slane %v7899, 2
        %v7901 = vadd.f32 %v7899, %v7900
        %v7902 = vrot.slane %v7901, 1
        %v7903 = vadd.f32 %v7901, %v7902
        %v7904 = vadd.f32 %v7539, %v7547
        %v7905 = vadd.f32 %v7904, %v7555
        %v7906 = vadd.f32 %v7905, %v7563
        %v7907 = vadd.f32 %v7906, %v7571
        %v7908 = vadd.f32 %v7907, %v7579
        %v7909 = vadd.f32 %v7908, %v7587
        %v7910 = vadd.f32 %v7909, %v7595
        %v7911 = vadd.f32 %v7910, %v7603
        %v7912 = vadd.f32 %v7911, %v7611
        %v7913 = vadd.f32 %v7912, %v7619
        %v7914 = vadd.f32 %v7913, %v7627
        %v7915 = vadd.f32 %v7914, %v7635
        %v7916 = vadd.f32 %v7915, %v7643
        %v7917 = vadd.f32 %v7916, %v7651
        %v7918 = vadd.f32 %v7917, %v7659
        %v7919 = vadd.f32 %v7918, %v7667
        %v7920 = vadd.f32 %v7919, %v7675
        %v7921 = vadd.f32 %v7920, %v7683
        %v7922 = vadd.f32 %v7921, %v7691
        %v7923 = vadd.f32 %v7922, %v7699
        %v7924 = vadd.f32 %v7923, %v7707
        %v7925 = vadd.f32 %v7924, %v7715
        %v7926 = vadd.f32 %v7925, %v7723
        %v7927 = vadd.f32 %v7926, %v7731
        %v7928 = vadd.f32 %v7927, %v7739
        %v7929 = vadd.f32 %v7928, %v7747
        %v7930 = vadd.f32 %v7929, %v7755
        %v7931 = vadd.f32 %v7930, %v7763
        %v7932 = vadd.f32 %v7931, %v7771
        %v7933 = vadd.f32 %v7932, %v7779
        %v7934 = vadd.f32 %v7933, %v7787
        %v7935 = vrot.slane %v7934, 4
        %v7936 = vadd.f32 %v7934, %v7935
        %v7937 = vrot.slane %v7936, 2
        %v7938 = vadd.f32 %v7936, %v7937
        %v7939 = vrot.slane %v7938, 1
        %v7940 = vadd.f32 %v7938, %v7939
        %v7941 = vadd.f32 %v7540, %v7548
        %v7942 = vadd.f32 %v7941, %v7556
        %v7943 = vadd.f32 %v7942, %v7564
        %v7944 = vadd.f32 %v7943, %v7572
        %v7945 = vadd.f32 %v7944, %v7580
        %v7946 = vadd.f32 %v7945, %v7588
        %v7947 = vadd.f32 %v7946, %v7596
        %v7948 = vadd.f32 %v7947, %v7604
        %v7949 = vadd.f32 %v7948, %v7612
        %v7950 = vadd.f32 %v7949, %v7620
        %v7951 = vadd.f32 %v7950, %v7628
        %v7952 = vadd.f32 %v7951, %v7636
        %v7953 = vadd.f32 %v7952, %v7644
        %v7954 = vadd.f32 %v7953, %v7652
        %v7955 = vadd.f32 %v7954, %v7660
        %v7956 = vadd.f32 %v7955, %v7668
        %v7957 = vadd.f32 %v7956, %v7676
        %v7958 = vadd.f32 %v7957, %v7684
        %v7959 = vadd.f32 %v7958, %v7692
        %v7960 = vadd.f32 %v7959, %v7700
        %v7961 = vadd.f32 %v7960, %v7708
        %v7962 = vadd.f32 %v7961, %v7716
        %v7963 = vadd.f32 %v7962, %v7724
        %v7964 = vadd.f32 %v7963, %v7732
        %v7965 = vadd.f32 %v7964, %v7740
        %v7966 = vadd.f32 %v7965, %v7748
        %v7967 = vadd.f32 %v7966, %v7756
        %v7968 = vadd.f32 %v7967, %v7764
        %v7969 = vadd.f32 %v7968, %v7772
        %v7970 = vadd.f32 %v7969, %v7780
        %v7971 = vadd.f32 %v7970, %v7788
        %v7972 = vrot.slane %v7971, 4
        %v7973 = vadd.f32 %v7971, %v7972
        %v7974 = vrot.slane %v7973, 2
        %v7975 = vadd.f32 %v7973, %v7974
        %v7976 = vrot.slane %v7975, 1
        %v7977 = vadd.f32 %v7975, %v7976
        %v7978 = vadd.f32 %v7541, %v7549
        %v7979 = vadd.f32 %v7978, %v7557
        %v7980 = vadd.f32 %v7979, %v7565
        %v7981 = vadd.f32 %v7980, %v7573
        %v7982 = vadd.f32 %v7981, %v7581
        %v7983 = vadd.f32 %v7982, %v7589
        %v7984 = vadd.f32 %v7983, %v7597
        %v7985 = vadd.f32 %v7984, %v7605
        %v7986 = vadd.f32 %v7985, %v7613
        %v7987 = vadd.f32 %v7986, %v7621
        %v7988 = vadd.f32 %v7987, %v7629
        %v7989 = vadd.f32 %v7988, %v7637
        %v7990 = vadd.f32 %v7989, %v7645
        %v7991 = vadd.f32 %v7990, %v7653
        %v7992 = vadd.f32 %v7991, %v7661
        %v7993 = vadd.f32 %v7992, %v7669
        %v7994 = vadd.f32 %v7993, %v7677
        %v7995 = vadd.f32 %v7994, %v7685
        %v7996 = vadd.f32 %v7995, %v7693
        %v7997 = vadd.f32 %v7996, %v7701
        %v7998 = vadd.f32 %v7997, %v7709
        %v7999 = vadd.f32 %v7998, %v7717
        %v8000 = vadd.f32 %v7999, %v7725
        %v8001 = vadd.f32 %v8000, %v7733
        %v8002 = vadd.f32 %v8001, %v7741
        %v8003 = vadd.f32 %v8002, %v7749
        %v8004 = vadd.f32 %v8003, %v7757
        %v8005 = vadd.f32 %v8004, %v7765
        %v8006 = vadd.f32 %v8005, %v7773
        %v8007 = vadd.f32 %v8006, %v7781
        %v8008 = vadd.f32 %v8007, %v7789
        %v8009 = vrot.slane %v8008, 4
        %v8010 = vadd.f32 %v8008, %v8009
        %v8011 = vrot.slane %v8010, 2
        %v8012 = vadd.f32 %v8010, %v8011
        %v8013 = vrot.slane %v8012, 1
        %v8014 = vadd.f32 %v8012, %v8013
        %v8015 = vadd.f32 %v7542, %v7550
        %v8016 = vadd.f32 %v8015, %v7558
        %v8017 = vadd.f32 %v8016, %v7566
        %v8018 = vadd.f32 %v8017, %v7574
        %v8019 = vadd.f32 %v8018, %v7582
        %v8020 = vadd.f32 %v8019, %v7590
        %v8021 = vadd.f32 %v8020, %v7598
        %v8022 = vadd.f32 %v8021, %v7606
        %v8023 = vadd.f32 %v8022, %v7614
        %v8024 = vadd.f32 %v8023, %v7622
        %v8025 = vadd.f32 %v8024, %v7630
        %v8026 = vadd.f32 %v8025, %v7638
        %v8027 = vadd.f32 %v8026, %v7646
        %v8028 = vadd.f32 %v8027, %v7654
        %v8029 = vadd.f32 %v8028, %v7662
        %v8030 = vadd.f32 %v8029, %v7670
        %v8031 = vadd.f32 %v8030, %v7678
        %v8032 = vadd.f32 %v8031, %v7686
        %v8033 = vadd.f32 %v8032, %v7694
        %v8034 = vadd.f32 %v8033, %v7702
        %v8035 = vadd.f32 %v8034, %v7710
        %v8036 = vadd.f32 %v8035, %v7718
        %v8037 = vadd.f32 %v8036, %v7726
        %v8038 = vadd.f32 %v8037, %v7734
        %v8039 = vadd.f32 %v8038, %v7742
        %v8040 = vadd.f32 %v8039, %v7750
        %v8041 = vadd.f32 %v8040, %v7758
        %v8042 = vadd.f32 %v8041, %v7766
        %v8043 = vadd.f32 %v8042, %v7774
        %v8044 = vadd.f32 %v8043, %v7782
        %v8045 = vadd.f32 %v8044, %v7790
        %v8046 = vrot.slane %v8045, 4
        %v8047 = vadd.f32 %v8045, %v8046
        %v8048 = vrot.slane %v8047, 2
        %v8049 = vadd.f32 %v8047, %v8048
        %v8050 = vrot.slane %v8049, 1
        %v8051 = vadd.f32 %v8049, %v8050
        %v8052 = vadd.f32 %v7543, %v7551
        %v8053 = vadd.f32 %v8052, %v7559
        %v8054 = vadd.f32 %v8053, %v7567
        %v8055 = vadd.f32 %v8054, %v7575
        %v8056 = vadd.f32 %v8055, %v7583
        %v8057 = vadd.f32 %v8056, %v7591
        %v8058 = vadd.f32 %v8057, %v7599
        %v8059 = vadd.f32 %v8058, %v7607
        %v8060 = vadd.f32 %v8059, %v7615
        %v8061 = vadd.f32 %v8060, %v7623
        %v8062 = vadd.f32 %v8061, %v7631
        %v8063 = vadd.f32 %v8062, %v7639
        %v8064 = vadd.f32 %v8063, %v7647
        %v8065 = vadd.f32 %v8064, %v7655
        %v8066 = vadd.f32 %v8065, %v7663
        %v8067 = vadd.f32 %v8066, %v7671
        %v8068 = vadd.f32 %v8067, %v7679
        %v8069 = vadd.f32 %v8068, %v7687
        %v8070 = vadd.f32 %v8069, %v7695
        %v8071 = vadd.f32 %v8070, %v7703
        %v8072 = vadd.f32 %v8071, %v7711
        %v8073 = vadd.f32 %v8072, %v7719
        %v8074 = vadd.f32 %v8073, %v7727
        %v8075 = vadd.f32 %v8074, %v7735
        %v8076 = vadd.f32 %v8075, %v7743
        %v8077 = vadd.f32 %v8076, %v7751
        %v8078 = vadd.f32 %v8077, %v7759
        %v8079 = vadd.f32 %v8078, %v7767
        %v8080 = vadd.f32 %v8079, %v7775
        %v8081 = vadd.f32 %v8080, %v7783
        %v8082 = vadd.f32 %v8081, %v7791
        %v8083 = vrot.slane %v8082, 4
        %v8084 = vadd.f32 %v8082, %v8083
        %v8085 = vrot.slane %v8084, 2
        %v8086 = vadd.f32 %v8084, %v8085
        %v8087 = vrot.slane %v8086, 1
        %v8088 = vadd.f32 %v8086, %v8087
        %v8097 = vrot.slane %v7866, 7
        %v8098 = vrot.slane %v7903, 6
        %v8099 = vrot.slane %v7940, 5
        %v8100 = vrot.slane %v7977, 4
        %v8101 = vrot.slane %v8014, 3
        %v8102 = vrot.slane %v8051, 2
        %v8103 = vrot.slane %v8088, 1
        %vm8104 = vcmask 1040384
        %v8105 = vsel %vm8104, %v7829, %v8097
        %vm8106 = vcmask 1042434
        %v8107 = vsel %vm8106, %v8098, %v8099
        %vm8108 = vcmask 1041408
        %v8109 = vsel %vm8108, %v8105, %v8107
        %vm8110 = vcmask 1044484
        %v8111 = vsel %vm8110, %v8100, %v8101
        %vm8112 = vcmask 1046534
        %v8113 = vsel %vm8112, %v8102, %v8103
        %vm8114 = vcmask 1045508
        %v8115 = vsel %vm8114, %v8111, %v8113
        %v8116 = vsel %vm643, %v8109, %v8115
        %v8118 = vadd.f32 %v7792, %v8116
        %8119 = vst [vmem:[%s439] sm:$0xff] %v8118
        // Predicated region
        $region77: #{tpu_custom_call.1} parent=59 // pred_check
          %p8120 = pneg %p453
        $region78: #{tpu_custom_call.1} parent=59 // pred_check_branch
          %8122 = sbr.rel (%p8120) target = $region80
        $region79: #{tpu_custom_call.1} parent=59 // pred_region
          %v8123 = vld [vmem:[%s439] sm:$0xff]
          %v8124 = vmul.f32 %v8123, 0.00390625
          %8125 = vst [vmem:[%s439] sm:$0xff] %v8124
        $region80: #{tpu_custom_call.1} parent=59 // pred_fallthru
          _
        %s8126 = sand.u32 %s274, 1
        %s8127 = scalar_lea.sflag [#allocation4], %s8126
        %s8128 = sand.u32 %s274, 1
        %s8129 = smul.addr %s8128, 8
        %s8130 = scalar_lea.vmem [#allocation8], %s8129
        // Predicated region
        $region81: #{tpu_custom_call.1} parent=59 // pred_check
          %p8131 = pneg %p284
        $region82: #{tpu_custom_call.1} parent=59 // pred_check_branch
          %8133 = sbr.rel (%p8131) target = $region84
        $region83: #{tpu_custom_call.1} parent=59 // pred_region
          %8135 = vsyncadd %s8127, 0
          %s8136 = smul.addr %s32, 8
          %s8137 = smul.addr %s31, 8
          %s8138 = sadd.s32 %s8136, %s8137
          %s8139 = scalar_lea.hbm %s10, %s8138
          %s8141 = sshll.u32 %s8130, 4
          %s8142 = int_to_ptr.vmem [resolvable:$true] %s8141
          %s8143 = sshll.u32 %s8139, 4
          %s8144 = int_to_ptr.hbm [resolvable:$true] %s8143
          %8146 = dma.vmem_to_hbm [thread:$0]  %s8142, 128, %s8144, %s8127
        $region84: #{tpu_custom_call.1} parent=59 // pred_fallthru
          _
      $region60: #{tpu_custom_call.1} parent=5 // pred_fallthru
        _
      %p8147 = scmp.le.s32.totalorder 2, %s21
      // Predicated region
      $region85: #{tpu_custom_call.1} parent=5 // pred_check
        %p8148 = pneg %p8147
      $region86: #{tpu_custom_call.1} parent=5 // pred_check_branch
        %8150 = sbr.rel (%p8148) target = $region88
      $region87: #{tpu_custom_call.1} parent=5 // pred_region
        %s8151 = ssub.s32 %s21, 2
        // Predicated region
        $region89: #{tpu_custom_call.1} parent=87 // pred_check
          %p8152 = pneg %p290
        $region90: #{tpu_custom_call.1} parent=87 // pred_check_branch
          %8154 = sbr.rel (%p8152) target = $region92
        $region91: #{tpu_custom_call.1} parent=87 // pred_region
          %s8155 = sand.u32 %s275, 1
          %s8156 = scalar_lea.sflag [#allocation4], %s8155
          %s8157 = sand.u32 %s275, 1
          %s8158 = smul.addr %s8157, 8
          %s8159 = scalar_lea.vmem [#allocation8], %s8158
          %8161 = dma.done %s8156, 128
        $region92: #{tpu_custom_call.1} parent=87 // pred_fallthru
          _
      $region88: #{tpu_custom_call.1} parent=5 // pred_fallthru
        _
    $region6: #{tpu_custom_call.1} parent=1 // loop_footer
      %s25 = sadd.s32 1, %s21
    $region7: #{tpu_custom_call.1} parent=1 // loop_footer_branch
      %20 = sbr.rel target = $region3
    $region8: #{tpu_custom_call.1} parent=1 // loop_exit
      _
    %8162 = vsyncpa [#allocation3], 1
    %s8163 = scalar_lea.sflag [#allocation3], 1
    %8164 = vsyncpa %s8163, 1
    %8165 = vsyncpa [#allocation6], 1
    %8166 = vsyncpa [#allocation4], 1
    %s8167 = scalar_lea.sflag [#allocation4], 1
    %8168 = vsyncpa %s8167, 1

</llo_original>
